<compile_context>
chip_gen: v7x
topology: tpu7x:2x2x1
jax: 0.10.0
libtpu: 0.0.40
codegen_flags: <defaults>
</compile_context>

<pallas_src>
import functools

import jax
import jax.numpy as jnp
from jax import lax
from jax.experimental import pallas as pl
from jax.experimental.pallas import tpu as pltpu


# ----------------------------------------------------------------------------
# shared GRU machinery
# ----------------------------------------------------------------------------
def _gru_chunk_body(gi_sc, h_sc, wihr_ref, whh_ref, bg_bb, bhn_bb, top_sc,
                    *, num_layers, time_chunk, hidden_pad):
    """Run `time_chunk` GRU steps over `num_layers` layers (fully unrolled).

    gi_sc   : VMEM (BB, TC, 3Hp) f32 — layer-0 input projection (bias/context folded)
    h_sc    : VMEM (L, BB, Hp)  f32 — carried hidden state
    wihr_ref: ref (L-1, Hp, 3Hp) bf16 — layer>=1 input weights
    whh_ref : ref (L, Hp, 3Hp)  bf16 — recurrent weights
    bg_bb   : list[L]; bg_bb[l>=1] = (BB, 3Hp) f32 folded input-path bias
    bhn_bb  : list[L] of (BB, Hp) f32 — hidden bias of the n gate (kept separate)
    top_sc  : optional VMEM (BB, TC, Hp) f32 collecting top-layer hidden states
    """
    L, TC, Hp = num_layers, time_chunk, hidden_pad
    # Keep the recurrent state in vregs for the whole chunk; write back once.
    h = [h_sc[l] for l in range(L)]
    hbf = [h[l].astype(jnp.bfloat16) for l in range(L)]
    for t in range(TC):
        # All recurrent matmuls depend only on the t-1 state: issue them
        # back-to-back so they pipeline in the MXU and overlap the gate math.
        gh = [jnp.dot(hbf[l], whh_ref[l], preferred_element_type=jnp.float32)
              for l in range(L)]
        below_bf = None
        for l in range(L):
            if l == 0:
                gi = gi_sc[:, t, :]                                 # (BB, 3Hp)
            else:
                gi = jnp.dot(below_bf, wihr_ref[l - 1],
                             preferred_element_type=jnp.float32) + bg_bb[l]
            ghl = gh[l]
            # lane-aligned gate slices (Hp is a multiple of 128)
            r = jax.nn.sigmoid(gi[:, 0:Hp] + ghl[:, 0:Hp])
            z = jax.nn.sigmoid(gi[:, Hp:2 * Hp] + ghl[:, Hp:2 * Hp])
            n = jnp.tanh(gi[:, 2 * Hp:3 * Hp]
                         + r * (ghl[:, 2 * Hp:3 * Hp] + bhn_bb[l]))
            h_new = (1.0 - z) * n + z * h[l]
            h[l] = h_new
            hbf[l] = below_bf = h_new.astype(jnp.bfloat16)          # single cast
        if top_sc is not None:
            top_sc[:, t, :] = h[L - 1]
    for l in range(L):
        h_sc[l] = h[l]


def _gru_encoder_kernel(x_ref, wx_ref, wihr_ref, whh_ref, bg_ref, bhn_ref,
                        hout_ref, h_sc, gi_sc,
                        *, num_layers, hidden_pad, time_chunk):
    """Encoder: multi-layer GRU, zero initial state, emits final hidden state."""
    L, Hp, TC = num_layers, hidden_pad, time_chunk
    BB, _, I = x_ref.shape

    @pl.when(pl.program_id(1) == 0)
    def _init():
        h_sc[...] = jnp.zeros_like(h_sc)

    # Hoisted, batched layer-0 input projection for the whole chunk (batch-major),
    # spilled to VMEM and re-read per step to bound vreg pressure.
    x_all = x_ref[...].reshape(BB * TC, I)                       # already bf16
    gi0 = jnp.dot(x_all, wx_ref[...], preferred_element_type=jnp.float32)
    gi_sc[...] = (gi0 + bg_ref[0]).reshape(BB, TC, 3 * Hp)

    # Bias broadcasts hoisted out of the time loop.
    bg_bb = [None] + [jnp.broadcast_to(bg_ref[l], (BB, 3 * Hp)) for l in range(1, L)]
    bhn_bb = [jnp.broadcast_to(bhn_ref[l], (BB, Hp)) for l in range(L)]

    _gru_chunk_body(gi_sc, h_sc, wihr_ref, whh_ref, bg_bb, bhn_bb, None,
                    num_layers=L, time_chunk=TC, hidden_pad=Hp)

    # Only the final chunk's state is needed; skip the copy on earlier chunks.
    @pl.when(pl.program_id(1) == pl.num_programs(1) - 1)
    def _emit():
        hout_ref[...] = h_sc[...].astype(hout_ref.dtype)


def _gru_decoder_kernel(x_ref, h0_ref, wx_ref, wctx_ref, wihr_ref, whh_ref,
                        bg_ref, bhn_ref, dw_ref, db_ref, out_ref,
                        h_sc, ctx_sc, gi_sc, top_sc,
                        *, num_layers, hidden_pad, time_chunk):
    """Decoder: GRU over [x, context] + Linear head, one time-chunk per grid step."""
    L, Hp, TC = num_layers, hidden_pad, time_chunk
    BB, _, I = x_ref.shape
    Op = out_ref.shape[2]

    @pl.when(pl.program_id(1) == 0)
    def _init():
        h_sc[...] = h0_ref[...].astype(jnp.float32)
        # Context contribution to the layer-0 gates is constant over time:
        # compute it once per batch block.  (Scratch is per-core, so this is
        # re-done for every batch block even under megacore sharding.)
        ctx_sc[...] = jnp.dot(h0_ref[L - 1].astype(jnp.bfloat16), wctx_ref[...],
                              preferred_element_type=jnp.float32)

    # Hoisted layer-0 projection (+ context + folded bias), batch-major.
    x_all = x_ref[...].reshape(BB * TC, I)                       # already bf16
    gi0 = jnp.dot(x_all, wx_ref[...], preferred_element_type=jnp.float32)
    gi_sc[...] = ((gi0 + bg_ref[0]).reshape(BB, TC, 3 * Hp)
                  + ctx_sc[...][:, None, :])

    bg_bb = [None] + [jnp.broadcast_to(bg_ref[l], (BB, 3 * Hp)) for l in range(1, L)]
    bhn_bb = [jnp.broadcast_to(bhn_ref[l], (BB, Hp)) for l in range(L)]

    _gru_chunk_body(gi_sc, h_sc, wihr_ref, whh_ref, bg_bb, bhn_bb, top_sc,
                    num_layers=L, time_chunk=TC, hidden_pad=Hp)

    # Batched output Linear over the whole chunk; lane-dense (Op = 128k),
    # batch-major store — no post-kernel transpose needed.
    top = top_sc[...].reshape(BB * TC, Hp).astype(jnp.bfloat16)
    out = jnp.dot(top, dw_ref[...], preferred_element_type=jnp.float32) + db_ref[...]
    out_ref[...] = out.reshape(BB, TC, Op).astype(out_ref.dtype)


# ----------------------------------------------------------------------------
# parameter preparation (padding / splitting / bias folding / bf16 casting)
# ----------------------------------------------------------------------------
def _round_up(x, m):
    return (x + m - 1) // m * m


def _pad_axis(w, n, n_pad, axis):
    if n_pad == n:
        return w
    pad = [(0, 0)] * w.ndim
    pad[axis] = (0, n_pad - n)
    return jnp.pad(w, pad)


def _pad_last_gates(w, H, Hp):
    """(..., 3H) -> (..., 3Hp), zero-padding each of the 3 gate blocks."""
    if Hp == H:
        return w
    lead = w.shape[:-1]
    w3 = w.reshape(lead + (3, H))
    w3 = jnp.pad(w3, [(0, 0)] * (len(lead) + 1) + [(0, Hp - H)])
    return w3.reshape(lead + (3 * Hp,))


def _prep_recurrent_params(wihr, whh, bih, bhh, H, Hp):
    """Pad + fold GRU parameters (layers >= 1 input weights, all hidden weights/biases)."""
    wihr_p = _pad_last_gates(_pad_axis(wihr, H, Hp, axis=1), H, Hp).astype(jnp.bfloat16)
    whh_p = _pad_last_gates(_pad_axis(whh, H, Hp, axis=1), H, Hp).astype(jnp.bfloat16)
    # Fold b_hh into b_ih for the r/z gates; b_hh of the n gate stays separate
    # because it is multiplied by r.
    bg = jnp.concatenate([bih[:, 0:H] + bhh[:, 0:H],
                          bih[:, H:2 * H] + bhh[:, H:2 * H],
                          bih[:, 2 * H:3 * H]], axis=1)              # (L, 3H)
    bg = _pad_last_gates(bg, H, Hp)[:, None, :].astype(jnp.float32)  # (L, 1, 3Hp)
    bhn = _pad_axis(bhh[:, 2 * H:3 * H], H, Hp, axis=1)[:, None, :].astype(jnp.float32)
    return wihr_p, whh_p, bg, bhn


@functools.lru_cache(maxsize=1)
def _vmem_limit_bytes():
    limit = 48 * 1024 * 1024
    try:
        info = pltpu.get_tpu_info()
        cap = int(getattr(info, "vmem_capacity_bytes", 0) or 0)
        if cap > 0:
            # ~100 MiB on 128 MiB parts (v5e/v6e), capacity - 8 MiB on v7x.
            limit = max(32 * 1024 * 1024,
                        min(cap - 8 * 1024 * 1024, 100 * 1024 * 1024))
    except Exception:
        pass
    return limit


def _compiler_params():
    return pltpu.CompilerParams(
        dimension_semantics=("parallel", "arbitrary"),   # (batch shard, time chunk)
        vmem_limit_bytes=_vmem_limit_bytes(),
    )


def _default_batch_block(B):
    # >=2 batch blocks lets "parallel" shard the batch axis across v7x's two
    # TensorCores while keeping the recurrent-matmul LHS as tall as possible.
    # Sweep batch_block (64-256 on big batches) for best MXU fill.
    if B >= 16 and B % 16 == 0:
        return B // 2
    return B


def _default_time_chunk(T):
    if T <= 16:
        return T
    for tc in (16, 8, 4, 2):
        if T % tc == 0:
            return tc
    return 1


# ----------------------------------------------------------------------------
# wrappers
# ----------------------------------------------------------------------------
def encoder_forward(enc_X, enc_params, *, num_layers, hidden_size,
                    time_chunk=None, batch_block=None, return_padded=False):
    """enc_X: (B, T, I) -> final hidden state (L, B, H) (or (L, B, Hp) padded)."""
    wih0, wihr, whh, bih, bhh = enc_params
    B, T, I = enc_X.shape
    L, H = num_layers, hidden_size
    Hp = _round_up(H, 128)
    BB = _default_batch_block(B) if batch_block is None else batch_block
    TC = _default_time_chunk(T) if time_chunk is None else min(time_chunk, T)
    assert T % TC == 0 and B % BB == 0
    assert BB == B or BB % 8 == 0, "batch block must be a multiple of 8 (f32 sublane)"

    wx = _pad_last_gates(wih0, H, Hp).astype(jnp.bfloat16)               # (I, 3Hp)
    wihr_p, whh_p, bg, bhn = _prep_recurrent_params(wihr, whh, bih, bhh, H, Hp)

    x = enc_X.astype(jnp.bfloat16)                # (B, T, I), native layout, bf16

    kernel = functools.partial(_gru_encoder_kernel, num_layers=L,
                               hidden_pad=Hp, time_chunk=TC)
    h_pad = pl.pallas_call(
        kernel,
        out_shape=jax.ShapeDtypeStruct((L, B, Hp), jnp.float32),
        grid_spec=pltpu.PrefetchScalarGridSpec(
            num_scalar_prefetch=0,
            grid=(B // BB, T // TC),
            in_specs=[
                pl.BlockSpec((BB, TC, I), lambda b, t: (b, t, 0)),       # x chunk
                pl.BlockSpec(wx.shape, lambda b, t: (0, 0)),
                pl.BlockSpec(wihr_p.shape, lambda b, t: (0, 0, 0)),
                pl.BlockSpec(whh_p.shape, lambda b, t: (0, 0, 0)),
                pl.BlockSpec(bg.shape, lambda b, t: (0, 0, 0)),
                pl.BlockSpec(bhn.shape, lambda b, t: (0, 0, 0)),
            ],
            out_specs=pl.BlockSpec((L, BB, Hp), lambda b, t: (0, b, 0)),
            scratch_shapes=[
                pltpu.VMEM((L, BB, Hp), jnp.float32),        # carried hidden state
                pltpu.VMEM((BB, TC, 3 * Hp), jnp.float32),   # hoisted layer-0 proj
            ],
        ),
        compiler_params=_compiler_params(),
    )(x, wx, wihr_p, whh_p, bg, bhn)
    return h_pad if return_padded else h_pad[:, :, :H]


def decoder_forward(dec_X, state, dec_params, *, num_layers, hidden_size,
                    output_size, time_chunk=None, batch_block=None):
    """dec_X: (B, T, I), state: (L, B, H) or padded (L, B, Hp) -> (B, T, output_size)."""
    wih0, wihr, whh, bih, bhh, dw, db = dec_params
    B, T, I = dec_X.shape
    L, H, O = num_layers, hidden_size, output_size
    Hp = _round_up(H, 128)
    Op = _round_up(O, 128)
    BB = _default_batch_block(B) if batch_block is None else batch_block
    TC = _default_time_chunk(T) if time_chunk is None else min(time_chunk, T)
    assert T % TC == 0 and B % BB == 0
    assert BB == B or BB % 8 == 0, "batch block must be a multiple of 8 (f32 sublane)"

    # Split layer-0 weights: rows [0:I] act on x, rows [I:I+H] act on the context.
    wx = _pad_last_gates(wih0[:I], H, Hp).astype(jnp.bfloat16)               # (I, 3Hp)
    wctx = _pad_last_gates(_pad_axis(wih0[I:], H, Hp, axis=0),
                           H, Hp).astype(jnp.bfloat16)                       # (Hp, 3Hp)
    wihr_p, whh_p, bg, bhn = _prep_recurrent_params(wihr, whh, bih, bhh, H, Hp)
    dw_p = _pad_axis(_pad_axis(dw, H, Hp, axis=0), O, Op, axis=1).astype(jnp.bfloat16)
    db_p = _pad_axis(db[None, :], O, Op, axis=1).astype(jnp.float32)         # (1, Op)

    x = dec_X.astype(jnp.bfloat16)                # (B, T, I), native layout, bf16
    # Accept a padded encoder state directly (avoids slice + re-pad HBM traffic).
    if state.shape[2] == Hp:
        h0 = state.astype(jnp.float32)
    else:
        h0 = _pad_axis(state.astype(jnp.float32), H, Hp, axis=2)             # (L, B, Hp)

    kernel = functools.partial(_gru_decoder_kernel, num_layers=L,
                               hidden_pad=Hp, time_chunk=TC)
    out_seq = pl.pallas_call(
        kernel,
        out_shape=jax.ShapeDtypeStruct((B, T, Op), jnp.float32),
        grid_spec=pltpu.PrefetchScalarGridSpec(
            num_scalar_prefetch=0,
            grid=(B // BB, T // TC),
            in_specs=[
                pl.BlockSpec((BB, TC, I), lambda b, t: (b, t, 0)),    # dec_X chunk
                pl.BlockSpec((L, BB, Hp), lambda b, t: (0, b, 0)),    # encoder state
                pl.BlockSpec(wx.shape, lambda b, t: (0, 0)),
                pl.BlockSpec(wctx.shape, lambda b, t: (0, 0)),
                pl.BlockSpec(wihr_p.shape, lambda b, t: (0, 0, 0)),
                pl.BlockSpec(whh_p.shape, lambda b, t: (0, 0, 0)),
                pl.BlockSpec(bg.shape, lambda b, t: (0, 0, 0)),
                pl.BlockSpec(bhn.shape, lambda b, t: (0, 0, 0)),
                pl.BlockSpec(dw_p.shape, lambda b, t: (0, 0)),
                pl.BlockSpec(db_p.shape, lambda b, t: (0, 0)),
            ],
            out_specs=pl.BlockSpec((BB, TC, Op), lambda b, t: (b, t, 0)),
            scratch_shapes=[
                pltpu.VMEM((L, BB, Hp), jnp.float32),        # carried hidden state
                pltpu.VMEM((BB, 3 * Hp), jnp.float32),       # context @ W_ctx
                pltpu.VMEM((BB, TC, 3 * Hp), jnp.float32),   # hoisted layer-0 proj
                pltpu.VMEM((BB, TC, Hp), jnp.float32),       # top-layer h over chunk
            ],
        ),
        compiler_params=_compiler_params(),
    )(x, h0, wx, wctx, wihr_p, whh_p, bg, bhn, dw_p, db_p)

    return out_seq[:, :, :O]


def encoder_decoder_forward(enc_X, dec_X, enc_params, dec_params, *, num_layers,
                            hidden_size, output_size, time_chunk=None,
                            batch_block=None):
    """EncoderDecoder.forward: state = encoder(enc_X); return decoder(dec_X, state)."""
    state = encoder_forward(enc_X, enc_params, num_layers=num_layers,
                            hidden_size=hidden_size, time_chunk=time_chunk,
                            batch_block=batch_block, return_padded=True)
    return decoder_forward(dec_X, state, dec_params, num_layers=num_layers,
                           hidden_size=hidden_size, output_size=output_size,
                           time_chunk=time_chunk, batch_block=batch_block)


# ----------------------------------------------------------------------------
# deterministic synthetic parameters (nn.GRU / nn.Linear shapes, transposed)
# ----------------------------------------------------------------------------
def make_encoder_params(key, input_size, hidden_size, num_layers):
    I, H, L = input_size, hidden_size, num_layers
    keys = jax.random.split(key, 5)
    s = 1.0 / jnp.sqrt(H)
    u = lambda k, shp: jax.random.uniform(k, shp, jnp.float32, -s, s)
    wih0 = u(keys[0], (I, 3 * H))
    wihr = u(keys[1], (max(L - 1, 1), H, 3 * H))
    whh = u(keys[2], (L, H, 3 * H))
    bih = u(keys[3], (L, 3 * H))
    bhh = u(keys[4], (L, 3 * H))
    return (wih0, wihr, whh, bih, bhh)


def make_decoder_params(key, input_size, hidden_size, num_layers, output_size):
    I, H, L, O = input_size, hidden_size, num_layers, output_size
    keys = jax.random.split(key, 7)
    s = 1.0 / jnp.sqrt(H)
    u = lambda k, shp: jax.random.uniform(k, shp, jnp.float32, -s, s)
    wih0 = u(keys[0], (I + H, 3 * H))            # layer-0 input is [x, context]
    wihr = u(keys[1], (max(L - 1, 1), H, 3 * H))
    whh = u(keys[2], (L, H, 3 * H))
    bih = u(keys[3], (L, 3 * H))
    bhh = u(keys[4], (L, 3 * H))
    dw = u(keys[5], (H, O))
    db = u(keys[6], (O,))
    return (wih0, wihr, whh, bih, bhh, dw, db)


# ----------------------------------------------------------------------------
# pure-JAX reference (PyTorch GRU semantics, mirroring the kernel's bf16 matmuls)
# ----------------------------------------------------------------------------
def _bf16_dot(a, b):
    return jnp.dot(a.astype(jnp.bfloat16), b.astype(jnp.bfloat16),
                   preferred_element_type=jnp.float32)


def _gru_stack_ref(x_seq, h0, wih0, wihr, whh, bih, bhh, H, L):
    def step(h_all, x_t):
        inp = x_t
        hs = []
        for l in range(L):
            h_prev = h_all[l]
            w_ih = wih0 if l == 0 else wihr[l - 1]
            gi = _bf16_dot(inp, w_ih) + bih[l]
            gh = _bf16_dot(h_prev, whh[l]) + bhh[l]
            i_r, i_z, i_n = gi[:, :H], gi[:, H:2 * H], gi[:, 2 * H:]
            h_r, h_z, h_n = gh[:, :H], gh[:, H:2 * H], gh[:, 2 * H:]
            r = jax.nn.sigmoid(i_r + h_r)
            z = jax.nn.sigmoid(i_z + h_z)
            n = jnp.tanh(i_n + r * h_n)
            h_new = (1.0 - z) * n + z * h_prev
            hs.append(h_new)
            inp = h_new
        return jnp.stack(hs), inp

    h_fin, outs = lax.scan(step, h0, x_seq)
    return h_fin, outs


def encoder_decoder_ref(enc_X, dec_X, enc_params, dec_params, *, num_layers,
                        hidden_size):
    e_wih0, e_wihr, e_whh, e_bih, e_bhh = enc_params
    d_wih0, d_wihr, d_whh, d_bih, d_bhh, dw, db = dec_params
    H, L = hidden_size, num_layers
    B = enc_X.shape[0]
    # Encoder
    xe = jnp.transpose(enc_X, (1, 0, 2))
    h0 = jnp.zeros((L, B, H), jnp.float32)
    state, _ = _gru_stack_ref(xe, h0, e_wih0, e_wihr, e_whh, e_bih, e_bhh, H, L)
    # Decoder
    Td = dec_X.shape[1]
    xd = jnp.transpose(dec_X, (1, 0, 2))
    ctx = jnp.broadcast_to(state[-1][None], (Td, B, H))
    xcat = jnp.concatenate([xd, ctx], axis=2)
    _, outs = _gru_stack_ref(xcat, state, d_wih0, d_wihr, d_whh, d_bih, d_bhh, H, L)
    out = _bf16_dot(outs, dw) + db
    return jnp.transpose(out, (1, 0, 2))


# ----------------------------------------------------------------------------
if __name__ == "__main__":
    num_layers, hidden_size, output_size = 2, 32, 24
    enc_input_size, dec_input_size = 16, 16
    B, T_enc, T_dec = 16, 8, 8

    key = jax.random.PRNGKey(0)
    k1, k2, k3, k4 = jax.random.split(key, 4)
    enc_X = jax.random.normal(k1, (B, T_enc, enc_input_size), jnp.float32)
    dec_X = jax.random.normal(k2, (B, T_dec, dec_input_size), jnp.float32)
    enc_params = make_encoder_params(k3, enc_input_size, hidden_size, num_layers)
    dec_params = make_decoder_params(k4, dec_input_size, hidden_size, num_layers,
                                     output_size)

    # Defaults: time_chunk = T (whole sequence per grid step), batch_block = B//2
    # (two batch blocks -> both v7x TensorCores via the "parallel" batch axis).
    out = encoder_decoder_forward(enc_X, dec_X, enc_params, dec_params,
                                  num_layers=num_layers, hidden_size=hidden_size,
                                  output_size=output_size)
    out = jax.block_until_ready(out)

    ref = encoder_decoder_ref(enc_X, dec_X, enc_params, dec_params,
                              num_layers=num_layers, hidden_size=hidden_size)
    assert out.shape == (B, T_dec, output_size)
    assert jnp.allclose(out, ref, atol=2e-2, rtol=2e-2), (
        "mismatch vs reference: max abs diff = %g"
        % float(jnp.max(jnp.abs(out - ref))))
    print("KERNEL_OK")
</pallas_src>

<mosaic_0001>
module attributes {stable_mosaic.version = 11 : i64} {
  func.func @_gru_encoder_kernel(%arg0: i32, %arg1: i32, %arg2: memref<8x8x16xbf16, #tpu.memory_space<vmem>>, %arg3: memref<16x384xbf16, #tpu.memory_space<vmem>>, %arg4: memref<1x128x384xbf16, #tpu.memory_space<vmem>>, %arg5: memref<2x128x384xbf16, #tpu.memory_space<vmem>>, %arg6: memref<2x1x384xf32, #tpu.memory_space<vmem>>, %arg7: memref<2x1x128xf32, #tpu.memory_space<vmem>>, %arg8: memref<2x8x128xf32, #tpu.memory_space<vmem>>, %arg9: memref<2x8x128xf32, #tpu.memory_space<vmem>>, %arg10: memref<8x8x384xf32, #tpu.memory_space<vmem>>) attributes {dimension_semantics = [#tpu.dimension_semantics<parallel>, #tpu.dimension_semantics<arbitrary>], iteration_bounds = array<i64: 2, 1>, scalar_prefetch = 0 : i64, scratch_operands = 2 : i64, tpu.core_type = #tpu.core_type<tc>, window_params = [{transform_indices = @transform_0, window_bounds = array<i64: 8, 8, 16>}, {pipeline_mode = #tpu.pipeline_mode<synchronous>, transform_indices = @transform_1, window_bounds = array<i64: 16, 384>}, {pipeline_mode = #tpu.pipeline_mode<synchronous>, transform_indices = @transform_2, window_bounds = array<i64: 1, 128, 384>}, {pipeline_mode = #tpu.pipeline_mode<synchronous>, transform_indices = @transform_3, window_bounds = array<i64: 2, 128, 384>}, {pipeline_mode = #tpu.pipeline_mode<synchronous>, transform_indices = @transform_4, window_bounds = array<i64: 2, 1, 384>}, {pipeline_mode = #tpu.pipeline_mode<synchronous>, transform_indices = @transform_5, window_bounds = array<i64: 2, 1, 128>}, {transform_indices = @transform_6, window_bounds = array<i64: 2, 8, 128>}]} {
    %c0_i32 = arith.constant 0 : i32
    %0 = arith.cmpi eq, %arg1, %c0_i32 : i32
    %1 = arith.extui %0 : i1 to i32
    %c0_i32_0 = arith.constant 0 : i32
    %2 = arith.cmpi ne, %1, %c0_i32_0 : i32
    scf.if %2 {
      %cst_195 = arith.constant 0.000000e+00 : f32
      %583 = vector.broadcast %cst_195 : f32 to vector<2x8x128xf32>
      %c0_196 = arith.constant 0 : index
      %c0_197 = arith.constant 0 : index
      %c0_198 = arith.constant 0 : index
      %584 = vector.load %arg9[%c0_196, %c0_197, %c0_198] : memref<2x8x128xf32, #tpu.memory_space<vmem>>, vector<2x8x128xf32>
      tpu.vector_store %arg9[%c0_196, %c0_197, %c0_198], %583 {strides = array<i32>} : memref<2x8x128xf32, #tpu.memory_space<vmem>>, vector<2x8x128xf32>,
    } else {
    }
    %c0 = arith.constant 0 : index
    %c0_1 = arith.constant 0 : index
    %c0_2 = arith.constant 0 : index
    %3 = vector.load %arg2[%c0, %c0_1, %c0_2] : memref<8x8x16xbf16, #tpu.memory_space<vmem>>, vector<8x8x16xbf16>
    %4 = vector.shape_cast %3 : vector<8x8x16xbf16> to vector<64x16xbf16>
    %c0_3 = arith.constant 0 : index
    %c0_4 = arith.constant 0 : index
    %5 = vector.load %arg3[%c0_3, %c0_4] : memref<16x384xbf16, #tpu.memory_space<vmem>>, vector<16x384xbf16>
    %cst = arith.constant dense<0.000000e+00> : vector<64x384xf32>
    %6 = tpu.matmul %4, %5, %cst {dimension_numbers = #tpu.dot_dimension_numbers<[1], [0], [0], [1], [0, 0, 1, 1], [], []>} : vector<64x16xbf16>, vector<16x384xbf16>, vector<64x384xf32> -> vector<64x384xf32>
    %c0_5 = arith.constant 0 : index
    %c0_6 = arith.constant 0 : index
    %c0_7 = arith.constant 0 : index
    %7 = vector.load %arg6[%c0_5, %c0_6, %c0_7] : memref<2x1x384xf32, #tpu.memory_space<vmem>>, vector<1x1x384xf32>
    %8 = vector.shape_cast %7 : vector<1x1x384xf32> to vector<1x384xf32>
    %9 = vector.broadcast %8 : vector<1x384xf32> to vector<64x384xf32>
    %10 = arith.addf %6, %9 : vector<64x384xf32>
    %11 = vector.shape_cast %10 : vector<64x384xf32> to vector<8x8x384xf32>
    %c0_8 = arith.constant 0 : index
    %c0_9 = arith.constant 0 : index
    %c0_10 = arith.constant 0 : index
    %12 = vector.load %arg10[%c0_8, %c0_9, %c0_10] : memref<8x8x384xf32, #tpu.memory_space<vmem>>, vector<8x8x384xf32>
    tpu.vector_store %arg10[%c0_8, %c0_9, %c0_10], %11 {strides = array<i32>} : memref<8x8x384xf32, #tpu.memory_space<vmem>>, vector<8x8x384xf32>,
    %c1 = arith.constant 1 : index
    %c0_11 = arith.constant 0 : index
    %c0_12 = arith.constant 0 : index
    %13 = vector.load %arg6[%c1, %c0_11, %c0_12] : memref<2x1x384xf32, #tpu.memory_space<vmem>>, vector<1x1x384xf32>
    %14 = vector.shape_cast %13 : vector<1x1x384xf32> to vector<1x384xf32>
    %15 = vector.shape_cast %14 : vector<1x384xf32> to vector<1x384xf32>
    %16 = vector.broadcast %15 : vector<1x384xf32> to vector<8x384xf32>
    %c0_13 = arith.constant 0 : index
    %c0_14 = arith.constant 0 : index
    %c0_15 = arith.constant 0 : index
    %17 = vector.load %arg7[%c0_13, %c0_14, %c0_15] : memref<2x1x128xf32, #tpu.memory_space<vmem>>, vector<1x1x128xf32>
    %18 = vector.shape_cast %17 : vector<1x1x128xf32> to vector<1x128xf32>
    %19 = vector.shape_cast %18 : vector<1x128xf32> to vector<1x128xf32>
    %20 = vector.broadcast %19 : vector<1x128xf32> to vector<8x128xf32>
    %c1_16 = arith.constant 1 : index
    %c0_17 = arith.constant 0 : index
    %c0_18 = arith.constant 0 : index
    %21 = vector.load %arg7[%c1_16, %c0_17, %c0_18] : memref<2x1x128xf32, #tpu.memory_space<vmem>>, vector<1x1x128xf32>
    %22 = vector.shape_cast %21 : vector<1x1x128xf32> to vector<1x128xf32>
    %23 = vector.shape_cast %22 : vector<1x128xf32> to vector<1x128xf32>
    %24 = vector.broadcast %23 : vector<1x128xf32> to vector<8x128xf32>
    %c0_19 = arith.constant 0 : index
    %c0_20 = arith.constant 0 : index
    %c0_21 = arith.constant 0 : index
    %25 = vector.load %arg9[%c0_19, %c0_20, %c0_21] : memref<2x8x128xf32, #tpu.memory_space<vmem>>, vector<1x8x128xf32>
    %26 = vector.shape_cast %25 : vector<1x8x128xf32> to vector<8x128xf32>
    %c1_22 = arith.constant 1 : index
    %c0_23 = arith.constant 0 : index
    %c0_24 = arith.constant 0 : index
    %27 = vector.load %arg9[%c1_22, %c0_23, %c0_24] : memref<2x8x128xf32, #tpu.memory_space<vmem>>, vector<1x8x128xf32>
    %28 = vector.shape_cast %27 : vector<1x8x128xf32> to vector<8x128xf32>
    %29 = arith.truncf %26 : vector<8x128xf32> to vector<8x128xbf16>
    %30 = arith.truncf %28 : vector<8x128xf32> to vector<8x128xbf16>
    %c0_25 = arith.constant 0 : index
    %c0_26 = arith.constant 0 : index
    %c0_27 = arith.constant 0 : index
    %31 = vector.load %arg5[%c0_25, %c0_26, %c0_27] : memref<2x128x384xbf16, #tpu.memory_space<vmem>>, vector<1x128x384xbf16>
    %32 = vector.shape_cast %31 : vector<1x128x384xbf16> to vector<128x384xbf16>
    %cst_28 = arith.constant dense<0.000000e+00> : vector<8x384xf32>
    %33 = tpu.matmul %29, %32, %cst_28 {dimension_numbers = #tpu.dot_dimension_numbers<[1], [0], [0], [1], [0, 0, 1, 1], [], []>} : vector<8x128xbf16>, vector<128x384xbf16>, vector<8x384xf32> -> vector<8x384xf32>
    %c1_29 = arith.constant 1 : index
    %c0_30 = arith.constant 0 : index
    %c0_31 = arith.constant 0 : index
    %34 = vector.load %arg5[%c1_29, %c0_30, %c0_31] : memref<2x128x384xbf16, #tpu.memory_space<vmem>>, vector<1x128x384xbf16>
    %35 = vector.shape_cast %34 : vector<1x128x384xbf16> to vector<128x384xbf16>
    %cst_32 = arith.constant dense<0.000000e+00> : vector<8x384xf32>
    %36 = tpu.matmul %30, %35, %cst_32 {dimension_numbers = #tpu.dot_dimension_numbers<[1], [0], [0], [1], [0, 0, 1, 1], [], []>} : vector<8x128xbf16>, vector<128x384xbf16>, vector<8x384xf32> -> vector<8x384xf32>
    %c0_33 = arith.constant 0 : index
    %c0_34 = arith.constant 0 : index
    %c0_35 = arith.constant 0 : index
    %37 = vector.load %arg10[%c0_33, %c0_34, %c0_35] : memref<8x8x384xf32, #tpu.memory_space<vmem>>, vector<8x1x384xf32>
    %38 = vector.shape_cast %37 : vector<8x1x384xf32> to vector<8x384xf32>
    %39 = vector.extract_strided_slice %38 {offsets = [0, 0], sizes = [8, 128], strides = [1, 1]} : vector<8x384xf32> to vector<8x128xf32>
    %40 = vector.extract_strided_slice %33 {offsets = [0, 0], sizes = [8, 128], strides = [1, 1]} : vector<8x384xf32> to vector<8x128xf32>
    %41 = arith.addf %39, %40 : vector<8x128xf32>
    %42 = arith.negf %41 : vector<8x128xf32>
    %43 = math.exp %42 : vector<8x128xf32>
    %cst_36 = arith.constant 1.000000e+00 : f32
    %44 = vector.broadcast %cst_36 : f32 to vector<8x128xf32>
    %45 = arith.addf %44, %43 : vector<8x128xf32>
    %46 = arith.divf %44, %45 : vector<8x128xf32>
    %47 = vector.extract_strided_slice %38 {offsets = [0, 128], sizes = [8, 128], strides = [1, 1]} : vector<8x384xf32> to vector<8x128xf32>
    %48 = vector.extract_strided_slice %33 {offsets = [0, 128], sizes = [8, 128], strides = [1, 1]} : vector<8x384xf32> to vector<8x128xf32>
    %49 = arith.addf %47, %48 : vector<8x128xf32>
    %50 = arith.negf %49 : vector<8x128xf32>
    %51 = math.exp %50 : vector<8x128xf32>
    %cst_37 = arith.constant 1.000000e+00 : f32
    %52 = vector.broadcast %cst_37 : f32 to vector<8x128xf32>
    %53 = arith.addf %52, %51 : vector<8x128xf32>
    %54 = arith.divf %52, %53 : vector<8x128xf32>
    %55 = vector.extract_strided_slice %38 {offsets = [0, 256], sizes = [8, 128], strides = [1, 1]} : vector<8x384xf32> to vector<8x128xf32>
    %56 = vector.extract_strided_slice %33 {offsets = [0, 256], sizes = [8, 128], strides = [1, 1]} : vector<8x384xf32> to vector<8x128xf32>
    %57 = arith.addf %56, %20 : vector<8x128xf32>
    %58 = arith.mulf %46, %57 : vector<8x128xf32>
    %59 = arith.addf %55, %58 : vector<8x128xf32>
    %60 = math.tanh %59 : vector<8x128xf32>
    %cst_38 = arith.constant 1.000000e+00 : f32
    %61 = vector.broadcast %cst_38 : f32 to vector<8x128xf32>
    %62 = arith.subf %61, %54 : vector<8x128xf32>
    %63 = arith.mulf %62, %60 : vector<8x128xf32>
    %64 = arith.mulf %54, %26 : vector<8x128xf32>
    %65 = arith.addf %63, %64 : vector<8x128xf32>
    %66 = arith.truncf %65 : vector<8x128xf32> to vector<8x128xbf16>
    %c0_39 = arith.constant 0 : index
    %c0_40 = arith.constant 0 : index
    %c0_41 = arith.constant 0 : index
    %67 = vector.load %arg4[%c0_39, %c0_40, %c0_41] : memref<1x128x384xbf16, #tpu.memory_space<vmem>>, vector<1x128x384xbf16>
    %68 = vector.shape_cast %67 : vector<1x128x384xbf16> to vector<128x384xbf16>
    %cst_42 = arith.constant dense<0.000000e+00> : vector<8x384xf32>
    %69 = tpu.matmul %66, %68, %cst_42 {dimension_numbers = #tpu.dot_dimension_numbers<[1], [0], [0], [1], [0, 0, 1, 1], [], []>} : vector<8x128xbf16>, vector<128x384xbf16>, vector<8x384xf32> -> vector<8x384xf32>
    %70 = arith.addf %69, %16 : vector<8x384xf32>
    %71 = vector.extract_strided_slice %70 {offsets = [0, 0], sizes = [8, 128], strides = [1, 1]} : vector<8x384xf32> to vector<8x128xf32>
    %72 = vector.extract_strided_slice %36 {offsets = [0, 0], sizes = [8, 128], strides = [1, 1]} : vector<8x384xf32> to vector<8x128xf32>
    %73 = arith.addf %71, %72 : vector<8x128xf32>
    %74 = arith.negf %73 : vector<8x128xf32>
    %75 = math.exp %74 : vector<8x128xf32>
    %cst_43 = arith.constant 1.000000e+00 : f32
    %76 = vector.broadcast %cst_43 : f32 to vector<8x128xf32>
    %77 = arith.addf %76, %75 : vector<8x128xf32>
    %78 = arith.divf %76, %77 : vector<8x128xf32>
    %79 = vector.extract_strided_slice %70 {offsets = [0, 128], sizes = [8, 128], strides = [1, 1]} : vector<8x384xf32> to vector<8x128xf32>
    %80 = vector.extract_strided_slice %36 {offsets = [0, 128], sizes = [8, 128], strides = [1, 1]} : vector<8x384xf32> to vector<8x128xf32>
    %81 = arith.addf %79, %80 : vector<8x128xf32>
    %82 = arith.negf %81 : vector<8x128xf32>
    %83 = math.exp %82 : vector<8x128xf32>
    %cst_44 = arith.constant 1.000000e+00 : f32
    %84 = vector.broadcast %cst_44 : f32 to vector<8x128xf32>
    %85 = arith.addf %84, %83 : vector<8x128xf32>
    %86 = arith.divf %84, %85 : vector<8x128xf32>
    %87 = vector.extract_strided_slice %70 {offsets = [0, 256], sizes = [8, 128], strides = [1, 1]} : vector<8x384xf32> to vector<8x128xf32>
    %88 = vector.extract_strided_slice %36 {offsets = [0, 256], sizes = [8, 128], strides = [1, 1]} : vector<8x384xf32> to vector<8x128xf32>
    %89 = arith.addf %88, %24 : vector<8x128xf32>
    %90 = arith.mulf %78, %89 : vector<8x128xf32>
    %91 = arith.addf %87, %90 : vector<8x128xf32>
    %92 = math.tanh %91 : vector<8x128xf32>
    %cst_45 = arith.constant 1.000000e+00 : f32
    %93 = vector.broadcast %cst_45 : f32 to vector<8x128xf32>
    %94 = arith.subf %93, %86 : vector<8x128xf32>
    %95 = arith.mulf %94, %92 : vector<8x128xf32>
    %96 = arith.mulf %86, %28 : vector<8x128xf32>
    %97 = arith.addf %95, %96 : vector<8x128xf32>
    %98 = arith.truncf %97 : vector<8x128xf32> to vector<8x128xbf16>
    %c0_46 = arith.constant 0 : index
    %c0_47 = arith.constant 0 : index
    %c0_48 = arith.constant 0 : index
    %99 = vector.load %arg5[%c0_46, %c0_47, %c0_48] : memref<2x128x384xbf16, #tpu.memory_space<vmem>>, vector<1x128x384xbf16>
    %100 = vector.shape_cast %99 : vector<1x128x384xbf16> to vector<128x384xbf16>
    %cst_49 = arith.constant dense<0.000000e+00> : vector<8x384xf32>
    %101 = tpu.matmul %66, %100, %cst_49 {dimension_numbers = #tpu.dot_dimension_numbers<[1], [0], [0], [1], [0, 0, 1, 1], [], []>} : vector<8x128xbf16>, vector<128x384xbf16>, vector<8x384xf32> -> vector<8x384xf32>
    %c1_50 = arith.constant 1 : index
    %c0_51 = arith.constant 0 : index
    %c0_52 = arith.constant 0 : index
    %102 = vector.load %arg5[%c1_50, %c0_51, %c0_52] : memref<2x128x384xbf16, #tpu.memory_space<vmem>>, vector<1x128x384xbf16>
    %103 = vector.shape_cast %102 : vector<1x128x384xbf16> to vector<128x384xbf16>
    %cst_53 = arith.constant dense<0.000000e+00> : vector<8x384xf32>
    %104 = tpu.matmul %98, %103, %cst_53 {dimension_numbers = #tpu.dot_dimension_numbers<[1], [0], [0], [1], [0, 0, 1, 1], [], []>} : vector<8x128xbf16>, vector<128x384xbf16>, vector<8x384xf32> -> vector<8x384xf32>
    %c0_54 = arith.constant 0 : index
    %c1_55 = arith.constant 1 : index
    %c0_56 = arith.constant 0 : index
    %105 = vector.load %arg10[%c0_54, %c1_55, %c0_56] : memref<8x8x384xf32, #tpu.memory_space<vmem>>, vector<8x1x384xf32>
    %106 = vector.shape_cast %105 : vector<8x1x384xf32> to vector<8x384xf32>
    %107 = vector.extract_strided_slice %106 {offsets = [0, 0], sizes = [8, 128], strides = [1, 1]} : vector<8x384xf32> to vector<8x128xf32>
    %108 = vector.extract_strided_slice %101 {offsets = [0, 0], sizes = [8, 128], strides = [1, 1]} : vector<8x384xf32> to vector<8x128xf32>
    %109 = arith.addf %107, %108 : vector<8x128xf32>
    %110 = arith.negf %109 : vector<8x128xf32>
    %111 = math.exp %110 : vector<8x128xf32>
    %cst_57 = arith.constant 1.000000e+00 : f32
    %112 = vector.broadcast %cst_57 : f32 to vector<8x128xf32>
    %113 = arith.addf %112, %111 : vector<8x128xf32>
    %114 = arith.divf %112, %113 : vector<8x128xf32>
    %115 = vector.extract_strided_slice %106 {offsets = [0, 128], sizes = [8, 128], strides = [1, 1]} : vector<8x384xf32> to vector<8x128xf32>
    %116 = vector.extract_strided_slice %101 {offsets = [0, 128], sizes = [8, 128], strides = [1, 1]} : vector<8x384xf32> to vector<8x128xf32>
    %117 = arith.addf %115, %116 : vector<8x128xf32>
    %118 = arith.negf %117 : vector<8x128xf32>
    %119 = math.exp %118 : vector<8x128xf32>
    %cst_58 = arith.constant 1.000000e+00 : f32
    %120 = vector.broadcast %cst_58 : f32 to vector<8x128xf32>
    %121 = arith.addf %120, %119 : vector<8x128xf32>
    %122 = arith.divf %120, %121 : vector<8x128xf32>
    %123 = vector.extract_strided_slice %106 {offsets = [0, 256], sizes = [8, 128], strides = [1, 1]} : vector<8x384xf32> to vector<8x128xf32>
    %124 = vector.extract_strided_slice %101 {offsets = [0, 256], sizes = [8, 128], strides = [1, 1]} : vector<8x384xf32> to vector<8x128xf32>
    %125 = arith.addf %124, %20 : vector<8x128xf32>
    %126 = arith.mulf %114, %125 : vector<8x128xf32>
    %127 = arith.addf %123, %126 : vector<8x128xf32>
    %128 = math.tanh %127 : vector<8x128xf32>
    %cst_59 = arith.constant 1.000000e+00 : f32
    %129 = vector.broadcast %cst_59 : f32 to vector<8x128xf32>
    %130 = arith.subf %129, %122 : vector<8x128xf32>
    %131 = arith.mulf %130, %128 : vector<8x128xf32>
    %132 = arith.mulf %122, %65 : vector<8x128xf32>
    %133 = arith.addf %131, %132 : vector<8x128xf32>
    %134 = arith.truncf %133 : vector<8x128xf32> to vector<8x128xbf16>
    %c0_60 = arith.constant 0 : index
    %c0_61 = arith.constant 0 : index
    %c0_62 = arith.constant 0 : index
    %135 = vector.load %arg4[%c0_60, %c0_61, %c0_62] : memref<1x128x384xbf16, #tpu.memory_space<vmem>>, vector<1x128x384xbf16>
    %136 = vector.shape_cast %135 : vector<1x128x384xbf16> to vector<128x384xbf16>
    %cst_63 = arith.constant dense<0.000000e+00> : vector<8x384xf32>
    %137 = tpu.matmul %134, %136, %cst_63 {dimension_numbers = #tpu.dot_dimension_numbers<[1], [0], [0], [1], [0, 0, 1, 1], [], []>} : vector<8x128xbf16>, vector<128x384xbf16>, vector<8x384xf32> -> vector<8x384xf32>
    %138 = arith.addf %137, %16 : vector<8x384xf32>
    %139 = vector.extract_strided_slice %138 {offsets = [0, 0], sizes = [8, 128], strides = [1, 1]} : vector<8x384xf32> to vector<8x128xf32>
    %140 = vector.extract_strided_slice %104 {offsets = [0, 0], sizes = [8, 128], strides = [1, 1]} : vector<8x384xf32> to vector<8x128xf32>
    %141 = arith.addf %139, %140 : vector<8x128xf32>
    %142 = arith.negf %141 : vector<8x128xf32>
    %143 = math.exp %142 : vector<8x128xf32>
    %cst_64 = arith.constant 1.000000e+00 : f32
    %144 = vector.broadcast %cst_64 : f32 to vector<8x128xf32>
    %145 = arith.addf %144, %143 : vector<8x128xf32>
    %146 = arith.divf %144, %145 : vector<8x128xf32>
    %147 = vector.extract_strided_slice %138 {offsets = [0, 128], sizes = [8, 128], strides = [1, 1]} : vector<8x384xf32> to vector<8x128xf32>
    %148 = vector.extract_strided_slice %104 {offsets = [0, 128], sizes = [8, 128], strides = [1, 1]} : vector<8x384xf32> to vector<8x128xf32>
    %149 = arith.addf %147, %148 : vector<8x128xf32>
    %150 = arith.negf %149 : vector<8x128xf32>
    %151 = math.exp %150 : vector<8x128xf32>
    %cst_65 = arith.constant 1.000000e+00 : f32
    %152 = vector.broadcast %cst_65 : f32 to vector<8x128xf32>
    %153 = arith.addf %152, %151 : vector<8x128xf32>
    %154 = arith.divf %152, %153 : vector<8x128xf32>
    %155 = vector.extract_strided_slice %138 {offsets = [0, 256], sizes = [8, 128], strides = [1, 1]} : vector<8x384xf32> to vector<8x128xf32>
    %156 = vector.extract_strided_slice %104 {offsets = [0, 256], sizes = [8, 128], strides = [1, 1]} : vector<8x384xf32> to vector<8x128xf32>
    %157 = arith.addf %156, %24 : vector<8x128xf32>
    %158 = arith.mulf %146, %157 : vector<8x128xf32>
    %159 = arith.addf %155, %158 : vector<8x128xf32>
    %160 = math.tanh %159 : vector<8x128xf32>
    %cst_66 = arith.constant 1.000000e+00 : f32
    %161 = vector.broadcast %cst_66 : f32 to vector<8x128xf32>
    %162 = arith.subf %161, %154 : vector<8x128xf32>
    %163 = arith.mulf %162, %160 : vector<8x128xf32>
    %164 = arith.mulf %154, %97 : vector<8x128xf32>
    %165 = arith.addf %163, %164 : vector<8x128xf32>
    %166 = arith.truncf %165 : vector<8x128xf32> to vector<8x128xbf16>
    %c0_67 = arith.constant 0 : index
    %c0_68 = arith.constant 0 : index
    %c0_69 = arith.constant 0 : index
    %167 = vector.load %arg5[%c0_67, %c0_68, %c0_69] : memref<2x128x384xbf16, #tpu.memory_space<vmem>>, vector<1x128x384xbf16>
    %168 = vector.shape_cast %167 : vector<1x128x384xbf16> to vector<128x384xbf16>
    %cst_70 = arith.constant dense<0.000000e+00> : vector<8x384xf32>
    %169 = tpu.matmul %134, %168, %cst_70 {dimension_numbers = #tpu.dot_dimension_numbers<[1], [0], [0], [1], [0, 0, 1, 1], [], []>} : vector<8x128xbf16>, vector<128x384xbf16>, vector<8x384xf32> -> vector<8x384xf32>
    %c1_71 = arith.constant 1 : index
    %c0_72 = arith.constant 0 : index
    %c0_73 = arith.constant 0 : index
    %170 = vector.load %arg5[%c1_71, %c0_72, %c0_73] : memref<2x128x384xbf16, #tpu.memory_space<vmem>>, vector<1x128x384xbf16>
    %171 = vector.shape_cast %170 : vector<1x128x384xbf16> to vector<128x384xbf16>
    %cst_74 = arith.constant dense<0.000000e+00> : vector<8x384xf32>
    %172 = tpu.matmul %166, %171, %cst_74 {dimension_numbers = #tpu.dot_dimension_numbers<[1], [0], [0], [1], [0, 0, 1, 1], [], []>} : vector<8x128xbf16>, vector<128x384xbf16>, vector<8x384xf32> -> vector<8x384xf32>
    %c0_75 = arith.constant 0 : index
    %c2 = arith.constant 2 : index
    %c0_76 = arith.constant 0 : index
    %173 = vector.load %arg10[%c0_75, %c2, %c0_76] : memref<8x8x384xf32, #tpu.memory_space<vmem>>, vector<8x1x384xf32>
    %174 = vector.shape_cast %173 : vector<8x1x384xf32> to vector<8x384xf32>
    %175 = vector.extract_strided_slice %174 {offsets = [0, 0], sizes = [8, 128], strides = [1, 1]} : vector<8x384xf32> to vector<8x128xf32>
    %176 = vector.extract_strided_slice %169 {offsets = [0, 0], sizes = [8, 128], strides = [1, 1]} : vector<8x384xf32> to vector<8x128xf32>
    %177 = arith.addf %175, %176 : vector<8x128xf32>
    %178 = arith.negf %177 : vector<8x128xf32>
    %179 = math.exp %178 : vector<8x128xf32>
    %cst_77 = arith.constant 1.000000e+00 : f32
    %180 = vector.broadcast %cst_77 : f32 to vector<8x128xf32>
    %181 = arith.addf %180, %179 : vector<8x128xf32>
    %182 = arith.divf %180, %181 : vector<8x128xf32>
    %183 = vector.extract_strided_slice %174 {offsets = [0, 128], sizes = [8, 128], strides = [1, 1]} : vector<8x384xf32> to vector<8x128xf32>
    %184 = vector.extract_strided_slice %169 {offsets = [0, 128], sizes = [8, 128], strides = [1, 1]} : vector<8x384xf32> to vector<8x128xf32>
    %185 = arith.addf %183, %184 : vector<8x128xf32>
    %186 = arith.negf %185 : vector<8x128xf32>
    %187 = math.exp %186 : vector<8x128xf32>
    %cst_78 = arith.constant 1.000000e+00 : f32
    %188 = vector.broadcast %cst_78 : f32 to vector<8x128xf32>
    %189 = arith.addf %188, %187 : vector<8x128xf32>
    %190 = arith.divf %188, %189 : vector<8x128xf32>
    %191 = vector.extract_strided_slice %174 {offsets = [0, 256], sizes = [8, 128], strides = [1, 1]} : vector<8x384xf32> to vector<8x128xf32>
    %192 = vector.extract_strided_slice %169 {offsets = [0, 256], sizes = [8, 128], strides = [1, 1]} : vector<8x384xf32> to vector<8x128xf32>
    %193 = arith.addf %192, %20 : vector<8x128xf32>
    %194 = arith.mulf %182, %193 : vector<8x128xf32>
    %195 = arith.addf %191, %194 : vector<8x128xf32>
    %196 = math.tanh %195 : vector<8x128xf32>
    %cst_79 = arith.constant 1.000000e+00 : f32
    %197 = vector.broadcast %cst_79 : f32 to vector<8x128xf32>
    %198 = arith.subf %197, %190 : vector<8x128xf32>
    %199 = arith.mulf %198, %196 : vector<8x128xf32>
    %200 = arith.mulf %190, %133 : vector<8x128xf32>
    %201 = arith.addf %199, %200 : vector<8x128xf32>
    %202 = arith.truncf %201 : vector<8x128xf32> to vector<8x128xbf16>
    %c0_80 = arith.constant 0 : index
    %c0_81 = arith.constant 0 : index
    %c0_82 = arith.constant 0 : index
    %203 = vector.load %arg4[%c0_80, %c0_81, %c0_82] : memref<1x128x384xbf16, #tpu.memory_space<vmem>>, vector<1x128x384xbf16>
    %204 = vector.shape_cast %203 : vector<1x128x384xbf16> to vector<128x384xbf16>
    %cst_83 = arith.constant dense<0.000000e+00> : vector<8x384xf32>
    %205 = tpu.matmul %202, %204, %cst_83 {dimension_numbers = #tpu.dot_dimension_numbers<[1], [0], [0], [1], [0, 0, 1, 1], [], []>} : vector<8x128xbf16>, vector<128x384xbf16>, vector<8x384xf32> -> vector<8x384xf32>
    %206 = arith.addf %205, %16 : vector<8x384xf32>
    %207 = vector.extract_strided_slice %206 {offsets = [0, 0], sizes = [8, 128], strides = [1, 1]} : vector<8x384xf32> to vector<8x128xf32>
    %208 = vector.extract_strided_slice %172 {offsets = [0, 0], sizes = [8, 128], strides = [1, 1]} : vector<8x384xf32> to vector<8x128xf32>
    %209 = arith.addf %207, %208 : vector<8x128xf32>
    %210 = arith.negf %209 : vector<8x128xf32>
    %211 = math.exp %210 : vector<8x128xf32>
    %cst_84 = arith.constant 1.000000e+00 : f32
    %212 = vector.broadcast %cst_84 : f32 to vector<8x128xf32>
    %213 = arith.addf %212, %211 : vector<8x128xf32>
    %214 = arith.divf %212, %213 : vector<8x128xf32>
    %215 = vector.extract_strided_slice %206 {offsets = [0, 128], sizes = [8, 128], strides = [1, 1]} : vector<8x384xf32> to vector<8x128xf32>
    %216 = vector.extract_strided_slice %172 {offsets = [0, 128], sizes = [8, 128], strides = [1, 1]} : vector<8x384xf32> to vector<8x128xf32>
    %217 = arith.addf %215, %216 : vector<8x128xf32>
    %218 = arith.negf %217 : vector<8x128xf32>
    %219 = math.exp %218 : vector<8x128xf32>
    %cst_85 = arith.constant 1.000000e+00 : f32
    %220 = vector.broadcast %cst_85 : f32 to vector<8x128xf32>
    %221 = arith.addf %220, %219 : vector<8x128xf32>
    %222 = arith.divf %220, %221 : vector<8x128xf32>
    %223 = vector.extract_strided_slice %206 {offsets = [0, 256], sizes = [8, 128], strides = [1, 1]} : vector<8x384xf32> to vector<8x128xf32>
    %224 = vector.extract_strided_slice %172 {offsets = [0, 256], sizes = [8, 128], strides = [1, 1]} : vector<8x384xf32> to vector<8x128xf32>
    %225 = arith.addf %224, %24 : vector<8x128xf32>
    %226 = arith.mulf %214, %225 : vector<8x128xf32>
    %227 = arith.addf %223, %226 : vector<8x128xf32>
    %228 = math.tanh %227 : vector<8x128xf32>
    %cst_86 = arith.constant 1.000000e+00 : f32
    %229 = vector.broadcast %cst_86 : f32 to vector<8x128xf32>
    %230 = arith.subf %229, %222 : vector<8x128xf32>
    %231 = arith.mulf %230, %228 : vector<8x128xf32>
    %232 = arith.mulf %222, %165 : vector<8x128xf32>
    %233 = arith.addf %231, %232 : vector<8x128xf32>
    %234 = arith.truncf %233 : vector<8x128xf32> to vector<8x128xbf16>
    %c0_87 = arith.constant 0 : index
    %c0_88 = arith.constant 0 : index
    %c0_89 = arith.constant 0 : index
    %235 = vector.load %arg5[%c0_87, %c0_88, %c0_89] : memref<2x128x384xbf16, #tpu.memory_space<vmem>>, vector<1x128x384xbf16>
    %236 = vector.shape_cast %235 : vector<1x128x384xbf16> to vector<128x384xbf16>
    %cst_90 = arith.constant dense<0.000000e+00> : vector<8x384xf32>
    %237 = tpu.matmul %202, %236, %cst_90 {dimension_numbers = #tpu.dot_dimension_numbers<[1], [0], [0], [1], [0, 0, 1, 1], [], []>} : vector<8x128xbf16>, vector<128x384xbf16>, vector<8x384xf32> -> vector<8x384xf32>
    %c1_91 = arith.constant 1 : index
    %c0_92 = arith.constant 0 : index
    %c0_93 = arith.constant 0 : index
    %238 = vector.load %arg5[%c1_91, %c0_92, %c0_93] : memref<2x128x384xbf16, #tpu.memory_space<vmem>>, vector<1x128x384xbf16>
    %239 = vector.shape_cast %238 : vector<1x128x384xbf16> to vector<128x384xbf16>
    %cst_94 = arith.constant dense<0.000000e+00> : vector<8x384xf32>
    %240 = tpu.matmul %234, %239, %cst_94 {dimension_numbers = #tpu.dot_dimension_numbers<[1], [0], [0], [1], [0, 0, 1, 1], [], []>} : vector<8x128xbf16>, vector<128x384xbf16>, vector<8x384xf32> -> vector<8x384xf32>
    %c0_95 = arith.constant 0 : index
    %c3 = arith.constant 3 : index
    %c0_96 = arith.constant 0 : index
    %241 = vector.load %arg10[%c0_95, %c3, %c0_96] : memref<8x8x384xf32, #tpu.memory_space<vmem>>, vector<8x1x384xf32>
    %242 = vector.shape_cast %241 : vector<8x1x384xf32> to vector<8x384xf32>
    %243 = vector.extract_strided_slice %242 {offsets = [0, 0], sizes = [8, 128], strides = [1, 1]} : vector<8x384xf32> to vector<8x128xf32>
    %244 = vector.extract_strided_slice %237 {offsets = [0, 0], sizes = [8, 128], strides = [1, 1]} : vector<8x384xf32> to vector<8x128xf32>
    %245 = arith.addf %243, %244 : vector<8x128xf32>
    %246 = arith.negf %245 : vector<8x128xf32>
    %247 = math.exp %246 : vector<8x128xf32>
    %cst_97 = arith.constant 1.000000e+00 : f32
    %248 = vector.broadcast %cst_97 : f32 to vector<8x128xf32>
    %249 = arith.addf %248, %247 : vector<8x128xf32>
    %250 = arith.divf %248, %249 : vector<8x128xf32>
    %251 = vector.extract_strided_slice %242 {offsets = [0, 128], sizes = [8, 128], strides = [1, 1]} : vector<8x384xf32> to vector<8x128xf32>
    %252 = vector.extract_strided_slice %237 {offsets = [0, 128], sizes = [8, 128], strides = [1, 1]} : vector<8x384xf32> to vector<8x128xf32>
    %253 = arith.addf %251, %252 : vector<8x128xf32>
    %254 = arith.negf %253 : vector<8x128xf32>
    %255 = math.exp %254 : vector<8x128xf32>
    %cst_98 = arith.constant 1.000000e+00 : f32
    %256 = vector.broadcast %cst_98 : f32 to vector<8x128xf32>
    %257 = arith.addf %256, %255 : vector<8x128xf32>
    %258 = arith.divf %256, %257 : vector<8x128xf32>
    %259 = vector.extract_strided_slice %242 {offsets = [0, 256], sizes = [8, 128], strides = [1, 1]} : vector<8x384xf32> to vector<8x128xf32>
    %260 = vector.extract_strided_slice %237 {offsets = [0, 256], sizes = [8, 128], strides = [1, 1]} : vector<8x384xf32> to vector<8x128xf32>
    %261 = arith.addf %260, %20 : vector<8x128xf32>
    %262 = arith.mulf %250, %261 : vector<8x128xf32>
    %263 = arith.addf %259, %262 : vector<8x128xf32>
    %264 = math.tanh %263 : vector<8x128xf32>
    %cst_99 = arith.constant 1.000000e+00 : f32
    %265 = vector.broadcast %cst_99 : f32 to vector<8x128xf32>
    %266 = arith.subf %265, %258 : vector<8x128xf32>
    %267 = arith.mulf %266, %264 : vector<8x128xf32>
    %268 = arith.mulf %258, %201 : vector<8x128xf32>
    %269 = arith.addf %267, %268 : vector<8x128xf32>
    %270 = arith.truncf %269 : vector<8x128xf32> to vector<8x128xbf16>
    %c0_100 = arith.constant 0 : index
    %c0_101 = arith.constant 0 : index
    %c0_102 = arith.constant 0 : index
    %271 = vector.load %arg4[%c0_100, %c0_101, %c0_102] : memref<1x128x384xbf16, #tpu.memory_space<vmem>>, vector<1x128x384xbf16>
    %272 = vector.shape_cast %271 : vector<1x128x384xbf16> to vector<128x384xbf16>
    %cst_103 = arith.constant dense<0.000000e+00> : vector<8x384xf32>
    %273 = tpu.matmul %270, %272, %cst_103 {dimension_numbers = #tpu.dot_dimension_numbers<[1], [0], [0], [1], [0, 0, 1, 1], [], []>} : vector<8x128xbf16>, vector<128x384xbf16>, vector<8x384xf32> -> vector<8x384xf32>
    %274 = arith.addf %273, %16 : vector<8x384xf32>
    %275 = vector.extract_strided_slice %274 {offsets = [0, 0], sizes = [8, 128], strides = [1, 1]} : vector<8x384xf32> to vector<8x128xf32>
    %276 = vector.extract_strided_slice %240 {offsets = [0, 0], sizes = [8, 128], strides = [1, 1]} : vector<8x384xf32> to vector<8x128xf32>
    %277 = arith.addf %275, %276 : vector<8x128xf32>
    %278 = arith.negf %277 : vector<8x128xf32>
    %279 = math.exp %278 : vector<8x128xf32>
    %cst_104 = arith.constant 1.000000e+00 : f32
    %280 = vector.broadcast %cst_104 : f32 to vector<8x128xf32>
    %281 = arith.addf %280, %279 : vector<8x128xf32>
    %282 = arith.divf %280, %281 : vector<8x128xf32>
    %283 = vector.extract_strided_slice %274 {offsets = [0, 128], sizes = [8, 128], strides = [1, 1]} : vector<8x384xf32> to vector<8x128xf32>
    %284 = vector.extract_strided_slice %240 {offsets = [0, 128], sizes = [8, 128], strides = [1, 1]} : vector<8x384xf32> to vector<8x128xf32>
    %285 = arith.addf %283, %284 : vector<8x128xf32>
    %286 = arith.negf %285 : vector<8x128xf32>
    %287 = math.exp %286 : vector<8x128xf32>
    %cst_105 = arith.constant 1.000000e+00 : f32
    %288 = vector.broadcast %cst_105 : f32 to vector<8x128xf32>
    %289 = arith.addf %288, %287 : vector<8x128xf32>
    %290 = arith.divf %288, %289 : vector<8x128xf32>
    %291 = vector.extract_strided_slice %274 {offsets = [0, 256], sizes = [8, 128], strides = [1, 1]} : vector<8x384xf32> to vector<8x128xf32>
    %292 = vector.extract_strided_slice %240 {offsets = [0, 256], sizes = [8, 128], strides = [1, 1]} : vector<8x384xf32> to vector<8x128xf32>
    %293 = arith.addf %292, %24 : vector<8x128xf32>
    %294 = arith.mulf %282, %293 : vector<8x128xf32>
    %295 = arith.addf %291, %294 : vector<8x128xf32>
    %296 = math.tanh %295 : vector<8x128xf32>
    %cst_106 = arith.constant 1.000000e+00 : f32
    %297 = vector.broadcast %cst_106 : f32 to vector<8x128xf32>
    %298 = arith.subf %297, %290 : vector<8x128xf32>
    %299 = arith.mulf %298, %296 : vector<8x128xf32>
    %300 = arith.mulf %290, %233 : vector<8x128xf32>
    %301 = arith.addf %299, %300 : vector<8x128xf32>
    %302 = arith.truncf %301 : vector<8x128xf32> to vector<8x128xbf16>
    %c0_107 = arith.constant 0 : index
    %c0_108 = arith.constant 0 : index
    %c0_109 = arith.constant 0 : index
    %303 = vector.load %arg5[%c0_107, %c0_108, %c0_109] : memref<2x128x384xbf16, #tpu.memory_space<vmem>>, vector<1x128x384xbf16>
    %304 = vector.shape_cast %303 : vector<1x128x384xbf16> to vector<128x384xbf16>
    %cst_110 = arith.constant dense<0.000000e+00> : vector<8x384xf32>
    %305 = tpu.matmul %270, %304, %cst_110 {dimension_numbers = #tpu.dot_dimension_numbers<[1], [0], [0], [1], [0, 0, 1, 1], [], []>} : vector<8x128xbf16>, vector<128x384xbf16>, vector<8x384xf32> -> vector<8x384xf32>
    %c1_111 = arith.constant 1 : index
    %c0_112 = arith.constant 0 : index
    %c0_113 = arith.constant 0 : index
    %306 = vector.load %arg5[%c1_111, %c0_112, %c0_113] : memref<2x128x384xbf16, #tpu.memory_space<vmem>>, vector<1x128x384xbf16>
    %307 = vector.shape_cast %306 : vector<1x128x384xbf16> to vector<128x384xbf16>
    %cst_114 = arith.constant dense<0.000000e+00> : vector<8x384xf32>
    %308 = tpu.matmul %302, %307, %cst_114 {dimension_numbers = #tpu.dot_dimension_numbers<[1], [0], [0], [1], [0, 0, 1, 1], [], []>} : vector<8x128xbf16>, vector<128x384xbf16>, vector<8x384xf32> -> vector<8x384xf32>
    %c0_115 = arith.constant 0 : index
    %c4 = arith.constant 4 : index
    %c0_116 = arith.constant 0 : index
    %309 = vector.load %arg10[%c0_115, %c4, %c0_116] : memref<8x8x384xf32, #tpu.memory_space<vmem>>, vector<8x1x384xf32>
    %310 = vector.shape_cast %309 : vector<8x1x384xf32> to vector<8x384xf32>
    %311 = vector.extract_strided_slice %310 {offsets = [0, 0], sizes = [8, 128], strides = [1, 1]} : vector<8x384xf32> to vector<8x128xf32>
    %312 = vector.extract_strided_slice %305 {offsets = [0, 0], sizes = [8, 128], strides = [1, 1]} : vector<8x384xf32> to vector<8x128xf32>
    %313 = arith.addf %311, %312 : vector<8x128xf32>
    %314 = arith.negf %313 : vector<8x128xf32>
    %315 = math.exp %314 : vector<8x128xf32>
    %cst_117 = arith.constant 1.000000e+00 : f32
    %316 = vector.broadcast %cst_117 : f32 to vector<8x128xf32>
    %317 = arith.addf %316, %315 : vector<8x128xf32>
    %318 = arith.divf %316, %317 : vector<8x128xf32>
    %319 = vector.extract_strided_slice %310 {offsets = [0, 128], sizes = [8, 128], strides = [1, 1]} : vector<8x384xf32> to vector<8x128xf32>
    %320 = vector.extract_strided_slice %305 {offsets = [0, 128], sizes = [8, 128], strides = [1, 1]} : vector<8x384xf32> to vector<8x128xf32>
    %321 = arith.addf %319, %320 : vector<8x128xf32>
    %322 = arith.negf %321 : vector<8x128xf32>
    %323 = math.exp %322 : vector<8x128xf32>
    %cst_118 = arith.constant 1.000000e+00 : f32
    %324 = vector.broadcast %cst_118 : f32 to vector<8x128xf32>
    %325 = arith.addf %324, %323 : vector<8x128xf32>
    %326 = arith.divf %324, %325 : vector<8x128xf32>
    %327 = vector.extract_strided_slice %310 {offsets = [0, 256], sizes = [8, 128], strides = [1, 1]} : vector<8x384xf32> to vector<8x128xf32>
    %328 = vector.extract_strided_slice %305 {offsets = [0, 256], sizes = [8, 128], strides = [1, 1]} : vector<8x384xf32> to vector<8x128xf32>
    %329 = arith.addf %328, %20 : vector<8x128xf32>
    %330 = arith.mulf %318, %329 : vector<8x128xf32>
    %331 = arith.addf %327, %330 : vector<8x128xf32>
    %332 = math.tanh %331 : vector<8x128xf32>
    %cst_119 = arith.constant 1.000000e+00 : f32
    %333 = vector.broadcast %cst_119 : f32 to vector<8x128xf32>
    %334 = arith.subf %333, %326 : vector<8x128xf32>
    %335 = arith.mulf %334, %332 : vector<8x128xf32>
    %336 = arith.mulf %326, %269 : vector<8x128xf32>
    %337 = arith.addf %335, %336 : vector<8x128xf32>
    %338 = arith.truncf %337 : vector<8x128xf32> to vector<8x128xbf16>
    %c0_120 = arith.constant 0 : index
    %c0_121 = arith.constant 0 : index
    %c0_122 = arith.constant 0 : index
    %339 = vector.load %arg4[%c0_120, %c0_121, %c0_122] : memref<1x128x384xbf16, #tpu.memory_space<vmem>>, vector<1x128x384xbf16>
    %340 = vector.shape_cast %339 : vector<1x128x384xbf16> to vector<128x384xbf16>
    %cst_123 = arith.constant dense<0.000000e+00> : vector<8x384xf32>
    %341 = tpu.matmul %338, %340, %cst_123 {dimension_numbers = #tpu.dot_dimension_numbers<[1], [0], [0], [1], [0, 0, 1, 1], [], []>} : vector<8x128xbf16>, vector<128x384xbf16>, vector<8x384xf32> -> vector<8x384xf32>
    %342 = arith.addf %341, %16 : vector<8x384xf32>
    %343 = vector.extract_strided_slice %342 {offsets = [0, 0], sizes = [8, 128], strides = [1, 1]} : vector<8x384xf32> to vector<8x128xf32>
    %344 = vector.extract_strided_slice %308 {offsets = [0, 0], sizes = [8, 128], strides = [1, 1]} : vector<8x384xf32> to vector<8x128xf32>
    %345 = arith.addf %343, %344 : vector<8x128xf32>
    %346 = arith.negf %345 : vector<8x128xf32>
    %347 = math.exp %346 : vector<8x128xf32>
    %cst_124 = arith.constant 1.000000e+00 : f32
    %348 = vector.broadcast %cst_124 : f32 to vector<8x128xf32>
    %349 = arith.addf %348, %347 : vector<8x128xf32>
    %350 = arith.divf %348, %349 : vector<8x128xf32>
    %351 = vector.extract_strided_slice %342 {offsets = [0, 128], sizes = [8, 128], strides = [1, 1]} : vector<8x384xf32> to vector<8x128xf32>
    %352 = vector.extract_strided_slice %308 {offsets = [0, 128], sizes = [8, 128], strides = [1, 1]} : vector<8x384xf32> to vector<8x128xf32>
    %353 = arith.addf %351, %352 : vector<8x128xf32>
    %354 = arith.negf %353 : vector<8x128xf32>
    %355 = math.exp %354 : vector<8x128xf32>
    %cst_125 = arith.constant 1.000000e+00 : f32
    %356 = vector.broadcast %cst_125 : f32 to vector<8x128xf32>
    %357 = arith.addf %356, %355 : vector<8x128xf32>
    %358 = arith.divf %356, %357 : vector<8x128xf32>
    %359 = vector.extract_strided_slice %342 {offsets = [0, 256], sizes = [8, 128], strides = [1, 1]} : vector<8x384xf32> to vector<8x128xf32>
    %360 = vector.extract_strided_slice %308 {offsets = [0, 256], sizes = [8, 128], strides = [1, 1]} : vector<8x384xf32> to vector<8x128xf32>
    %361 = arith.addf %360, %24 : vector<8x128xf32>
    %362 = arith.mulf %350, %361 : vector<8x128xf32>
    %363 = arith.addf %359, %362 : vector<8x128xf32>
    %364 = math.tanh %363 : vector<8x128xf32>
    %cst_126 = arith.constant 1.000000e+00 : f32
    %365 = vector.broadcast %cst_126 : f32 to vector<8x128xf32>
    %366 = arith.subf %365, %358 : vector<8x128xf32>
    %367 = arith.mulf %366, %364 : vector<8x128xf32>
    %368 = arith.mulf %358, %301 : vector<8x128xf32>
    %369 = arith.addf %367, %368 : vector<8x128xf32>
    %370 = arith.truncf %369 : vector<8x128xf32> to vector<8x128xbf16>
    %c0_127 = arith.constant 0 : index
    %c0_128 = arith.constant 0 : index
    %c0_129 = arith.constant 0 : index
    %371 = vector.load %arg5[%c0_127, %c0_128, %c0_129] : memref<2x128x384xbf16, #tpu.memory_space<vmem>>, vector<1x128x384xbf16>
    %372 = vector.shape_cast %371 : vector<1x128x384xbf16> to vector<128x384xbf16>
    %cst_130 = arith.constant dense<0.000000e+00> : vector<8x384xf32>
    %373 = tpu.matmul %338, %372, %cst_130 {dimension_numbers = #tpu.dot_dimension_numbers<[1], [0], [0], [1], [0, 0, 1, 1], [], []>} : vector<8x128xbf16>, vector<128x384xbf16>, vector<8x384xf32> -> vector<8x384xf32>
    %c1_131 = arith.constant 1 : index
    %c0_132 = arith.constant 0 : index
    %c0_133 = arith.constant 0 : index
    %374 = vector.load %arg5[%c1_131, %c0_132, %c0_133] : memref<2x128x384xbf16, #tpu.memory_space<vmem>>, vector<1x128x384xbf16>
    %375 = vector.shape_cast %374 : vector<1x128x384xbf16> to vector<128x384xbf16>
    %cst_134 = arith.constant dense<0.000000e+00> : vector<8x384xf32>
    %376 = tpu.matmul %370, %375, %cst_134 {dimension_numbers = #tpu.dot_dimension_numbers<[1], [0], [0], [1], [0, 0, 1, 1], [], []>} : vector<8x128xbf16>, vector<128x384xbf16>, vector<8x384xf32> -> vector<8x384xf32>
    %c0_135 = arith.constant 0 : index
    %c5 = arith.constant 5 : index
    %c0_136 = arith.constant 0 : index
    %377 = vector.load %arg10[%c0_135, %c5, %c0_136] : memref<8x8x384xf32, #tpu.memory_space<vmem>>, vector<8x1x384xf32>
    %378 = vector.shape_cast %377 : vector<8x1x384xf32> to vector<8x384xf32>
    %379 = vector.extract_strided_slice %378 {offsets = [0, 0], sizes = [8, 128], strides = [1, 1]} : vector<8x384xf32> to vector<8x128xf32>
    %380 = vector.extract_strided_slice %373 {offsets = [0, 0], sizes = [8, 128], strides = [1, 1]} : vector<8x384xf32> to vector<8x128xf32>
    %381 = arith.addf %379, %380 : vector<8x128xf32>
    %382 = arith.negf %381 : vector<8x128xf32>
    %383 = math.exp %382 : vector<8x128xf32>
    %cst_137 = arith.constant 1.000000e+00 : f32
    %384 = vector.broadcast %cst_137 : f32 to vector<8x128xf32>
    %385 = arith.addf %384, %383 : vector<8x128xf32>
    %386 = arith.divf %384, %385 : vector<8x128xf32>
    %387 = vector.extract_strided_slice %378 {offsets = [0, 128], sizes = [8, 128], strides = [1, 1]} : vector<8x384xf32> to vector<8x128xf32>
    %388 = vector.extract_strided_slice %373 {offsets = [0, 128], sizes = [8, 128], strides = [1, 1]} : vector<8x384xf32> to vector<8x128xf32>
    %389 = arith.addf %387, %388 : vector<8x128xf32>
    %390 = arith.negf %389 : vector<8x128xf32>
    %391 = math.exp %390 : vector<8x128xf32>
    %cst_138 = arith.constant 1.000000e+00 : f32
    %392 = vector.broadcast %cst_138 : f32 to vector<8x128xf32>
    %393 = arith.addf %392, %391 : vector<8x128xf32>
    %394 = arith.divf %392, %393 : vector<8x128xf32>
    %395 = vector.extract_strided_slice %378 {offsets = [0, 256], sizes = [8, 128], strides = [1, 1]} : vector<8x384xf32> to vector<8x128xf32>
    %396 = vector.extract_strided_slice %373 {offsets = [0, 256], sizes = [8, 128], strides = [1, 1]} : vector<8x384xf32> to vector<8x128xf32>
    %397 = arith.addf %396, %20 : vector<8x128xf32>
    %398 = arith.mulf %386, %397 : vector<8x128xf32>
    %399 = arith.addf %395, %398 : vector<8x128xf32>
    %400 = math.tanh %399 : vector<8x128xf32>
    %cst_139 = arith.constant 1.000000e+00 : f32
    %401 = vector.broadcast %cst_139 : f32 to vector<8x128xf32>
    %402 = arith.subf %401, %394 : vector<8x128xf32>
    %403 = arith.mulf %402, %400 : vector<8x128xf32>
    %404 = arith.mulf %394, %337 : vector<8x128xf32>
    %405 = arith.addf %403, %404 : vector<8x128xf32>
    %406 = arith.truncf %405 : vector<8x128xf32> to vector<8x128xbf16>
    %c0_140 = arith.constant 0 : index
    %c0_141 = arith.constant 0 : index
    %c0_142 = arith.constant 0 : index
    %407 = vector.load %arg4[%c0_140, %c0_141, %c0_142] : memref<1x128x384xbf16, #tpu.memory_space<vmem>>, vector<1x128x384xbf16>
    %408 = vector.shape_cast %407 : vector<1x128x384xbf16> to vector<128x384xbf16>
    %cst_143 = arith.constant dense<0.000000e+00> : vector<8x384xf32>
    %409 = tpu.matmul %406, %408, %cst_143 {dimension_numbers = #tpu.dot_dimension_numbers<[1], [0], [0], [1], [0, 0, 1, 1], [], []>} : vector<8x128xbf16>, vector<128x384xbf16>, vector<8x384xf32> -> vector<8x384xf32>
    %410 = arith.addf %409, %16 : vector<8x384xf32>
    %411 = vector.extract_strided_slice %410 {offsets = [0, 0], sizes = [8, 128], strides = [1, 1]} : vector<8x384xf32> to vector<8x128xf32>
    %412 = vector.extract_strided_slice %376 {offsets = [0, 0], sizes = [8, 128], strides = [1, 1]} : vector<8x384xf32> to vector<8x128xf32>
    %413 = arith.addf %411, %412 : vector<8x128xf32>
    %414 = arith.negf %413 : vector<8x128xf32>
    %415 = math.exp %414 : vector<8x128xf32>
    %cst_144 = arith.constant 1.000000e+00 : f32
    %416 = vector.broadcast %cst_144 : f32 to vector<8x128xf32>
    %417 = arith.addf %416, %415 : vector<8x128xf32>
    %418 = arith.divf %416, %417 : vector<8x128xf32>
    %419 = vector.extract_strided_slice %410 {offsets = [0, 128], sizes = [8, 128], strides = [1, 1]} : vector<8x384xf32> to vector<8x128xf32>
    %420 = vector.extract_strided_slice %376 {offsets = [0, 128], sizes = [8, 128], strides = [1, 1]} : vector<8x384xf32> to vector<8x128xf32>
    %421 = arith.addf %419, %420 : vector<8x128xf32>
    %422 = arith.negf %421 : vector<8x128xf32>
    %423 = math.exp %422 : vector<8x128xf32>
    %cst_145 = arith.constant 1.000000e+00 : f32
    %424 = vector.broadcast %cst_145 : f32 to vector<8x128xf32>
    %425 = arith.addf %424, %423 : vector<8x128xf32>
    %426 = arith.divf %424, %425 : vector<8x128xf32>
    %427 = vector.extract_strided_slice %410 {offsets = [0, 256], sizes = [8, 128], strides = [1, 1]} : vector<8x384xf32> to vector<8x128xf32>
    %428 = vector.extract_strided_slice %376 {offsets = [0, 256], sizes = [8, 128], strides = [1, 1]} : vector<8x384xf32> to vector<8x128xf32>
    %429 = arith.addf %428, %24 : vector<8x128xf32>
    %430 = arith.mulf %418, %429 : vector<8x128xf32>
    %431 = arith.addf %427, %430 : vector<8x128xf32>
    %432 = math.tanh %431 : vector<8x128xf32>
    %cst_146 = arith.constant 1.000000e+00 : f32
    %433 = vector.broadcast %cst_146 : f32 to vector<8x128xf32>
    %434 = arith.subf %433, %426 : vector<8x128xf32>
    %435 = arith.mulf %434, %432 : vector<8x128xf32>
    %436 = arith.mulf %426, %369 : vector<8x128xf32>
    %437 = arith.addf %435, %436 : vector<8x128xf32>
    %438 = arith.truncf %437 : vector<8x128xf32> to vector<8x128xbf16>
    %c0_147 = arith.constant 0 : index
    %c0_148 = arith.constant 0 : index
    %c0_149 = arith.constant 0 : index
    %439 = vector.load %arg5[%c0_147, %c0_148, %c0_149] : memref<2x128x384xbf16, #tpu.memory_space<vmem>>, vector<1x128x384xbf16>
    %440 = vector.shape_cast %439 : vector<1x128x384xbf16> to vector<128x384xbf16>
    %cst_150 = arith.constant dense<0.000000e+00> : vector<8x384xf32>
    %441 = tpu.matmul %406, %440, %cst_150 {dimension_numbers = #tpu.dot_dimension_numbers<[1], [0], [0], [1], [0, 0, 1, 1], [], []>} : vector<8x128xbf16>, vector<128x384xbf16>, vector<8x384xf32> -> vector<8x384xf32>
    %c1_151 = arith.constant 1 : index
    %c0_152 = arith.constant 0 : index
    %c0_153 = arith.constant 0 : index
    %442 = vector.load %arg5[%c1_151, %c0_152, %c0_153] : memref<2x128x384xbf16, #tpu.memory_space<vmem>>, vector<1x128x384xbf16>
    %443 = vector.shape_cast %442 : vector<1x128x384xbf16> to vector<128x384xbf16>
    %cst_154 = arith.constant dense<0.000000e+00> : vector<8x384xf32>
    %444 = tpu.matmul %438, %443, %cst_154 {dimension_numbers = #tpu.dot_dimension_numbers<[1], [0], [0], [1], [0, 0, 1, 1], [], []>} : vector<8x128xbf16>, vector<128x384xbf16>, vector<8x384xf32> -> vector<8x384xf32>
    %c0_155 = arith.constant 0 : index
    %c6 = arith.constant 6 : index
    %c0_156 = arith.constant 0 : index
    %445 = vector.load %arg10[%c0_155, %c6, %c0_156] : memref<8x8x384xf32, #tpu.memory_space<vmem>>, vector<8x1x384xf32>
    %446 = vector.shape_cast %445 : vector<8x1x384xf32> to vector<8x384xf32>
    %447 = vector.extract_strided_slice %446 {offsets = [0, 0], sizes = [8, 128], strides = [1, 1]} : vector<8x384xf32> to vector<8x128xf32>
    %448 = vector.extract_strided_slice %441 {offsets = [0, 0], sizes = [8, 128], strides = [1, 1]} : vector<8x384xf32> to vector<8x128xf32>
    %449 = arith.addf %447, %448 : vector<8x128xf32>
    %450 = arith.negf %449 : vector<8x128xf32>
    %451 = math.exp %450 : vector<8x128xf32>
    %cst_157 = arith.constant 1.000000e+00 : f32
    %452 = vector.broadcast %cst_157 : f32 to vector<8x128xf32>
    %453 = arith.addf %452, %451 : vector<8x128xf32>
    %454 = arith.divf %452, %453 : vector<8x128xf32>
    %455 = vector.extract_strided_slice %446 {offsets = [0, 128], sizes = [8, 128], strides = [1, 1]} : vector<8x384xf32> to vector<8x128xf32>
    %456 = vector.extract_strided_slice %441 {offsets = [0, 128], sizes = [8, 128], strides = [1, 1]} : vector<8x384xf32> to vector<8x128xf32>
    %457 = arith.addf %455, %456 : vector<8x128xf32>
    %458 = arith.negf %457 : vector<8x128xf32>
    %459 = math.exp %458 : vector<8x128xf32>
    %cst_158 = arith.constant 1.000000e+00 : f32
    %460 = vector.broadcast %cst_158 : f32 to vector<8x128xf32>
    %461 = arith.addf %460, %459 : vector<8x128xf32>
    %462 = arith.divf %460, %461 : vector<8x128xf32>
    %463 = vector.extract_strided_slice %446 {offsets = [0, 256], sizes = [8, 128], strides = [1, 1]} : vector<8x384xf32> to vector<8x128xf32>
    %464 = vector.extract_strided_slice %441 {offsets = [0, 256], sizes = [8, 128], strides = [1, 1]} : vector<8x384xf32> to vector<8x128xf32>
    %465 = arith.addf %464, %20 : vector<8x128xf32>
    %466 = arith.mulf %454, %465 : vector<8x128xf32>
    %467 = arith.addf %463, %466 : vector<8x128xf32>
    %468 = math.tanh %467 : vector<8x128xf32>
    %cst_159 = arith.constant 1.000000e+00 : f32
    %469 = vector.broadcast %cst_159 : f32 to vector<8x128xf32>
    %470 = arith.subf %469, %462 : vector<8x128xf32>
    %471 = arith.mulf %470, %468 : vector<8x128xf32>
    %472 = arith.mulf %462, %405 : vector<8x128xf32>
    %473 = arith.addf %471, %472 : vector<8x128xf32>
    %474 = arith.truncf %473 : vector<8x128xf32> to vector<8x128xbf16>
    %c0_160 = arith.constant 0 : index
    %c0_161 = arith.constant 0 : index
    %c0_162 = arith.constant 0 : index
    %475 = vector.load %arg4[%c0_160, %c0_161, %c0_162] : memref<1x128x384xbf16, #tpu.memory_space<vmem>>, vector<1x128x384xbf16>
    %476 = vector.shape_cast %475 : vector<1x128x384xbf16> to vector<128x384xbf16>
    %cst_163 = arith.constant dense<0.000000e+00> : vector<8x384xf32>
    %477 = tpu.matmul %474, %476, %cst_163 {dimension_numbers = #tpu.dot_dimension_numbers<[1], [0], [0], [1], [0, 0, 1, 1], [], []>} : vector<8x128xbf16>, vector<128x384xbf16>, vector<8x384xf32> -> vector<8x384xf32>
    %478 = arith.addf %477, %16 : vector<8x384xf32>
    %479 = vector.extract_strided_slice %478 {offsets = [0, 0], sizes = [8, 128], strides = [1, 1]} : vector<8x384xf32> to vector<8x128xf32>
    %480 = vector.extract_strided_slice %444 {offsets = [0, 0], sizes = [8, 128], strides = [1, 1]} : vector<8x384xf32> to vector<8x128xf32>
    %481 = arith.addf %479, %480 : vector<8x128xf32>
    %482 = arith.negf %481 : vector<8x128xf32>
    %483 = math.exp %482 : vector<8x128xf32>
    %cst_164 = arith.constant 1.000000e+00 : f32
    %484 = vector.broadcast %cst_164 : f32 to vector<8x128xf32>
    %485 = arith.addf %484, %483 : vector<8x128xf32>
    %486 = arith.divf %484, %485 : vector<8x128xf32>
    %487 = vector.extract_strided_slice %478 {offsets = [0, 128], sizes = [8, 128], strides = [1, 1]} : vector<8x384xf32> to vector<8x128xf32>
    %488 = vector.extract_strided_slice %444 {offsets = [0, 128], sizes = [8, 128], strides = [1, 1]} : vector<8x384xf32> to vector<8x128xf32>
    %489 = arith.addf %487, %488 : vector<8x128xf32>
    %490 = arith.negf %489 : vector<8x128xf32>
    %491 = math.exp %490 : vector<8x128xf32>
    %cst_165 = arith.constant 1.000000e+00 : f32
    %492 = vector.broadcast %cst_165 : f32 to vector<8x128xf32>
    %493 = arith.addf %492, %491 : vector<8x128xf32>
    %494 = arith.divf %492, %493 : vector<8x128xf32>
    %495 = vector.extract_strided_slice %478 {offsets = [0, 256], sizes = [8, 128], strides = [1, 1]} : vector<8x384xf32> to vector<8x128xf32>
    %496 = vector.extract_strided_slice %444 {offsets = [0, 256], sizes = [8, 128], strides = [1, 1]} : vector<8x384xf32> to vector<8x128xf32>
    %497 = arith.addf %496, %24 : vector<8x128xf32>
    %498 = arith.mulf %486, %497 : vector<8x128xf32>
    %499 = arith.addf %495, %498 : vector<8x128xf32>
    %500 = math.tanh %499 : vector<8x128xf32>
    %cst_166 = arith.constant 1.000000e+00 : f32
    %501 = vector.broadcast %cst_166 : f32 to vector<8x128xf32>
    %502 = arith.subf %501, %494 : vector<8x128xf32>
    %503 = arith.mulf %502, %500 : vector<8x128xf32>
    %504 = arith.mulf %494, %437 : vector<8x128xf32>
    %505 = arith.addf %503, %504 : vector<8x128xf32>
    %506 = arith.truncf %505 : vector<8x128xf32> to vector<8x128xbf16>
    %c0_167 = arith.constant 0 : index
    %c0_168 = arith.constant 0 : index
    %c0_169 = arith.constant 0 : index
    %507 = vector.load %arg5[%c0_167, %c0_168, %c0_169] : memref<2x128x384xbf16, #tpu.memory_space<vmem>>, vector<1x128x384xbf16>
    %508 = vector.shape_cast %507 : vector<1x128x384xbf16> to vector<128x384xbf16>
    %cst_170 = arith.constant dense<0.000000e+00> : vector<8x384xf32>
    %509 = tpu.matmul %474, %508, %cst_170 {dimension_numbers = #tpu.dot_dimension_numbers<[1], [0], [0], [1], [0, 0, 1, 1], [], []>} : vector<8x128xbf16>, vector<128x384xbf16>, vector<8x384xf32> -> vector<8x384xf32>
    %c1_171 = arith.constant 1 : index
    %c0_172 = arith.constant 0 : index
    %c0_173 = arith.constant 0 : index
    %510 = vector.load %arg5[%c1_171, %c0_172, %c0_173] : memref<2x128x384xbf16, #tpu.memory_space<vmem>>, vector<1x128x384xbf16>
    %511 = vector.shape_cast %510 : vector<1x128x384xbf16> to vector<128x384xbf16>
    %cst_174 = arith.constant dense<0.000000e+00> : vector<8x384xf32>
    %512 = tpu.matmul %506, %511, %cst_174 {dimension_numbers = #tpu.dot_dimension_numbers<[1], [0], [0], [1], [0, 0, 1, 1], [], []>} : vector<8x128xbf16>, vector<128x384xbf16>, vector<8x384xf32> -> vector<8x384xf32>
    %c0_175 = arith.constant 0 : index
    %c7 = arith.constant 7 : index
    %c0_176 = arith.constant 0 : index
    %513 = vector.load %arg10[%c0_175, %c7, %c0_176] : memref<8x8x384xf32, #tpu.memory_space<vmem>>, vector<8x1x384xf32>
    %514 = vector.shape_cast %513 : vector<8x1x384xf32> to vector<8x384xf32>
    %515 = vector.extract_strided_slice %514 {offsets = [0, 0], sizes = [8, 128], strides = [1, 1]} : vector<8x384xf32> to vector<8x128xf32>
    %516 = vector.extract_strided_slice %509 {offsets = [0, 0], sizes = [8, 128], strides = [1, 1]} : vector<8x384xf32> to vector<8x128xf32>
    %517 = arith.addf %515, %516 : vector<8x128xf32>
    %518 = arith.negf %517 : vector<8x128xf32>
    %519 = math.exp %518 : vector<8x128xf32>
    %cst_177 = arith.constant 1.000000e+00 : f32
    %520 = vector.broadcast %cst_177 : f32 to vector<8x128xf32>
    %521 = arith.addf %520, %519 : vector<8x128xf32>
    %522 = arith.divf %520, %521 : vector<8x128xf32>
    %523 = vector.extract_strided_slice %514 {offsets = [0, 128], sizes = [8, 128], strides = [1, 1]} : vector<8x384xf32> to vector<8x128xf32>
    %524 = vector.extract_strided_slice %509 {offsets = [0, 128], sizes = [8, 128], strides = [1, 1]} : vector<8x384xf32> to vector<8x128xf32>
    %525 = arith.addf %523, %524 : vector<8x128xf32>
    %526 = arith.negf %525 : vector<8x128xf32>
    %527 = math.exp %526 : vector<8x128xf32>
    %cst_178 = arith.constant 1.000000e+00 : f32
    %528 = vector.broadcast %cst_178 : f32 to vector<8x128xf32>
    %529 = arith.addf %528, %527 : vector<8x128xf32>
    %530 = arith.divf %528, %529 : vector<8x128xf32>
    %531 = vector.extract_strided_slice %514 {offsets = [0, 256], sizes = [8, 128], strides = [1, 1]} : vector<8x384xf32> to vector<8x128xf32>
    %532 = vector.extract_strided_slice %509 {offsets = [0, 256], sizes = [8, 128], strides = [1, 1]} : vector<8x384xf32> to vector<8x128xf32>
    %533 = arith.addf %532, %20 : vector<8x128xf32>
    %534 = arith.mulf %522, %533 : vector<8x128xf32>
    %535 = arith.addf %531, %534 : vector<8x128xf32>
    %536 = math.tanh %535 : vector<8x128xf32>
    %cst_179 = arith.constant 1.000000e+00 : f32
    %537 = vector.broadcast %cst_179 : f32 to vector<8x128xf32>
    %538 = arith.subf %537, %530 : vector<8x128xf32>
    %539 = arith.mulf %538, %536 : vector<8x128xf32>
    %540 = arith.mulf %530, %473 : vector<8x128xf32>
    %541 = arith.addf %539, %540 : vector<8x128xf32>
    %542 = arith.truncf %541 : vector<8x128xf32> to vector<8x128xbf16>
    %c0_180 = arith.constant 0 : index
    %c0_181 = arith.constant 0 : index
    %c0_182 = arith.constant 0 : index
    %543 = vector.load %arg4[%c0_180, %c0_181, %c0_182] : memref<1x128x384xbf16, #tpu.memory_space<vmem>>, vector<1x128x384xbf16>
    %544 = vector.shape_cast %543 : vector<1x128x384xbf16> to vector<128x384xbf16>
    %cst_183 = arith.constant dense<0.000000e+00> : vector<8x384xf32>
    %545 = tpu.matmul %542, %544, %cst_183 {dimension_numbers = #tpu.dot_dimension_numbers<[1], [0], [0], [1], [0, 0, 1, 1], [], []>} : vector<8x128xbf16>, vector<128x384xbf16>, vector<8x384xf32> -> vector<8x384xf32>
    %546 = arith.addf %545, %16 : vector<8x384xf32>
    %547 = vector.extract_strided_slice %546 {offsets = [0, 0], sizes = [8, 128], strides = [1, 1]} : vector<8x384xf32> to vector<8x128xf32>
    %548 = vector.extract_strided_slice %512 {offsets = [0, 0], sizes = [8, 128], strides = [1, 1]} : vector<8x384xf32> to vector<8x128xf32>
    %549 = arith.addf %547, %548 : vector<8x128xf32>
    %550 = arith.negf %549 : vector<8x128xf32>
    %551 = math.exp %550 : vector<8x128xf32>
    %cst_184 = arith.constant 1.000000e+00 : f32
    %552 = vector.broadcast %cst_184 : f32 to vector<8x128xf32>
    %553 = arith.addf %552, %551 : vector<8x128xf32>
    %554 = arith.divf %552, %553 : vector<8x128xf32>
    %555 = vector.extract_strided_slice %546 {offsets = [0, 128], sizes = [8, 128], strides = [1, 1]} : vector<8x384xf32> to vector<8x128xf32>
    %556 = vector.extract_strided_slice %512 {offsets = [0, 128], sizes = [8, 128], strides = [1, 1]} : vector<8x384xf32> to vector<8x128xf32>
    %557 = arith.addf %555, %556 : vector<8x128xf32>
    %558 = arith.negf %557 : vector<8x128xf32>
    %559 = math.exp %558 : vector<8x128xf32>
    %cst_185 = arith.constant 1.000000e+00 : f32
    %560 = vector.broadcast %cst_185 : f32 to vector<8x128xf32>
    %561 = arith.addf %560, %559 : vector<8x128xf32>
    %562 = arith.divf %560, %561 : vector<8x128xf32>
    %563 = vector.extract_strided_slice %546 {offsets = [0, 256], sizes = [8, 128], strides = [1, 1]} : vector<8x384xf32> to vector<8x128xf32>
    %564 = vector.extract_strided_slice %512 {offsets = [0, 256], sizes = [8, 128], strides = [1, 1]} : vector<8x384xf32> to vector<8x128xf32>
    %565 = arith.addf %564, %24 : vector<8x128xf32>
    %566 = arith.mulf %554, %565 : vector<8x128xf32>
    %567 = arith.addf %563, %566 : vector<8x128xf32>
    %568 = math.tanh %567 : vector<8x128xf32>
    %cst_186 = arith.constant 1.000000e+00 : f32
    %569 = vector.broadcast %cst_186 : f32 to vector<8x128xf32>
    %570 = arith.subf %569, %562 : vector<8x128xf32>
    %571 = arith.mulf %570, %568 : vector<8x128xf32>
    %572 = arith.mulf %562, %505 : vector<8x128xf32>
    %573 = arith.addf %571, %572 : vector<8x128xf32>
    %c0_187 = arith.constant 0 : index
    %c0_188 = arith.constant 0 : index
    %c0_189 = arith.constant 0 : index
    %574 = vector.load %arg9[%c0_187, %c0_188, %c0_189] : memref<2x8x128xf32, #tpu.memory_space<vmem>>, vector<1x8x128xf32>
    %575 = vector.shape_cast %574 : vector<1x8x128xf32> to vector<8x128xf32>
    %576 = vector.shape_cast %541 : vector<8x128xf32> to vector<1x8x128xf32>
    tpu.vector_store %arg9[%c0_187, %c0_188, %c0_189], %576 {strides = array<i32>} : memref<2x8x128xf32, #tpu.memory_space<vmem>>, vector<1x8x128xf32>,
    %c1_190 = arith.constant 1 : index
    %c0_191 = arith.constant 0 : index
    %c0_192 = arith.constant 0 : index
    %577 = vector.load %arg9[%c1_190, %c0_191, %c0_192] : memref<2x8x128xf32, #tpu.memory_space<vmem>>, vector<1x8x128xf32>
    %578 = vector.shape_cast %577 : vector<1x8x128xf32> to vector<8x128xf32>
    %579 = vector.shape_cast %573 : vector<8x128xf32> to vector<1x8x128xf32>
    tpu.vector_store %arg9[%c1_190, %c0_191, %c0_192], %579 {strides = array<i32>} : memref<2x8x128xf32, #tpu.memory_space<vmem>>, vector<1x8x128xf32>,
    %c0_i32_193 = arith.constant 0 : i32
    %580 = arith.cmpi eq, %arg1, %c0_i32_193 : i32
    %581 = arith.extui %580 : i1 to i32
    %c0_i32_194 = arith.constant 0 : i32
    %582 = arith.cmpi ne, %581, %c0_i32_194 : i32
    scf.if %582 {
      %c0_195 = arith.constant 0 : index
      %c0_196 = arith.constant 0 : index
      %c0_197 = arith.constant 0 : index
      %583 = vector.load %arg9[%c0_195, %c0_196, %c0_197] : memref<2x8x128xf32, #tpu.memory_space<vmem>>, vector<2x8x128xf32>
      %c0_198 = arith.constant 0 : index
      %c0_199 = arith.constant 0 : index
      %c0_200 = arith.constant 0 : index
      %584 = vector.load %arg8[%c0_198, %c0_199, %c0_200] : memref<2x8x128xf32, #tpu.memory_space<vmem>>, vector<2x8x128xf32>
      tpu.vector_store %arg8[%c0_198, %c0_199, %c0_200], %583 {strides = array<i32>} : memref<2x8x128xf32, #tpu.memory_space<vmem>>, vector<2x8x128xf32>,
    } else {
    }
    return
  }
  func.func @transform_0(%arg0: i32, %arg1: i32) -> (i32, i32, i32) {
    %c0_i32 = arith.constant 0 : i32
    %c0_i32_0 = arith.constant 0 : i32
    return %arg0, %arg1, %c0_i32 : i32, i32, i32
  }
  func.func @transform_1(%arg0: i32, %arg1: i32) -> (i32, i32) {
    %c0_i32 = arith.constant 0 : i32
    %c0_i32_0 = arith.constant 0 : i32
    %c0_i32_1 = arith.constant 0 : i32
    return %c0_i32, %c0_i32_0 : i32, i32
  }
  func.func @transform_2(%arg0: i32, %arg1: i32) -> (i32, i32, i32) {
    %c0_i32 = arith.constant 0 : i32
    %c0_i32_0 = arith.constant 0 : i32
    %c0_i32_1 = arith.constant 0 : i32
    %c0_i32_2 = arith.constant 0 : i32
    return %c0_i32, %c0_i32_0, %c0_i32_1 : i32, i32, i32
  }
  func.func @transform_3(%arg0: i32, %arg1: i32) -> (i32, i32, i32) {
    %c0_i32 = arith.constant 0 : i32
    %c0_i32_0 = arith.constant 0 : i32
    %c0_i32_1 = arith.constant 0 : i32
    %c0_i32_2 = arith.constant 0 : i32
    return %c0_i32, %c0_i32_0, %c0_i32_1 : i32, i32, i32
  }
  func.func @transform_4(%arg0: i32, %arg1: i32) -> (i32, i32, i32) {
    %c0_i32 = arith.constant 0 : i32
    %c0_i32_0 = arith.constant 0 : i32
    %c0_i32_1 = arith.constant 0 : i32
    %c0_i32_2 = arith.constant 0 : i32
    return %c0_i32, %c0_i32_0, %c0_i32_1 : i32, i32, i32
  }
  func.func @transform_5(%arg0: i32, %arg1: i32) -> (i32, i32, i32) {
    %c0_i32 = arith.constant 0 : i32
    %c0_i32_0 = arith.constant 0 : i32
    %c0_i32_1 = arith.constant 0 : i32
    %c0_i32_2 = arith.constant 0 : i32
    return %c0_i32, %c0_i32_0, %c0_i32_1 : i32, i32, i32
  }
  func.func @transform_6(%arg0: i32, %arg1: i32) -> (i32, i32, i32) {
    %c0_i32 = arith.constant 0 : i32
    %c0_i32_0 = arith.constant 0 : i32
    %c0_i32_1 = arith.constant 0 : i32
    return %c0_i32, %arg0, %c0_i32_0 : i32, i32, i32
  }
}

</mosaic_0001>

<llo_original>
// kernel: tpu_custom_call.1
$region0: #{tpu_custom_call.1}
  #allocation0 [shape = 'u32[]', space=smem, size = 0x4, offset = 0x4, fixed_abs, tag = 'smem constant byte address 0x4 - core index']
  #allocation1 [shape = 'u32[144,128]{1,0:T(1,128)}', space=vmem, size = 0x12000, scoped, tag = 'internal scratch']
  #allocation2 [shape = 'f32[2,8,128]{2,1,0:T(8,128)}', space=vmem, size = 0x2000, scoped, tag = 'scratch operand']
  #allocation3 [shape = 'f32[8,8,384]{2,1,0:T(8,128)}', space=vmem, size = 0x18000, scoped, tag = 'scratch operand']
  %s0 = inlined_call_operand.hbm [shape: bf16[16,8,16], index: 0, kind: input, shape index: {}]
  %s1 = inlined_call_operand.hbm [shape: bf16[16,384], index: 1, kind: input, shape index: {}]
  %s2 = inlined_call_operand.hbm [shape: bf16[1,128,384], index: 2, kind: input, shape index: {}]
  %s3 = inlined_call_operand.hbm [shape: bf16[2,128,384], index: 3, kind: input, shape index: {}]
  %s4 = inlined_call_operand.vmem [shape: f32[2,1,384], index: 4, kind: input, shape index: {}]
  %s5 = inlined_call_operand.vmem [shape: f32[2,1,128], index: 5, kind: input, shape index: {}]
  %s6 = inlined_call_operand.hbm [shape: f32[2,16,128], index: 6, kind: output, shape index: {}]
  %s7 = sld [smem:[#allocation0]]
  $region81: #{tpu_custom_call.1} parent=0
    _
  %s9 = ssub.s32 1, %s7
  %s10 = scalar_select 0, %s9, %s7
  $region1: #{tpu_custom_call.1} parent=0
    #allocation4 [shape = 'u8[32768]{0}', space=vmem, size = 0x8000, scoped, tag = 'input window, operand 0']
    #allocation5 [shape = 's32[2]{0}', space=sflag, size = 0x8, scoped, tag = 'scoped memory for tpu_custom_call.1']
    #allocation6 [shape = 's32[2]{0}', space=sflag, size = 0x8, scoped, tag = 'scoped memory for tpu_custom_call.1']
    #allocation7 [shape = 'u8[12288]{0}', space=vmem, size = 0x3000, scoped, tag = 'input window, operand 1, single buffered']
    #allocation8 [shape = 's32[1]{0}', space=sflag, size = 0x4, scoped, tag = 'scoped memory for tpu_custom_call.1']
    #allocation9 [shape = 'u8[98304]{0}', space=vmem, size = 0x18000, scoped, tag = 'input window, operand 2, single buffered']
    #allocation10 [shape = 'u8[196608]{0}', space=vmem, size = 0x30000, scoped, tag = 'input window, operand 3, single buffered']
    #allocation11 [shape = 's32[1]{0}', space=sflag, size = 0x4, scoped, tag = 'scoped memory for tpu_custom_call.1']
    #allocation12 [shape = 'u8[16384]{0}', space=vmem, size = 0x4000, scoped, tag = 'output window, operand 0']
    %11 = vsyncpa [#allocation5], 0
    %s12 = scalar_lea.sflag [#allocation5], 1
    %13 = vsyncpa %s12, 0
    %14 = vsyncpa [#allocation8], 0
    %15 = vsyncpa [#allocation11], 0
    %16 = vsyncpa [#allocation6], 0
    %s17 = scalar_lea.sflag [#allocation6], 1
    %18 = vsyncpa %s17, 0
    loop: start=0, step=1, limit=4
    $region2: #{tpu_custom_call.1} parent=1 // loop_pre_header
      _
    $region3: #{tpu_custom_call.1} parent=1 // loop_header
      %s20 = sphi 0, %s24
      %p21 = scmp.ge.s32.totalorder %s20, 4
      %s27 = sphi 0, %s39
      %s28 = sphi 0, %s35
      %s29 = sphi 0, %s27
      %s30 = sphi 0, %s28
      %s31 = sphi 0, %s29
      %s32 = sphi 0, %s30
      %s44 = sphi 0, %s46
      %s47 = sphi 0, %s44
      %s48 = sphi 0, %s47
      %s64 = sphi 0, %s48
      %s68 = sphi 0, %s68
      %s70 = sphi 0, %s68
      %s71 = sphi 0, %s70
      %s85 = sphi 0, %s71
      %s89 = sphi 0, %s89
      %s91 = sphi 0, %s89
      %s92 = sphi 0, %s91
      %s106 = sphi 0, %s92
      %s110 = sphi 0, %s110
      %s112 = sphi 0, %s110
      %s113 = sphi 0, %s112
      %s127 = sphi 0, %s113
      %s131 = sphi 0, %s131
      %s133 = sphi 0, %s131
      %s134 = sphi 0, %s133
      %s148 = sphi 0, %s134
      %s152 = sphi 0, %s152
      %s154 = sphi 0, %s152
      %s155 = sphi 0, %s154
      %s169 = sphi 0, %s155
      %s175 = sphi 0, %s177
      %s178 = sphi 0, %s175
      %s179 = sphi 0, %s178
      %s195 = sphi 0, %s179
    $region4: #{tpu_custom_call.1} parent=1 // loop_header_branch
      %23 = sbr.rel (%p21) target = $region8
    $region5: #{tpu_custom_call.1} parent=1 // loop_body
      %s25 = ssub.s32 %s20, 1
      %s26 = ssub.s32 %s20, 2
      %s33 = sadd.s32 1, %s28
      %p34 = scmp.ge.s32.totalorder %s33, 1
      %s35 = scalar_select %p34, 0, %s33
      %s36 = sadd.s32 1, %s27
      %s37 = scalar_select %p34, %s36, %s27
      %p38 = scmp.ge.s32.totalorder %s37, 2
      %s39 = scalar_select %p38, 0, %s37
      %s40 = ssub.s32 %s27, %s39
      %s41 = ssub.s32 %s28, %s35
      %s42 = sor.u32 %s40, %s41
      %p43 = scmp.eq.s32.totalorder %s42, 0
      %s45 = sadd.s32 %s44, 1
      %s46 = scalar_select %p43, %s44, %s45
      %p49 = pneg %p43
      %p50 = scmp.eq.s32.totalorder %s20, 1
      %p51 = por %p49, %p50
      %p52 = scmp.ne.s32.totalorder %s44, %s47
      %p53 = scmp.eq.s32.totalorder %s20, 0
      %p54 = por %p52, %p53
      %p55 = scmp.ne.s32.totalorder %s44, %s47
      %p56 = scmp.eq.s32.totalorder %s25, 1
      %p57 = por %p55, %p56
      %p58 = scmp.ne.s32.totalorder %s47, %s48
      %p59 = scmp.eq.s32.totalorder %s25, 0
      %p60 = por %p58, %p59
      %p61 = scmp.ne.s32.totalorder %s47, %s48
      %p62 = scmp.eq.s32.totalorder %s26, 1
      %p63 = por %p61, %p62
      %p65 = scmp.ne.s32.totalorder %s48, %s64
      %p66 = scmp.eq.s32.totalorder %s26, 0
      %p67 = por %p65, %p66
      %s69 = sadd.s32 %s68, 1
      %p72 = scmp.eq.s32.totalorder %s20, 1
      %p73 = scmp.ne.s32.totalorder %s68, %s70
      %p74 = scmp.eq.s32.totalorder %s20, 0
      %p75 = por %p73, %p74
      %p76 = scmp.ne.s32.totalorder %s68, %s70
      %p77 = scmp.eq.s32.totalorder %s25, 1
      %p78 = por %p76, %p77
      %p79 = scmp.ne.s32.totalorder %s70, %s71
      %p80 = scmp.eq.s32.totalorder %s25, 0
      %p81 = por %p79, %p80
      %p82 = scmp.ne.s32.totalorder %s70, %s71
      %p83 = scmp.eq.s32.totalorder %s26, 1
      %p84 = por %p82, %p83
      %p86 = scmp.ne.s32.totalorder %s71, %s85
      %p87 = scmp.eq.s32.totalorder %s26, 0
      %p88 = por %p86, %p87
      %s90 = sadd.s32 %s89, 1
      %p93 = scmp.eq.s32.totalorder %s20, 1
      %p94 = scmp.ne.s32.totalorder %s89, %s91
      %p95 = scmp.eq.s32.totalorder %s20, 0
      %p96 = por %p94, %p95
      %p97 = scmp.ne.s32.totalorder %s89, %s91
      %p98 = scmp.eq.s32.totalorder %s25, 1
      %p99 = por %p97, %p98
      %p100 = scmp.ne.s32.totalorder %s91, %s92
      %p101 = scmp.eq.s32.totalorder %s25, 0
      %p102 = por %p100, %p101
      %p103 = scmp.ne.s32.totalorder %s91, %s92
      %p104 = scmp.eq.s32.totalorder %s26, 1
      %p105 = por %p103, %p104
      %p107 = scmp.ne.s32.totalorder %s92, %s106
      %p108 = scmp.eq.s32.totalorder %s26, 0
      %p109 = por %p107, %p108
      %s111 = sadd.s32 %s110, 1
      %p114 = scmp.eq.s32.totalorder %s20, 1
      %p115 = scmp.ne.s32.totalorder %s110, %s112
      %p116 = scmp.eq.s32.totalorder %s20, 0
      %p117 = por %p115, %p116
      %p118 = scmp.ne.s32.totalorder %s110, %s112
      %p119 = scmp.eq.s32.totalorder %s25, 1
      %p120 = por %p118, %p119
      %p121 = scmp.ne.s32.totalorder %s112, %s113
      %p122 = scmp.eq.s32.totalorder %s25, 0
      %p123 = por %p121, %p122
      %p124 = scmp.ne.s32.totalorder %s112, %s113
      %p125 = scmp.eq.s32.totalorder %s26, 1
      %p126 = por %p124, %p125
      %p128 = scmp.ne.s32.totalorder %s113, %s127
      %p129 = scmp.eq.s32.totalorder %s26, 0
      %p130 = por %p128, %p129
      %s132 = sadd.s32 %s131, 1
      %p135 = scmp.eq.s32.totalorder %s20, 1
      %p136 = scmp.ne.s32.totalorder %s131, %s133
      %p137 = scmp.eq.s32.totalorder %s20, 0
      %p138 = por %p136, %p137
      %p139 = scmp.ne.s32.totalorder %s131, %s133
      %p140 = scmp.eq.s32.totalorder %s25, 1
      %p141 = por %p139, %p140
      %p142 = scmp.ne.s32.totalorder %s133, %s134
      %p143 = scmp.eq.s32.totalorder %s25, 0
      %p144 = por %p142, %p143
      %p145 = scmp.ne.s32.totalorder %s133, %s134
      %p146 = scmp.eq.s32.totalorder %s26, 1
      %p147 = por %p145, %p146
      %p149 = scmp.ne.s32.totalorder %s134, %s148
      %p150 = scmp.eq.s32.totalorder %s26, 0
      %p151 = por %p149, %p150
      %s153 = sadd.s32 %s152, 1
      %p156 = scmp.eq.s32.totalorder %s20, 1
      %p157 = scmp.ne.s32.totalorder %s152, %s154
      %p158 = scmp.eq.s32.totalorder %s20, 0
      %p159 = por %p157, %p158
      %p160 = scmp.ne.s32.totalorder %s152, %s154
      %p161 = scmp.eq.s32.totalorder %s25, 1
      %p162 = por %p160, %p161
      %p163 = scmp.ne.s32.totalorder %s154, %s155
      %p164 = scmp.eq.s32.totalorder %s25, 0
      %p165 = por %p163, %p164
      %p166 = scmp.ne.s32.totalorder %s154, %s155
      %p167 = scmp.eq.s32.totalorder %s26, 1
      %p168 = por %p166, %p167
      %p170 = scmp.ne.s32.totalorder %s155, %s169
      %p171 = scmp.eq.s32.totalorder %s26, 0
      %p172 = por %p170, %p171
      %s173 = ssub.s32 %s27, %s39
      %p174 = scmp.eq.s32.totalorder %s173, 0
      %s176 = sadd.s32 %s175, 1
      %s177 = scalar_select %p174, %s175, %s176
      %p180 = pneg %p174
      %p181 = scmp.eq.s32.totalorder %s20, 1
      %p182 = por %p180, %p181
      %p183 = scmp.ne.s32.totalorder %s175, %s178
      %p184 = scmp.eq.s32.totalorder %s20, 0
      %p185 = por %p183, %p184
      %p186 = scmp.ne.s32.totalorder %s175, %s178
      %p187 = scmp.eq.s32.totalorder %s25, 1
      %p188 = por %p186, %p187
      %p189 = scmp.ne.s32.totalorder %s178, %s179
      %p190 = scmp.eq.s32.totalorder %s25, 0
      %p191 = por %p189, %p190
      %p192 = scmp.ne.s32.totalorder %s178, %s179
      %p193 = scmp.eq.s32.totalorder %s26, 1
      %p194 = por %p192, %p193
      %p196 = scmp.ne.s32.totalorder %s179, %s195
      %p197 = scmp.eq.s32.totalorder %s26, 0
      %p198 = por %p196, %p197
      %p199 = scmp.le.s32.totalorder 1, %s20
      %p200 = scmp.lt.s32.totalorder %s20, 3
      %p201 = pnand %p199, %p200
      %p202 = pneg %p201
      // Predicated region
      $region9: #{tpu_custom_call.1} parent=5 // pred_check
        _
      $region10: #{tpu_custom_call.1} parent=5 // pred_check_branch
        %204 = sbr.rel (%p201) target = $region12
      $region11: #{tpu_custom_call.1} parent=5 // pred_region
        %s205 = ssub.s32 %s20, 1
        // Predicated region
        $region13: #{tpu_custom_call.1} parent=11 // pred_check
          %p206 = pneg %p81
        $region14: #{tpu_custom_call.1} parent=11 // pred_check_branch
          %208 = sbr.rel (%p206) target = $region16
        $region15: #{tpu_custom_call.1} parent=11 // pred_region
          %s210 = ssub.s32 384, 384
          %211 = vsyncadd [#allocation8], %s210
          %s212 = sshll.u32 [#allocation7], 4
          %s213 = int_to_ptr.vmem [resolvable:$true] %s212
          %218 = dma.hbm_to_vmem [thread:$0]  %s1, 384, %s213, [#allocation8], 192, 192, 12
        $region16: #{tpu_custom_call.1} parent=11 // pred_fallthru
          _
        // Predicated region
        $region17: #{tpu_custom_call.1} parent=11 // pred_check
          %p219 = pneg %p102
        $region18: #{tpu_custom_call.1} parent=11 // pred_check_branch
          %221 = sbr.rel (%p219) target = $region20
        $region19: #{tpu_custom_call.1} parent=11 // pred_region
          %s223 = ssub.s32 3072, 3072
          %224 = vsyncadd [#allocation8], %s223
          %s225 = sshll.u32 [#allocation9], 4
          %s226 = int_to_ptr.vmem [resolvable:$true] %s225
          %231 = dma.hbm_to_vmem [thread:$0]  %s2, 3072, %s226, [#allocation8], 192, 192, 12
        $region20: #{tpu_custom_call.1} parent=11 // pred_fallthru
          _
        // Predicated region
        $region21: #{tpu_custom_call.1} parent=11 // pred_check
          %p232 = pneg %p123
        $region22: #{tpu_custom_call.1} parent=11 // pred_check_branch
          %234 = sbr.rel (%p232) target = $region24
        $region23: #{tpu_custom_call.1} parent=11 // pred_region
          %s236 = ssub.s32 6144, 6144
          %237 = vsyncadd [#allocation11], %s236
          %s238 = sshll.u32 [#allocation10], 4
          %s239 = int_to_ptr.vmem [resolvable:$true] %s238
          %244 = dma.hbm_to_vmem [thread:$0]  %s3, 6144, %s239, [#allocation11], 192, 192, 12
        $region24: #{tpu_custom_call.1} parent=11 // pred_fallthru
          _
        // Predicated region
        $region25: #{tpu_custom_call.1} parent=11 // pred_check
          %p245 = pneg %p144
        $region26: #{tpu_custom_call.1} parent=11 // pred_check_branch
          %247 = sbr.rel (%p245) target = $region28
        $region27: #{tpu_custom_call.1} parent=11 // pred_region
          _
        $region28: #{tpu_custom_call.1} parent=11 // pred_fallthru
          _
        // Predicated region
        $region29: #{tpu_custom_call.1} parent=11 // pred_check
          %p248 = pneg %p165
        $region30: #{tpu_custom_call.1} parent=11 // pred_check_branch
          %250 = sbr.rel (%p248) target = $region32
        $region31: #{tpu_custom_call.1} parent=11 // pred_region
          _
        $region32: #{tpu_custom_call.1} parent=11 // pred_fallthru
          _
      $region12: #{tpu_custom_call.1} parent=5 // pred_fallthru
        _
      %p251 = scmp.lt.s32.totalorder %s20, 2
      // Predicated region
      $region33: #{tpu_custom_call.1} parent=5 // pred_check
        %p252 = pneg %p251
      $region34: #{tpu_custom_call.1} parent=5 // pred_check_branch
        %254 = sbr.rel (%p252) target = $region36
      $region35: #{tpu_custom_call.1} parent=5 // pred_region
        // Predicated region
        $region37: #{tpu_custom_call.1} parent=35 // pred_check
          %p255 = pneg %p54
        $region38: #{tpu_custom_call.1} parent=35 // pred_check_branch
          %257 = sbr.rel (%p255) target = $region40
        $region39: #{tpu_custom_call.1} parent=35 // pred_region
          %s258 = sand.u32 %s44, 1
          %s259 = scalar_lea.sflag [#allocation5], %s258
          %s260 = sand.u32 %s44, 1
          %s261 = smul.addr %s260, 32
          %s262 = scalar_lea.vmem [#allocation4], %s261
          %s263 = smul.u32 8, %s27
          %s265 = ssub.s32 512, 512
          %266 = vsyncadd %s259, %s265
          %s267 = sadd.s32 %s28, %s263
          %s268 = smul.addr %s267, 64
          %s269 = scalar_lea.hbm %s0, %s268
          %s270 = sshll.u32 %s262, 4
          %s271 = int_to_ptr.vmem [resolvable:$true] %s270
          %276 = dma.hbm_to_vmem [thread:$0]  %s269, 512, %s271, %s259, 64, 64, 4
        $region40: #{tpu_custom_call.1} parent=35 // pred_fallthru
          _
      $region36: #{tpu_custom_call.1} parent=5 // pred_fallthru
        _
      %p277 = scmp.le.s32.totalorder 1, %s20
      %p278 = scmp.lt.s32.totalorder %s20, 3
      %p279 = pnand %p277, %p278
      %p280 = pneg %p279
      // Predicated region
      $region41: #{tpu_custom_call.1} parent=5 // pred_check
        _
      $region42: #{tpu_custom_call.1} parent=5 // pred_check_branch
        %282 = sbr.rel (%p279) target = $region44
      $region43: #{tpu_custom_call.1} parent=5 // pred_region
        %s283 = ssub.s32 %s20, 1
        %s284 = sand.u32 %s47, 1
        %s285 = scalar_lea.sflag [#allocation5], %s284
        %s286 = sand.u32 %s47, 1
        %s287 = smul.addr %s286, 32
        %s288 = scalar_lea.vmem [#allocation4], %s287
        // Predicated region
        $region45: #{tpu_custom_call.1} parent=43 // pred_check
          %p289 = pneg %p60
        $region46: #{tpu_custom_call.1} parent=43 // pred_check_branch
          %291 = sbr.rel (%p289) target = $region48
        $region47: #{tpu_custom_call.1} parent=43 // pred_region
          %292 = dma.done %s285, 512
        $region48: #{tpu_custom_call.1} parent=43 // pred_fallthru
          _
        // Predicated region
        $region49: #{tpu_custom_call.1} parent=43 // pred_check
          %p293 = pneg %p81
        $region50: #{tpu_custom_call.1} parent=43 // pred_check_branch
          %295 = sbr.rel (%p293) target = $region52
        $region51: #{tpu_custom_call.1} parent=43 // pred_region
          %296 = dma.done [#allocation8], 384
        $region52: #{tpu_custom_call.1} parent=43 // pred_fallthru
          _
        // Predicated region
        $region53: #{tpu_custom_call.1} parent=43 // pred_check
          %p297 = pneg %p102
        $region54: #{tpu_custom_call.1} parent=43 // pred_check_branch
          %299 = sbr.rel (%p297) target = $region56
        $region55: #{tpu_custom_call.1} parent=43 // pred_region
          %300 = dma.done [#allocation8], 3072
        $region56: #{tpu_custom_call.1} parent=43 // pred_fallthru
          _
        // Predicated region
        $region57: #{tpu_custom_call.1} parent=43 // pred_check
          %p301 = pneg %p123
        $region58: #{tpu_custom_call.1} parent=43 // pred_check_branch
          %303 = sbr.rel (%p301) target = $region60
        $region59: #{tpu_custom_call.1} parent=43 // pred_region
          %304 = dma.done [#allocation11], 6144
        $region60: #{tpu_custom_call.1} parent=43 // pred_fallthru
          _
        %s305 = sand.u32 %s47, 1
        %s306 = scalar_lea.sflag [#allocation5], %s305
        %s307 = sand.u32 %s47, 1
        %s308 = smul.addr %s307, 32
        %s309 = scalar_lea.vmem [#allocation4], %s308
        %p310 = pneg %p60
        %p311 = pneg %p57
        %p312 = pneg %p81
        %p313 = pneg %p78
        %p314 = pneg %p102
        %p315 = pneg %p99
        %p316 = pneg %p123
        %p317 = pneg %p120
        %p318 = pneg %p144
        %p319 = pneg %p141
        %p320 = pneg %p165
        %p321 = pneg %p162
        %p322 = pneg %p191
        %p323 = pneg %p188
        %s324 = sand.u32 %s178, 1
        %s325 = scalar_lea.sflag [#allocation6], %s324
        %s326 = sand.u32 %s178, 1
        %s327 = smul.addr %s326, 16
        %s328 = scalar_lea.vmem [#allocation12], %s327
        %s329 = smul.u32 8, %s29
        %p331 = scmp.eq.s32.totalorder %s30, 0
        // Predicated region
        $region61: #{tpu_custom_call.1} parent=43 // pred_check
          %p332 = pneg %p331
        $region62: #{tpu_custom_call.1} parent=43 // pred_check_branch
          %334 = sbr.rel (%p332) target = $region64
        $region63: #{tpu_custom_call.1} parent=43 // pred_region
          %335 = vst [vmem:[#allocation2] sm:$0xff] 0.0
          %336 = vst [vmem:[#allocation2 + $0x8] sm:$0xff] 0.0
        $region64: #{tpu_custom_call.1} parent=43 // pred_fallthru
          _
        %v337 = vld [vmem:[%s288] sm:$0xf]
        %v338 = vld [vmem:[%s288 + $0x4] sm:$0xf]
        %v339 = vld [vmem:[%s288 + $0x8] sm:$0xf]
        %v340 = vld [vmem:[%s288 + $0xc] sm:$0xf]
        %v341 = vld [vmem:[%s288 + $0x10] sm:$0xf]
        %v342 = vld [vmem:[%s288 + $0x14] sm:$0xf]
        %v343 = vld [vmem:[%s288 + $0x18] sm:$0xf]
        %v344 = vld [vmem:[%s288 + $0x1c] sm:$0xf]
        %v345 = vld [vmem:[#allocation7] sm:$0xff]
        %v346 = vld [vmem:[#allocation7 + $0x8] sm:$0xf]
        %v347 = vld [vmem:[#allocation7 + $0xc] sm:$0xff]
        %v348 = vld [vmem:[#allocation7 + $0x14] sm:$0xf]
        %v349 = vld [vmem:[%s4] sm:$0x7]
        %v351 = vlaneseq
        %v352 = vshrl.u32 %v351, 7
        %v353 = vsub.s32 0, %v352
        %v354 = vrot.slane %v349, %v353
        %v355 = vlaneseq
        %v356 = vshrl.u32 %v355, 7
        %v357 = vsub.s32 1, %v356
        %v358 = vrot.slane %v349, %v357
        %v359 = vlaneseq
        %v360 = vshrl.u32 %v359, 7
        %v361 = vsub.s32 2, %v360
        %v362 = vrot.slane %v349, %v361
        %v374 = vunpack.c.l.b16 %v337
        %v375 = vunpack.c.l.b16 %v338
        %v376 = vunpack.c.l.b16 %v339
        %v377 = vunpack.c.l.b16 %v340
        %v378 = vunpack.c.l.b16 %v341
        %v379 = vunpack.c.l.b16 %v342
        %v380 = vunpack.c.l.b16 %v343
        %v381 = vunpack.c.l.b16 %v344
        %v382 = vpack.c.b16 %v375, %v374
        %v383 = vpack.c.b16 %v377, %v376
        %v384 = vpack.c.b16 %v379, %v378
        %v385 = vpack.c.b16 %v381, %v380
        %v390 = vunpack.c.l.b16 %v345
        %v391 = vunpack.c.h.b16 %v345
        %v392 = vunpack.c.l.b16 %v346
        %v393 = vunpack.c.l.b16 %v347
        %v394 = vunpack.c.h.b16 %v347
        %v395 = vunpack.c.l.b16 %v348
        %v396 = vpack.c.b16 %v393, %v390
        %v397 = vpack.c.b16 %v394, %v391
        %v398 = vpack.c.b16 %v395, %v392
        %vm402 = vcmask 130048
        %v404 = vsel %vm402, %v382, 0
        %v407 = vsel %vm402, %v383, 0
        %v410 = vsel %vm402, %v384, 0
        %v413 = vsel %vm402, %v385, 0
        %415 = vmatprep.subr.bf16.mxu0 %v397
        %416 = vmatpush1.bf16.msra.mxu0 %v396
        %417 = vmatprep.subr.bf16.mxu0 0
        %418 = vmatpush1.bf16.msra.mxu0 0
        %419 = vmatprep.subr.bf16.mxu0 0
        %420 = vmatpush1.bf16.msra.mxu0 0
        %421 = vmatprep.subr.bf16.mxu0 0
        %422 = vmatpush1.bf16.msra.mxu0 0
        %423 = vmatprep.subr.bf16.mxu0 0
        %424 = vmatpush1.bf16.msra.mxu0 0
        %425 = vmatprep.subr.bf16.mxu0 0
        %426 = vmatpush1.bf16.msra.mxu0 0
        %427 = vmatprep.subr.bf16.mxu0 0
        %428 = vmatpush1.bf16.msra.mxu0 0
        %429 = vmatprep.subr.bf16.mxu0 0
        %430 = vmatpush1.bf16.msra.mxu0 0
        %431 = vmatprep.subr.bf16.mxu0 0
        %432 = vmatpush1.bf16.msra.mxu0 0
        %433 = vmatprep.subr.bf16.mxu0 0
        %434 = vmatpush1.bf16.msra.mxu0 0
        %435 = vmatprep.subr.bf16.mxu0 0
        %436 = vmatpush1.bf16.msra.mxu0 0
        %437 = vmatprep.subr.bf16.mxu0 0
        %438 = vmatpush1.bf16.msra.mxu0 0
        %439 = vmatprep.subr.bf16.mxu0 0
        %440 = vmatpush1.bf16.msra.mxu0 0
        %441 = vmatprep.subr.bf16.mxu0 0
        %442 = vmatpush1.bf16.msra.mxu0 0
        %443 = vmatprep.subr.bf16.mxu0 0
        %444 = vmatpush1.bf16.msra.mxu0 0
        %445 = vmatprep.subr.bf16.mxu0 0
        %446 = vmatpush1.bf16.msra.mxu0 0
        %447 = vmatprep.mubr.bf16.mxu0 0
        %448 = vmatmul.mubr.bf16.gmra.mrb[0].mxu0 %v404
        %v449 = vpop.f32.mrb[0].mxu0
        %v450 = vadd.f32 %v354, %v449
        %v451 = vpop.f32.mrb[0].mxu0
        %v452 = vadd.f32 %v358, %v451
        %v453 = vpop.f32.mrb[0].mxu0
        %v454 = vadd.f32 %v354, %v453
        %v455 = vpop.f32.mrb[0].mxu0
        %v456 = vadd.f32 %v358, %v455
        %457 = vmatprep.mubr.bf16.mxu0 0
        %458 = vmatmul.mubr.bf16.gmra.mrb[0].mxu0 %v407
        %v459 = vpop.f32.mrb[0].mxu0
        %v460 = vadd.f32 %v354, %v459
        %v461 = vpop.f32.mrb[0].mxu0
        %v462 = vadd.f32 %v358, %v461
        %v463 = vpop.f32.mrb[0].mxu0
        %v464 = vadd.f32 %v354, %v463
        %v465 = vpop.f32.mrb[0].mxu0
        %v466 = vadd.f32 %v358, %v465
        %467 = vmatprep.mubr.bf16.mxu0 0
        %468 = vmatmul.mubr.bf16.gmra.mrb[0].mxu0 %v410
        %v469 = vpop.f32.mrb[0].mxu0
        %v470 = vadd.f32 %v354, %v469
        %v471 = vpop.f32.mrb[0].mxu0
        %v472 = vadd.f32 %v358, %v471
        %v473 = vpop.f32.mrb[0].mxu0
        %v474 = vadd.f32 %v354, %v473
        %v475 = vpop.f32.mrb[0].mxu0
        %v476 = vadd.f32 %v358, %v475
        %477 = vmatprep.mubr.bf16.mxu0 0
        %478 = vmatmul.mubr.bf16.gmra.mrb[0].mxu0 %v413
        %v479 = vpop.f32.mrb[0].mxu0
        %v480 = vadd.f32 %v354, %v479
        %v481 = vpop.f32.mrb[0].mxu0
        %v482 = vadd.f32 %v358, %v481
        %v483 = vpop.f32.mrb[0].mxu0
        %v484 = vadd.f32 %v354, %v483
        %v485 = vpop.f32.mrb[0].mxu0
        %v486 = vadd.f32 %v358, %v485
        %487 = vdwg.mxu0
        %488 = vmatprep.subr.bf16.mxu0 0
        %489 = vmatpush1.bf16.msra.mxu0 %v398
        %490 = vmatprep.subr.bf16.mxu0 0
        %491 = vmatpush1.bf16.msra.mxu0 0
        %492 = vmatprep.subr.bf16.mxu0 0
        %493 = vmatpush1.bf16.msra.mxu0 0
        %494 = vmatprep.subr.bf16.mxu0 0
        %495 = vmatpush1.bf16.msra.mxu0 0
        %496 = vmatprep.subr.bf16.mxu0 0
        %497 = vmatpush1.bf16.msra.mxu0 0
        %498 = vmatprep.subr.bf16.mxu0 0
        %499 = vmatpush1.bf16.msra.mxu0 0
        %500 = vmatprep.subr.bf16.mxu0 0
        %501 = vmatpush1.bf16.msra.mxu0 0
        %502 = vmatprep.subr.bf16.mxu0 0
        %503 = vmatpush1.bf16.msra.mxu0 0
        %504 = vmatprep.subr.bf16.mxu0 0
        %505 = vmatpush1.bf16.msra.mxu0 0
        %506 = vmatprep.subr.bf16.mxu0 0
        %507 = vmatpush1.bf16.msra.mxu0 0
        %508 = vmatprep.subr.bf16.mxu0 0
        %509 = vmatpush1.bf16.msra.mxu0 0
        %510 = vmatprep.subr.bf16.mxu0 0
        %511 = vmatpush1.bf16.msra.mxu0 0
        %512 = vmatprep.subr.bf16.mxu0 0
        %513 = vmatpush1.bf16.msra.mxu0 0
        %514 = vmatprep.subr.bf16.mxu0 0
        %515 = vmatpush1.bf16.msra.mxu0 0
        %516 = vmatprep.subr.bf16.mxu0 0
        %517 = vmatpush1.bf16.msra.mxu0 0
        %518 = vmatprep.subr.bf16.mxu0 0
        %519 = vmatpush1.bf16.msra.mxu0 0
        %520 = vmatprep.mubr.bf16.mxu0 0
        %521 = vmatmul.mubr.bf16.gmra.mrb[0].mxu0 %v404
        %v522 = vpop.f32.mrb[0].mxu0
        %v523 = vadd.f32 %v362, %v522
        %v524 = vpop.f32.mrb[0].mxu0
        %v525 = vpop.f32.mrb[0].mxu0
        %v526 = vadd.f32 %v362, %v525
        %v527 = vpop.f32.mrb[0].mxu0
        %528 = vmatprep.mubr.bf16.mxu0 0
        %529 = vmatmul.mubr.bf16.gmra.mrb[0].mxu0 %v407
        %v530 = vpop.f32.mrb[0].mxu0
        %v531 = vadd.f32 %v362, %v530
        %v532 = vpop.f32.mrb[0].mxu0
        %v533 = vpop.f32.mrb[0].mxu0
        %v534 = vadd.f32 %v362, %v533
        %v535 = vpop.f32.mrb[0].mxu0
        %536 = vmatprep.mubr.bf16.mxu0 0
        %537 = vmatmul.mubr.bf16.gmra.mrb[0].mxu0 %v410
        %v538 = vpop.f32.mrb[0].mxu0
        %v539 = vadd.f32 %v362, %v538
        %v540 = vpop.f32.mrb[0].mxu0
        %v541 = vpop.f32.mrb[0].mxu0
        %v542 = vadd.f32 %v362, %v541
        %v543 = vpop.f32.mrb[0].mxu0
        %544 = vmatprep.mubr.bf16.mxu0 0
        %545 = vmatmul.mubr.bf16.gmra.mrb[0].mxu0 %v413
        %v546 = vpop.f32.mrb[0].mxu0
        %v547 = vadd.f32 %v362, %v546
        %v548 = vpop.f32.mrb[0].mxu0
        %v549 = vpop.f32.mrb[0].mxu0
        %v550 = vadd.f32 %v362, %v549
        %v551 = vpop.f32.mrb[0].mxu0
        %552 = vdwg.mxu0
        %553 = vst [vmem:[#allocation3] sm:$0xff] %v450
        %554 = vst [vmem:[#allocation3 + $0x8] sm:$0xff] %v452
        %555 = vst [vmem:[#allocation3 + $0x10] sm:$0xff] %v523
        %556 = vst [vmem:[#allocation3 + $0x18] sm:$0xff] %v454
        %557 = vst [vmem:[#allocation3 + $0x20] sm:$0xff] %v456
        %558 = vst [vmem:[#allocation3 + $0x28] sm:$0xff] %v526
        %559 = vst [vmem:[#allocation3 + $0x30] sm:$0xff] %v460
        %560 = vst [vmem:[#allocation3 + $0x38] sm:$0xff] %v462
        %561 = vst [vmem:[#allocation3 + $0x40] sm:$0xff] %v531
        %562 = vst [vmem:[#allocation3 + $0x48] sm:$0xff] %v464
        %563 = vst [vmem:[#allocation3 + $0x50] sm:$0xff] %v466
        %564 = vst [vmem:[#allocation3 + $0x58] sm:$0xff] %v534
        %565 = vst [vmem:[#allocation3 + $0x60] sm:$0xff] %v470
        %566 = vst [vmem:[#allocation3 + $0x68] sm:$0xff] %v472
        %567 = vst [vmem:[#allocation3 + $0x70] sm:$0xff] %v539
        %568 = vst [vmem:[#allocation3 + $0x78] sm:$0xff] %v474
        %569 = vst [vmem:[#allocation3 + $0x80] sm:$0xff] %v476
        %570 = vst [vmem:[#allocation3 + $0x88] sm:$0xff] %v542
        %571 = vst [vmem:[#allocation3 + $0x90] sm:$0xff] %v480
        %572 = vst [vmem:[#allocation3 + $0x98] sm:$0xff] %v482
        %573 = vst [vmem:[#allocation3 + $0xa0] sm:$0xff] %v547
        %574 = vst [vmem:[#allocation3 + $0xa8] sm:$0xff] %v484
        %575 = vst [vmem:[#allocation3 + $0xb0] sm:$0xff] %v486
        %576 = vst [vmem:[#allocation3 + $0xb8] sm:$0xff] %v550
        %s577 = scalar_lea.vmem %s4, 3
        %v578 = vld [vmem:[%s577] sm:$0x7]
        %v580 = vlaneseq
        %v581 = vshrl.u32 %v580, 7
        %v582 = vsub.s32 0, %v581
        %v583 = vrot.slane %v578, %v582
        %v584 = vlaneseq
        %v585 = vshrl.u32 %v584, 7
        %v586 = vsub.s32 1, %v585
        %v587 = vrot.slane %v578, %v586
        %v588 = vlaneseq
        %v589 = vshrl.u32 %v588, 7
        %v590 = vsub.s32 2, %v589
        %v591 = vrot.slane %v578, %v590
        %v595 = vld [vmem:[%s5] sm:$0x1]
        %v597 = vlaneseq
        %v598 = vshrl.u32 %v597, 7
        %v599 = vsub.s32 0, %v598
        %v600 = vrot.slane %v595, %v599
        %s602 = scalar_lea.vmem %s5, 1
        %v603 = vld [vmem:[%s602] sm:$0x1]
        %v605 = vlaneseq
        %v606 = vshrl.u32 %v605, 7
        %v607 = vsub.s32 0, %v606
        %v608 = vrot.slane %v603, %v607
        %v610 = vld [vmem:[#allocation2] sm:$0xff]
        %s611 = scalar_lea.vmem [#allocation2], 8
        %v612 = vld [vmem:[%s611] sm:$0xff]
        %v613 = vpack.c.bf16 %v610, %v610
        %v614 = vpack.c.bf16 %v612, %v612
        %v615 = vld [vmem:[#allocation10] sm:$0xff]
        %v616 = vld [vmem:[#allocation10 + $0x8] sm:$0xf]
        %v617 = vld [vmem:[#allocation10 + $0xc] sm:$0xff]
        %v618 = vld [vmem:[#allocation10 + $0x14] sm:$0xf]
        %v619 = vld [vmem:[#allocation10 + $0x18] sm:$0xff]
        %v620 = vld [vmem:[#allocation10 + $0x20] sm:$0xf]
        %v621 = vld [vmem:[#allocation10 + $0x24] sm:$0xff]
        %v622 = vld [vmem:[#allocation10 + $0x2c] sm:$0xf]
        %v623 = vld [vmem:[#allocation10 + $0x30] sm:$0xff]
        %v624 = vld [vmem:[#allocation10 + $0x38] sm:$0xf]
        %v625 = vld [vmem:[#allocation10 + $0x3c] sm:$0xff]
        %v626 = vld [vmem:[#allocation10 + $0x44] sm:$0xf]
        %v627 = vld [vmem:[#allocation10 + $0x48] sm:$0xff]
        %v628 = vld [vmem:[#allocation10 + $0x50] sm:$0xf]
        %v629 = vld [vmem:[#allocation10 + $0x54] sm:$0xff]
        %v630 = vld [vmem:[#allocation10 + $0x5c] sm:$0xf]
        %v631 = vld [vmem:[#allocation10 + $0x60] sm:$0xff]
        %v632 = vld [vmem:[#allocation10 + $0x68] sm:$0xf]
        %v633 = vld [vmem:[#allocation10 + $0x6c] sm:$0xff]
        %v634 = vld [vmem:[#allocation10 + $0x74] sm:$0xf]
        %v635 = vld [vmem:[#allocation10 + $0x78] sm:$0xff]
        %v636 = vld [vmem:[#allocation10 + $0x80] sm:$0xf]
        %v637 = vld [vmem:[#allocation10 + $0x84] sm:$0xff]
        %v638 = vld [vmem:[#allocation10 + $0x8c] sm:$0xf]
        %v639 = vld [vmem:[#allocation10 + $0x90] sm:$0xff]
        %v640 = vld [vmem:[#allocation10 + $0x98] sm:$0xf]
        %v641 = vld [vmem:[#allocation10 + $0x9c] sm:$0xff]
        %v642 = vld [vmem:[#allocation10 + $0xa4] sm:$0xf]
        %v643 = vld [vmem:[#allocation10 + $0xa8] sm:$0xff]
        %v644 = vld [vmem:[#allocation10 + $0xb0] sm:$0xf]
        %v645 = vld [vmem:[#allocation10 + $0xb4] sm:$0xff]
        %v646 = vld [vmem:[#allocation10 + $0xbc] sm:$0xf]
        %v679 = vunpack.c.l.b16 %v615
        %v680 = vunpack.c.h.b16 %v615
        %v681 = vunpack.c.l.b16 %v616
        %v682 = vunpack.c.l.b16 %v617
        %v683 = vunpack.c.h.b16 %v617
        %v684 = vunpack.c.l.b16 %v618
        %v685 = vunpack.c.l.b16 %v619
        %v686 = vunpack.c.h.b16 %v619
        %v687 = vunpack.c.l.b16 %v620
        %v688 = vunpack.c.l.b16 %v621
        %v689 = vunpack.c.h.b16 %v621
        %v690 = vunpack.c.l.b16 %v622
        %v691 = vunpack.c.l.b16 %v623
        %v692 = vunpack.c.h.b16 %v623
        %v693 = vunpack.c.l.b16 %v624
        %v694 = vunpack.c.l.b16 %v625
        %v695 = vunpack.c.h.b16 %v625
        %v696 = vunpack.c.l.b16 %v626
        %v697 = vunpack.c.l.b16 %v627
        %v698 = vunpack.c.h.b16 %v627
        %v699 = vunpack.c.l.b16 %v628
        %v700 = vunpack.c.l.b16 %v629
        %v701 = vunpack.c.h.b16 %v629
        %v702 = vunpack.c.l.b16 %v630
        %v703 = vunpack.c.l.b16 %v631
        %v704 = vunpack.c.h.b16 %v631
        %v705 = vunpack.c.l.b16 %v632
        %v706 = vunpack.c.l.b16 %v633
        %v707 = vunpack.c.h.b16 %v633
        %v708 = vunpack.c.l.b16 %v634
        %v709 = vunpack.c.l.b16 %v635
        %v710 = vunpack.c.h.b16 %v635
        %v711 = vunpack.c.l.b16 %v636
        %v712 = vunpack.c.l.b16 %v637
        %v713 = vunpack.c.h.b16 %v637
        %v714 = vunpack.c.l.b16 %v638
        %v715 = vunpack.c.l.b16 %v639
        %v716 = vunpack.c.h.b16 %v639
        %v717 = vunpack.c.l.b16 %v640
        %v718 = vunpack.c.l.b16 %v641
        %v719 = vunpack.c.h.b16 %v641
        %v720 = vunpack.c.l.b16 %v642
        %v721 = vunpack.c.l.b16 %v643
        %v722 = vunpack.c.h.b16 %v643
        %v723 = vunpack.c.l.b16 %v644
        %v724 = vunpack.c.l.b16 %v645
        %v725 = vunpack.c.h.b16 %v645
        %v726 = vunpack.c.l.b16 %v646
        %v727 = vpack.c.b16 %v682, %v679
        %v728 = vpack.c.b16 %v683, %v680
        %v729 = vpack.c.b16 %v684, %v681
        %v730 = vpack.c.b16 %v688, %v685
        %v731 = vpack.c.b16 %v689, %v686
        %v732 = vpack.c.b16 %v690, %v687
        %v733 = vpack.c.b16 %v694, %v691
        %v734 = vpack.c.b16 %v695, %v692
        %v735 = vpack.c.b16 %v696, %v693
        %v736 = vpack.c.b16 %v700, %v697
        %v737 = vpack.c.b16 %v701, %v698
        %v738 = vpack.c.b16 %v702, %v699
        %v739 = vpack.c.b16 %v706, %v703
        %v740 = vpack.c.b16 %v707, %v704
        %v741 = vpack.c.b16 %v708, %v705
        %v742 = vpack.c.b16 %v712, %v709
        %v743 = vpack.c.b16 %v713, %v710
        %v744 = vpack.c.b16 %v714, %v711
        %v745 = vpack.c.b16 %v718, %v715
        %v746 = vpack.c.b16 %v719, %v716
        %v747 = vpack.c.b16 %v720, %v717
        %v748 = vpack.c.b16 %v724, %v721
        %v749 = vpack.c.b16 %v725, %v722
        %v750 = vpack.c.b16 %v726, %v723
        %775 = vmatprep.subr.bf16.mxu0 %v728
        %776 = vmatpush1.bf16.msra.mxu0 %v727
        %777 = vmatprep.subr.bf16.mxu0 %v731
        %778 = vmatpush1.bf16.msra.mxu0 %v730
        %779 = vmatprep.subr.bf16.mxu0 %v734
        %780 = vmatpush1.bf16.msra.mxu0 %v733
        %781 = vmatprep.subr.bf16.mxu0 %v737
        %782 = vmatpush1.bf16.msra.mxu0 %v736
        %783 = vmatprep.subr.bf16.mxu0 %v740
        %784 = vmatpush1.bf16.msra.mxu0 %v739
        %785 = vmatprep.subr.bf16.mxu0 %v743
        %786 = vmatpush1.bf16.msra.mxu0 %v742
        %787 = vmatprep.subr.bf16.mxu0 %v746
        %788 = vmatpush1.bf16.msra.mxu0 %v745
        %789 = vmatprep.subr.bf16.mxu0 %v749
        %790 = vmatpush1.bf16.msra.mxu0 %v748
        %791 = vmatprep.subr.bf16.mxu0 0
        %792 = vmatpush1.bf16.msra.mxu0 0
        %793 = vmatprep.subr.bf16.mxu0 0
        %794 = vmatpush1.bf16.msra.mxu0 0
        %795 = vmatprep.subr.bf16.mxu0 0
        %796 = vmatpush1.bf16.msra.mxu0 0
        %797 = vmatprep.subr.bf16.mxu0 0
        %798 = vmatpush1.bf16.msra.mxu0 0
        %799 = vmatprep.subr.bf16.mxu0 0
        %800 = vmatpush1.bf16.msra.mxu0 0
        %801 = vmatprep.subr.bf16.mxu0 0
        %802 = vmatpush1.bf16.msra.mxu0 0
        %803 = vmatprep.subr.bf16.mxu0 0
        %804 = vmatpush1.bf16.msra.mxu0 0
        %805 = vmatprep.subr.bf16.mxu0 0
        %806 = vmatpush1.bf16.msra.mxu0 0
        %807 = vmatprep.mubr.bf16.mxu0 0
        %808 = vmatmul.mubr.bf16.gmra.mrb[0].mxu0 %v613
        %v809 = vpop.f32.mrb[0].mxu0
        %v810 = vadd.f32 0.0, %v809
        %v811 = vpop.f32.mrb[0].mxu0
        %v812 = vadd.f32 0.0, %v811
        %v813 = vpop.f32.mrb[0].mxu0
        %v814 = vpop.f32.mrb[0].mxu0
        %815 = vdwg.mxu0
        %816 = vmatprep.subr.bf16.mxu0 0
        %817 = vmatpush1.bf16.msra.mxu0 %v729
        %818 = vmatprep.subr.bf16.mxu0 0
        %819 = vmatpush1.bf16.msra.mxu0 %v732
        %820 = vmatprep.subr.bf16.mxu0 0
        %821 = vmatpush1.bf16.msra.mxu0 %v735
        %822 = vmatprep.subr.bf16.mxu0 0
        %823 = vmatpush1.bf16.msra.mxu0 %v738
        %824 = vmatprep.subr.bf16.mxu0 0
        %825 = vmatpush1.bf16.msra.mxu0 %v741
        %826 = vmatprep.subr.bf16.mxu0 0
        %827 = vmatpush1.bf16.msra.mxu0 %v744
        %828 = vmatprep.subr.bf16.mxu0 0
        %829 = vmatpush1.bf16.msra.mxu0 %v747
        %830 = vmatprep.subr.bf16.mxu0 0
        %831 = vmatpush1.bf16.msra.mxu0 %v750
        %832 = vmatprep.subr.bf16.mxu0 0
        %833 = vmatpush1.bf16.msra.mxu0 0
        %834 = vmatprep.subr.bf16.mxu0 0
        %835 = vmatpush1.bf16.msra.mxu0 0
        %836 = vmatprep.subr.bf16.mxu0 0
        %837 = vmatpush1.bf16.msra.mxu0 0
        %838 = vmatprep.subr.bf16.mxu0 0
        %839 = vmatpush1.bf16.msra.mxu0 0
        %840 = vmatprep.subr.bf16.mxu0 0
        %841 = vmatpush1.bf16.msra.mxu0 0
        %842 = vmatprep.subr.bf16.mxu0 0
        %843 = vmatpush1.bf16.msra.mxu0 0
        %844 = vmatprep.subr.bf16.mxu0 0
        %845 = vmatpush1.bf16.msra.mxu0 0
        %846 = vmatprep.subr.bf16.mxu0 0
        %847 = vmatpush1.bf16.msra.mxu0 0
        %848 = vmatprep.mubr.bf16.mxu0 0
        %849 = vmatmul.mubr.bf16.gmra.mrb[0].mxu0 %v613
        %v850 = vpop.f32.mrb[0].mxu0
        %v851 = vadd.f32 0.0, %v850
        %v852 = vpop.f32.mrb[0].mxu0
        %v853 = vpop.f32.mrb[0].mxu0
        %v854 = vpop.f32.mrb[0].mxu0
        %855 = vdwg.mxu0
        %s856 = scalar_lea.vmem [#allocation10], 192
        %v857 = vld [vmem:[%s856] sm:$0xff]
        %v858 = vld [vmem:[%s856 + $0x8] sm:$0xf]
        %v859 = vld [vmem:[%s856 + $0xc] sm:$0xff]
        %v860 = vld [vmem:[%s856 + $0x14] sm:$0xf]
        %v861 = vld [vmem:[%s856 + $0x18] sm:$0xff]
        %v862 = vld [vmem:[%s856 + $0x20] sm:$0xf]
        %v863 = vld [vmem:[%s856 + $0x24] sm:$0xff]
        %v864 = vld [vmem:[%s856 + $0x2c] sm:$0xf]
        %v865 = vld [vmem:[%s856 + $0x30] sm:$0xff]
        %v866 = vld [vmem:[%s856 + $0x38] sm:$0xf]
        %v867 = vld [vmem:[%s856 + $0x3c] sm:$0xff]
        %v868 = vld [vmem:[%s856 + $0x44] sm:$0xf]
        %v869 = vld [vmem:[%s856 + $0x48] sm:$0xff]
        %v870 = vld [vmem:[%s856 + $0x50] sm:$0xf]
        %v871 = vld [vmem:[%s856 + $0x54] sm:$0xff]
        %v872 = vld [vmem:[%s856 + $0x5c] sm:$0xf]
        %v873 = vld [vmem:[%s856 + $0x60] sm:$0xff]
        %v874 = vld [vmem:[%s856 + $0x68] sm:$0xf]
        %v875 = vld [vmem:[%s856 + $0x6c] sm:$0xff]
        %v876 = vld [vmem:[%s856 + $0x74] sm:$0xf]
        %v877 = vld [vmem:[%s856 + $0x78] sm:$0xff]
        %v878 = vld [vmem:[%s856 + $0x80] sm:$0xf]
        %v879 = vld [vmem:[%s856 + $0x84] sm:$0xff]
        %v880 = vld [vmem:[%s856 + $0x8c] sm:$0xf]
        %v881 = vld [vmem:[%s856 + $0x90] sm:$0xff]
        %v882 = vld [vmem:[%s856 + $0x98] sm:$0xf]
        %v883 = vld [vmem:[%s856 + $0x9c] sm:$0xff]
        %v884 = vld [vmem:[%s856 + $0xa4] sm:$0xf]
        %v885 = vld [vmem:[%s856 + $0xa8] sm:$0xff]
        %v886 = vld [vmem:[%s856 + $0xb0] sm:$0xf]
        %v887 = vld [vmem:[%s856 + $0xb4] sm:$0xff]
        %v888 = vld [vmem:[%s856 + $0xbc] sm:$0xf]
        %v921 = vunpack.c.l.b16 %v857
        %v922 = vunpack.c.h.b16 %v857
        %v923 = vunpack.c.l.b16 %v858
        %v924 = vunpack.c.l.b16 %v859
        %v925 = vunpack.c.h.b16 %v859
        %v926 = vunpack.c.l.b16 %v860
        %v927 = vunpack.c.l.b16 %v861
        %v928 = vunpack.c.h.b16 %v861
        %v929 = vunpack.c.l.b16 %v862
        %v930 = vunpack.c.l.b16 %v863
        %v931 = vunpack.c.h.b16 %v863
        %v932 = vunpack.c.l.b16 %v864
        %v933 = vunpack.c.l.b16 %v865
        %v934 = vunpack.c.h.b16 %v865
        %v935 = vunpack.c.l.b16 %v866
        %v936 = vunpack.c.l.b16 %v867
        %v937 = vunpack.c.h.b16 %v867
        %v938 = vunpack.c.l.b16 %v868
        %v939 = vunpack.c.l.b16 %v869
        %v940 = vunpack.c.h.b16 %v869
        %v941 = vunpack.c.l.b16 %v870
        %v942 = vunpack.c.l.b16 %v871
        %v943 = vunpack.c.h.b16 %v871
        %v944 = vunpack.c.l.b16 %v872
        %v945 = vunpack.c.l.b16 %v873
        %v946 = vunpack.c.h.b16 %v873
        %v947 = vunpack.c.l.b16 %v874
        %v948 = vunpack.c.l.b16 %v875
        %v949 = vunpack.c.h.b16 %v875
        %v950 = vunpack.c.l.b16 %v876
        %v951 = vunpack.c.l.b16 %v877
        %v952 = vunpack.c.h.b16 %v877
        %v953 = vunpack.c.l.b16 %v878
        %v954 = vunpack.c.l.b16 %v879
        %v955 = vunpack.c.h.b16 %v879
        %v956 = vunpack.c.l.b16 %v880
        %v957 = vunpack.c.l.b16 %v881
        %v958 = vunpack.c.h.b16 %v881
        %v959 = vunpack.c.l.b16 %v882
        %v960 = vunpack.c.l.b16 %v883
        %v961 = vunpack.c.h.b16 %v883
        %v962 = vunpack.c.l.b16 %v884
        %v963 = vunpack.c.l.b16 %v885
        %v964 = vunpack.c.h.b16 %v885
        %v965 = vunpack.c.l.b16 %v886
        %v966 = vunpack.c.l.b16 %v887
        %v967 = vunpack.c.h.b16 %v887
        %v968 = vunpack.c.l.b16 %v888
        %v969 = vpack.c.b16 %v924, %v921
        %v970 = vpack.c.b16 %v925, %v922
        %v971 = vpack.c.b16 %v926, %v923
        %v972 = vpack.c.b16 %v930, %v927
        %v973 = vpack.c.b16 %v931, %v928
        %v974 = vpack.c.b16 %v932, %v929
        %v975 = vpack.c.b16 %v936, %v933
        %v976 = vpack.c.b16 %v937, %v934
        %v977 = vpack.c.b16 %v938, %v935
        %v978 = vpack.c.b16 %v942, %v939
        %v979 = vpack.c.b16 %v943, %v940
        %v980 = vpack.c.b16 %v944, %v941
        %v981 = vpack.c.b16 %v948, %v945
        %v982 = vpack.c.b16 %v949, %v946
        %v983 = vpack.c.b16 %v950, %v947
        %v984 = vpack.c.b16 %v954, %v951
        %v985 = vpack.c.b16 %v955, %v952
        %v986 = vpack.c.b16 %v956, %v953
        %v987 = vpack.c.b16 %v960, %v957
        %v988 = vpack.c.b16 %v961, %v958
        %v989 = vpack.c.b16 %v962, %v959
        %v990 = vpack.c.b16 %v966, %v963
        %v991 = vpack.c.b16 %v967, %v964
        %v992 = vpack.c.b16 %v968, %v965
        %1017 = vmatprep.subr.bf16.mxu0 %v970
        %1018 = vmatpush1.bf16.msra.mxu0 %v969
        %1019 = vmatprep.subr.bf16.mxu0 %v973
        %1020 = vmatpush1.bf16.msra.mxu0 %v972
        %1021 = vmatprep.subr.bf16.mxu0 %v976
        %1022 = vmatpush1.bf16.msra.mxu0 %v975
        %1023 = vmatprep.subr.bf16.mxu0 %v979
        %1024 = vmatpush1.bf16.msra.mxu0 %v978
        %1025 = vmatprep.subr.bf16.mxu0 %v982
        %1026 = vmatpush1.bf16.msra.mxu0 %v981
        %1027 = vmatprep.subr.bf16.mxu0 %v985
        %1028 = vmatpush1.bf16.msra.mxu0 %v984
        %1029 = vmatprep.subr.bf16.mxu0 %v988
        %1030 = vmatpush1.bf16.msra.mxu0 %v987
        %1031 = vmatprep.subr.bf16.mxu0 %v991
        %1032 = vmatpush1.bf16.msra.mxu0 %v990
        %1033 = vmatprep.subr.bf16.mxu0 0
        %1034 = vmatpush1.bf16.msra.mxu0 0
        %1035 = vmatprep.subr.bf16.mxu0 0
        %1036 = vmatpush1.bf16.msra.mxu0 0
        %1037 = vmatprep.subr.bf16.mxu0 0
        %1038 = vmatpush1.bf16.msra.mxu0 0
        %1039 = vmatprep.subr.bf16.mxu0 0
        %1040 = vmatpush1.bf16.msra.mxu0 0
        %1041 = vmatprep.subr.bf16.mxu0 0
        %1042 = vmatpush1.bf16.msra.mxu0 0
        %1043 = vmatprep.subr.bf16.mxu0 0
        %1044 = vmatpush1.bf16.msra.mxu0 0
        %1045 = vmatprep.subr.bf16.mxu0 0
        %1046 = vmatpush1.bf16.msra.mxu0 0
        %1047 = vmatprep.subr.bf16.mxu0 0
        %1048 = vmatpush1.bf16.msra.mxu0 0
        %1049 = vmatprep.mubr.bf16.mxu0 0
        %1050 = vmatmul.mubr.bf16.gmra.mrb[0].mxu0 %v614
        %v1051 = vpop.f32.mrb[0].mxu0
        %v1052 = vadd.f32 0.0, %v1051
        %v1053 = vpop.f32.mrb[0].mxu0
        %v1054 = vadd.f32 0.0, %v1053
        %v1055 = vpop.f32.mrb[0].mxu0
        %v1056 = vpop.f32.mrb[0].mxu0
        %1057 = vdwg.mxu0
        %1058 = vmatprep.subr.bf16.mxu0 0
        %1059 = vmatpush1.bf16.msra.mxu0 %v971
        %1060 = vmatprep.subr.bf16.mxu0 0
        %1061 = vmatpush1.bf16.msra.mxu0 %v974
        %1062 = vmatprep.subr.bf16.mxu0 0
        %1063 = vmatpush1.bf16.msra.mxu0 %v977
        %1064 = vmatprep.subr.bf16.mxu0 0
        %1065 = vmatpush1.bf16.msra.mxu0 %v980
        %1066 = vmatprep.subr.bf16.mxu0 0
        %1067 = vmatpush1.bf16.msra.mxu0 %v983
        %1068 = vmatprep.subr.bf16.mxu0 0
        %1069 = vmatpush1.bf16.msra.mxu0 %v986
        %1070 = vmatprep.subr.bf16.mxu0 0
        %1071 = vmatpush1.bf16.msra.mxu0 %v989
        %1072 = vmatprep.subr.bf16.mxu0 0
        %1073 = vmatpush1.bf16.msra.mxu0 %v992
        %1074 = vmatprep.subr.bf16.mxu0 0
        %1075 = vmatpush1.bf16.msra.mxu0 0
        %1076 = vmatprep.subr.bf16.mxu0 0
        %1077 = vmatpush1.bf16.msra.mxu0 0
        %1078 = vmatprep.subr.bf16.mxu0 0
        %1079 = vmatpush1.bf16.msra.mxu0 0
        %1080 = vmatprep.subr.bf16.mxu0 0
        %1081 = vmatpush1.bf16.msra.mxu0 0
        %1082 = vmatprep.subr.bf16.mxu0 0
        %1083 = vmatpush1.bf16.msra.mxu0 0
        %1084 = vmatprep.subr.bf16.mxu0 0
        %1085 = vmatpush1.bf16.msra.mxu0 0
        %1086 = vmatprep.subr.bf16.mxu0 0
        %1087 = vmatpush1.bf16.msra.mxu0 0
        %1088 = vmatprep.subr.bf16.mxu0 0
        %1089 = vmatpush1.bf16.msra.mxu0 0
        %1090 = vmatprep.mubr.bf16.mxu0 0
        %1091 = vmatmul.mubr.bf16.gmra.mrb[0].mxu0 %v614
        %v1092 = vpop.f32.mrb[0].mxu0
        %v1093 = vadd.f32 0.0, %v1092
        %v1094 = vpop.f32.mrb[0].mxu0
        %v1095 = vpop.f32.mrb[0].mxu0
        %v1096 = vpop.f32.mrb[0].mxu0
        %1097 = vdwg.mxu0
        %v1098 = vld [vmem:[#allocation3] ss:$8 sm:$0x7]
        %s1099 = scalar_lea.vmem [#allocation3], 24
        %v1100 = vld [vmem:[%s1099] ss:$8 sm:$0x7]
        %s1101 = scalar_lea.vmem [#allocation3], 48
        %v1102 = vld [vmem:[%s1101] ss:$8 sm:$0x7]
        %s1103 = scalar_lea.vmem [#allocation3], 72
        %v1104 = vld [vmem:[%s1103] ss:$8 sm:$0x7]
        %s1105 = scalar_lea.vmem [#allocation3], 96
        %v1106 = vld [vmem:[%s1105] ss:$8 sm:$0x7]
        %s1107 = scalar_lea.vmem [#allocation3], 120
        %v1108 = vld [vmem:[%s1107] ss:$8 sm:$0x7]
        %s1109 = scalar_lea.vmem [#allocation3], 144
        %v1110 = vld [vmem:[%s1109] ss:$8 sm:$0x7]
        %s1111 = scalar_lea.vmem [#allocation3], 168
        %v1112 = vld [vmem:[%s1111] ss:$8 sm:$0x7]
        %v1114 = vcombine.high %v810, %v810
        %v1116 = vunpack.c.l.s4 1966171168
        %v1117 = vunpack.c.0.s8 %v1116
        %v1118 = vlaneseq
        %v1119 = vshrl.u32 %v1118, 7
        %v1120 = vsub.s32 %v1117, %v1119
        %v1121 = vrot.slane %v810, %v1120
        %v1123 = vunpack.c.l.s4 1966171168
        %v1124 = vunpack.c.0.s8 %v1123
        %v1125 = vlaneseq
        %v1126 = vshrl.u32 %v1125, 7
        %v1127 = vsub.s32 %v1124, %v1126
        %v1128 = vrot.slane %v1114, %v1127
        %v1129 = vcombine.high %v1121, %v1121
        %v1130 = vcombine.high %v1128, %v1128
        %v1132 = vunpack.c.l.s4 1966171168
        %v1133 = vunpack.c.0.s8 %v1132
        %v1134 = vlaneseq
        %v1135 = vshrl.u32 %v1134, 7
        %v1136 = vsub.s32 %v1133, %v1135
        %v1137 = vrot.slane %v1121, %v1136
        %v1139 = vunpack.c.l.s4 1966171168
        %v1140 = vunpack.c.0.s8 %v1139
        %v1141 = vlaneseq
        %v1142 = vshrl.u32 %v1141, 7
        %v1143 = vsub.s32 %v1140, %v1142
        %v1144 = vrot.slane %v1128, %v1143
        %v1146 = vunpack.c.l.s4 1966171168
        %v1147 = vunpack.c.0.s8 %v1146
        %v1148 = vlaneseq
        %v1149 = vshrl.u32 %v1148, 7
        %v1150 = vsub.s32 %v1147, %v1149
        %v1151 = vrot.slane %v1129, %v1150
        %v1153 = vunpack.c.l.s4 1966171168
        %v1154 = vunpack.c.0.s8 %v1153
        %v1155 = vlaneseq
        %v1156 = vshrl.u32 %v1155, 7
        %v1157 = vsub.s32 %v1154, %v1156
        %v1158 = vrot.slane %v1130, %v1157
        %v1159 = vcombine.high %v1137, %v1137
        %v1160 = vcombine.high %v1144, %v1144
        %v1161 = vcombine.high %v1151, %v1151
        %v1162 = vcombine.high %v1158, %v1158
        %v1171 = vadd.f32 %v1098, %v1137
        %v1172 = vadd.f32 %v1100, %v1151
        %v1173 = vadd.f32 %v1102, %v1159
        %v1174 = vadd.f32 %v1104, %v1161
        %v1175 = vadd.f32 %v1106, %v1144
        %v1176 = vadd.f32 %v1108, %v1158
        %v1177 = vadd.f32 %v1110, %v1160
        %v1178 = vadd.f32 %v1112, %v1162
        %v1179 = vxor.u32 %v1171, 2147483648
        %v1180 = vxor.u32 %v1172, 2147483648
        %v1181 = vxor.u32 %v1173, 2147483648
        %v1182 = vxor.u32 %v1174, 2147483648
        %v1183 = vxor.u32 %v1175, 2147483648
        %v1184 = vxor.u32 %v1176, 2147483648
        %v1185 = vxor.u32 %v1177, 2147483648
        %v1186 = vxor.u32 %v1178, 2147483648
        %v1187 = vmul.f32 %v1179, 1.442695
        %v1188 = vpow.pop %v1187
        %v1189 = vmul.f32 %v1180, 1.442695
        %v1190 = vpow.pop %v1189
        %v1191 = vmul.f32 %v1181, 1.442695
        %v1192 = vpow.pop %v1191
        %v1193 = vmul.f32 %v1182, 1.442695
        %v1194 = vpow.pop %v1193
        %v1195 = vmul.f32 %v1183, 1.442695
        %v1196 = vpow.pop %v1195
        %v1197 = vmul.f32 %v1184, 1.442695
        %v1198 = vpow.pop %v1197
        %v1199 = vmul.f32 %v1185, 1.442695
        %v1200 = vpow.pop %v1199
        %v1201 = vmul.f32 %v1186, 1.442695
        %v1202 = vpow.pop %v1201
        %v1203 = vadd.f32 %v1188, 1.0
        %v1204 = vadd.f32 %v1190, 1.0
        %v1205 = vadd.f32 %v1192, 1.0
        %v1206 = vadd.f32 %v1194, 1.0
        %v1207 = vadd.f32 %v1196, 1.0
        %v1208 = vadd.f32 %v1198, 1.0
        %v1209 = vadd.f32 %v1200, 1.0
        %v1210 = vadd.f32 %v1202, 1.0
        %v1211 = vrcp.pop %v1203
        %v1212 = vmul.f32 1.0, %v1211
        %v1213 = vrcp.pop %v1204
        %v1214 = vmul.f32 1.0, %v1213
        %v1215 = vrcp.pop %v1205
        %v1216 = vmul.f32 1.0, %v1215
        %v1217 = vrcp.pop %v1206
        %v1218 = vmul.f32 1.0, %v1217
        %v1219 = vrcp.pop %v1207
        %v1220 = vmul.f32 1.0, %v1219
        %v1221 = vrcp.pop %v1208
        %v1222 = vmul.f32 1.0, %v1221
        %v1223 = vrcp.pop %v1209
        %v1224 = vmul.f32 1.0, %v1223
        %v1225 = vrcp.pop %v1210
        %v1226 = vmul.f32 1.0, %v1225
        %v1235 = vrot.slane %v1098, 1
        %v1236 = vrot.slane %v1100, 1
        %v1237 = vrot.slane %v1102, 1
        %v1238 = vrot.slane %v1104, 1
        %v1239 = vrot.slane %v1106, 1
        %v1240 = vrot.slane %v1108, 1
        %v1241 = vrot.slane %v1110, 1
        %v1242 = vrot.slane %v1112, 1
        %v1252 = vcombine.high %v812, %v812
        %v1254 = vunpack.c.l.s4 1966171168
        %v1255 = vunpack.c.0.s8 %v1254
        %v1256 = vlaneseq
        %v1257 = vshrl.u32 %v1256, 7
        %v1258 = vsub.s32 %v1255, %v1257
        %v1259 = vrot.slane %v812, %v1258
        %v1261 = vunpack.c.l.s4 1966171168
        %v1262 = vunpack.c.0.s8 %v1261
        %v1263 = vlaneseq
        %v1264 = vshrl.u32 %v1263, 7
        %v1265 = vsub.s32 %v1262, %v1264
        %v1266 = vrot.slane %v1252, %v1265
        %v1267 = vcombine.high %v1259, %v1259
        %v1268 = vcombine.high %v1266, %v1266
        %v1270 = vunpack.c.l.s4 1966171168
        %v1271 = vunpack.c.0.s8 %v1270
        %v1272 = vlaneseq
        %v1273 = vshrl.u32 %v1272, 7
        %v1274 = vsub.s32 %v1271, %v1273
        %v1275 = vrot.slane %v1259, %v1274
        %v1277 = vunpack.c.l.s4 1966171168
        %v1278 = vunpack.c.0.s8 %v1277
        %v1279 = vlaneseq
        %v1280 = vshrl.u32 %v1279, 7
        %v1281 = vsub.s32 %v1278, %v1280
        %v1282 = vrot.slane %v1266, %v1281
        %v1284 = vunpack.c.l.s4 1966171168
        %v1285 = vunpack.c.0.s8 %v1284
        %v1286 = vlaneseq
        %v1287 = vshrl.u32 %v1286, 7
        %v1288 = vsub.s32 %v1285, %v1287
        %v1289 = vrot.slane %v1267, %v1288
        %v1291 = vunpack.c.l.s4 1966171168
        %v1292 = vunpack.c.0.s8 %v1291
        %v1293 = vlaneseq
        %v1294 = vshrl.u32 %v1293, 7
        %v1295 = vsub.s32 %v1292, %v1294
        %v1296 = vrot.slane %v1268, %v1295
        %v1297 = vcombine.high %v1275, %v1275
        %v1298 = vcombine.high %v1282, %v1282
        %v1299 = vcombine.high %v1289, %v1289
        %v1300 = vcombine.high %v1296, %v1296
        %v1309 = vadd.f32 %v1235, %v1275
        %v1310 = vadd.f32 %v1236, %v1289
        %v1311 = vadd.f32 %v1237, %v1297
        %v1312 = vadd.f32 %v1238, %v1299
        %v1313 = vadd.f32 %v1239, %v1282
        %v1314 = vadd.f32 %v1240, %v1296
        %v1315 = vadd.f32 %v1241, %v1298
        %v1316 = vadd.f32 %v1242, %v1300
        %v1317 = vxor.u32 %v1309, 2147483648
        %v1318 = vxor.u32 %v1310, 2147483648
        %v1319 = vxor.u32 %v1311, 2147483648
        %v1320 = vxor.u32 %v1312, 2147483648
        %v1321 = vxor.u32 %v1313, 2147483648
        %v1322 = vxor.u32 %v1314, 2147483648
        %v1323 = vxor.u32 %v1315, 2147483648
        %v1324 = vxor.u32 %v1316, 2147483648
        %v1325 = vmul.f32 %v1317, 1.442695
        %v1326 = vpow.pop %v1325
        %v1327 = vmul.f32 %v1318, 1.442695
        %v1328 = vpow.pop %v1327
        %v1329 = vmul.f32 %v1319, 1.442695
        %v1330 = vpow.pop %v1329
        %v1331 = vmul.f32 %v1320, 1.442695
        %v1332 = vpow.pop %v1331
        %v1333 = vmul.f32 %v1321, 1.442695
        %v1334 = vpow.pop %v1333
        %v1335 = vmul.f32 %v1322, 1.442695
        %v1336 = vpow.pop %v1335
        %v1337 = vmul.f32 %v1323, 1.442695
        %v1338 = vpow.pop %v1337
        %v1339 = vmul.f32 %v1324, 1.442695
        %v1340 = vpow.pop %v1339
        %v1341 = vadd.f32 %v1326, 1.0
        %v1342 = vadd.f32 %v1328, 1.0
        %v1343 = vadd.f32 %v1330, 1.0
        %v1344 = vadd.f32 %v1332, 1.0
        %v1345 = vadd.f32 %v1334, 1.0
        %v1346 = vadd.f32 %v1336, 1.0
        %v1347 = vadd.f32 %v1338, 1.0
        %v1348 = vadd.f32 %v1340, 1.0
        %v1349 = vrcp.pop %v1341
        %v1350 = vmul.f32 1.0, %v1349
        %v1351 = vrcp.pop %v1342
        %v1352 = vmul.f32 1.0, %v1351
        %v1353 = vrcp.pop %v1343
        %v1354 = vmul.f32 1.0, %v1353
        %v1355 = vrcp.pop %v1344
        %v1356 = vmul.f32 1.0, %v1355
        %v1357 = vrcp.pop %v1345
        %v1358 = vmul.f32 1.0, %v1357
        %v1359 = vrcp.pop %v1346
        %v1360 = vmul.f32 1.0, %v1359
        %v1361 = vrcp.pop %v1347
        %v1362 = vmul.f32 1.0, %v1361
        %v1363 = vrcp.pop %v1348
        %v1364 = vmul.f32 1.0, %v1363
        %v1365 = vadd.f32 %v851, %v600
        %v1367 = vcombine.high %v1365, %v1365
        %v1369 = vunpack.c.l.s4 1966171168
        %v1370 = vunpack.c.0.s8 %v1369
        %v1371 = vlaneseq
        %v1372 = vshrl.u32 %v1371, 7
        %v1373 = vsub.s32 %v1370, %v1372
        %v1374 = vrot.slane %v1365, %v1373
        %v1376 = vunpack.c.l.s4 1966171168
        %v1377 = vunpack.c.0.s8 %v1376
        %v1378 = vlaneseq
        %v1379 = vshrl.u32 %v1378, 7
        %v1380 = vsub.s32 %v1377, %v1379
        %v1381 = vrot.slane %v1367, %v1380
        %v1382 = vcombine.high %v1374, %v1374
        %v1383 = vcombine.high %v1381, %v1381
        %v1385 = vunpack.c.l.s4 1966171168
        %v1386 = vunpack.c.0.s8 %v1385
        %v1387 = vlaneseq
        %v1388 = vshrl.u32 %v1387, 7
        %v1389 = vsub.s32 %v1386, %v1388
        %v1390 = vrot.slane %v1374, %v1389
        %v1392 = vunpack.c.l.s4 1966171168
        %v1393 = vunpack.c.0.s8 %v1392
        %v1394 = vlaneseq
        %v1395 = vshrl.u32 %v1394, 7
        %v1396 = vsub.s32 %v1393, %v1395
        %v1397 = vrot.slane %v1381, %v1396
        %v1399 = vunpack.c.l.s4 1966171168
        %v1400 = vunpack.c.0.s8 %v1399
        %v1401 = vlaneseq
        %v1402 = vshrl.u32 %v1401, 7
        %v1403 = vsub.s32 %v1400, %v1402
        %v1404 = vrot.slane %v1382, %v1403
        %v1406 = vunpack.c.l.s4 1966171168
        %v1407 = vunpack.c.0.s8 %v1406
        %v1408 = vlaneseq
        %v1409 = vshrl.u32 %v1408, 7
        %v1410 = vsub.s32 %v1407, %v1409
        %v1411 = vrot.slane %v1383, %v1410
        %v1412 = vcombine.high %v1390, %v1390
        %v1413 = vcombine.high %v1397, %v1397
        %v1414 = vcombine.high %v1404, %v1404
        %v1415 = vcombine.high %v1411, %v1411
        %v1424 = vmul.f32 %v1212, %v1390
        %v1425 = vmul.f32 %v1214, %v1404
        %v1426 = vmul.f32 %v1216, %v1412
        %v1427 = vmul.f32 %v1218, %v1414
        %v1428 = vmul.f32 %v1220, %v1397
        %v1429 = vmul.f32 %v1222, %v1411
        %v1430 = vmul.f32 %v1224, %v1413
        %v1431 = vmul.f32 %v1226, %v1415
        %v1432 = vrot.slane %v1098, 2
        %v1433 = vrot.slane %v1100, 2
        %v1434 = vrot.slane %v1102, 2
        %v1435 = vrot.slane %v1104, 2
        %v1436 = vrot.slane %v1106, 2
        %v1437 = vrot.slane %v1108, 2
        %v1438 = vrot.slane %v1110, 2
        %v1439 = vrot.slane %v1112, 2
        %v1448 = vadd.f32 %v1432, %v1424
        %v1449 = vadd.f32 %v1433, %v1425
        %v1450 = vadd.f32 %v1434, %v1426
        %v1451 = vadd.f32 %v1435, %v1427
        %v1452 = vadd.f32 %v1436, %v1428
        %v1453 = vadd.f32 %v1437, %v1429
        %v1454 = vadd.f32 %v1438, %v1430
        %v1455 = vadd.f32 %v1439, %v1431
        %v1456 = vtanh.pop %v1448
        %v1457 = vtanh.pop %v1449
        %v1458 = vtanh.pop %v1450
        %v1459 = vtanh.pop %v1451
        %v1460 = vtanh.pop %v1452
        %v1461 = vtanh.pop %v1453
        %v1462 = vtanh.pop %v1454
        %v1463 = vtanh.pop %v1455
        %v1464 = vsub.f32 1.0, %v1350
        %v1465 = vsub.f32 1.0, %v1352
        %v1466 = vsub.f32 1.0, %v1354
        %v1467 = vsub.f32 1.0, %v1356
        %v1468 = vsub.f32 1.0, %v1358
        %v1469 = vsub.f32 1.0, %v1360
        %v1470 = vsub.f32 1.0, %v1362
        %v1471 = vsub.f32 1.0, %v1364
        %v1472 = vmul.f32 %v1464, %v1456
        %v1473 = vmul.f32 %v1465, %v1457
        %v1474 = vmul.f32 %v1466, %v1458
        %v1475 = vmul.f32 %v1467, %v1459
        %v1476 = vmul.f32 %v1468, %v1460
        %v1477 = vmul.f32 %v1469, %v1461
        %v1478 = vmul.f32 %v1470, %v1462
        %v1479 = vmul.f32 %v1471, %v1463
        %v1481 = vcombine.high %v610, %v610
        %v1483 = vunpack.c.l.s4 1966171168
        %v1484 = vunpack.c.0.s8 %v1483
        %v1485 = vlaneseq
        %v1486 = vshrl.u32 %v1485, 7
        %v1487 = vsub.s32 %v1484, %v1486
        %v1488 = vrot.slane %v610, %v1487
        %v1490 = vunpack.c.l.s4 1966171168
        %v1491 = vunpack.c.0.s8 %v1490
        %v1492 = vlaneseq
        %v1493 = vshrl.u32 %v1492, 7
        %v1494 = vsub.s32 %v1491, %v1493
        %v1495 = vrot.slane %v1481, %v1494
        %v1496 = vcombine.high %v1488, %v1488
        %v1497 = vcombine.high %v1495, %v1495
        %v1499 = vunpack.c.l.s4 1966171168
        %v1500 = vunpack.c.0.s8 %v1499
        %v1501 = vlaneseq
        %v1502 = vshrl.u32 %v1501, 7
        %v1503 = vsub.s32 %v1500, %v1502
        %v1504 = vrot.slane %v1488, %v1503
        %v1506 = vunpack.c.l.s4 1966171168
        %v1507 = vunpack.c.0.s8 %v1506
        %v1508 = vlaneseq
        %v1509 = vshrl.u32 %v1508, 7
        %v1510 = vsub.s32 %v1507, %v1509
        %v1511 = vrot.slane %v1495, %v1510
        %v1513 = vunpack.c.l.s4 1966171168
        %v1514 = vunpack.c.0.s8 %v1513
        %v1515 = vlaneseq
        %v1516 = vshrl.u32 %v1515, 7
        %v1517 = vsub.s32 %v1514, %v1516
        %v1518 = vrot.slane %v1496, %v1517
        %v1520 = vunpack.c.l.s4 1966171168
        %v1521 = vunpack.c.0.s8 %v1520
        %v1522 = vlaneseq
        %v1523 = vshrl.u32 %v1522, 7
        %v1524 = vsub.s32 %v1521, %v1523
        %v1525 = vrot.slane %v1497, %v1524
        %v1526 = vcombine.high %v1504, %v1504
        %v1527 = vcombine.high %v1511, %v1511
        %v1528 = vcombine.high %v1518, %v1518
        %v1529 = vcombine.high %v1525, %v1525
        %v1538 = vmul.f32 %v1350, %v1504
        %v1539 = vmul.f32 %v1352, %v1518
        %v1540 = vmul.f32 %v1354, %v1526
        %v1541 = vmul.f32 %v1356, %v1528
        %v1542 = vmul.f32 %v1358, %v1511
        %v1543 = vmul.f32 %v1360, %v1525
        %v1544 = vmul.f32 %v1362, %v1527
        %v1545 = vmul.f32 %v1364, %v1529
        %v1546 = vadd.f32 %v1472, %v1538
        %v1547 = vadd.f32 %v1473, %v1539
        %v1548 = vadd.f32 %v1474, %v1540
        %v1549 = vadd.f32 %v1475, %v1541
        %v1550 = vadd.f32 %v1476, %v1542
        %v1551 = vadd.f32 %v1477, %v1543
        %v1552 = vadd.f32 %v1478, %v1544
        %v1553 = vadd.f32 %v1479, %v1545
        %v1554 = vpack.c.bf16 %v1546, %v1546
        %v1555 = vpack.c.bf16 %v1547, %v1547
        %v1556 = vpack.c.bf16 %v1548, %v1548
        %v1557 = vpack.c.bf16 %v1549, %v1549
        %v1558 = vpack.c.bf16 %v1550, %v1550
        %v1559 = vpack.c.bf16 %v1551, %v1551
        %v1560 = vpack.c.bf16 %v1552, %v1552
        %v1561 = vpack.c.bf16 %v1553, %v1553
        %v1562 = vld [vmem:[#allocation9] sm:$0xff]
        %v1563 = vld [vmem:[#allocation9 + $0x8] sm:$0xf]
        %v1564 = vld [vmem:[#allocation9 + $0xc] sm:$0xff]
        %v1565 = vld [vmem:[#allocation9 + $0x14] sm:$0xf]
        %v1566 = vld [vmem:[#allocation9 + $0x18] sm:$0xff]
        %v1567 = vld [vmem:[#allocation9 + $0x20] sm:$0xf]
        %v1568 = vld [vmem:[#allocation9 + $0x24] sm:$0xff]
        %v1569 = vld [vmem:[#allocation9 + $0x2c] sm:$0xf]
        %v1570 = vld [vmem:[#allocation9 + $0x30] sm:$0xff]
        %v1571 = vld [vmem:[#allocation9 + $0x38] sm:$0xf]
        %v1572 = vld [vmem:[#allocation9 + $0x3c] sm:$0xff]
        %v1573 = vld [vmem:[#allocation9 + $0x44] sm:$0xf]
        %v1574 = vld [vmem:[#allocation9 + $0x48] sm:$0xff]
        %v1575 = vld [vmem:[#allocation9 + $0x50] sm:$0xf]
        %v1576 = vld [vmem:[#allocation9 + $0x54] sm:$0xff]
        %v1577 = vld [vmem:[#allocation9 + $0x5c] sm:$0xf]
        %v1578 = vld [vmem:[#allocation9 + $0x60] sm:$0xff]
        %v1579 = vld [vmem:[#allocation9 + $0x68] sm:$0xf]
        %v1580 = vld [vmem:[#allocation9 + $0x6c] sm:$0xff]
        %v1581 = vld [vmem:[#allocation9 + $0x74] sm:$0xf]
        %v1582 = vld [vmem:[#allocation9 + $0x78] sm:$0xff]
        %v1583 = vld [vmem:[#allocation9 + $0x80] sm:$0xf]
        %v1584 = vld [vmem:[#allocation9 + $0x84] sm:$0xff]
        %v1585 = vld [vmem:[#allocation9 + $0x8c] sm:$0xf]
        %v1586 = vld [vmem:[#allocation9 + $0x90] sm:$0xff]
        %v1587 = vld [vmem:[#allocation9 + $0x98] sm:$0xf]
        %v1588 = vld [vmem:[#allocation9 + $0x9c] sm:$0xff]
        %v1589 = vld [vmem:[#allocation9 + $0xa4] sm:$0xf]
        %v1590 = vld [vmem:[#allocation9 + $0xa8] sm:$0xff]
        %v1591 = vld [vmem:[#allocation9 + $0xb0] sm:$0xf]
        %v1592 = vld [vmem:[#allocation9 + $0xb4] sm:$0xff]
        %v1593 = vld [vmem:[#allocation9 + $0xbc] sm:$0xf]
        %v1602 = vunpack.c.l.b16 %v1554
        %v1603 = vunpack.c.l.b16 %v1555
        %v1604 = vunpack.c.l.b16 %v1556
        %v1605 = vunpack.c.l.b16 %v1557
        %v1606 = vunpack.c.l.b16 %v1558
        %v1607 = vunpack.c.l.b16 %v1559
        %v1608 = vunpack.c.l.b16 %v1560
        %v1609 = vunpack.c.l.b16 %v1561
        %v1610 = vrot.slane %v1603, 7
        %vm1611 = vcmask 1041409
        %v1612 = vsel %vm1611, %v1610, %v1602
        %v1613 = vrot.slane %v1604, 6
        %vm1614 = vcmask 1042434
        %v1615 = vsel %vm1614, %v1613, %v1612
        %v1616 = vrot.slane %v1605, 5
        %vm1617 = vcmask 1043459
        %v1618 = vsel %vm1617, %v1616, %v1615
        %v1619 = vrot.slane %v1606, 4
        %vm1620 = vcmask 1044484
        %v1621 = vsel %vm1620, %v1619, %v1618
        %v1622 = vrot.slane %v1607, 3
        %vm1623 = vcmask 1045509
        %v1624 = vsel %vm1623, %v1622, %v1621
        %v1625 = vrot.slane %v1608, 2
        %vm1626 = vcmask 1046534
        %v1627 = vsel %vm1626, %v1625, %v1624
        %v1628 = vrot.slane %v1609, 1
        %vm1629 = vcmask 1047559
        %v1630 = vsel %vm1629, %v1628, %v1627
        %v1631 = vpack.c.b16 %v1630, %v1630
        %v1665 = vunpack.c.l.b16 %v1562
        %v1666 = vunpack.c.h.b16 %v1562
        %v1667 = vunpack.c.l.b16 %v1563
        %v1668 = vunpack.c.l.b16 %v1564
        %v1669 = vunpack.c.h.b16 %v1564
        %v1670 = vunpack.c.l.b16 %v1565
        %v1671 = vunpack.c.l.b16 %v1566
        %v1672 = vunpack.c.h.b16 %v1566
        %v1673 = vunpack.c.l.b16 %v1567
        %v1674 = vunpack.c.l.b16 %v1568
        %v1675 = vunpack.c.h.b16 %v1568
        %v1676 = vunpack.c.l.b16 %v1569
        %v1677 = vunpack.c.l.b16 %v1570
        %v1678 = vunpack.c.h.b16 %v1570
        %v1679 = vunpack.c.l.b16 %v1571
        %v1680 = vunpack.c.l.b16 %v1572
        %v1681 = vunpack.c.h.b16 %v1572
        %v1682 = vunpack.c.l.b16 %v1573
        %v1683 = vunpack.c.l.b16 %v1574
        %v1684 = vunpack.c.h.b16 %v1574
        %v1685 = vunpack.c.l.b16 %v1575
        %v1686 = vunpack.c.l.b16 %v1576
        %v1687 = vunpack.c.h.b16 %v1576
        %v1688 = vunpack.c.l.b16 %v1577
        %v1689 = vunpack.c.l.b16 %v1578
        %v1690 = vunpack.c.h.b16 %v1578
        %v1691 = vunpack.c.l.b16 %v1579
        %v1692 = vunpack.c.l.b16 %v1580
        %v1693 = vunpack.c.h.b16 %v1580
        %v1694 = vunpack.c.l.b16 %v1581
        %v1695 = vunpack.c.l.b16 %v1582
        %v1696 = vunpack.c.h.b16 %v1582
        %v1697 = vunpack.c.l.b16 %v1583
        %v1698 = vunpack.c.l.b16 %v1584
        %v1699 = vunpack.c.h.b16 %v1584
        %v1700 = vunpack.c.l.b16 %v1585
        %v1701 = vunpack.c.l.b16 %v1586
        %v1702 = vunpack.c.h.b16 %v1586
        %v1703 = vunpack.c.l.b16 %v1587
        %v1704 = vunpack.c.l.b16 %v1588
        %v1705 = vunpack.c.h.b16 %v1588
        %v1706 = vunpack.c.l.b16 %v1589
        %v1707 = vunpack.c.l.b16 %v1590
        %v1708 = vunpack.c.h.b16 %v1590
        %v1709 = vunpack.c.l.b16 %v1591
        %v1710 = vunpack.c.l.b16 %v1592
        %v1711 = vunpack.c.h.b16 %v1592
        %v1712 = vunpack.c.l.b16 %v1593
        %v1713 = vpack.c.b16 %v1668, %v1665
        %v1714 = vpack.c.b16 %v1669, %v1666
        %v1715 = vpack.c.b16 %v1670, %v1667
        %v1716 = vpack.c.b16 %v1674, %v1671
        %v1717 = vpack.c.b16 %v1675, %v1672
        %v1718 = vpack.c.b16 %v1676, %v1673
        %v1719 = vpack.c.b16 %v1680, %v1677
        %v1720 = vpack.c.b16 %v1681, %v1678
        %v1721 = vpack.c.b16 %v1682, %v1679
        %v1722 = vpack.c.b16 %v1686, %v1683
        %v1723 = vpack.c.b16 %v1687, %v1684
        %v1724 = vpack.c.b16 %v1688, %v1685
        %v1725 = vpack.c.b16 %v1692, %v1689
        %v1726 = vpack.c.b16 %v1693, %v1690
        %v1727 = vpack.c.b16 %v1694, %v1691
        %v1728 = vpack.c.b16 %v1698, %v1695
        %v1729 = vpack.c.b16 %v1699, %v1696
        %v1730 = vpack.c.b16 %v1700, %v1697
        %v1731 = vpack.c.b16 %v1704, %v1701
        %v1732 = vpack.c.b16 %v1705, %v1702
        %v1733 = vpack.c.b16 %v1706, %v1703
        %v1734 = vpack.c.b16 %v1710, %v1707
        %v1735 = vpack.c.b16 %v1711, %v1708
        %v1736 = vpack.c.b16 %v1712, %v1709
        %1761 = vmatprep.subr.bf16.mxu0 %v1714
        %1762 = vmatpush1.bf16.msra.mxu0 %v1713
        %1763 = vmatprep.subr.bf16.mxu0 %v1717
        %1764 = vmatpush1.bf16.msra.mxu0 %v1716
        %1765 = vmatprep.subr.bf16.mxu0 %v1720
        %1766 = vmatpush1.bf16.msra.mxu0 %v1719
        %1767 = vmatprep.subr.bf16.mxu0 %v1723
        %1768 = vmatpush1.bf16.msra.mxu0 %v1722
        %1769 = vmatprep.subr.bf16.mxu0 %v1726
        %1770 = vmatpush1.bf16.msra.mxu0 %v1725
        %1771 = vmatprep.subr.bf16.mxu0 %v1729
        %1772 = vmatpush1.bf16.msra.mxu0 %v1728
        %1773 = vmatprep.subr.bf16.mxu0 %v1732
        %1774 = vmatpush1.bf16.msra.mxu0 %v1731
        %1775 = vmatprep.subr.bf16.mxu0 %v1735
        %1776 = vmatpush1.bf16.msra.mxu0 %v1734
        %1777 = vmatprep.subr.bf16.mxu0 0
        %1778 = vmatpush1.bf16.msra.mxu0 0
        %1779 = vmatprep.subr.bf16.mxu0 0
        %1780 = vmatpush1.bf16.msra.mxu0 0
        %1781 = vmatprep.subr.bf16.mxu0 0
        %1782 = vmatpush1.bf16.msra.mxu0 0
        %1783 = vmatprep.subr.bf16.mxu0 0
        %1784 = vmatpush1.bf16.msra.mxu0 0
        %1785 = vmatprep.subr.bf16.mxu0 0
        %1786 = vmatpush1.bf16.msra.mxu0 0
        %1787 = vmatprep.subr.bf16.mxu0 0
        %1788 = vmatpush1.bf16.msra.mxu0 0
        %1789 = vmatprep.subr.bf16.mxu0 0
        %1790 = vmatpush1.bf16.msra.mxu0 0
        %1791 = vmatprep.subr.bf16.mxu0 0
        %1792 = vmatpush1.bf16.msra.mxu0 0
        %1793 = vmatprep.mubr.bf16.mxu0 0
        %1794 = vmatmul.mubr.bf16.gmra.mrb[0].mxu0 %v1631
        %v1795 = vpop.f32.mrb[0].mxu0
        %v1796 = vadd.f32 %v583, %v1795
        %v1797 = vpop.f32.mrb[0].mxu0
        %v1798 = vadd.f32 %v587, %v1797
        %v1799 = vpop.f32.mrb[0].mxu0
        %v1800 = vpop.f32.mrb[0].mxu0
        %1801 = vdwg.mxu0
        %1802 = vmatprep.subr.bf16.mxu0 0
        %1803 = vmatpush1.bf16.msra.mxu0 %v1715
        %1804 = vmatprep.subr.bf16.mxu0 0
        %1805 = vmatpush1.bf16.msra.mxu0 %v1718
        %1806 = vmatprep.subr.bf16.mxu0 0
        %1807 = vmatpush1.bf16.msra.mxu0 %v1721
        %1808 = vmatprep.subr.bf16.mxu0 0
        %1809 = vmatpush1.bf16.msra.mxu0 %v1724
        %1810 = vmatprep.subr.bf16.mxu0 0
        %1811 = vmatpush1.bf16.msra.mxu0 %v1727
        %1812 = vmatprep.subr.bf16.mxu0 0
        %1813 = vmatpush1.bf16.msra.mxu0 %v1730
        %1814 = vmatprep.subr.bf16.mxu0 0
        %1815 = vmatpush1.bf16.msra.mxu0 %v1733
        %1816 = vmatprep.subr.bf16.mxu0 0
        %1817 = vmatpush1.bf16.msra.mxu0 %v1736
        %1818 = vmatprep.subr.bf16.mxu0 0
        %1819 = vmatpush1.bf16.msra.mxu0 0
        %1820 = vmatprep.subr.bf16.mxu0 0
        %1821 = vmatpush1.bf16.msra.mxu0 0
        %1822 = vmatprep.subr.bf16.mxu0 0
        %1823 = vmatpush1.bf16.msra.mxu0 0
        %1824 = vmatprep.subr.bf16.mxu0 0
        %1825 = vmatpush1.bf16.msra.mxu0 0
        %1826 = vmatprep.subr.bf16.mxu0 0
        %1827 = vmatpush1.bf16.msra.mxu0 0
        %1828 = vmatprep.subr.bf16.mxu0 0
        %1829 = vmatpush1.bf16.msra.mxu0 0
        %1830 = vmatprep.subr.bf16.mxu0 0
        %1831 = vmatpush1.bf16.msra.mxu0 0
        %1832 = vmatprep.subr.bf16.mxu0 0
        %1833 = vmatpush1.bf16.msra.mxu0 0
        %1834 = vmatprep.mubr.bf16.mxu0 0
        %1835 = vmatmul.mubr.bf16.gmra.mrb[0].mxu0 %v1631
        %v1836 = vpop.f32.mrb[0].mxu0
        %v1837 = vadd.f32 %v591, %v1836
        %v1838 = vpop.f32.mrb[0].mxu0
        %v1839 = vpop.f32.mrb[0].mxu0
        %v1840 = vpop.f32.mrb[0].mxu0
        %1841 = vdwg.mxu0
        %v1842 = vadd.f32 %v1796, %v1052
        %v1843 = vxor.u32 %v1842, 2147483648
        %v1844 = vmul.f32 %v1843, 1.442695
        %v1845 = vpow.pop %v1844
        %v1846 = vadd.f32 %v1845, 1.0
        %v1847 = vrcp.pop %v1846
        %v1848 = vmul.f32 1.0, %v1847
        %v1849 = vadd.f32 %v1798, %v1054
        %v1850 = vxor.u32 %v1849, 2147483648
        %v1851 = vmul.f32 %v1850, 1.442695
        %v1852 = vpow.pop %v1851
        %v1853 = vadd.f32 %v1852, 1.0
        %v1854 = vrcp.pop %v1853
        %v1855 = vmul.f32 1.0, %v1854
        %v1856 = vadd.f32 %v1093, %v608
        %v1857 = vmul.f32 %v1848, %v1856
        %v1858 = vadd.f32 %v1837, %v1857
        %v1859 = vtanh.pop %v1858
        %v1860 = vsub.f32 1.0, %v1855
        %v1861 = vmul.f32 %v1860, %v1859
        %v1862 = vmul.f32 %v1855, %v612
        %v1863 = vadd.f32 %v1861, %v1862
        %v1864 = vpack.c.bf16 %v1863, %v1863
        %1865 = vmatprep.subr.bf16.mxu0 %v728
        %1866 = vmatpush1.bf16.msra.mxu0 %v727
        %1867 = vmatprep.subr.bf16.mxu0 %v731
        %1868 = vmatpush1.bf16.msra.mxu0 %v730
        %1869 = vmatprep.subr.bf16.mxu0 %v734
        %1870 = vmatpush1.bf16.msra.mxu0 %v733
        %1871 = vmatprep.subr.bf16.mxu0 %v737
        %1872 = vmatpush1.bf16.msra.mxu0 %v736
        %1873 = vmatprep.subr.bf16.mxu0 %v740
        %1874 = vmatpush1.bf16.msra.mxu0 %v739
        %1875 = vmatprep.subr.bf16.mxu0 %v743
        %1876 = vmatpush1.bf16.msra.mxu0 %v742
        %1877 = vmatprep.subr.bf16.mxu0 %v746
        %1878 = vmatpush1.bf16.msra.mxu0 %v745
        %1879 = vmatprep.subr.bf16.mxu0 %v749
        %1880 = vmatpush1.bf16.msra.mxu0 %v748
        %1881 = vmatprep.subr.bf16.mxu0 0
        %1882 = vmatpush1.bf16.msra.mxu0 0
        %1883 = vmatprep.subr.bf16.mxu0 0
        %1884 = vmatpush1.bf16.msra.mxu0 0
        %1885 = vmatprep.subr.bf16.mxu0 0
        %1886 = vmatpush1.bf16.msra.mxu0 0
        %1887 = vmatprep.subr.bf16.mxu0 0
        %1888 = vmatpush1.bf16.msra.mxu0 0
        %1889 = vmatprep.subr.bf16.mxu0 0
        %1890 = vmatpush1.bf16.msra.mxu0 0
        %1891 = vmatprep.subr.bf16.mxu0 0
        %1892 = vmatpush1.bf16.msra.mxu0 0
        %1893 = vmatprep.subr.bf16.mxu0 0
        %1894 = vmatpush1.bf16.msra.mxu0 0
        %1895 = vmatprep.subr.bf16.mxu0 0
        %1896 = vmatpush1.bf16.msra.mxu0 0
        %1897 = vmatprep.mubr.bf16.mxu0 0
        %1898 = vmatmul.mubr.bf16.gmra.mrb[0].mxu0 %v1631
        %v1899 = vpop.f32.mrb[0].mxu0
        %v1900 = vadd.f32 0.0, %v1899
        %v1901 = vpop.f32.mrb[0].mxu0
        %v1902 = vadd.f32 0.0, %v1901
        %v1903 = vpop.f32.mrb[0].mxu0
        %v1904 = vpop.f32.mrb[0].mxu0
        %1905 = vdwg.mxu0
        %1906 = vmatprep.subr.bf16.mxu0 0
        %1907 = vmatpush1.bf16.msra.mxu0 %v729
        %1908 = vmatprep.subr.bf16.mxu0 0
        %1909 = vmatpush1.bf16.msra.mxu0 %v732
        %1910 = vmatprep.subr.bf16.mxu0 0
        %1911 = vmatpush1.bf16.msra.mxu0 %v735
        %1912 = vmatprep.subr.bf16.mxu0 0
        %1913 = vmatpush1.bf16.msra.mxu0 %v738
        %1914 = vmatprep.subr.bf16.mxu0 0
        %1915 = vmatpush1.bf16.msra.mxu0 %v741
        %1916 = vmatprep.subr.bf16.mxu0 0
        %1917 = vmatpush1.bf16.msra.mxu0 %v744
        %1918 = vmatprep.subr.bf16.mxu0 0
        %1919 = vmatpush1.bf16.msra.mxu0 %v747
        %1920 = vmatprep.subr.bf16.mxu0 0
        %1921 = vmatpush1.bf16.msra.mxu0 %v750
        %1922 = vmatprep.subr.bf16.mxu0 0
        %1923 = vmatpush1.bf16.msra.mxu0 0
        %1924 = vmatprep.subr.bf16.mxu0 0
        %1925 = vmatpush1.bf16.msra.mxu0 0
        %1926 = vmatprep.subr.bf16.mxu0 0
        %1927 = vmatpush1.bf16.msra.mxu0 0
        %1928 = vmatprep.subr.bf16.mxu0 0
        %1929 = vmatpush1.bf16.msra.mxu0 0
        %1930 = vmatprep.subr.bf16.mxu0 0
        %1931 = vmatpush1.bf16.msra.mxu0 0
        %1932 = vmatprep.subr.bf16.mxu0 0
        %1933 = vmatpush1.bf16.msra.mxu0 0
        %1934 = vmatprep.subr.bf16.mxu0 0
        %1935 = vmatpush1.bf16.msra.mxu0 0
        %1936 = vmatprep.subr.bf16.mxu0 0
        %1937 = vmatpush1.bf16.msra.mxu0 0
        %1938 = vmatprep.mubr.bf16.mxu0 0
        %1939 = vmatmul.mubr.bf16.gmra.mrb[0].mxu0 %v1631
        %v1940 = vpop.f32.mrb[0].mxu0
        %v1941 = vadd.f32 0.0, %v1940
        %v1942 = vpop.f32.mrb[0].mxu0
        %v1943 = vpop.f32.mrb[0].mxu0
        %v1944 = vpop.f32.mrb[0].mxu0
        %1945 = vdwg.mxu0
        %1946 = vmatprep.subr.bf16.mxu0 %v970
        %1947 = vmatpush1.bf16.msra.mxu0 %v969
        %1948 = vmatprep.subr.bf16.mxu0 %v973
        %1949 = vmatpush1.bf16.msra.mxu0 %v972
        %1950 = vmatprep.subr.bf16.mxu0 %v976
        %1951 = vmatpush1.bf16.msra.mxu0 %v975
        %1952 = vmatprep.subr.bf16.mxu0 %v979
        %1953 = vmatpush1.bf16.msra.mxu0 %v978
        %1954 = vmatprep.subr.bf16.mxu0 %v982
        %1955 = vmatpush1.bf16.msra.mxu0 %v981
        %1956 = vmatprep.subr.bf16.mxu0 %v985
        %1957 = vmatpush1.bf16.msra.mxu0 %v984
        %1958 = vmatprep.subr.bf16.mxu0 %v988
        %1959 = vmatpush1.bf16.msra.mxu0 %v987
        %1960 = vmatprep.subr.bf16.mxu0 %v991
        %1961 = vmatpush1.bf16.msra.mxu0 %v990
        %1962 = vmatprep.subr.bf16.mxu0 0
        %1963 = vmatpush1.bf16.msra.mxu0 0
        %1964 = vmatprep.subr.bf16.mxu0 0
        %1965 = vmatpush1.bf16.msra.mxu0 0
        %1966 = vmatprep.subr.bf16.mxu0 0
        %1967 = vmatpush1.bf16.msra.mxu0 0
        %1968 = vmatprep.subr.bf16.mxu0 0
        %1969 = vmatpush1.bf16.msra.mxu0 0
        %1970 = vmatprep.subr.bf16.mxu0 0
        %1971 = vmatpush1.bf16.msra.mxu0 0
        %1972 = vmatprep.subr.bf16.mxu0 0
        %1973 = vmatpush1.bf16.msra.mxu0 0
        %1974 = vmatprep.subr.bf16.mxu0 0
        %1975 = vmatpush1.bf16.msra.mxu0 0
        %1976 = vmatprep.subr.bf16.mxu0 0
        %1977 = vmatpush1.bf16.msra.mxu0 0
        %1978 = vmatprep.mubr.bf16.mxu0 0
        %1979 = vmatmul.mubr.bf16.gmra.mrb[0].mxu0 %v1864
        %v1980 = vpop.f32.mrb[0].mxu0
        %v1981 = vadd.f32 0.0, %v1980
        %v1982 = vpop.f32.mrb[0].mxu0
        %v1983 = vadd.f32 0.0, %v1982
        %v1984 = vpop.f32.mrb[0].mxu0
        %v1985 = vpop.f32.mrb[0].mxu0
        %1986 = vdwg.mxu0
        %1987 = vmatprep.subr.bf16.mxu0 0
        %1988 = vmatpush1.bf16.msra.mxu0 %v971
        %1989 = vmatprep.subr.bf16.mxu0 0
        %1990 = vmatpush1.bf16.msra.mxu0 %v974
        %1991 = vmatprep.subr.bf16.mxu0 0
        %1992 = vmatpush1.bf16.msra.mxu0 %v977
        %1993 = vmatprep.subr.bf16.mxu0 0
        %1994 = vmatpush1.bf16.msra.mxu0 %v980
        %1995 = vmatprep.subr.bf16.mxu0 0
        %1996 = vmatpush1.bf16.msra.mxu0 %v983
        %1997 = vmatprep.subr.bf16.mxu0 0
        %1998 = vmatpush1.bf16.msra.mxu0 %v986
        %1999 = vmatprep.subr.bf16.mxu0 0
        %2000 = vmatpush1.bf16.msra.mxu0 %v989
        %2001 = vmatprep.subr.bf16.mxu0 0
        %2002 = vmatpush1.bf16.msra.mxu0 %v992
        %2003 = vmatprep.subr.bf16.mxu0 0
        %2004 = vmatpush1.bf16.msra.mxu0 0
        %2005 = vmatprep.subr.bf16.mxu0 0
        %2006 = vmatpush1.bf16.msra.mxu0 0
        %2007 = vmatprep.subr.bf16.mxu0 0
        %2008 = vmatpush1.bf16.msra.mxu0 0
        %2009 = vmatprep.subr.bf16.mxu0 0
        %2010 = vmatpush1.bf16.msra.mxu0 0
        %2011 = vmatprep.subr.bf16.mxu0 0
        %2012 = vmatpush1.bf16.msra.mxu0 0
        %2013 = vmatprep.subr.bf16.mxu0 0
        %2014 = vmatpush1.bf16.msra.mxu0 0
        %2015 = vmatprep.subr.bf16.mxu0 0
        %2016 = vmatpush1.bf16.msra.mxu0 0
        %2017 = vmatprep.subr.bf16.mxu0 0
        %2018 = vmatpush1.bf16.msra.mxu0 0
        %2019 = vmatprep.mubr.bf16.mxu0 0
        %2020 = vmatmul.mubr.bf16.gmra.mrb[0].mxu0 %v1864
        %v2021 = vpop.f32.mrb[0].mxu0
        %v2022 = vadd.f32 0.0, %v2021
        %v2023 = vpop.f32.mrb[0].mxu0
        %v2024 = vpop.f32.mrb[0].mxu0
        %v2025 = vpop.f32.mrb[0].mxu0
        %2026 = vdwg.mxu0
        %s2027 = scalar_lea.vmem [#allocation3], 1
        %v2028 = vld [vmem:[%s2027] ss:$8 sm:$0x7]
        %s2029 = scalar_lea.vmem [#allocation3], 25
        %v2030 = vld [vmem:[%s2029] ss:$8 sm:$0x7]
        %s2031 = scalar_lea.vmem [#allocation3], 49
        %v2032 = vld [vmem:[%s2031] ss:$8 sm:$0x7]
        %s2033 = scalar_lea.vmem [#allocation3], 73
        %v2034 = vld [vmem:[%s2033] ss:$8 sm:$0x7]
        %s2035 = scalar_lea.vmem [#allocation3], 97
        %v2036 = vld [vmem:[%s2035] ss:$8 sm:$0x7]
        %s2037 = scalar_lea.vmem [#allocation3], 121
        %v2038 = vld [vmem:[%s2037] ss:$8 sm:$0x7]
        %s2039 = scalar_lea.vmem [#allocation3], 145
        %v2040 = vld [vmem:[%s2039] ss:$8 sm:$0x7]
        %s2041 = scalar_lea.vmem [#allocation3], 169
        %v2042 = vld [vmem:[%s2041] ss:$8 sm:$0x7]
        %v2044 = vcombine.high %v1900, %v1900
        %v2046 = vunpack.c.l.s4 1966171168
        %v2047 = vunpack.c.0.s8 %v2046
        %v2048 = vlaneseq
        %v2049 = vshrl.u32 %v2048, 7
        %v2050 = vsub.s32 %v2047, %v2049
        %v2051 = vrot.slane %v1900, %v2050
        %v2053 = vunpack.c.l.s4 1966171168
        %v2054 = vunpack.c.0.s8 %v2053
        %v2055 = vlaneseq
        %v2056 = vshrl.u32 %v2055, 7
        %v2057 = vsub.s32 %v2054, %v2056
        %v2058 = vrot.slane %v2044, %v2057
        %v2059 = vcombine.high %v2051, %v2051
        %v2060 = vcombine.high %v2058, %v2058
        %v2062 = vunpack.c.l.s4 1966171168
        %v2063 = vunpack.c.0.s8 %v2062
        %v2064 = vlaneseq
        %v2065 = vshrl.u32 %v2064, 7
        %v2066 = vsub.s32 %v2063, %v2065
        %v2067 = vrot.slane %v2051, %v2066
        %v2069 = vunpack.c.l.s4 1966171168
        %v2070 = vunpack.c.0.s8 %v2069
        %v2071 = vlaneseq
        %v2072 = vshrl.u32 %v2071, 7
        %v2073 = vsub.s32 %v2070, %v2072
        %v2074 = vrot.slane %v2058, %v2073
        %v2076 = vunpack.c.l.s4 1966171168
        %v2077 = vunpack.c.0.s8 %v2076
        %v2078 = vlaneseq
        %v2079 = vshrl.u32 %v2078, 7
        %v2080 = vsub.s32 %v2077, %v2079
        %v2081 = vrot.slane %v2059, %v2080
        %v2083 = vunpack.c.l.s4 1966171168
        %v2084 = vunpack.c.0.s8 %v2083
        %v2085 = vlaneseq
        %v2086 = vshrl.u32 %v2085, 7
        %v2087 = vsub.s32 %v2084, %v2086
        %v2088 = vrot.slane %v2060, %v2087
        %v2089 = vcombine.high %v2067, %v2067
        %v2090 = vcombine.high %v2074, %v2074
        %v2091 = vcombine.high %v2081, %v2081
        %v2092 = vcombine.high %v2088, %v2088
        %v2101 = vadd.f32 %v2028, %v2067
        %v2102 = vadd.f32 %v2030, %v2081
        %v2103 = vadd.f32 %v2032, %v2089
        %v2104 = vadd.f32 %v2034, %v2091
        %v2105 = vadd.f32 %v2036, %v2074
        %v2106 = vadd.f32 %v2038, %v2088
        %v2107 = vadd.f32 %v2040, %v2090
        %v2108 = vadd.f32 %v2042, %v2092
        %v2109 = vxor.u32 %v2101, 2147483648
        %v2110 = vxor.u32 %v2102, 2147483648
        %v2111 = vxor.u32 %v2103, 2147483648
        %v2112 = vxor.u32 %v2104, 2147483648
        %v2113 = vxor.u32 %v2105, 2147483648
        %v2114 = vxor.u32 %v2106, 2147483648
        %v2115 = vxor.u32 %v2107, 2147483648
        %v2116 = vxor.u32 %v2108, 2147483648
        %v2117 = vmul.f32 %v2109, 1.442695
        %v2118 = vpow.pop %v2117
        %v2119 = vmul.f32 %v2110, 1.442695
        %v2120 = vpow.pop %v2119
        %v2121 = vmul.f32 %v2111, 1.442695
        %v2122 = vpow.pop %v2121
        %v2123 = vmul.f32 %v2112, 1.442695
        %v2124 = vpow.pop %v2123
        %v2125 = vmul.f32 %v2113, 1.442695
        %v2126 = vpow.pop %v2125
        %v2127 = vmul.f32 %v2114, 1.442695
        %v2128 = vpow.pop %v2127
        %v2129 = vmul.f32 %v2115, 1.442695
        %v2130 = vpow.pop %v2129
        %v2131 = vmul.f32 %v2116, 1.442695
        %v2132 = vpow.pop %v2131
        %v2133 = vadd.f32 %v2118, 1.0
        %v2134 = vadd.f32 %v2120, 1.0
        %v2135 = vadd.f32 %v2122, 1.0
        %v2136 = vadd.f32 %v2124, 1.0
        %v2137 = vadd.f32 %v2126, 1.0
        %v2138 = vadd.f32 %v2128, 1.0
        %v2139 = vadd.f32 %v2130, 1.0
        %v2140 = vadd.f32 %v2132, 1.0
        %v2141 = vrcp.pop %v2133
        %v2142 = vmul.f32 1.0, %v2141
        %v2143 = vrcp.pop %v2134
        %v2144 = vmul.f32 1.0, %v2143
        %v2145 = vrcp.pop %v2135
        %v2146 = vmul.f32 1.0, %v2145
        %v2147 = vrcp.pop %v2136
        %v2148 = vmul.f32 1.0, %v2147
        %v2149 = vrcp.pop %v2137
        %v2150 = vmul.f32 1.0, %v2149
        %v2151 = vrcp.pop %v2138
        %v2152 = vmul.f32 1.0, %v2151
        %v2153 = vrcp.pop %v2139
        %v2154 = vmul.f32 1.0, %v2153
        %v2155 = vrcp.pop %v2140
        %v2156 = vmul.f32 1.0, %v2155
        %v2165 = vrot.slane %v2028, 1
        %v2166 = vrot.slane %v2030, 1
        %v2167 = vrot.slane %v2032, 1
        %v2168 = vrot.slane %v2034, 1
        %v2169 = vrot.slane %v2036, 1
        %v2170 = vrot.slane %v2038, 1
        %v2171 = vrot.slane %v2040, 1
        %v2172 = vrot.slane %v2042, 1
        %v2182 = vcombine.high %v1902, %v1902
        %v2184 = vunpack.c.l.s4 1966171168
        %v2185 = vunpack.c.0.s8 %v2184
        %v2186 = vlaneseq
        %v2187 = vshrl.u32 %v2186, 7
        %v2188 = vsub.s32 %v2185, %v2187
        %v2189 = vrot.slane %v1902, %v2188
        %v2191 = vunpack.c.l.s4 1966171168
        %v2192 = vunpack.c.0.s8 %v2191
        %v2193 = vlaneseq
        %v2194 = vshrl.u32 %v2193, 7
        %v2195 = vsub.s32 %v2192, %v2194
        %v2196 = vrot.slane %v2182, %v2195
        %v2197 = vcombine.high %v2189, %v2189
        %v2198 = vcombine.high %v2196, %v2196
        %v2200 = vunpack.c.l.s4 1966171168
        %v2201 = vunpack.c.0.s8 %v2200
        %v2202 = vlaneseq
        %v2203 = vshrl.u32 %v2202, 7
        %v2204 = vsub.s32 %v2201, %v2203
        %v2205 = vrot.slane %v2189, %v2204
        %v2207 = vunpack.c.l.s4 1966171168
        %v2208 = vunpack.c.0.s8 %v2207
        %v2209 = vlaneseq
        %v2210 = vshrl.u32 %v2209, 7
        %v2211 = vsub.s32 %v2208, %v2210
        %v2212 = vrot.slane %v2196, %v2211
        %v2214 = vunpack.c.l.s4 1966171168
        %v2215 = vunpack.c.0.s8 %v2214
        %v2216 = vlaneseq
        %v2217 = vshrl.u32 %v2216, 7
        %v2218 = vsub.s32 %v2215, %v2217
        %v2219 = vrot.slane %v2197, %v2218
        %v2221 = vunpack.c.l.s4 1966171168
        %v2222 = vunpack.c.0.s8 %v2221
        %v2223 = vlaneseq
        %v2224 = vshrl.u32 %v2223, 7
        %v2225 = vsub.s32 %v2222, %v2224
        %v2226 = vrot.slane %v2198, %v2225
        %v2227 = vcombine.high %v2205, %v2205
        %v2228 = vcombine.high %v2212, %v2212
        %v2229 = vcombine.high %v2219, %v2219
        %v2230 = vcombine.high %v2226, %v2226
        %v2239 = vadd.f32 %v2165, %v2205
        %v2240 = vadd.f32 %v2166, %v2219
        %v2241 = vadd.f32 %v2167, %v2227
        %v2242 = vadd.f32 %v2168, %v2229
        %v2243 = vadd.f32 %v2169, %v2212
        %v2244 = vadd.f32 %v2170, %v2226
        %v2245 = vadd.f32 %v2171, %v2228
        %v2246 = vadd.f32 %v2172, %v2230
        %v2247 = vxor.u32 %v2239, 2147483648
        %v2248 = vxor.u32 %v2240, 2147483648
        %v2249 = vxor.u32 %v2241, 2147483648
        %v2250 = vxor.u32 %v2242, 2147483648
        %v2251 = vxor.u32 %v2243, 2147483648
        %v2252 = vxor.u32 %v2244, 2147483648
        %v2253 = vxor.u32 %v2245, 2147483648
        %v2254 = vxor.u32 %v2246, 2147483648
        %v2255 = vmul.f32 %v2247, 1.442695
        %v2256 = vpow.pop %v2255
        %v2257 = vmul.f32 %v2248, 1.442695
        %v2258 = vpow.pop %v2257
        %v2259 = vmul.f32 %v2249, 1.442695
        %v2260 = vpow.pop %v2259
        %v2261 = vmul.f32 %v2250, 1.442695
        %v2262 = vpow.pop %v2261
        %v2263 = vmul.f32 %v2251, 1.442695
        %v2264 = vpow.pop %v2263
        %v2265 = vmul.f32 %v2252, 1.442695
        %v2266 = vpow.pop %v2265
        %v2267 = vmul.f32 %v2253, 1.442695
        %v2268 = vpow.pop %v2267
        %v2269 = vmul.f32 %v2254, 1.442695
        %v2270 = vpow.pop %v2269
        %v2271 = vadd.f32 %v2256, 1.0
        %v2272 = vadd.f32 %v2258, 1.0
        %v2273 = vadd.f32 %v2260, 1.0
        %v2274 = vadd.f32 %v2262, 1.0
        %v2275 = vadd.f32 %v2264, 1.0
        %v2276 = vadd.f32 %v2266, 1.0
        %v2277 = vadd.f32 %v2268, 1.0
        %v2278 = vadd.f32 %v2270, 1.0
        %v2279 = vrcp.pop %v2271
        %v2280 = vmul.f32 1.0, %v2279
        %v2281 = vrcp.pop %v2272
        %v2282 = vmul.f32 1.0, %v2281
        %v2283 = vrcp.pop %v2273
        %v2284 = vmul.f32 1.0, %v2283
        %v2285 = vrcp.pop %v2274
        %v2286 = vmul.f32 1.0, %v2285
        %v2287 = vrcp.pop %v2275
        %v2288 = vmul.f32 1.0, %v2287
        %v2289 = vrcp.pop %v2276
        %v2290 = vmul.f32 1.0, %v2289
        %v2291 = vrcp.pop %v2277
        %v2292 = vmul.f32 1.0, %v2291
        %v2293 = vrcp.pop %v2278
        %v2294 = vmul.f32 1.0, %v2293
        %v2295 = vadd.f32 %v1941, %v600
        %v2297 = vcombine.high %v2295, %v2295
        %v2299 = vunpack.c.l.s4 1966171168
        %v2300 = vunpack.c.0.s8 %v2299
        %v2301 = vlaneseq
        %v2302 = vshrl.u32 %v2301, 7
        %v2303 = vsub.s32 %v2300, %v2302
        %v2304 = vrot.slane %v2295, %v2303
        %v2306 = vunpack.c.l.s4 1966171168
        %v2307 = vunpack.c.0.s8 %v2306
        %v2308 = vlaneseq
        %v2309 = vshrl.u32 %v2308, 7
        %v2310 = vsub.s32 %v2307, %v2309
        %v2311 = vrot.slane %v2297, %v2310
        %v2312 = vcombine.high %v2304, %v2304
        %v2313 = vcombine.high %v2311, %v2311
        %v2315 = vunpack.c.l.s4 1966171168
        %v2316 = vunpack.c.0.s8 %v2315
        %v2317 = vlaneseq
        %v2318 = vshrl.u32 %v2317, 7
        %v2319 = vsub.s32 %v2316, %v2318
        %v2320 = vrot.slane %v2304, %v2319
        %v2322 = vunpack.c.l.s4 1966171168
        %v2323 = vunpack.c.0.s8 %v2322
        %v2324 = vlaneseq
        %v2325 = vshrl.u32 %v2324, 7
        %v2326 = vsub.s32 %v2323, %v2325
        %v2327 = vrot.slane %v2311, %v2326
        %v2329 = vunpack.c.l.s4 1966171168
        %v2330 = vunpack.c.0.s8 %v2329
        %v2331 = vlaneseq
        %v2332 = vshrl.u32 %v2331, 7
        %v2333 = vsub.s32 %v2330, %v2332
        %v2334 = vrot.slane %v2312, %v2333
        %v2336 = vunpack.c.l.s4 1966171168
        %v2337 = vunpack.c.0.s8 %v2336
        %v2338 = vlaneseq
        %v2339 = vshrl.u32 %v2338, 7
        %v2340 = vsub.s32 %v2337, %v2339
        %v2341 = vrot.slane %v2313, %v2340
        %v2342 = vcombine.high %v2320, %v2320
        %v2343 = vcombine.high %v2327, %v2327
        %v2344 = vcombine.high %v2334, %v2334
        %v2345 = vcombine.high %v2341, %v2341
        %v2354 = vmul.f32 %v2142, %v2320
        %v2355 = vmul.f32 %v2144, %v2334
        %v2356 = vmul.f32 %v2146, %v2342
        %v2357 = vmul.f32 %v2148, %v2344
        %v2358 = vmul.f32 %v2150, %v2327
        %v2359 = vmul.f32 %v2152, %v2341
        %v2360 = vmul.f32 %v2154, %v2343
        %v2361 = vmul.f32 %v2156, %v2345
        %v2362 = vrot.slane %v2028, 2
        %v2363 = vrot.slane %v2030, 2
        %v2364 = vrot.slane %v2032, 2
        %v2365 = vrot.slane %v2034, 2
        %v2366 = vrot.slane %v2036, 2
        %v2367 = vrot.slane %v2038, 2
        %v2368 = vrot.slane %v2040, 2
        %v2369 = vrot.slane %v2042, 2
        %v2378 = vadd.f32 %v2362, %v2354
        %v2379 = vadd.f32 %v2363, %v2355
        %v2380 = vadd.f32 %v2364, %v2356
        %v2381 = vadd.f32 %v2365, %v2357
        %v2382 = vadd.f32 %v2366, %v2358
        %v2383 = vadd.f32 %v2367, %v2359
        %v2384 = vadd.f32 %v2368, %v2360
        %v2385 = vadd.f32 %v2369, %v2361
        %v2386 = vtanh.pop %v2378
        %v2387 = vtanh.pop %v2379
        %v2388 = vtanh.pop %v2380
        %v2389 = vtanh.pop %v2381
        %v2390 = vtanh.pop %v2382
        %v2391 = vtanh.pop %v2383
        %v2392 = vtanh.pop %v2384
        %v2393 = vtanh.pop %v2385
        %v2394 = vsub.f32 1.0, %v2280
        %v2395 = vsub.f32 1.0, %v2282
        %v2396 = vsub.f32 1.0, %v2284
        %v2397 = vsub.f32 1.0, %v2286
        %v2398 = vsub.f32 1.0, %v2288
        %v2399 = vsub.f32 1.0, %v2290
        %v2400 = vsub.f32 1.0, %v2292
        %v2401 = vsub.f32 1.0, %v2294
        %v2402 = vmul.f32 %v2394, %v2386
        %v2403 = vmul.f32 %v2395, %v2387
        %v2404 = vmul.f32 %v2396, %v2388
        %v2405 = vmul.f32 %v2397, %v2389
        %v2406 = vmul.f32 %v2398, %v2390
        %v2407 = vmul.f32 %v2399, %v2391
        %v2408 = vmul.f32 %v2400, %v2392
        %v2409 = vmul.f32 %v2401, %v2393
        %v2410 = vmul.f32 %v2280, %v1546
        %v2411 = vmul.f32 %v2282, %v1547
        %v2412 = vmul.f32 %v2284, %v1548
        %v2413 = vmul.f32 %v2286, %v1549
        %v2414 = vmul.f32 %v2288, %v1550
        %v2415 = vmul.f32 %v2290, %v1551
        %v2416 = vmul.f32 %v2292, %v1552
        %v2417 = vmul.f32 %v2294, %v1553
        %v2418 = vadd.f32 %v2402, %v2410
        %v2419 = vadd.f32 %v2403, %v2411
        %v2420 = vadd.f32 %v2404, %v2412
        %v2421 = vadd.f32 %v2405, %v2413
        %v2422 = vadd.f32 %v2406, %v2414
        %v2423 = vadd.f32 %v2407, %v2415
        %v2424 = vadd.f32 %v2408, %v2416
        %v2425 = vadd.f32 %v2409, %v2417
        %v2426 = vpack.c.bf16 %v2418, %v2418
        %v2427 = vpack.c.bf16 %v2419, %v2419
        %v2428 = vpack.c.bf16 %v2420, %v2420
        %v2429 = vpack.c.bf16 %v2421, %v2421
        %v2430 = vpack.c.bf16 %v2422, %v2422
        %v2431 = vpack.c.bf16 %v2423, %v2423
        %v2432 = vpack.c.bf16 %v2424, %v2424
        %v2433 = vpack.c.bf16 %v2425, %v2425
        %v2442 = vunpack.c.l.b16 %v2426
        %v2443 = vunpack.c.l.b16 %v2427
        %v2444 = vunpack.c.l.b16 %v2428
        %v2445 = vunpack.c.l.b16 %v2429
        %v2446 = vunpack.c.l.b16 %v2430
        %v2447 = vunpack.c.l.b16 %v2431
        %v2448 = vunpack.c.l.b16 %v2432
        %v2449 = vunpack.c.l.b16 %v2433
        %v2450 = vrot.slane %v2443, 7
        %v2451 = vsel %vm1611, %v2450, %v2442
        %v2452 = vrot.slane %v2444, 6
        %v2453 = vsel %vm1614, %v2452, %v2451
        %v2454 = vrot.slane %v2445, 5
        %v2455 = vsel %vm1617, %v2454, %v2453
        %v2456 = vrot.slane %v2446, 4
        %v2457 = vsel %vm1620, %v2456, %v2455
        %v2458 = vrot.slane %v2447, 3
        %v2459 = vsel %vm1623, %v2458, %v2457
        %v2460 = vrot.slane %v2448, 2
        %v2461 = vsel %vm1626, %v2460, %v2459
        %v2462 = vrot.slane %v2449, 1
        %v2463 = vsel %vm1629, %v2462, %v2461
        %v2464 = vpack.c.b16 %v2463, %v2463
        %2466 = vmatprep.subr.bf16.mxu0 %v1714
        %2467 = vmatpush1.bf16.msra.mxu0 %v1713
        %2468 = vmatprep.subr.bf16.mxu0 %v1717
        %2469 = vmatpush1.bf16.msra.mxu0 %v1716
        %2470 = vmatprep.subr.bf16.mxu0 %v1720
        %2471 = vmatpush1.bf16.msra.mxu0 %v1719
        %2472 = vmatprep.subr.bf16.mxu0 %v1723
        %2473 = vmatpush1.bf16.msra.mxu0 %v1722
        %2474 = vmatprep.subr.bf16.mxu0 %v1726
        %2475 = vmatpush1.bf16.msra.mxu0 %v1725
        %2476 = vmatprep.subr.bf16.mxu0 %v1729
        %2477 = vmatpush1.bf16.msra.mxu0 %v1728
        %2478 = vmatprep.subr.bf16.mxu0 %v1732
        %2479 = vmatpush1.bf16.msra.mxu0 %v1731
        %2480 = vmatprep.subr.bf16.mxu0 %v1735
        %2481 = vmatpush1.bf16.msra.mxu0 %v1734
        %2482 = vmatprep.subr.bf16.mxu0 0
        %2483 = vmatpush1.bf16.msra.mxu0 0
        %2484 = vmatprep.subr.bf16.mxu0 0
        %2485 = vmatpush1.bf16.msra.mxu0 0
        %2486 = vmatprep.subr.bf16.mxu0 0
        %2487 = vmatpush1.bf16.msra.mxu0 0
        %2488 = vmatprep.subr.bf16.mxu0 0
        %2489 = vmatpush1.bf16.msra.mxu0 0
        %2490 = vmatprep.subr.bf16.mxu0 0
        %2491 = vmatpush1.bf16.msra.mxu0 0
        %2492 = vmatprep.subr.bf16.mxu0 0
        %2493 = vmatpush1.bf16.msra.mxu0 0
        %2494 = vmatprep.subr.bf16.mxu0 0
        %2495 = vmatpush1.bf16.msra.mxu0 0
        %2496 = vmatprep.subr.bf16.mxu0 0
        %2497 = vmatpush1.bf16.msra.mxu0 0
        %2498 = vmatprep.mubr.bf16.mxu0 0
        %2499 = vmatmul.mubr.bf16.gmra.mrb[0].mxu0 %v2464
        %v2500 = vpop.f32.mrb[0].mxu0
        %v2501 = vadd.f32 %v583, %v2500
        %v2502 = vpop.f32.mrb[0].mxu0
        %v2503 = vadd.f32 %v587, %v2502
        %v2504 = vpop.f32.mrb[0].mxu0
        %v2505 = vpop.f32.mrb[0].mxu0
        %2506 = vdwg.mxu0
        %2507 = vmatprep.subr.bf16.mxu0 0
        %2508 = vmatpush1.bf16.msra.mxu0 %v1715
        %2509 = vmatprep.subr.bf16.mxu0 0
        %2510 = vmatpush1.bf16.msra.mxu0 %v1718
        %2511 = vmatprep.subr.bf16.mxu0 0
        %2512 = vmatpush1.bf16.msra.mxu0 %v1721
        %2513 = vmatprep.subr.bf16.mxu0 0
        %2514 = vmatpush1.bf16.msra.mxu0 %v1724
        %2515 = vmatprep.subr.bf16.mxu0 0
        %2516 = vmatpush1.bf16.msra.mxu0 %v1727
        %2517 = vmatprep.subr.bf16.mxu0 0
        %2518 = vmatpush1.bf16.msra.mxu0 %v1730
        %2519 = vmatprep.subr.bf16.mxu0 0
        %2520 = vmatpush1.bf16.msra.mxu0 %v1733
        %2521 = vmatprep.subr.bf16.mxu0 0
        %2522 = vmatpush1.bf16.msra.mxu0 %v1736
        %2523 = vmatprep.subr.bf16.mxu0 0
        %2524 = vmatpush1.bf16.msra.mxu0 0
        %2525 = vmatprep.subr.bf16.mxu0 0
        %2526 = vmatpush1.bf16.msra.mxu0 0
        %2527 = vmatprep.subr.bf16.mxu0 0
        %2528 = vmatpush1.bf16.msra.mxu0 0
        %2529 = vmatprep.subr.bf16.mxu0 0
        %2530 = vmatpush1.bf16.msra.mxu0 0
        %2531 = vmatprep.subr.bf16.mxu0 0
        %2532 = vmatpush1.bf16.msra.mxu0 0
        %2533 = vmatprep.subr.bf16.mxu0 0
        %2534 = vmatpush1.bf16.msra.mxu0 0
        %2535 = vmatprep.subr.bf16.mxu0 0
        %2536 = vmatpush1.bf16.msra.mxu0 0
        %2537 = vmatprep.subr.bf16.mxu0 0
        %2538 = vmatpush1.bf16.msra.mxu0 0
        %2539 = vmatprep.mubr.bf16.mxu0 0
        %2540 = vmatmul.mubr.bf16.gmra.mrb[0].mxu0 %v2464
        %v2541 = vpop.f32.mrb[0].mxu0
        %v2542 = vadd.f32 %v591, %v2541
        %v2543 = vpop.f32.mrb[0].mxu0
        %v2544 = vpop.f32.mrb[0].mxu0
        %v2545 = vpop.f32.mrb[0].mxu0
        %2546 = vdwg.mxu0
        %v2547 = vadd.f32 %v2501, %v1981
        %v2548 = vxor.u32 %v2547, 2147483648
        %v2549 = vmul.f32 %v2548, 1.442695
        %v2550 = vpow.pop %v2549
        %v2551 = vadd.f32 %v2550, 1.0
        %v2552 = vrcp.pop %v2551
        %v2553 = vmul.f32 1.0, %v2552
        %v2554 = vadd.f32 %v2503, %v1983
        %v2555 = vxor.u32 %v2554, 2147483648
        %v2556 = vmul.f32 %v2555, 1.442695
        %v2557 = vpow.pop %v2556
        %v2558 = vadd.f32 %v2557, 1.0
        %v2559 = vrcp.pop %v2558
        %v2560 = vmul.f32 1.0, %v2559
        %v2561 = vadd.f32 %v2022, %v608
        %v2562 = vmul.f32 %v2553, %v2561
        %v2563 = vadd.f32 %v2542, %v2562
        %v2564 = vtanh.pop %v2563
        %v2565 = vsub.f32 1.0, %v2560
        %v2566 = vmul.f32 %v2565, %v2564
        %v2567 = vmul.f32 %v2560, %v1863
        %v2568 = vadd.f32 %v2566, %v2567
        %v2569 = vpack.c.bf16 %v2568, %v2568
        %2570 = vmatprep.subr.bf16.mxu0 %v728
        %2571 = vmatpush1.bf16.msra.mxu0 %v727
        %2572 = vmatprep.subr.bf16.mxu0 %v731
        %2573 = vmatpush1.bf16.msra.mxu0 %v730
        %2574 = vmatprep.subr.bf16.mxu0 %v734
        %2575 = vmatpush1.bf16.msra.mxu0 %v733
        %2576 = vmatprep.subr.bf16.mxu0 %v737
        %2577 = vmatpush1.bf16.msra.mxu0 %v736
        %2578 = vmatprep.subr.bf16.mxu0 %v740
        %2579 = vmatpush1.bf16.msra.mxu0 %v739
        %2580 = vmatprep.subr.bf16.mxu0 %v743
        %2581 = vmatpush1.bf16.msra.mxu0 %v742
        %2582 = vmatprep.subr.bf16.mxu0 %v746
        %2583 = vmatpush1.bf16.msra.mxu0 %v745
        %2584 = vmatprep.subr.bf16.mxu0 %v749
        %2585 = vmatpush1.bf16.msra.mxu0 %v748
        %2586 = vmatprep.subr.bf16.mxu0 0
        %2587 = vmatpush1.bf16.msra.mxu0 0
        %2588 = vmatprep.subr.bf16.mxu0 0
        %2589 = vmatpush1.bf16.msra.mxu0 0
        %2590 = vmatprep.subr.bf16.mxu0 0
        %2591 = vmatpush1.bf16.msra.mxu0 0
        %2592 = vmatprep.subr.bf16.mxu0 0
        %2593 = vmatpush1.bf16.msra.mxu0 0
        %2594 = vmatprep.subr.bf16.mxu0 0
        %2595 = vmatpush1.bf16.msra.mxu0 0
        %2596 = vmatprep.subr.bf16.mxu0 0
        %2597 = vmatpush1.bf16.msra.mxu0 0
        %2598 = vmatprep.subr.bf16.mxu0 0
        %2599 = vmatpush1.bf16.msra.mxu0 0
        %2600 = vmatprep.subr.bf16.mxu0 0
        %2601 = vmatpush1.bf16.msra.mxu0 0
        %2602 = vmatprep.mubr.bf16.mxu0 0
        %2603 = vmatmul.mubr.bf16.gmra.mrb[0].mxu0 %v2464
        %v2604 = vpop.f32.mrb[0].mxu0
        %v2605 = vadd.f32 0.0, %v2604
        %v2606 = vpop.f32.mrb[0].mxu0
        %v2607 = vadd.f32 0.0, %v2606
        %v2608 = vpop.f32.mrb[0].mxu0
        %v2609 = vpop.f32.mrb[0].mxu0
        %2610 = vdwg.mxu0
        %2611 = vmatprep.subr.bf16.mxu0 0
        %2612 = vmatpush1.bf16.msra.mxu0 %v729
        %2613 = vmatprep.subr.bf16.mxu0 0
        %2614 = vmatpush1.bf16.msra.mxu0 %v732
        %2615 = vmatprep.subr.bf16.mxu0 0
        %2616 = vmatpush1.bf16.msra.mxu0 %v735
        %2617 = vmatprep.subr.bf16.mxu0 0
        %2618 = vmatpush1.bf16.msra.mxu0 %v738
        %2619 = vmatprep.subr.bf16.mxu0 0
        %2620 = vmatpush1.bf16.msra.mxu0 %v741
        %2621 = vmatprep.subr.bf16.mxu0 0
        %2622 = vmatpush1.bf16.msra.mxu0 %v744
        %2623 = vmatprep.subr.bf16.mxu0 0
        %2624 = vmatpush1.bf16.msra.mxu0 %v747
        %2625 = vmatprep.subr.bf16.mxu0 0
        %2626 = vmatpush1.bf16.msra.mxu0 %v750
        %2627 = vmatprep.subr.bf16.mxu0 0
        %2628 = vmatpush1.bf16.msra.mxu0 0
        %2629 = vmatprep.subr.bf16.mxu0 0
        %2630 = vmatpush1.bf16.msra.mxu0 0
        %2631 = vmatprep.subr.bf16.mxu0 0
        %2632 = vmatpush1.bf16.msra.mxu0 0
        %2633 = vmatprep.subr.bf16.mxu0 0
        %2634 = vmatpush1.bf16.msra.mxu0 0
        %2635 = vmatprep.subr.bf16.mxu0 0
        %2636 = vmatpush1.bf16.msra.mxu0 0
        %2637 = vmatprep.subr.bf16.mxu0 0
        %2638 = vmatpush1.bf16.msra.mxu0 0
        %2639 = vmatprep.subr.bf16.mxu0 0
        %2640 = vmatpush1.bf16.msra.mxu0 0
        %2641 = vmatprep.subr.bf16.mxu0 0
        %2642 = vmatpush1.bf16.msra.mxu0 0
        %2643 = vmatprep.mubr.bf16.mxu0 0
        %2644 = vmatmul.mubr.bf16.gmra.mrb[0].mxu0 %v2464
        %v2645 = vpop.f32.mrb[0].mxu0
        %v2646 = vadd.f32 0.0, %v2645
        %v2647 = vpop.f32.mrb[0].mxu0
        %v2648 = vpop.f32.mrb[0].mxu0
        %v2649 = vpop.f32.mrb[0].mxu0
        %2650 = vdwg.mxu0
        %2651 = vmatprep.subr.bf16.mxu0 %v970
        %2652 = vmatpush1.bf16.msra.mxu0 %v969
        %2653 = vmatprep.subr.bf16.mxu0 %v973
        %2654 = vmatpush1.bf16.msra.mxu0 %v972
        %2655 = vmatprep.subr.bf16.mxu0 %v976
        %2656 = vmatpush1.bf16.msra.mxu0 %v975
        %2657 = vmatprep.subr.bf16.mxu0 %v979
        %2658 = vmatpush1.bf16.msra.mxu0 %v978
        %2659 = vmatprep.subr.bf16.mxu0 %v982
        %2660 = vmatpush1.bf16.msra.mxu0 %v981
        %2661 = vmatprep.subr.bf16.mxu0 %v985
        %2662 = vmatpush1.bf16.msra.mxu0 %v984
        %2663 = vmatprep.subr.bf16.mxu0 %v988
        %2664 = vmatpush1.bf16.msra.mxu0 %v987
        %2665 = vmatprep.subr.bf16.mxu0 %v991
        %2666 = vmatpush1.bf16.msra.mxu0 %v990
        %2667 = vmatprep.subr.bf16.mxu0 0
        %2668 = vmatpush1.bf16.msra.mxu0 0
        %2669 = vmatprep.subr.bf16.mxu0 0
        %2670 = vmatpush1.bf16.msra.mxu0 0
        %2671 = vmatprep.subr.bf16.mxu0 0
        %2672 = vmatpush1.bf16.msra.mxu0 0
        %2673 = vmatprep.subr.bf16.mxu0 0
        %2674 = vmatpush1.bf16.msra.mxu0 0
        %2675 = vmatprep.subr.bf16.mxu0 0
        %2676 = vmatpush1.bf16.msra.mxu0 0
        %2677 = vmatprep.subr.bf16.mxu0 0
        %2678 = vmatpush1.bf16.msra.mxu0 0
        %2679 = vmatprep.subr.bf16.mxu0 0
        %2680 = vmatpush1.bf16.msra.mxu0 0
        %2681 = vmatprep.subr.bf16.mxu0 0
        %2682 = vmatpush1.bf16.msra.mxu0 0
        %2683 = vmatprep.mubr.bf16.mxu0 0
        %2684 = vmatmul.mubr.bf16.gmra.mrb[0].mxu0 %v2569
        %v2685 = vpop.f32.mrb[0].mxu0
        %v2686 = vadd.f32 0.0, %v2685
        %v2687 = vpop.f32.mrb[0].mxu0
        %v2688 = vadd.f32 0.0, %v2687
        %v2689 = vpop.f32.mrb[0].mxu0
        %v2690 = vpop.f32.mrb[0].mxu0
        %2691 = vdwg.mxu0
        %2692 = vmatprep.subr.bf16.mxu0 0
        %2693 = vmatpush1.bf16.msra.mxu0 %v971
        %2694 = vmatprep.subr.bf16.mxu0 0
        %2695 = vmatpush1.bf16.msra.mxu0 %v974
        %2696 = vmatprep.subr.bf16.mxu0 0
        %2697 = vmatpush1.bf16.msra.mxu0 %v977
        %2698 = vmatprep.subr.bf16.mxu0 0
        %2699 = vmatpush1.bf16.msra.mxu0 %v980
        %2700 = vmatprep.subr.bf16.mxu0 0
        %2701 = vmatpush1.bf16.msra.mxu0 %v983
        %2702 = vmatprep.subr.bf16.mxu0 0
        %2703 = vmatpush1.bf16.msra.mxu0 %v986
        %2704 = vmatprep.subr.bf16.mxu0 0
        %2705 = vmatpush1.bf16.msra.mxu0 %v989
        %2706 = vmatprep.subr.bf16.mxu0 0
        %2707 = vmatpush1.bf16.msra.mxu0 %v992
        %2708 = vmatprep.subr.bf16.mxu0 0
        %2709 = vmatpush1.bf16.msra.mxu0 0
        %2710 = vmatprep.subr.bf16.mxu0 0
        %2711 = vmatpush1.bf16.msra.mxu0 0
        %2712 = vmatprep.subr.bf16.mxu0 0
        %2713 = vmatpush1.bf16.msra.mxu0 0
        %2714 = vmatprep.subr.bf16.mxu0 0
        %2715 = vmatpush1.bf16.msra.mxu0 0
        %2716 = vmatprep.subr.bf16.mxu0 0
        %2717 = vmatpush1.bf16.msra.mxu0 0
        %2718 = vmatprep.subr.bf16.mxu0 0
        %2719 = vmatpush1.bf16.msra.mxu0 0
        %2720 = vmatprep.subr.bf16.mxu0 0
        %2721 = vmatpush1.bf16.msra.mxu0 0
        %2722 = vmatprep.subr.bf16.mxu0 0
        %2723 = vmatpush1.bf16.msra.mxu0 0
        %2724 = vmatprep.mubr.bf16.mxu0 0
        %2725 = vmatmul.mubr.bf16.gmra.mrb[0].mxu0 %v2569
        %v2726 = vpop.f32.mrb[0].mxu0
        %v2727 = vadd.f32 0.0, %v2726
        %v2728 = vpop.f32.mrb[0].mxu0
        %v2729 = vpop.f32.mrb[0].mxu0
        %v2730 = vpop.f32.mrb[0].mxu0
        %2731 = vdwg.mxu0
        %s2732 = scalar_lea.vmem [#allocation3], 2
        %v2733 = vld [vmem:[%s2732] ss:$8 sm:$0x7]
        %s2734 = scalar_lea.vmem [#allocation3], 26
        %v2735 = vld [vmem:[%s2734] ss:$8 sm:$0x7]
        %s2736 = scalar_lea.vmem [#allocation3], 50
        %v2737 = vld [vmem:[%s2736] ss:$8 sm:$0x7]
        %s2738 = scalar_lea.vmem [#allocation3], 74
        %v2739 = vld [vmem:[%s2738] ss:$8 sm:$0x7]
        %s2740 = scalar_lea.vmem [#allocation3], 98
        %v2741 = vld [vmem:[%s2740] ss:$8 sm:$0x7]
        %s2742 = scalar_lea.vmem [#allocation3], 122
        %v2743 = vld [vmem:[%s2742] ss:$8 sm:$0x7]
        %s2744 = scalar_lea.vmem [#allocation3], 146
        %v2745 = vld [vmem:[%s2744] ss:$8 sm:$0x7]
        %s2746 = scalar_lea.vmem [#allocation3], 170
        %v2747 = vld [vmem:[%s2746] ss:$8 sm:$0x7]
        %v2749 = vcombine.high %v2605, %v2605
        %v2751 = vunpack.c.l.s4 1966171168
        %v2752 = vunpack.c.0.s8 %v2751
        %v2753 = vlaneseq
        %v2754 = vshrl.u32 %v2753, 7
        %v2755 = vsub.s32 %v2752, %v2754
        %v2756 = vrot.slane %v2605, %v2755
        %v2758 = vunpack.c.l.s4 1966171168
        %v2759 = vunpack.c.0.s8 %v2758
        %v2760 = vlaneseq
        %v2761 = vshrl.u32 %v2760, 7
        %v2762 = vsub.s32 %v2759, %v2761
        %v2763 = vrot.slane %v2749, %v2762
        %v2764 = vcombine.high %v2756, %v2756
        %v2765 = vcombine.high %v2763, %v2763
        %v2767 = vunpack.c.l.s4 1966171168
        %v2768 = vunpack.c.0.s8 %v2767
        %v2769 = vlaneseq
        %v2770 = vshrl.u32 %v2769, 7
        %v2771 = vsub.s32 %v2768, %v2770
        %v2772 = vrot.slane %v2756, %v2771
        %v2774 = vunpack.c.l.s4 1966171168
        %v2775 = vunpack.c.0.s8 %v2774
        %v2776 = vlaneseq
        %v2777 = vshrl.u32 %v2776, 7
        %v2778 = vsub.s32 %v2775, %v2777
        %v2779 = vrot.slane %v2763, %v2778
        %v2781 = vunpack.c.l.s4 1966171168
        %v2782 = vunpack.c.0.s8 %v2781
        %v2783 = vlaneseq
        %v2784 = vshrl.u32 %v2783, 7
        %v2785 = vsub.s32 %v2782, %v2784
        %v2786 = vrot.slane %v2764, %v2785
        %v2788 = vunpack.c.l.s4 1966171168
        %v2789 = vunpack.c.0.s8 %v2788
        %v2790 = vlaneseq
        %v2791 = vshrl.u32 %v2790, 7
        %v2792 = vsub.s32 %v2789, %v2791
        %v2793 = vrot.slane %v2765, %v2792
        %v2794 = vcombine.high %v2772, %v2772
        %v2795 = vcombine.high %v2779, %v2779
        %v2796 = vcombine.high %v2786, %v2786
        %v2797 = vcombine.high %v2793, %v2793
        %v2806 = vadd.f32 %v2733, %v2772
        %v2807 = vadd.f32 %v2735, %v2786
        %v2808 = vadd.f32 %v2737, %v2794
        %v2809 = vadd.f32 %v2739, %v2796
        %v2810 = vadd.f32 %v2741, %v2779
        %v2811 = vadd.f32 %v2743, %v2793
        %v2812 = vadd.f32 %v2745, %v2795
        %v2813 = vadd.f32 %v2747, %v2797
        %v2814 = vxor.u32 %v2806, 2147483648
        %v2815 = vxor.u32 %v2807, 2147483648
        %v2816 = vxor.u32 %v2808, 2147483648
        %v2817 = vxor.u32 %v2809, 2147483648
        %v2818 = vxor.u32 %v2810, 2147483648
        %v2819 = vxor.u32 %v2811, 2147483648
        %v2820 = vxor.u32 %v2812, 2147483648
        %v2821 = vxor.u32 %v2813, 2147483648
        %v2822 = vmul.f32 %v2814, 1.442695
        %v2823 = vpow.pop %v2822
        %v2824 = vmul.f32 %v2815, 1.442695
        %v2825 = vpow.pop %v2824
        %v2826 = vmul.f32 %v2816, 1.442695
        %v2827 = vpow.pop %v2826
        %v2828 = vmul.f32 %v2817, 1.442695
        %v2829 = vpow.pop %v2828
        %v2830 = vmul.f32 %v2818, 1.442695
        %v2831 = vpow.pop %v2830
        %v2832 = vmul.f32 %v2819, 1.442695
        %v2833 = vpow.pop %v2832
        %v2834 = vmul.f32 %v2820, 1.442695
        %v2835 = vpow.pop %v2834
        %v2836 = vmul.f32 %v2821, 1.442695
        %v2837 = vpow.pop %v2836
        %v2838 = vadd.f32 %v2823, 1.0
        %v2839 = vadd.f32 %v2825, 1.0
        %v2840 = vadd.f32 %v2827, 1.0
        %v2841 = vadd.f32 %v2829, 1.0
        %v2842 = vadd.f32 %v2831, 1.0
        %v2843 = vadd.f32 %v2833, 1.0
        %v2844 = vadd.f32 %v2835, 1.0
        %v2845 = vadd.f32 %v2837, 1.0
        %v2846 = vrcp.pop %v2838
        %v2847 = vmul.f32 1.0, %v2846
        %v2848 = vrcp.pop %v2839
        %v2849 = vmul.f32 1.0, %v2848
        %v2850 = vrcp.pop %v2840
        %v2851 = vmul.f32 1.0, %v2850
        %v2852 = vrcp.pop %v2841
        %v2853 = vmul.f32 1.0, %v2852
        %v2854 = vrcp.pop %v2842
        %v2855 = vmul.f32 1.0, %v2854
        %v2856 = vrcp.pop %v2843
        %v2857 = vmul.f32 1.0, %v2856
        %v2858 = vrcp.pop %v2844
        %v2859 = vmul.f32 1.0, %v2858
        %v2860 = vrcp.pop %v2845
        %v2861 = vmul.f32 1.0, %v2860
        %v2870 = vrot.slane %v2733, 1
        %v2871 = vrot.slane %v2735, 1
        %v2872 = vrot.slane %v2737, 1
        %v2873 = vrot.slane %v2739, 1
        %v2874 = vrot.slane %v2741, 1
        %v2875 = vrot.slane %v2743, 1
        %v2876 = vrot.slane %v2745, 1
        %v2877 = vrot.slane %v2747, 1
        %v2887 = vcombine.high %v2607, %v2607
        %v2889 = vunpack.c.l.s4 1966171168
        %v2890 = vunpack.c.0.s8 %v2889
        %v2891 = vlaneseq
        %v2892 = vshrl.u32 %v2891, 7
        %v2893 = vsub.s32 %v2890, %v2892
        %v2894 = vrot.slane %v2607, %v2893
        %v2896 = vunpack.c.l.s4 1966171168
        %v2897 = vunpack.c.0.s8 %v2896
        %v2898 = vlaneseq
        %v2899 = vshrl.u32 %v2898, 7
        %v2900 = vsub.s32 %v2897, %v2899
        %v2901 = vrot.slane %v2887, %v2900
        %v2902 = vcombine.high %v2894, %v2894
        %v2903 = vcombine.high %v2901, %v2901
        %v2905 = vunpack.c.l.s4 1966171168
        %v2906 = vunpack.c.0.s8 %v2905
        %v2907 = vlaneseq
        %v2908 = vshrl.u32 %v2907, 7
        %v2909 = vsub.s32 %v2906, %v2908
        %v2910 = vrot.slane %v2894, %v2909
        %v2912 = vunpack.c.l.s4 1966171168
        %v2913 = vunpack.c.0.s8 %v2912
        %v2914 = vlaneseq
        %v2915 = vshrl.u32 %v2914, 7
        %v2916 = vsub.s32 %v2913, %v2915
        %v2917 = vrot.slane %v2901, %v2916
        %v2919 = vunpack.c.l.s4 1966171168
        %v2920 = vunpack.c.0.s8 %v2919
        %v2921 = vlaneseq
        %v2922 = vshrl.u32 %v2921, 7
        %v2923 = vsub.s32 %v2920, %v2922
        %v2924 = vrot.slane %v2902, %v2923
        %v2926 = vunpack.c.l.s4 1966171168
        %v2927 = vunpack.c.0.s8 %v2926
        %v2928 = vlaneseq
        %v2929 = vshrl.u32 %v2928, 7
        %v2930 = vsub.s32 %v2927, %v2929
        %v2931 = vrot.slane %v2903, %v2930
        %v2932 = vcombine.high %v2910, %v2910
        %v2933 = vcombine.high %v2917, %v2917
        %v2934 = vcombine.high %v2924, %v2924
        %v2935 = vcombine.high %v2931, %v2931
        %v2944 = vadd.f32 %v2870, %v2910
        %v2945 = vadd.f32 %v2871, %v2924
        %v2946 = vadd.f32 %v2872, %v2932
        %v2947 = vadd.f32 %v2873, %v2934
        %v2948 = vadd.f32 %v2874, %v2917
        %v2949 = vadd.f32 %v2875, %v2931
        %v2950 = vadd.f32 %v2876, %v2933
        %v2951 = vadd.f32 %v2877, %v2935
        %v2952 = vxor.u32 %v2944, 2147483648
        %v2953 = vxor.u32 %v2945, 2147483648
        %v2954 = vxor.u32 %v2946, 2147483648
        %v2955 = vxor.u32 %v2947, 2147483648
        %v2956 = vxor.u32 %v2948, 2147483648
        %v2957 = vxor.u32 %v2949, 2147483648
        %v2958 = vxor.u32 %v2950, 2147483648
        %v2959 = vxor.u32 %v2951, 2147483648
        %v2960 = vmul.f32 %v2952, 1.442695
        %v2961 = vpow.pop %v2960
        %v2962 = vmul.f32 %v2953, 1.442695
        %v2963 = vpow.pop %v2962
        %v2964 = vmul.f32 %v2954, 1.442695
        %v2965 = vpow.pop %v2964
        %v2966 = vmul.f32 %v2955, 1.442695
        %v2967 = vpow.pop %v2966
        %v2968 = vmul.f32 %v2956, 1.442695
        %v2969 = vpow.pop %v2968
        %v2970 = vmul.f32 %v2957, 1.442695
        %v2971 = vpow.pop %v2970
        %v2972 = vmul.f32 %v2958, 1.442695
        %v2973 = vpow.pop %v2972
        %v2974 = vmul.f32 %v2959, 1.442695
        %v2975 = vpow.pop %v2974
        %v2976 = vadd.f32 %v2961, 1.0
        %v2977 = vadd.f32 %v2963, 1.0
        %v2978 = vadd.f32 %v2965, 1.0
        %v2979 = vadd.f32 %v2967, 1.0
        %v2980 = vadd.f32 %v2969, 1.0
        %v2981 = vadd.f32 %v2971, 1.0
        %v2982 = vadd.f32 %v2973, 1.0
        %v2983 = vadd.f32 %v2975, 1.0
        %v2984 = vrcp.pop %v2976
        %v2985 = vmul.f32 1.0, %v2984
        %v2986 = vrcp.pop %v2977
        %v2987 = vmul.f32 1.0, %v2986
        %v2988 = vrcp.pop %v2978
        %v2989 = vmul.f32 1.0, %v2988
        %v2990 = vrcp.pop %v2979
        %v2991 = vmul.f32 1.0, %v2990
        %v2992 = vrcp.pop %v2980
        %v2993 = vmul.f32 1.0, %v2992
        %v2994 = vrcp.pop %v2981
        %v2995 = vmul.f32 1.0, %v2994
        %v2996 = vrcp.pop %v2982
        %v2997 = vmul.f32 1.0, %v2996
        %v2998 = vrcp.pop %v2983
        %v2999 = vmul.f32 1.0, %v2998
        %v3000 = vadd.f32 %v2646, %v600
        %v3002 = vcombine.high %v3000, %v3000
        %v3004 = vunpack.c.l.s4 1966171168
        %v3005 = vunpack.c.0.s8 %v3004
        %v3006 = vlaneseq
        %v3007 = vshrl.u32 %v3006, 7
        %v3008 = vsub.s32 %v3005, %v3007
        %v3009 = vrot.slane %v3000, %v3008
        %v3011 = vunpack.c.l.s4 1966171168
        %v3012 = vunpack.c.0.s8 %v3011
        %v3013 = vlaneseq
        %v3014 = vshrl.u32 %v3013, 7
        %v3015 = vsub.s32 %v3012, %v3014
        %v3016 = vrot.slane %v3002, %v3015
        %v3017 = vcombine.high %v3009, %v3009
        %v3018 = vcombine.high %v3016, %v3016
        %v3020 = vunpack.c.l.s4 1966171168
        %v3021 = vunpack.c.0.s8 %v3020
        %v3022 = vlaneseq
        %v3023 = vshrl.u32 %v3022, 7
        %v3024 = vsub.s32 %v3021, %v3023
        %v3025 = vrot.slane %v3009, %v3024
        %v3027 = vunpack.c.l.s4 1966171168
        %v3028 = vunpack.c.0.s8 %v3027
        %v3029 = vlaneseq
        %v3030 = vshrl.u32 %v3029, 7
        %v3031 = vsub.s32 %v3028, %v3030
        %v3032 = vrot.slane %v3016, %v3031
        %v3034 = vunpack.c.l.s4 1966171168
        %v3035 = vunpack.c.0.s8 %v3034
        %v3036 = vlaneseq
        %v3037 = vshrl.u32 %v3036, 7
        %v3038 = vsub.s32 %v3035, %v3037
        %v3039 = vrot.slane %v3017, %v3038
        %v3041 = vunpack.c.l.s4 1966171168
        %v3042 = vunpack.c.0.s8 %v3041
        %v3043 = vlaneseq
        %v3044 = vshrl.u32 %v3043, 7
        %v3045 = vsub.s32 %v3042, %v3044
        %v3046 = vrot.slane %v3018, %v3045
        %v3047 = vcombine.high %v3025, %v3025
        %v3048 = vcombine.high %v3032, %v3032
        %v3049 = vcombine.high %v3039, %v3039
        %v3050 = vcombine.high %v3046, %v3046
        %v3059 = vmul.f32 %v2847, %v3025
        %v3060 = vmul.f32 %v2849, %v3039
        %v3061 = vmul.f32 %v2851, %v3047
        %v3062 = vmul.f32 %v2853, %v3049
        %v3063 = vmul.f32 %v2855, %v3032
        %v3064 = vmul.f32 %v2857, %v3046
        %v3065 = vmul.f32 %v2859, %v3048
        %v3066 = vmul.f32 %v2861, %v3050
        %v3067 = vrot.slane %v2733, 2
        %v3068 = vrot.slane %v2735, 2
        %v3069 = vrot.slane %v2737, 2
        %v3070 = vrot.slane %v2739, 2
        %v3071 = vrot.slane %v2741, 2
        %v3072 = vrot.slane %v2743, 2
        %v3073 = vrot.slane %v2745, 2
        %v3074 = vrot.slane %v2747, 2
        %v3083 = vadd.f32 %v3067, %v3059
        %v3084 = vadd.f32 %v3068, %v3060
        %v3085 = vadd.f32 %v3069, %v3061
        %v3086 = vadd.f32 %v3070, %v3062
        %v3087 = vadd.f32 %v3071, %v3063
        %v3088 = vadd.f32 %v3072, %v3064
        %v3089 = vadd.f32 %v3073, %v3065
        %v3090 = vadd.f32 %v3074, %v3066
        %v3091 = vtanh.pop %v3083
        %v3092 = vtanh.pop %v3084
        %v3093 = vtanh.pop %v3085
        %v3094 = vtanh.pop %v3086
        %v3095 = vtanh.pop %v3087
        %v3096 = vtanh.pop %v3088
        %v3097 = vtanh.pop %v3089
        %v3098 = vtanh.pop %v3090
        %v3099 = vsub.f32 1.0, %v2985
        %v3100 = vsub.f32 1.0, %v2987
        %v3101 = vsub.f32 1.0, %v2989
        %v3102 = vsub.f32 1.0, %v2991
        %v3103 = vsub.f32 1.0, %v2993
        %v3104 = vsub.f32 1.0, %v2995
        %v3105 = vsub.f32 1.0, %v2997
        %v3106 = vsub.f32 1.0, %v2999
        %v3107 = vmul.f32 %v3099, %v3091
        %v3108 = vmul.f32 %v3100, %v3092
        %v3109 = vmul.f32 %v3101, %v3093
        %v3110 = vmul.f32 %v3102, %v3094
        %v3111 = vmul.f32 %v3103, %v3095
        %v3112 = vmul.f32 %v3104, %v3096
        %v3113 = vmul.f32 %v3105, %v3097
        %v3114 = vmul.f32 %v3106, %v3098
        %v3115 = vmul.f32 %v2985, %v2418
        %v3116 = vmul.f32 %v2987, %v2419
        %v3117 = vmul.f32 %v2989, %v2420
        %v3118 = vmul.f32 %v2991, %v2421
        %v3119 = vmul.f32 %v2993, %v2422
        %v3120 = vmul.f32 %v2995, %v2423
        %v3121 = vmul.f32 %v2997, %v2424
        %v3122 = vmul.f32 %v2999, %v2425
        %v3123 = vadd.f32 %v3107, %v3115
        %v3124 = vadd.f32 %v3108, %v3116
        %v3125 = vadd.f32 %v3109, %v3117
        %v3126 = vadd.f32 %v3110, %v3118
        %v3127 = vadd.f32 %v3111, %v3119
        %v3128 = vadd.f32 %v3112, %v3120
        %v3129 = vadd.f32 %v3113, %v3121
        %v3130 = vadd.f32 %v3114, %v3122
        %v3131 = vpack.c.bf16 %v3123, %v3123
        %v3132 = vpack.c.bf16 %v3124, %v3124
        %v3133 = vpack.c.bf16 %v3125, %v3125
        %v3134 = vpack.c.bf16 %v3126, %v3126
        %v3135 = vpack.c.bf16 %v3127, %v3127
        %v3136 = vpack.c.bf16 %v3128, %v3128
        %v3137 = vpack.c.bf16 %v3129, %v3129
        %v3138 = vpack.c.bf16 %v3130, %v3130
        %v3147 = vunpack.c.l.b16 %v3131
        %v3148 = vunpack.c.l.b16 %v3132
        %v3149 = vunpack.c.l.b16 %v3133
        %v3150 = vunpack.c.l.b16 %v3134
        %v3151 = vunpack.c.l.b16 %v3135
        %v3152 = vunpack.c.l.b16 %v3136
        %v3153 = vunpack.c.l.b16 %v3137
        %v3154 = vunpack.c.l.b16 %v3138
        %v3155 = vrot.slane %v3148, 7
        %v3156 = vsel %vm1611, %v3155, %v3147
        %v3157 = vrot.slane %v3149, 6
        %v3158 = vsel %vm1614, %v3157, %v3156
        %v3159 = vrot.slane %v3150, 5
        %v3160 = vsel %vm1617, %v3159, %v3158
        %v3161 = vrot.slane %v3151, 4
        %v3162 = vsel %vm1620, %v3161, %v3160
        %v3163 = vrot.slane %v3152, 3
        %v3164 = vsel %vm1623, %v3163, %v3162
        %v3165 = vrot.slane %v3153, 2
        %v3166 = vsel %vm1626, %v3165, %v3164
        %v3167 = vrot.slane %v3154, 1
        %v3168 = vsel %vm1629, %v3167, %v3166
        %v3169 = vpack.c.b16 %v3168, %v3168
        %3171 = vmatprep.subr.bf16.mxu0 %v1714
        %3172 = vmatpush1.bf16.msra.mxu0 %v1713
        %3173 = vmatprep.subr.bf16.mxu0 %v1717
        %3174 = vmatpush1.bf16.msra.mxu0 %v1716
        %3175 = vmatprep.subr.bf16.mxu0 %v1720
        %3176 = vmatpush1.bf16.msra.mxu0 %v1719
        %3177 = vmatprep.subr.bf16.mxu0 %v1723
        %3178 = vmatpush1.bf16.msra.mxu0 %v1722
        %3179 = vmatprep.subr.bf16.mxu0 %v1726
        %3180 = vmatpush1.bf16.msra.mxu0 %v1725
        %3181 = vmatprep.subr.bf16.mxu0 %v1729
        %3182 = vmatpush1.bf16.msra.mxu0 %v1728
        %3183 = vmatprep.subr.bf16.mxu0 %v1732
        %3184 = vmatpush1.bf16.msra.mxu0 %v1731
        %3185 = vmatprep.subr.bf16.mxu0 %v1735
        %3186 = vmatpush1.bf16.msra.mxu0 %v1734
        %3187 = vmatprep.subr.bf16.mxu0 0
        %3188 = vmatpush1.bf16.msra.mxu0 0
        %3189 = vmatprep.subr.bf16.mxu0 0
        %3190 = vmatpush1.bf16.msra.mxu0 0
        %3191 = vmatprep.subr.bf16.mxu0 0
        %3192 = vmatpush1.bf16.msra.mxu0 0
        %3193 = vmatprep.subr.bf16.mxu0 0
        %3194 = vmatpush1.bf16.msra.mxu0 0
        %3195 = vmatprep.subr.bf16.mxu0 0
        %3196 = vmatpush1.bf16.msra.mxu0 0
        %3197 = vmatprep.subr.bf16.mxu0 0
        %3198 = vmatpush1.bf16.msra.mxu0 0
        %3199 = vmatprep.subr.bf16.mxu0 0
        %3200 = vmatpush1.bf16.msra.mxu0 0
        %3201 = vmatprep.subr.bf16.mxu0 0
        %3202 = vmatpush1.bf16.msra.mxu0 0
        %3203 = vmatprep.mubr.bf16.mxu0 0
        %3204 = vmatmul.mubr.bf16.gmra.mrb[0].mxu0 %v3169
        %v3205 = vpop.f32.mrb[0].mxu0
        %v3206 = vadd.f32 %v583, %v3205
        %v3207 = vpop.f32.mrb[0].mxu0
        %v3208 = vadd.f32 %v587, %v3207
        %v3209 = vpop.f32.mrb[0].mxu0
        %v3210 = vpop.f32.mrb[0].mxu0
        %3211 = vdwg.mxu0
        %3212 = vmatprep.subr.bf16.mxu0 0
        %3213 = vmatpush1.bf16.msra.mxu0 %v1715
        %3214 = vmatprep.subr.bf16.mxu0 0
        %3215 = vmatpush1.bf16.msra.mxu0 %v1718
        %3216 = vmatprep.subr.bf16.mxu0 0
        %3217 = vmatpush1.bf16.msra.mxu0 %v1721
        %3218 = vmatprep.subr.bf16.mxu0 0
        %3219 = vmatpush1.bf16.msra.mxu0 %v1724
        %3220 = vmatprep.subr.bf16.mxu0 0
        %3221 = vmatpush1.bf16.msra.mxu0 %v1727
        %3222 = vmatprep.subr.bf16.mxu0 0
        %3223 = vmatpush1.bf16.msra.mxu0 %v1730
        %3224 = vmatprep.subr.bf16.mxu0 0
        %3225 = vmatpush1.bf16.msra.mxu0 %v1733
        %3226 = vmatprep.subr.bf16.mxu0 0
        %3227 = vmatpush1.bf16.msra.mxu0 %v1736
        %3228 = vmatprep.subr.bf16.mxu0 0
        %3229 = vmatpush1.bf16.msra.mxu0 0
        %3230 = vmatprep.subr.bf16.mxu0 0
        %3231 = vmatpush1.bf16.msra.mxu0 0
        %3232 = vmatprep.subr.bf16.mxu0 0
        %3233 = vmatpush1.bf16.msra.mxu0 0
        %3234 = vmatprep.subr.bf16.mxu0 0
        %3235 = vmatpush1.bf16.msra.mxu0 0
        %3236 = vmatprep.subr.bf16.mxu0 0
        %3237 = vmatpush1.bf16.msra.mxu0 0
        %3238 = vmatprep.subr.bf16.mxu0 0
        %3239 = vmatpush1.bf16.msra.mxu0 0
        %3240 = vmatprep.subr.bf16.mxu0 0
        %3241 = vmatpush1.bf16.msra.mxu0 0
        %3242 = vmatprep.subr.bf16.mxu0 0
        %3243 = vmatpush1.bf16.msra.mxu0 0
        %3244 = vmatprep.mubr.bf16.mxu0 0
        %3245 = vmatmul.mubr.bf16.gmra.mrb[0].mxu0 %v3169
        %v3246 = vpop.f32.mrb[0].mxu0
        %v3247 = vadd.f32 %v591, %v3246
        %v3248 = vpop.f32.mrb[0].mxu0
        %v3249 = vpop.f32.mrb[0].mxu0
        %v3250 = vpop.f32.mrb[0].mxu0
        %3251 = vdwg.mxu0
        %v3252 = vadd.f32 %v3206, %v2686
        %v3253 = vxor.u32 %v3252, 2147483648
        %v3254 = vmul.f32 %v3253, 1.442695
        %v3255 = vpow.pop %v3254
        %v3256 = vadd.f32 %v3255, 1.0
        %v3257 = vrcp.pop %v3256
        %v3258 = vmul.f32 1.0, %v3257
        %v3259 = vadd.f32 %v3208, %v2688
        %v3260 = vxor.u32 %v3259, 2147483648
        %v3261 = vmul.f32 %v3260, 1.442695
        %v3262 = vpow.pop %v3261
        %v3263 = vadd.f32 %v3262, 1.0
        %v3264 = vrcp.pop %v3263
        %v3265 = vmul.f32 1.0, %v3264
        %v3266 = vadd.f32 %v2727, %v608
        %v3267 = vmul.f32 %v3258, %v3266
        %v3268 = vadd.f32 %v3247, %v3267
        %v3269 = vtanh.pop %v3268
        %v3270 = vsub.f32 1.0, %v3265
        %v3271 = vmul.f32 %v3270, %v3269
        %v3272 = vmul.f32 %v3265, %v2568
        %v3273 = vadd.f32 %v3271, %v3272
        %v3274 = vpack.c.bf16 %v3273, %v3273
        %3275 = vmatprep.subr.bf16.mxu0 %v728
        %3276 = vmatpush1.bf16.msra.mxu0 %v727
        %3277 = vmatprep.subr.bf16.mxu0 %v731
        %3278 = vmatpush1.bf16.msra.mxu0 %v730
        %3279 = vmatprep.subr.bf16.mxu0 %v734
        %3280 = vmatpush1.bf16.msra.mxu0 %v733
        %3281 = vmatprep.subr.bf16.mxu0 %v737
        %3282 = vmatpush1.bf16.msra.mxu0 %v736
        %3283 = vmatprep.subr.bf16.mxu0 %v740
        %3284 = vmatpush1.bf16.msra.mxu0 %v739
        %3285 = vmatprep.subr.bf16.mxu0 %v743
        %3286 = vmatpush1.bf16.msra.mxu0 %v742
        %3287 = vmatprep.subr.bf16.mxu0 %v746
        %3288 = vmatpush1.bf16.msra.mxu0 %v745
        %3289 = vmatprep.subr.bf16.mxu0 %v749
        %3290 = vmatpush1.bf16.msra.mxu0 %v748
        %3291 = vmatprep.subr.bf16.mxu0 0
        %3292 = vmatpush1.bf16.msra.mxu0 0
        %3293 = vmatprep.subr.bf16.mxu0 0
        %3294 = vmatpush1.bf16.msra.mxu0 0
        %3295 = vmatprep.subr.bf16.mxu0 0
        %3296 = vmatpush1.bf16.msra.mxu0 0
        %3297 = vmatprep.subr.bf16.mxu0 0
        %3298 = vmatpush1.bf16.msra.mxu0 0
        %3299 = vmatprep.subr.bf16.mxu0 0
        %3300 = vmatpush1.bf16.msra.mxu0 0
        %3301 = vmatprep.subr.bf16.mxu0 0
        %3302 = vmatpush1.bf16.msra.mxu0 0
        %3303 = vmatprep.subr.bf16.mxu0 0
        %3304 = vmatpush1.bf16.msra.mxu0 0
        %3305 = vmatprep.subr.bf16.mxu0 0
        %3306 = vmatpush1.bf16.msra.mxu0 0
        %3307 = vmatprep.mubr.bf16.mxu0 0
        %3308 = vmatmul.mubr.bf16.gmra.mrb[0].mxu0 %v3169
        %v3309 = vpop.f32.mrb[0].mxu0
        %v3310 = vadd.f32 0.0, %v3309
        %v3311 = vpop.f32.mrb[0].mxu0
        %v3312 = vadd.f32 0.0, %v3311
        %v3313 = vpop.f32.mrb[0].mxu0
        %v3314 = vpop.f32.mrb[0].mxu0
        %3315 = vdwg.mxu0
        %3316 = vmatprep.subr.bf16.mxu0 0
        %3317 = vmatpush1.bf16.msra.mxu0 %v729
        %3318 = vmatprep.subr.bf16.mxu0 0
        %3319 = vmatpush1.bf16.msra.mxu0 %v732
        %3320 = vmatprep.subr.bf16.mxu0 0
        %3321 = vmatpush1.bf16.msra.mxu0 %v735
        %3322 = vmatprep.subr.bf16.mxu0 0
        %3323 = vmatpush1.bf16.msra.mxu0 %v738
        %3324 = vmatprep.subr.bf16.mxu0 0
        %3325 = vmatpush1.bf16.msra.mxu0 %v741
        %3326 = vmatprep.subr.bf16.mxu0 0
        %3327 = vmatpush1.bf16.msra.mxu0 %v744
        %3328 = vmatprep.subr.bf16.mxu0 0
        %3329 = vmatpush1.bf16.msra.mxu0 %v747
        %3330 = vmatprep.subr.bf16.mxu0 0
        %3331 = vmatpush1.bf16.msra.mxu0 %v750
        %3332 = vmatprep.subr.bf16.mxu0 0
        %3333 = vmatpush1.bf16.msra.mxu0 0
        %3334 = vmatprep.subr.bf16.mxu0 0
        %3335 = vmatpush1.bf16.msra.mxu0 0
        %3336 = vmatprep.subr.bf16.mxu0 0
        %3337 = vmatpush1.bf16.msra.mxu0 0
        %3338 = vmatprep.subr.bf16.mxu0 0
        %3339 = vmatpush1.bf16.msra.mxu0 0
        %3340 = vmatprep.subr.bf16.mxu0 0
        %3341 = vmatpush1.bf16.msra.mxu0 0
        %3342 = vmatprep.subr.bf16.mxu0 0
        %3343 = vmatpush1.bf16.msra.mxu0 0
        %3344 = vmatprep.subr.bf16.mxu0 0
        %3345 = vmatpush1.bf16.msra.mxu0 0
        %3346 = vmatprep.subr.bf16.mxu0 0
        %3347 = vmatpush1.bf16.msra.mxu0 0
        %3348 = vmatprep.mubr.bf16.mxu0 0
        %3349 = vmatmul.mubr.bf16.gmra.mrb[0].mxu0 %v3169
        %v3350 = vpop.f32.mrb[0].mxu0
        %v3351 = vadd.f32 0.0, %v3350
        %v3352 = vpop.f32.mrb[0].mxu0
        %v3353 = vpop.f32.mrb[0].mxu0
        %v3354 = vpop.f32.mrb[0].mxu0
        %3355 = vdwg.mxu0
        %3356 = vmatprep.subr.bf16.mxu0 %v970
        %3357 = vmatpush1.bf16.msra.mxu0 %v969
        %3358 = vmatprep.subr.bf16.mxu0 %v973
        %3359 = vmatpush1.bf16.msra.mxu0 %v972
        %3360 = vmatprep.subr.bf16.mxu0 %v976
        %3361 = vmatpush1.bf16.msra.mxu0 %v975
        %3362 = vmatprep.subr.bf16.mxu0 %v979
        %3363 = vmatpush1.bf16.msra.mxu0 %v978
        %3364 = vmatprep.subr.bf16.mxu0 %v982
        %3365 = vmatpush1.bf16.msra.mxu0 %v981
        %3366 = vmatprep.subr.bf16.mxu0 %v985
        %3367 = vmatpush1.bf16.msra.mxu0 %v984
        %3368 = vmatprep.subr.bf16.mxu0 %v988
        %3369 = vmatpush1.bf16.msra.mxu0 %v987
        %3370 = vmatprep.subr.bf16.mxu0 %v991
        %3371 = vmatpush1.bf16.msra.mxu0 %v990
        %3372 = vmatprep.subr.bf16.mxu0 0
        %3373 = vmatpush1.bf16.msra.mxu0 0
        %3374 = vmatprep.subr.bf16.mxu0 0
        %3375 = vmatpush1.bf16.msra.mxu0 0
        %3376 = vmatprep.subr.bf16.mxu0 0
        %3377 = vmatpush1.bf16.msra.mxu0 0
        %3378 = vmatprep.subr.bf16.mxu0 0
        %3379 = vmatpush1.bf16.msra.mxu0 0
        %3380 = vmatprep.subr.bf16.mxu0 0
        %3381 = vmatpush1.bf16.msra.mxu0 0
        %3382 = vmatprep.subr.bf16.mxu0 0
        %3383 = vmatpush1.bf16.msra.mxu0 0
        %3384 = vmatprep.subr.bf16.mxu0 0
        %3385 = vmatpush1.bf16.msra.mxu0 0
        %3386 = vmatprep.subr.bf16.mxu0 0
        %3387 = vmatpush1.bf16.msra.mxu0 0
        %3388 = vmatprep.mubr.bf16.mxu0 0
        %3389 = vmatmul.mubr.bf16.gmra.mrb[0].mxu0 %v3274
        %v3390 = vpop.f32.mrb[0].mxu0
        %v3391 = vadd.f32 0.0, %v3390
        %v3392 = vpop.f32.mrb[0].mxu0
        %v3393 = vadd.f32 0.0, %v3392
        %v3394 = vpop.f32.mrb[0].mxu0
        %v3395 = vpop.f32.mrb[0].mxu0
        %3396 = vdwg.mxu0
        %3397 = vmatprep.subr.bf16.mxu0 0
        %3398 = vmatpush1.bf16.msra.mxu0 %v971
        %3399 = vmatprep.subr.bf16.mxu0 0
        %3400 = vmatpush1.bf16.msra.mxu0 %v974
        %3401 = vmatprep.subr.bf16.mxu0 0
        %3402 = vmatpush1.bf16.msra.mxu0 %v977
        %3403 = vmatprep.subr.bf16.mxu0 0
        %3404 = vmatpush1.bf16.msra.mxu0 %v980
        %3405 = vmatprep.subr.bf16.mxu0 0
        %3406 = vmatpush1.bf16.msra.mxu0 %v983
        %3407 = vmatprep.subr.bf16.mxu0 0
        %3408 = vmatpush1.bf16.msra.mxu0 %v986
        %3409 = vmatprep.subr.bf16.mxu0 0
        %3410 = vmatpush1.bf16.msra.mxu0 %v989
        %3411 = vmatprep.subr.bf16.mxu0 0
        %3412 = vmatpush1.bf16.msra.mxu0 %v992
        %3413 = vmatprep.subr.bf16.mxu0 0
        %3414 = vmatpush1.bf16.msra.mxu0 0
        %3415 = vmatprep.subr.bf16.mxu0 0
        %3416 = vmatpush1.bf16.msra.mxu0 0
        %3417 = vmatprep.subr.bf16.mxu0 0
        %3418 = vmatpush1.bf16.msra.mxu0 0
        %3419 = vmatprep.subr.bf16.mxu0 0
        %3420 = vmatpush1.bf16.msra.mxu0 0
        %3421 = vmatprep.subr.bf16.mxu0 0
        %3422 = vmatpush1.bf16.msra.mxu0 0
        %3423 = vmatprep.subr.bf16.mxu0 0
        %3424 = vmatpush1.bf16.msra.mxu0 0
        %3425 = vmatprep.subr.bf16.mxu0 0
        %3426 = vmatpush1.bf16.msra.mxu0 0
        %3427 = vmatprep.subr.bf16.mxu0 0
        %3428 = vmatpush1.bf16.msra.mxu0 0
        %3429 = vmatprep.mubr.bf16.mxu0 0
        %3430 = vmatmul.mubr.bf16.gmra.mrb[0].mxu0 %v3274
        %v3431 = vpop.f32.mrb[0].mxu0
        %v3432 = vadd.f32 0.0, %v3431
        %v3433 = vpop.f32.mrb[0].mxu0
        %v3434 = vpop.f32.mrb[0].mxu0
        %v3435 = vpop.f32.mrb[0].mxu0
        %3436 = vdwg.mxu0
        %s3437 = scalar_lea.vmem [#allocation3], 3
        %v3438 = vld [vmem:[%s3437] ss:$8 sm:$0x7]
        %s3439 = scalar_lea.vmem [#allocation3], 27
        %v3440 = vld [vmem:[%s3439] ss:$8 sm:$0x7]
        %s3441 = scalar_lea.vmem [#allocation3], 51
        %v3442 = vld [vmem:[%s3441] ss:$8 sm:$0x7]
        %s3443 = scalar_lea.vmem [#allocation3], 75
        %v3444 = vld [vmem:[%s3443] ss:$8 sm:$0x7]
        %s3445 = scalar_lea.vmem [#allocation3], 99
        %v3446 = vld [vmem:[%s3445] ss:$8 sm:$0x7]
        %s3447 = scalar_lea.vmem [#allocation3], 123
        %v3448 = vld [vmem:[%s3447] ss:$8 sm:$0x7]
        %s3449 = scalar_lea.vmem [#allocation3], 147
        %v3450 = vld [vmem:[%s3449] ss:$8 sm:$0x7]
        %s3451 = scalar_lea.vmem [#allocation3], 171
        %v3452 = vld [vmem:[%s3451] ss:$8 sm:$0x7]
        %v3454 = vcombine.high %v3310, %v3310
        %v3456 = vunpack.c.l.s4 1966171168
        %v3457 = vunpack.c.0.s8 %v3456
        %v3458 = vlaneseq
        %v3459 = vshrl.u32 %v3458, 7
        %v3460 = vsub.s32 %v3457, %v3459
        %v3461 = vrot.slane %v3310, %v3460
        %v3463 = vunpack.c.l.s4 1966171168
        %v3464 = vunpack.c.0.s8 %v3463
        %v3465 = vlaneseq
        %v3466 = vshrl.u32 %v3465, 7
        %v3467 = vsub.s32 %v3464, %v3466
        %v3468 = vrot.slane %v3454, %v3467
        %v3469 = vcombine.high %v3461, %v3461
        %v3470 = vcombine.high %v3468, %v3468
        %v3472 = vunpack.c.l.s4 1966171168
        %v3473 = vunpack.c.0.s8 %v3472
        %v3474 = vlaneseq
        %v3475 = vshrl.u32 %v3474, 7
        %v3476 = vsub.s32 %v3473, %v3475
        %v3477 = vrot.slane %v3461, %v3476
        %v3479 = vunpack.c.l.s4 1966171168
        %v3480 = vunpack.c.0.s8 %v3479
        %v3481 = vlaneseq
        %v3482 = vshrl.u32 %v3481, 7
        %v3483 = vsub.s32 %v3480, %v3482
        %v3484 = vrot.slane %v3468, %v3483
        %v3486 = vunpack.c.l.s4 1966171168
        %v3487 = vunpack.c.0.s8 %v3486
        %v3488 = vlaneseq
        %v3489 = vshrl.u32 %v3488, 7
        %v3490 = vsub.s32 %v3487, %v3489
        %v3491 = vrot.slane %v3469, %v3490
        %v3493 = vunpack.c.l.s4 1966171168
        %v3494 = vunpack.c.0.s8 %v3493
        %v3495 = vlaneseq
        %v3496 = vshrl.u32 %v3495, 7
        %v3497 = vsub.s32 %v3494, %v3496
        %v3498 = vrot.slane %v3470, %v3497
        %v3499 = vcombine.high %v3477, %v3477
        %v3500 = vcombine.high %v3484, %v3484
        %v3501 = vcombine.high %v3491, %v3491
        %v3502 = vcombine.high %v3498, %v3498
        %v3511 = vadd.f32 %v3438, %v3477
        %v3512 = vadd.f32 %v3440, %v3491
        %v3513 = vadd.f32 %v3442, %v3499
        %v3514 = vadd.f32 %v3444, %v3501
        %v3515 = vadd.f32 %v3446, %v3484
        %v3516 = vadd.f32 %v3448, %v3498
        %v3517 = vadd.f32 %v3450, %v3500
        %v3518 = vadd.f32 %v3452, %v3502
        %v3519 = vxor.u32 %v3511, 2147483648
        %v3520 = vxor.u32 %v3512, 2147483648
        %v3521 = vxor.u32 %v3513, 2147483648
        %v3522 = vxor.u32 %v3514, 2147483648
        %v3523 = vxor.u32 %v3515, 2147483648
        %v3524 = vxor.u32 %v3516, 2147483648
        %v3525 = vxor.u32 %v3517, 2147483648
        %v3526 = vxor.u32 %v3518, 2147483648
        %v3527 = vmul.f32 %v3519, 1.442695
        %v3528 = vpow.pop %v3527
        %v3529 = vmul.f32 %v3520, 1.442695
        %v3530 = vpow.pop %v3529
        %v3531 = vmul.f32 %v3521, 1.442695
        %v3532 = vpow.pop %v3531
        %v3533 = vmul.f32 %v3522, 1.442695
        %v3534 = vpow.pop %v3533
        %v3535 = vmul.f32 %v3523, 1.442695
        %v3536 = vpow.pop %v3535
        %v3537 = vmul.f32 %v3524, 1.442695
        %v3538 = vpow.pop %v3537
        %v3539 = vmul.f32 %v3525, 1.442695
        %v3540 = vpow.pop %v3539
        %v3541 = vmul.f32 %v3526, 1.442695
        %v3542 = vpow.pop %v3541
        %v3543 = vadd.f32 %v3528, 1.0
        %v3544 = vadd.f32 %v3530, 1.0
        %v3545 = vadd.f32 %v3532, 1.0
        %v3546 = vadd.f32 %v3534, 1.0
        %v3547 = vadd.f32 %v3536, 1.0
        %v3548 = vadd.f32 %v3538, 1.0
        %v3549 = vadd.f32 %v3540, 1.0
        %v3550 = vadd.f32 %v3542, 1.0
        %v3551 = vrcp.pop %v3543
        %v3552 = vmul.f32 1.0, %v3551
        %v3553 = vrcp.pop %v3544
        %v3554 = vmul.f32 1.0, %v3553
        %v3555 = vrcp.pop %v3545
        %v3556 = vmul.f32 1.0, %v3555
        %v3557 = vrcp.pop %v3546
        %v3558 = vmul.f32 1.0, %v3557
        %v3559 = vrcp.pop %v3547
        %v3560 = vmul.f32 1.0, %v3559
        %v3561 = vrcp.pop %v3548
        %v3562 = vmul.f32 1.0, %v3561
        %v3563 = vrcp.pop %v3549
        %v3564 = vmul.f32 1.0, %v3563
        %v3565 = vrcp.pop %v3550
        %v3566 = vmul.f32 1.0, %v3565
        %v3575 = vrot.slane %v3438, 1
        %v3576 = vrot.slane %v3440, 1
        %v3577 = vrot.slane %v3442, 1
        %v3578 = vrot.slane %v3444, 1
        %v3579 = vrot.slane %v3446, 1
        %v3580 = vrot.slane %v3448, 1
        %v3581 = vrot.slane %v3450, 1
        %v3582 = vrot.slane %v3452, 1
        %v3592 = vcombine.high %v3312, %v3312
        %v3594 = vunpack.c.l.s4 1966171168
        %v3595 = vunpack.c.0.s8 %v3594
        %v3596 = vlaneseq
        %v3597 = vshrl.u32 %v3596, 7
        %v3598 = vsub.s32 %v3595, %v3597
        %v3599 = vrot.slane %v3312, %v3598
        %v3601 = vunpack.c.l.s4 1966171168
        %v3602 = vunpack.c.0.s8 %v3601
        %v3603 = vlaneseq
        %v3604 = vshrl.u32 %v3603, 7
        %v3605 = vsub.s32 %v3602, %v3604
        %v3606 = vrot.slane %v3592, %v3605
        %v3607 = vcombine.high %v3599, %v3599
        %v3608 = vcombine.high %v3606, %v3606
        %v3610 = vunpack.c.l.s4 1966171168
        %v3611 = vunpack.c.0.s8 %v3610
        %v3612 = vlaneseq
        %v3613 = vshrl.u32 %v3612, 7
        %v3614 = vsub.s32 %v3611, %v3613
        %v3615 = vrot.slane %v3599, %v3614
        %v3617 = vunpack.c.l.s4 1966171168
        %v3618 = vunpack.c.0.s8 %v3617
        %v3619 = vlaneseq
        %v3620 = vshrl.u32 %v3619, 7
        %v3621 = vsub.s32 %v3618, %v3620
        %v3622 = vrot.slane %v3606, %v3621
        %v3624 = vunpack.c.l.s4 1966171168
        %v3625 = vunpack.c.0.s8 %v3624
        %v3626 = vlaneseq
        %v3627 = vshrl.u32 %v3626, 7
        %v3628 = vsub.s32 %v3625, %v3627
        %v3629 = vrot.slane %v3607, %v3628
        %v3631 = vunpack.c.l.s4 1966171168
        %v3632 = vunpack.c.0.s8 %v3631
        %v3633 = vlaneseq
        %v3634 = vshrl.u32 %v3633, 7
        %v3635 = vsub.s32 %v3632, %v3634
        %v3636 = vrot.slane %v3608, %v3635
        %v3637 = vcombine.high %v3615, %v3615
        %v3638 = vcombine.high %v3622, %v3622
        %v3639 = vcombine.high %v3629, %v3629
        %v3640 = vcombine.high %v3636, %v3636
        %v3649 = vadd.f32 %v3575, %v3615
        %v3650 = vadd.f32 %v3576, %v3629
        %v3651 = vadd.f32 %v3577, %v3637
        %v3652 = vadd.f32 %v3578, %v3639
        %v3653 = vadd.f32 %v3579, %v3622
        %v3654 = vadd.f32 %v3580, %v3636
        %v3655 = vadd.f32 %v3581, %v3638
        %v3656 = vadd.f32 %v3582, %v3640
        %v3657 = vxor.u32 %v3649, 2147483648
        %v3658 = vxor.u32 %v3650, 2147483648
        %v3659 = vxor.u32 %v3651, 2147483648
        %v3660 = vxor.u32 %v3652, 2147483648
        %v3661 = vxor.u32 %v3653, 2147483648
        %v3662 = vxor.u32 %v3654, 2147483648
        %v3663 = vxor.u32 %v3655, 2147483648
        %v3664 = vxor.u32 %v3656, 2147483648
        %v3665 = vmul.f32 %v3657, 1.442695
        %v3666 = vpow.pop %v3665
        %v3667 = vmul.f32 %v3658, 1.442695
        %v3668 = vpow.pop %v3667
        %v3669 = vmul.f32 %v3659, 1.442695
        %v3670 = vpow.pop %v3669
        %v3671 = vmul.f32 %v3660, 1.442695
        %v3672 = vpow.pop %v3671
        %v3673 = vmul.f32 %v3661, 1.442695
        %v3674 = vpow.pop %v3673
        %v3675 = vmul.f32 %v3662, 1.442695
        %v3676 = vpow.pop %v3675
        %v3677 = vmul.f32 %v3663, 1.442695
        %v3678 = vpow.pop %v3677
        %v3679 = vmul.f32 %v3664, 1.442695
        %v3680 = vpow.pop %v3679
        %v3681 = vadd.f32 %v3666, 1.0
        %v3682 = vadd.f32 %v3668, 1.0
        %v3683 = vadd.f32 %v3670, 1.0
        %v3684 = vadd.f32 %v3672, 1.0
        %v3685 = vadd.f32 %v3674, 1.0
        %v3686 = vadd.f32 %v3676, 1.0
        %v3687 = vadd.f32 %v3678, 1.0
        %v3688 = vadd.f32 %v3680, 1.0
        %v3689 = vrcp.pop %v3681
        %v3690 = vmul.f32 1.0, %v3689
        %v3691 = vrcp.pop %v3682
        %v3692 = vmul.f32 1.0, %v3691
        %v3693 = vrcp.pop %v3683
        %v3694 = vmul.f32 1.0, %v3693
        %v3695 = vrcp.pop %v3684
        %v3696 = vmul.f32 1.0, %v3695
        %v3697 = vrcp.pop %v3685
        %v3698 = vmul.f32 1.0, %v3697
        %v3699 = vrcp.pop %v3686
        %v3700 = vmul.f32 1.0, %v3699
        %v3701 = vrcp.pop %v3687
        %v3702 = vmul.f32 1.0, %v3701
        %v3703 = vrcp.pop %v3688
        %v3704 = vmul.f32 1.0, %v3703
        %v3705 = vadd.f32 %v3351, %v600
        %v3707 = vcombine.high %v3705, %v3705
        %v3709 = vunpack.c.l.s4 1966171168
        %v3710 = vunpack.c.0.s8 %v3709
        %v3711 = vlaneseq
        %v3712 = vshrl.u32 %v3711, 7
        %v3713 = vsub.s32 %v3710, %v3712
        %v3714 = vrot.slane %v3705, %v3713
        %v3716 = vunpack.c.l.s4 1966171168
        %v3717 = vunpack.c.0.s8 %v3716
        %v3718 = vlaneseq
        %v3719 = vshrl.u32 %v3718, 7
        %v3720 = vsub.s32 %v3717, %v3719
        %v3721 = vrot.slane %v3707, %v3720
        %v3722 = vcombine.high %v3714, %v3714
        %v3723 = vcombine.high %v3721, %v3721
        %v3725 = vunpack.c.l.s4 1966171168
        %v3726 = vunpack.c.0.s8 %v3725
        %v3727 = vlaneseq
        %v3728 = vshrl.u32 %v3727, 7
        %v3729 = vsub.s32 %v3726, %v3728
        %v3730 = vrot.slane %v3714, %v3729
        %v3732 = vunpack.c.l.s4 1966171168
        %v3733 = vunpack.c.0.s8 %v3732
        %v3734 = vlaneseq
        %v3735 = vshrl.u32 %v3734, 7
        %v3736 = vsub.s32 %v3733, %v3735
        %v3737 = vrot.slane %v3721, %v3736
        %v3739 = vunpack.c.l.s4 1966171168
        %v3740 = vunpack.c.0.s8 %v3739
        %v3741 = vlaneseq
        %v3742 = vshrl.u32 %v3741, 7
        %v3743 = vsub.s32 %v3740, %v3742
        %v3744 = vrot.slane %v3722, %v3743
        %v3746 = vunpack.c.l.s4 1966171168
        %v3747 = vunpack.c.0.s8 %v3746
        %v3748 = vlaneseq
        %v3749 = vshrl.u32 %v3748, 7
        %v3750 = vsub.s32 %v3747, %v3749
        %v3751 = vrot.slane %v3723, %v3750
        %v3752 = vcombine.high %v3730, %v3730
        %v3753 = vcombine.high %v3737, %v3737
        %v3754 = vcombine.high %v3744, %v3744
        %v3755 = vcombine.high %v3751, %v3751
        %v3764 = vmul.f32 %v3552, %v3730
        %v3765 = vmul.f32 %v3554, %v3744
        %v3766 = vmul.f32 %v3556, %v3752
        %v3767 = vmul.f32 %v3558, %v3754
        %v3768 = vmul.f32 %v3560, %v3737
        %v3769 = vmul.f32 %v3562, %v3751
        %v3770 = vmul.f32 %v3564, %v3753
        %v3771 = vmul.f32 %v3566, %v3755
        %v3772 = vrot.slane %v3438, 2
        %v3773 = vrot.slane %v3440, 2
        %v3774 = vrot.slane %v3442, 2
        %v3775 = vrot.slane %v3444, 2
        %v3776 = vrot.slane %v3446, 2
        %v3777 = vrot.slane %v3448, 2
        %v3778 = vrot.slane %v3450, 2
        %v3779 = vrot.slane %v3452, 2
        %v3788 = vadd.f32 %v3772, %v3764
        %v3789 = vadd.f32 %v3773, %v3765
        %v3790 = vadd.f32 %v3774, %v3766
        %v3791 = vadd.f32 %v3775, %v3767
        %v3792 = vadd.f32 %v3776, %v3768
        %v3793 = vadd.f32 %v3777, %v3769
        %v3794 = vadd.f32 %v3778, %v3770
        %v3795 = vadd.f32 %v3779, %v3771
        %v3796 = vtanh.pop %v3788
        %v3797 = vtanh.pop %v3789
        %v3798 = vtanh.pop %v3790
        %v3799 = vtanh.pop %v3791
        %v3800 = vtanh.pop %v3792
        %v3801 = vtanh.pop %v3793
        %v3802 = vtanh.pop %v3794
        %v3803 = vtanh.pop %v3795
        %v3804 = vsub.f32 1.0, %v3690
        %v3805 = vsub.f32 1.0, %v3692
        %v3806 = vsub.f32 1.0, %v3694
        %v3807 = vsub.f32 1.0, %v3696
        %v3808 = vsub.f32 1.0, %v3698
        %v3809 = vsub.f32 1.0, %v3700
        %v3810 = vsub.f32 1.0, %v3702
        %v3811 = vsub.f32 1.0, %v3704
        %v3812 = vmul.f32 %v3804, %v3796
        %v3813 = vmul.f32 %v3805, %v3797
        %v3814 = vmul.f32 %v3806, %v3798
        %v3815 = vmul.f32 %v3807, %v3799
        %v3816 = vmul.f32 %v3808, %v3800
        %v3817 = vmul.f32 %v3809, %v3801
        %v3818 = vmul.f32 %v3810, %v3802
        %v3819 = vmul.f32 %v3811, %v3803
        %v3820 = vmul.f32 %v3690, %v3123
        %v3821 = vmul.f32 %v3692, %v3124
        %v3822 = vmul.f32 %v3694, %v3125
        %v3823 = vmul.f32 %v3696, %v3126
        %v3824 = vmul.f32 %v3698, %v3127
        %v3825 = vmul.f32 %v3700, %v3128
        %v3826 = vmul.f32 %v3702, %v3129
        %v3827 = vmul.f32 %v3704, %v3130
        %v3828 = vadd.f32 %v3812, %v3820
        %v3829 = vadd.f32 %v3813, %v3821
        %v3830 = vadd.f32 %v3814, %v3822
        %v3831 = vadd.f32 %v3815, %v3823
        %v3832 = vadd.f32 %v3816, %v3824
        %v3833 = vadd.f32 %v3817, %v3825
        %v3834 = vadd.f32 %v3818, %v3826
        %v3835 = vadd.f32 %v3819, %v3827
        %v3836 = vpack.c.bf16 %v3828, %v3828
        %v3837 = vpack.c.bf16 %v3829, %v3829
        %v3838 = vpack.c.bf16 %v3830, %v3830
        %v3839 = vpack.c.bf16 %v3831, %v3831
        %v3840 = vpack.c.bf16 %v3832, %v3832
        %v3841 = vpack.c.bf16 %v3833, %v3833
        %v3842 = vpack.c.bf16 %v3834, %v3834
        %v3843 = vpack.c.bf16 %v3835, %v3835
        %v3852 = vunpack.c.l.b16 %v3836
        %v3853 = vunpack.c.l.b16 %v3837
        %v3854 = vunpack.c.l.b16 %v3838
        %v3855 = vunpack.c.l.b16 %v3839
        %v3856 = vunpack.c.l.b16 %v3840
        %v3857 = vunpack.c.l.b16 %v3841
        %v3858 = vunpack.c.l.b16 %v3842
        %v3859 = vunpack.c.l.b16 %v3843
        %v3860 = vrot.slane %v3853, 7
        %v3861 = vsel %vm1611, %v3860, %v3852
        %v3862 = vrot.slane %v3854, 6
        %v3863 = vsel %vm1614, %v3862, %v3861
        %v3864 = vrot.slane %v3855, 5
        %v3865 = vsel %vm1617, %v3864, %v3863
        %v3866 = vrot.slane %v3856, 4
        %v3867 = vsel %vm1620, %v3866, %v3865
        %v3868 = vrot.slane %v3857, 3
        %v3869 = vsel %vm1623, %v3868, %v3867
        %v3870 = vrot.slane %v3858, 2
        %v3871 = vsel %vm1626, %v3870, %v3869
        %v3872 = vrot.slane %v3859, 1
        %v3873 = vsel %vm1629, %v3872, %v3871
        %v3874 = vpack.c.b16 %v3873, %v3873
        %3876 = vmatprep.subr.bf16.mxu0 %v1714
        %3877 = vmatpush1.bf16.msra.mxu0 %v1713
        %3878 = vmatprep.subr.bf16.mxu0 %v1717
        %3879 = vmatpush1.bf16.msra.mxu0 %v1716
        %3880 = vmatprep.subr.bf16.mxu0 %v1720
        %3881 = vmatpush1.bf16.msra.mxu0 %v1719
        %3882 = vmatprep.subr.bf16.mxu0 %v1723
        %3883 = vmatpush1.bf16.msra.mxu0 %v1722
        %3884 = vmatprep.subr.bf16.mxu0 %v1726
        %3885 = vmatpush1.bf16.msra.mxu0 %v1725
        %3886 = vmatprep.subr.bf16.mxu0 %v1729
        %3887 = vmatpush1.bf16.msra.mxu0 %v1728
        %3888 = vmatprep.subr.bf16.mxu0 %v1732
        %3889 = vmatpush1.bf16.msra.mxu0 %v1731
        %3890 = vmatprep.subr.bf16.mxu0 %v1735
        %3891 = vmatpush1.bf16.msra.mxu0 %v1734
        %3892 = vmatprep.subr.bf16.mxu0 0
        %3893 = vmatpush1.bf16.msra.mxu0 0
        %3894 = vmatprep.subr.bf16.mxu0 0
        %3895 = vmatpush1.bf16.msra.mxu0 0
        %3896 = vmatprep.subr.bf16.mxu0 0
        %3897 = vmatpush1.bf16.msra.mxu0 0
        %3898 = vmatprep.subr.bf16.mxu0 0
        %3899 = vmatpush1.bf16.msra.mxu0 0
        %3900 = vmatprep.subr.bf16.mxu0 0
        %3901 = vmatpush1.bf16.msra.mxu0 0
        %3902 = vmatprep.subr.bf16.mxu0 0
        %3903 = vmatpush1.bf16.msra.mxu0 0
        %3904 = vmatprep.subr.bf16.mxu0 0
        %3905 = vmatpush1.bf16.msra.mxu0 0
        %3906 = vmatprep.subr.bf16.mxu0 0
        %3907 = vmatpush1.bf16.msra.mxu0 0
        %3908 = vmatprep.mubr.bf16.mxu0 0
        %3909 = vmatmul.mubr.bf16.gmra.mrb[0].mxu0 %v3874
        %v3910 = vpop.f32.mrb[0].mxu0
        %v3911 = vadd.f32 %v583, %v3910
        %v3912 = vpop.f32.mrb[0].mxu0
        %v3913 = vadd.f32 %v587, %v3912
        %v3914 = vpop.f32.mrb[0].mxu0
        %v3915 = vpop.f32.mrb[0].mxu0
        %3916 = vdwg.mxu0
        %3917 = vmatprep.subr.bf16.mxu0 0
        %3918 = vmatpush1.bf16.msra.mxu0 %v1715
        %3919 = vmatprep.subr.bf16.mxu0 0
        %3920 = vmatpush1.bf16.msra.mxu0 %v1718
        %3921 = vmatprep.subr.bf16.mxu0 0
        %3922 = vmatpush1.bf16.msra.mxu0 %v1721
        %3923 = vmatprep.subr.bf16.mxu0 0
        %3924 = vmatpush1.bf16.msra.mxu0 %v1724
        %3925 = vmatprep.subr.bf16.mxu0 0
        %3926 = vmatpush1.bf16.msra.mxu0 %v1727
        %3927 = vmatprep.subr.bf16.mxu0 0
        %3928 = vmatpush1.bf16.msra.mxu0 %v1730
        %3929 = vmatprep.subr.bf16.mxu0 0
        %3930 = vmatpush1.bf16.msra.mxu0 %v1733
        %3931 = vmatprep.subr.bf16.mxu0 0
        %3932 = vmatpush1.bf16.msra.mxu0 %v1736
        %3933 = vmatprep.subr.bf16.mxu0 0
        %3934 = vmatpush1.bf16.msra.mxu0 0
        %3935 = vmatprep.subr.bf16.mxu0 0
        %3936 = vmatpush1.bf16.msra.mxu0 0
        %3937 = vmatprep.subr.bf16.mxu0 0
        %3938 = vmatpush1.bf16.msra.mxu0 0
        %3939 = vmatprep.subr.bf16.mxu0 0
        %3940 = vmatpush1.bf16.msra.mxu0 0
        %3941 = vmatprep.subr.bf16.mxu0 0
        %3942 = vmatpush1.bf16.msra.mxu0 0
        %3943 = vmatprep.subr.bf16.mxu0 0
        %3944 = vmatpush1.bf16.msra.mxu0 0
        %3945 = vmatprep.subr.bf16.mxu0 0
        %3946 = vmatpush1.bf16.msra.mxu0 0
        %3947 = vmatprep.subr.bf16.mxu0 0
        %3948 = vmatpush1.bf16.msra.mxu0 0
        %3949 = vmatprep.mubr.bf16.mxu0 0
        %3950 = vmatmul.mubr.bf16.gmra.mrb[0].mxu0 %v3874
        %v3951 = vpop.f32.mrb[0].mxu0
        %v3952 = vadd.f32 %v591, %v3951
        %v3953 = vpop.f32.mrb[0].mxu0
        %v3954 = vpop.f32.mrb[0].mxu0
        %v3955 = vpop.f32.mrb[0].mxu0
        %3956 = vdwg.mxu0
        %v3957 = vadd.f32 %v3911, %v3391
        %v3958 = vxor.u32 %v3957, 2147483648
        %v3959 = vmul.f32 %v3958, 1.442695
        %v3960 = vpow.pop %v3959
        %v3961 = vadd.f32 %v3960, 1.0
        %v3962 = vrcp.pop %v3961
        %v3963 = vmul.f32 1.0, %v3962
        %v3964 = vadd.f32 %v3913, %v3393
        %v3965 = vxor.u32 %v3964, 2147483648
        %v3966 = vmul.f32 %v3965, 1.442695
        %v3967 = vpow.pop %v3966
        %v3968 = vadd.f32 %v3967, 1.0
        %v3969 = vrcp.pop %v3968
        %v3970 = vmul.f32 1.0, %v3969
        %v3971 = vadd.f32 %v3432, %v608
        %v3972 = vmul.f32 %v3963, %v3971
        %v3973 = vadd.f32 %v3952, %v3972
        %v3974 = vtanh.pop %v3973
        %v3975 = vsub.f32 1.0, %v3970
        %v3976 = vmul.f32 %v3975, %v3974
        %v3977 = vmul.f32 %v3970, %v3273
        %v3978 = vadd.f32 %v3976, %v3977
        %v3979 = vpack.c.bf16 %v3978, %v3978
        %3980 = vmatprep.subr.bf16.mxu0 %v728
        %3981 = vmatpush1.bf16.msra.mxu0 %v727
        %3982 = vmatprep.subr.bf16.mxu0 %v731
        %3983 = vmatpush1.bf16.msra.mxu0 %v730
        %3984 = vmatprep.subr.bf16.mxu0 %v734
        %3985 = vmatpush1.bf16.msra.mxu0 %v733
        %3986 = vmatprep.subr.bf16.mxu0 %v737
        %3987 = vmatpush1.bf16.msra.mxu0 %v736
        %3988 = vmatprep.subr.bf16.mxu0 %v740
        %3989 = vmatpush1.bf16.msra.mxu0 %v739
        %3990 = vmatprep.subr.bf16.mxu0 %v743
        %3991 = vmatpush1.bf16.msra.mxu0 %v742
        %3992 = vmatprep.subr.bf16.mxu0 %v746
        %3993 = vmatpush1.bf16.msra.mxu0 %v745
        %3994 = vmatprep.subr.bf16.mxu0 %v749
        %3995 = vmatpush1.bf16.msra.mxu0 %v748
        %3996 = vmatprep.subr.bf16.mxu0 0
        %3997 = vmatpush1.bf16.msra.mxu0 0
        %3998 = vmatprep.subr.bf16.mxu0 0
        %3999 = vmatpush1.bf16.msra.mxu0 0
        %4000 = vmatprep.subr.bf16.mxu0 0
        %4001 = vmatpush1.bf16.msra.mxu0 0
        %4002 = vmatprep.subr.bf16.mxu0 0
        %4003 = vmatpush1.bf16.msra.mxu0 0
        %4004 = vmatprep.subr.bf16.mxu0 0
        %4005 = vmatpush1.bf16.msra.mxu0 0
        %4006 = vmatprep.subr.bf16.mxu0 0
        %4007 = vmatpush1.bf16.msra.mxu0 0
        %4008 = vmatprep.subr.bf16.mxu0 0
        %4009 = vmatpush1.bf16.msra.mxu0 0
        %4010 = vmatprep.subr.bf16.mxu0 0
        %4011 = vmatpush1.bf16.msra.mxu0 0
        %4012 = vmatprep.mubr.bf16.mxu0 0
        %4013 = vmatmul.mubr.bf16.gmra.mrb[0].mxu0 %v3874
        %v4014 = vpop.f32.mrb[0].mxu0
        %v4015 = vadd.f32 0.0, %v4014
        %v4016 = vpop.f32.mrb[0].mxu0
        %v4017 = vadd.f32 0.0, %v4016
        %v4018 = vpop.f32.mrb[0].mxu0
        %v4019 = vpop.f32.mrb[0].mxu0
        %4020 = vdwg.mxu0
        %4021 = vmatprep.subr.bf16.mxu0 0
        %4022 = vmatpush1.bf16.msra.mxu0 %v729
        %4023 = vmatprep.subr.bf16.mxu0 0
        %4024 = vmatpush1.bf16.msra.mxu0 %v732
        %4025 = vmatprep.subr.bf16.mxu0 0
        %4026 = vmatpush1.bf16.msra.mxu0 %v735
        %4027 = vmatprep.subr.bf16.mxu0 0
        %4028 = vmatpush1.bf16.msra.mxu0 %v738
        %4029 = vmatprep.subr.bf16.mxu0 0
        %4030 = vmatpush1.bf16.msra.mxu0 %v741
        %4031 = vmatprep.subr.bf16.mxu0 0
        %4032 = vmatpush1.bf16.msra.mxu0 %v744
        %4033 = vmatprep.subr.bf16.mxu0 0
        %4034 = vmatpush1.bf16.msra.mxu0 %v747
        %4035 = vmatprep.subr.bf16.mxu0 0
        %4036 = vmatpush1.bf16.msra.mxu0 %v750
        %4037 = vmatprep.subr.bf16.mxu0 0
        %4038 = vmatpush1.bf16.msra.mxu0 0
        %4039 = vmatprep.subr.bf16.mxu0 0
        %4040 = vmatpush1.bf16.msra.mxu0 0
        %4041 = vmatprep.subr.bf16.mxu0 0
        %4042 = vmatpush1.bf16.msra.mxu0 0
        %4043 = vmatprep.subr.bf16.mxu0 0
        %4044 = vmatpush1.bf16.msra.mxu0 0
        %4045 = vmatprep.subr.bf16.mxu0 0
        %4046 = vmatpush1.bf16.msra.mxu0 0
        %4047 = vmatprep.subr.bf16.mxu0 0
        %4048 = vmatpush1.bf16.msra.mxu0 0
        %4049 = vmatprep.subr.bf16.mxu0 0
        %4050 = vmatpush1.bf16.msra.mxu0 0
        %4051 = vmatprep.subr.bf16.mxu0 0
        %4052 = vmatpush1.bf16.msra.mxu0 0
        %4053 = vmatprep.mubr.bf16.mxu0 0
        %4054 = vmatmul.mubr.bf16.gmra.mrb[0].mxu0 %v3874
        %v4055 = vpop.f32.mrb[0].mxu0
        %v4056 = vadd.f32 0.0, %v4055
        %v4057 = vpop.f32.mrb[0].mxu0
        %v4058 = vpop.f32.mrb[0].mxu0
        %v4059 = vpop.f32.mrb[0].mxu0
        %4060 = vdwg.mxu0
        %4061 = vmatprep.subr.bf16.mxu0 %v970
        %4062 = vmatpush1.bf16.msra.mxu0 %v969
        %4063 = vmatprep.subr.bf16.mxu0 %v973
        %4064 = vmatpush1.bf16.msra.mxu0 %v972
        %4065 = vmatprep.subr.bf16.mxu0 %v976
        %4066 = vmatpush1.bf16.msra.mxu0 %v975
        %4067 = vmatprep.subr.bf16.mxu0 %v979
        %4068 = vmatpush1.bf16.msra.mxu0 %v978
        %4069 = vmatprep.subr.bf16.mxu0 %v982
        %4070 = vmatpush1.bf16.msra.mxu0 %v981
        %4071 = vmatprep.subr.bf16.mxu0 %v985
        %4072 = vmatpush1.bf16.msra.mxu0 %v984
        %4073 = vmatprep.subr.bf16.mxu0 %v988
        %4074 = vmatpush1.bf16.msra.mxu0 %v987
        %4075 = vmatprep.subr.bf16.mxu0 %v991
        %4076 = vmatpush1.bf16.msra.mxu0 %v990
        %4077 = vmatprep.subr.bf16.mxu0 0
        %4078 = vmatpush1.bf16.msra.mxu0 0
        %4079 = vmatprep.subr.bf16.mxu0 0
        %4080 = vmatpush1.bf16.msra.mxu0 0
        %4081 = vmatprep.subr.bf16.mxu0 0
        %4082 = vmatpush1.bf16.msra.mxu0 0
        %4083 = vmatprep.subr.bf16.mxu0 0
        %4084 = vmatpush1.bf16.msra.mxu0 0
        %4085 = vmatprep.subr.bf16.mxu0 0
        %4086 = vmatpush1.bf16.msra.mxu0 0
        %4087 = vmatprep.subr.bf16.mxu0 0
        %4088 = vmatpush1.bf16.msra.mxu0 0
        %4089 = vmatprep.subr.bf16.mxu0 0
        %4090 = vmatpush1.bf16.msra.mxu0 0
        %4091 = vmatprep.subr.bf16.mxu0 0
        %4092 = vmatpush1.bf16.msra.mxu0 0
        %4093 = vmatprep.mubr.bf16.mxu0 0
        %4094 = vmatmul.mubr.bf16.gmra.mrb[0].mxu0 %v3979
        %v4095 = vpop.f32.mrb[0].mxu0
        %v4096 = vadd.f32 0.0, %v4095
        %v4097 = vpop.f32.mrb[0].mxu0
        %v4098 = vadd.f32 0.0, %v4097
        %v4099 = vpop.f32.mrb[0].mxu0
        %v4100 = vpop.f32.mrb[0].mxu0
        %4101 = vdwg.mxu0
        %4102 = vmatprep.subr.bf16.mxu0 0
        %4103 = vmatpush1.bf16.msra.mxu0 %v971
        %4104 = vmatprep.subr.bf16.mxu0 0
        %4105 = vmatpush1.bf16.msra.mxu0 %v974
        %4106 = vmatprep.subr.bf16.mxu0 0
        %4107 = vmatpush1.bf16.msra.mxu0 %v977
        %4108 = vmatprep.subr.bf16.mxu0 0
        %4109 = vmatpush1.bf16.msra.mxu0 %v980
        %4110 = vmatprep.subr.bf16.mxu0 0
        %4111 = vmatpush1.bf16.msra.mxu0 %v983
        %4112 = vmatprep.subr.bf16.mxu0 0
        %4113 = vmatpush1.bf16.msra.mxu0 %v986
        %4114 = vmatprep.subr.bf16.mxu0 0
        %4115 = vmatpush1.bf16.msra.mxu0 %v989
        %4116 = vmatprep.subr.bf16.mxu0 0
        %4117 = vmatpush1.bf16.msra.mxu0 %v992
        %4118 = vmatprep.subr.bf16.mxu0 0
        %4119 = vmatpush1.bf16.msra.mxu0 0
        %4120 = vmatprep.subr.bf16.mxu0 0
        %4121 = vmatpush1.bf16.msra.mxu0 0
        %4122 = vmatprep.subr.bf16.mxu0 0
        %4123 = vmatpush1.bf16.msra.mxu0 0
        %4124 = vmatprep.subr.bf16.mxu0 0
        %4125 = vmatpush1.bf16.msra.mxu0 0
        %4126 = vmatprep.subr.bf16.mxu0 0
        %4127 = vmatpush1.bf16.msra.mxu0 0
        %4128 = vmatprep.subr.bf16.mxu0 0
        %4129 = vmatpush1.bf16.msra.mxu0 0
        %4130 = vmatprep.subr.bf16.mxu0 0
        %4131 = vmatpush1.bf16.msra.mxu0 0
        %4132 = vmatprep.subr.bf16.mxu0 0
        %4133 = vmatpush1.bf16.msra.mxu0 0
        %4134 = vmatprep.mubr.bf16.mxu0 0
        %4135 = vmatmul.mubr.bf16.gmra.mrb[0].mxu0 %v3979
        %v4136 = vpop.f32.mrb[0].mxu0
        %v4137 = vadd.f32 0.0, %v4136
        %v4138 = vpop.f32.mrb[0].mxu0
        %v4139 = vpop.f32.mrb[0].mxu0
        %v4140 = vpop.f32.mrb[0].mxu0
        %4141 = vdwg.mxu0
        %s4142 = scalar_lea.vmem [#allocation3], 4
        %v4143 = vld [vmem:[%s4142] ss:$8 sm:$0x7]
        %s4144 = scalar_lea.vmem [#allocation3], 28
        %v4145 = vld [vmem:[%s4144] ss:$8 sm:$0x7]
        %s4146 = scalar_lea.vmem [#allocation3], 52
        %v4147 = vld [vmem:[%s4146] ss:$8 sm:$0x7]
        %s4148 = scalar_lea.vmem [#allocation3], 76
        %v4149 = vld [vmem:[%s4148] ss:$8 sm:$0x7]
        %s4150 = scalar_lea.vmem [#allocation3], 100
        %v4151 = vld [vmem:[%s4150] ss:$8 sm:$0x7]
        %s4152 = scalar_lea.vmem [#allocation3], 124
        %v4153 = vld [vmem:[%s4152] ss:$8 sm:$0x7]
        %s4154 = scalar_lea.vmem [#allocation3], 148
        %v4155 = vld [vmem:[%s4154] ss:$8 sm:$0x7]
        %s4156 = scalar_lea.vmem [#allocation3], 172
        %v4157 = vld [vmem:[%s4156] ss:$8 sm:$0x7]
        %v4159 = vcombine.high %v4015, %v4015
        %v4161 = vunpack.c.l.s4 1966171168
        %v4162 = vunpack.c.0.s8 %v4161
        %v4163 = vlaneseq
        %v4164 = vshrl.u32 %v4163, 7
        %v4165 = vsub.s32 %v4162, %v4164
        %v4166 = vrot.slane %v4015, %v4165
        %v4168 = vunpack.c.l.s4 1966171168
        %v4169 = vunpack.c.0.s8 %v4168
        %v4170 = vlaneseq
        %v4171 = vshrl.u32 %v4170, 7
        %v4172 = vsub.s32 %v4169, %v4171
        %v4173 = vrot.slane %v4159, %v4172
        %v4174 = vcombine.high %v4166, %v4166
        %v4175 = vcombine.high %v4173, %v4173
        %v4177 = vunpack.c.l.s4 1966171168
        %v4178 = vunpack.c.0.s8 %v4177
        %v4179 = vlaneseq
        %v4180 = vshrl.u32 %v4179, 7
        %v4181 = vsub.s32 %v4178, %v4180
        %v4182 = vrot.slane %v4166, %v4181
        %v4184 = vunpack.c.l.s4 1966171168
        %v4185 = vunpack.c.0.s8 %v4184
        %v4186 = vlaneseq
        %v4187 = vshrl.u32 %v4186, 7
        %v4188 = vsub.s32 %v4185, %v4187
        %v4189 = vrot.slane %v4173, %v4188
        %v4191 = vunpack.c.l.s4 1966171168
        %v4192 = vunpack.c.0.s8 %v4191
        %v4193 = vlaneseq
        %v4194 = vshrl.u32 %v4193, 7
        %v4195 = vsub.s32 %v4192, %v4194
        %v4196 = vrot.slane %v4174, %v4195
        %v4198 = vunpack.c.l.s4 1966171168
        %v4199 = vunpack.c.0.s8 %v4198
        %v4200 = vlaneseq
        %v4201 = vshrl.u32 %v4200, 7
        %v4202 = vsub.s32 %v4199, %v4201
        %v4203 = vrot.slane %v4175, %v4202
        %v4204 = vcombine.high %v4182, %v4182
        %v4205 = vcombine.high %v4189, %v4189
        %v4206 = vcombine.high %v4196, %v4196
        %v4207 = vcombine.high %v4203, %v4203
        %v4216 = vadd.f32 %v4143, %v4182
        %v4217 = vadd.f32 %v4145, %v4196
        %v4218 = vadd.f32 %v4147, %v4204
        %v4219 = vadd.f32 %v4149, %v4206
        %v4220 = vadd.f32 %v4151, %v4189
        %v4221 = vadd.f32 %v4153, %v4203
        %v4222 = vadd.f32 %v4155, %v4205
        %v4223 = vadd.f32 %v4157, %v4207
        %v4224 = vxor.u32 %v4216, 2147483648
        %v4225 = vxor.u32 %v4217, 2147483648
        %v4226 = vxor.u32 %v4218, 2147483648
        %v4227 = vxor.u32 %v4219, 2147483648
        %v4228 = vxor.u32 %v4220, 2147483648
        %v4229 = vxor.u32 %v4221, 2147483648
        %v4230 = vxor.u32 %v4222, 2147483648
        %v4231 = vxor.u32 %v4223, 2147483648
        %v4232 = vmul.f32 %v4224, 1.442695
        %v4233 = vpow.pop %v4232
        %v4234 = vmul.f32 %v4225, 1.442695
        %v4235 = vpow.pop %v4234
        %v4236 = vmul.f32 %v4226, 1.442695
        %v4237 = vpow.pop %v4236
        %v4238 = vmul.f32 %v4227, 1.442695
        %v4239 = vpow.pop %v4238
        %v4240 = vmul.f32 %v4228, 1.442695
        %v4241 = vpow.pop %v4240
        %v4242 = vmul.f32 %v4229, 1.442695
        %v4243 = vpow.pop %v4242
        %v4244 = vmul.f32 %v4230, 1.442695
        %v4245 = vpow.pop %v4244
        %v4246 = vmul.f32 %v4231, 1.442695
        %v4247 = vpow.pop %v4246
        %v4248 = vadd.f32 %v4233, 1.0
        %v4249 = vadd.f32 %v4235, 1.0
        %v4250 = vadd.f32 %v4237, 1.0
        %v4251 = vadd.f32 %v4239, 1.0
        %v4252 = vadd.f32 %v4241, 1.0
        %v4253 = vadd.f32 %v4243, 1.0
        %v4254 = vadd.f32 %v4245, 1.0
        %v4255 = vadd.f32 %v4247, 1.0
        %v4256 = vrcp.pop %v4248
        %v4257 = vmul.f32 1.0, %v4256
        %v4258 = vrcp.pop %v4249
        %v4259 = vmul.f32 1.0, %v4258
        %v4260 = vrcp.pop %v4250
        %v4261 = vmul.f32 1.0, %v4260
        %v4262 = vrcp.pop %v4251
        %v4263 = vmul.f32 1.0, %v4262
        %v4264 = vrcp.pop %v4252
        %v4265 = vmul.f32 1.0, %v4264
        %v4266 = vrcp.pop %v4253
        %v4267 = vmul.f32 1.0, %v4266
        %v4268 = vrcp.pop %v4254
        %v4269 = vmul.f32 1.0, %v4268
        %v4270 = vrcp.pop %v4255
        %v4271 = vmul.f32 1.0, %v4270
        %v4280 = vrot.slane %v4143, 1
        %v4281 = vrot.slane %v4145, 1
        %v4282 = vrot.slane %v4147, 1
        %v4283 = vrot.slane %v4149, 1
        %v4284 = vrot.slane %v4151, 1
        %v4285 = vrot.slane %v4153, 1
        %v4286 = vrot.slane %v4155, 1
        %v4287 = vrot.slane %v4157, 1
        %v4297 = vcombine.high %v4017, %v4017
        %v4299 = vunpack.c.l.s4 1966171168
        %v4300 = vunpack.c.0.s8 %v4299
        %v4301 = vlaneseq
        %v4302 = vshrl.u32 %v4301, 7
        %v4303 = vsub.s32 %v4300, %v4302
        %v4304 = vrot.slane %v4017, %v4303
        %v4306 = vunpack.c.l.s4 1966171168
        %v4307 = vunpack.c.0.s8 %v4306
        %v4308 = vlaneseq
        %v4309 = vshrl.u32 %v4308, 7
        %v4310 = vsub.s32 %v4307, %v4309
        %v4311 = vrot.slane %v4297, %v4310
        %v4312 = vcombine.high %v4304, %v4304
        %v4313 = vcombine.high %v4311, %v4311
        %v4315 = vunpack.c.l.s4 1966171168
        %v4316 = vunpack.c.0.s8 %v4315
        %v4317 = vlaneseq
        %v4318 = vshrl.u32 %v4317, 7
        %v4319 = vsub.s32 %v4316, %v4318
        %v4320 = vrot.slane %v4304, %v4319
        %v4322 = vunpack.c.l.s4 1966171168
        %v4323 = vunpack.c.0.s8 %v4322
        %v4324 = vlaneseq
        %v4325 = vshrl.u32 %v4324, 7
        %v4326 = vsub.s32 %v4323, %v4325
        %v4327 = vrot.slane %v4311, %v4326
        %v4329 = vunpack.c.l.s4 1966171168
        %v4330 = vunpack.c.0.s8 %v4329
        %v4331 = vlaneseq
        %v4332 = vshrl.u32 %v4331, 7
        %v4333 = vsub.s32 %v4330, %v4332
        %v4334 = vrot.slane %v4312, %v4333
        %v4336 = vunpack.c.l.s4 1966171168
        %v4337 = vunpack.c.0.s8 %v4336
        %v4338 = vlaneseq
        %v4339 = vshrl.u32 %v4338, 7
        %v4340 = vsub.s32 %v4337, %v4339
        %v4341 = vrot.slane %v4313, %v4340
        %v4342 = vcombine.high %v4320, %v4320
        %v4343 = vcombine.high %v4327, %v4327
        %v4344 = vcombine.high %v4334, %v4334
        %v4345 = vcombine.high %v4341, %v4341
        %v4354 = vadd.f32 %v4280, %v4320
        %v4355 = vadd.f32 %v4281, %v4334
        %v4356 = vadd.f32 %v4282, %v4342
        %v4357 = vadd.f32 %v4283, %v4344
        %v4358 = vadd.f32 %v4284, %v4327
        %v4359 = vadd.f32 %v4285, %v4341
        %v4360 = vadd.f32 %v4286, %v4343
        %v4361 = vadd.f32 %v4287, %v4345
        %v4362 = vxor.u32 %v4354, 2147483648
        %v4363 = vxor.u32 %v4355, 2147483648
        %v4364 = vxor.u32 %v4356, 2147483648
        %v4365 = vxor.u32 %v4357, 2147483648
        %v4366 = vxor.u32 %v4358, 2147483648
        %v4367 = vxor.u32 %v4359, 2147483648
        %v4368 = vxor.u32 %v4360, 2147483648
        %v4369 = vxor.u32 %v4361, 2147483648
        %v4370 = vmul.f32 %v4362, 1.442695
        %v4371 = vpow.pop %v4370
        %v4372 = vmul.f32 %v4363, 1.442695
        %v4373 = vpow.pop %v4372
        %v4374 = vmul.f32 %v4364, 1.442695
        %v4375 = vpow.pop %v4374
        %v4376 = vmul.f32 %v4365, 1.442695
        %v4377 = vpow.pop %v4376
        %v4378 = vmul.f32 %v4366, 1.442695
        %v4379 = vpow.pop %v4378
        %v4380 = vmul.f32 %v4367, 1.442695
        %v4381 = vpow.pop %v4380
        %v4382 = vmul.f32 %v4368, 1.442695
        %v4383 = vpow.pop %v4382
        %v4384 = vmul.f32 %v4369, 1.442695
        %v4385 = vpow.pop %v4384
        %v4386 = vadd.f32 %v4371, 1.0
        %v4387 = vadd.f32 %v4373, 1.0
        %v4388 = vadd.f32 %v4375, 1.0
        %v4389 = vadd.f32 %v4377, 1.0
        %v4390 = vadd.f32 %v4379, 1.0
        %v4391 = vadd.f32 %v4381, 1.0
        %v4392 = vadd.f32 %v4383, 1.0
        %v4393 = vadd.f32 %v4385, 1.0
        %v4394 = vrcp.pop %v4386
        %v4395 = vmul.f32 1.0, %v4394
        %v4396 = vrcp.pop %v4387
        %v4397 = vmul.f32 1.0, %v4396
        %v4398 = vrcp.pop %v4388
        %v4399 = vmul.f32 1.0, %v4398
        %v4400 = vrcp.pop %v4389
        %v4401 = vmul.f32 1.0, %v4400
        %v4402 = vrcp.pop %v4390
        %v4403 = vmul.f32 1.0, %v4402
        %v4404 = vrcp.pop %v4391
        %v4405 = vmul.f32 1.0, %v4404
        %v4406 = vrcp.pop %v4392
        %v4407 = vmul.f32 1.0, %v4406
        %v4408 = vrcp.pop %v4393
        %v4409 = vmul.f32 1.0, %v4408
        %v4410 = vadd.f32 %v4056, %v600
        %v4412 = vcombine.high %v4410, %v4410
        %v4414 = vunpack.c.l.s4 1966171168
        %v4415 = vunpack.c.0.s8 %v4414
        %v4416 = vlaneseq
        %v4417 = vshrl.u32 %v4416, 7
        %v4418 = vsub.s32 %v4415, %v4417
        %v4419 = vrot.slane %v4410, %v4418
        %v4421 = vunpack.c.l.s4 1966171168
        %v4422 = vunpack.c.0.s8 %v4421
        %v4423 = vlaneseq
        %v4424 = vshrl.u32 %v4423, 7
        %v4425 = vsub.s32 %v4422, %v4424
        %v4426 = vrot.slane %v4412, %v4425
        %v4427 = vcombine.high %v4419, %v4419
        %v4428 = vcombine.high %v4426, %v4426
        %v4430 = vunpack.c.l.s4 1966171168
        %v4431 = vunpack.c.0.s8 %v4430
        %v4432 = vlaneseq
        %v4433 = vshrl.u32 %v4432, 7
        %v4434 = vsub.s32 %v4431, %v4433
        %v4435 = vrot.slane %v4419, %v4434
        %v4437 = vunpack.c.l.s4 1966171168
        %v4438 = vunpack.c.0.s8 %v4437
        %v4439 = vlaneseq
        %v4440 = vshrl.u32 %v4439, 7
        %v4441 = vsub.s32 %v4438, %v4440
        %v4442 = vrot.slane %v4426, %v4441
        %v4444 = vunpack.c.l.s4 1966171168
        %v4445 = vunpack.c.0.s8 %v4444
        %v4446 = vlaneseq
        %v4447 = vshrl.u32 %v4446, 7
        %v4448 = vsub.s32 %v4445, %v4447
        %v4449 = vrot.slane %v4427, %v4448
        %v4451 = vunpack.c.l.s4 1966171168
        %v4452 = vunpack.c.0.s8 %v4451
        %v4453 = vlaneseq
        %v4454 = vshrl.u32 %v4453, 7
        %v4455 = vsub.s32 %v4452, %v4454
        %v4456 = vrot.slane %v4428, %v4455
        %v4457 = vcombine.high %v4435, %v4435
        %v4458 = vcombine.high %v4442, %v4442
        %v4459 = vcombine.high %v4449, %v4449
        %v4460 = vcombine.high %v4456, %v4456
        %v4469 = vmul.f32 %v4257, %v4435
        %v4470 = vmul.f32 %v4259, %v4449
        %v4471 = vmul.f32 %v4261, %v4457
        %v4472 = vmul.f32 %v4263, %v4459
        %v4473 = vmul.f32 %v4265, %v4442
        %v4474 = vmul.f32 %v4267, %v4456
        %v4475 = vmul.f32 %v4269, %v4458
        %v4476 = vmul.f32 %v4271, %v4460
        %v4477 = vrot.slane %v4143, 2
        %v4478 = vrot.slane %v4145, 2
        %v4479 = vrot.slane %v4147, 2
        %v4480 = vrot.slane %v4149, 2
        %v4481 = vrot.slane %v4151, 2
        %v4482 = vrot.slane %v4153, 2
        %v4483 = vrot.slane %v4155, 2
        %v4484 = vrot.slane %v4157, 2
        %v4493 = vadd.f32 %v4477, %v4469
        %v4494 = vadd.f32 %v4478, %v4470
        %v4495 = vadd.f32 %v4479, %v4471
        %v4496 = vadd.f32 %v4480, %v4472
        %v4497 = vadd.f32 %v4481, %v4473
        %v4498 = vadd.f32 %v4482, %v4474
        %v4499 = vadd.f32 %v4483, %v4475
        %v4500 = vadd.f32 %v4484, %v4476
        %v4501 = vtanh.pop %v4493
        %v4502 = vtanh.pop %v4494
        %v4503 = vtanh.pop %v4495
        %v4504 = vtanh.pop %v4496
        %v4505 = vtanh.pop %v4497
        %v4506 = vtanh.pop %v4498
        %v4507 = vtanh.pop %v4499
        %v4508 = vtanh.pop %v4500
        %v4509 = vsub.f32 1.0, %v4395
        %v4510 = vsub.f32 1.0, %v4397
        %v4511 = vsub.f32 1.0, %v4399
        %v4512 = vsub.f32 1.0, %v4401
        %v4513 = vsub.f32 1.0, %v4403
        %v4514 = vsub.f32 1.0, %v4405
        %v4515 = vsub.f32 1.0, %v4407
        %v4516 = vsub.f32 1.0, %v4409
        %v4517 = vmul.f32 %v4509, %v4501
        %v4518 = vmul.f32 %v4510, %v4502
        %v4519 = vmul.f32 %v4511, %v4503
        %v4520 = vmul.f32 %v4512, %v4504
        %v4521 = vmul.f32 %v4513, %v4505
        %v4522 = vmul.f32 %v4514, %v4506
        %v4523 = vmul.f32 %v4515, %v4507
        %v4524 = vmul.f32 %v4516, %v4508
        %v4525 = vmul.f32 %v4395, %v3828
        %v4526 = vmul.f32 %v4397, %v3829
        %v4527 = vmul.f32 %v4399, %v3830
        %v4528 = vmul.f32 %v4401, %v3831
        %v4529 = vmul.f32 %v4403, %v3832
        %v4530 = vmul.f32 %v4405, %v3833
        %v4531 = vmul.f32 %v4407, %v3834
        %v4532 = vmul.f32 %v4409, %v3835
        %v4533 = vadd.f32 %v4517, %v4525
        %v4534 = vadd.f32 %v4518, %v4526
        %v4535 = vadd.f32 %v4519, %v4527
        %v4536 = vadd.f32 %v4520, %v4528
        %v4537 = vadd.f32 %v4521, %v4529
        %v4538 = vadd.f32 %v4522, %v4530
        %v4539 = vadd.f32 %v4523, %v4531
        %v4540 = vadd.f32 %v4524, %v4532
        %v4541 = vpack.c.bf16 %v4533, %v4533
        %v4542 = vpack.c.bf16 %v4534, %v4534
        %v4543 = vpack.c.bf16 %v4535, %v4535
        %v4544 = vpack.c.bf16 %v4536, %v4536
        %v4545 = vpack.c.bf16 %v4537, %v4537
        %v4546 = vpack.c.bf16 %v4538, %v4538
        %v4547 = vpack.c.bf16 %v4539, %v4539
        %v4548 = vpack.c.bf16 %v4540, %v4540
        %v4557 = vunpack.c.l.b16 %v4541
        %v4558 = vunpack.c.l.b16 %v4542
        %v4559 = vunpack.c.l.b16 %v4543
        %v4560 = vunpack.c.l.b16 %v4544
        %v4561 = vunpack.c.l.b16 %v4545
        %v4562 = vunpack.c.l.b16 %v4546
        %v4563 = vunpack.c.l.b16 %v4547
        %v4564 = vunpack.c.l.b16 %v4548
        %v4565 = vrot.slane %v4558, 7
        %v4566 = vsel %vm1611, %v4565, %v4557
        %v4567 = vrot.slane %v4559, 6
        %v4568 = vsel %vm1614, %v4567, %v4566
        %v4569 = vrot.slane %v4560, 5
        %v4570 = vsel %vm1617, %v4569, %v4568
        %v4571 = vrot.slane %v4561, 4
        %v4572 = vsel %vm1620, %v4571, %v4570
        %v4573 = vrot.slane %v4562, 3
        %v4574 = vsel %vm1623, %v4573, %v4572
        %v4575 = vrot.slane %v4563, 2
        %v4576 = vsel %vm1626, %v4575, %v4574
        %v4577 = vrot.slane %v4564, 1
        %v4578 = vsel %vm1629, %v4577, %v4576
        %v4579 = vpack.c.b16 %v4578, %v4578
        %4581 = vmatprep.subr.bf16.mxu0 %v1714
        %4582 = vmatpush1.bf16.msra.mxu0 %v1713
        %4583 = vmatprep.subr.bf16.mxu0 %v1717
        %4584 = vmatpush1.bf16.msra.mxu0 %v1716
        %4585 = vmatprep.subr.bf16.mxu0 %v1720
        %4586 = vmatpush1.bf16.msra.mxu0 %v1719
        %4587 = vmatprep.subr.bf16.mxu0 %v1723
        %4588 = vmatpush1.bf16.msra.mxu0 %v1722
        %4589 = vmatprep.subr.bf16.mxu0 %v1726
        %4590 = vmatpush1.bf16.msra.mxu0 %v1725
        %4591 = vmatprep.subr.bf16.mxu0 %v1729
        %4592 = vmatpush1.bf16.msra.mxu0 %v1728
        %4593 = vmatprep.subr.bf16.mxu0 %v1732
        %4594 = vmatpush1.bf16.msra.mxu0 %v1731
        %4595 = vmatprep.subr.bf16.mxu0 %v1735
        %4596 = vmatpush1.bf16.msra.mxu0 %v1734
        %4597 = vmatprep.subr.bf16.mxu0 0
        %4598 = vmatpush1.bf16.msra.mxu0 0
        %4599 = vmatprep.subr.bf16.mxu0 0
        %4600 = vmatpush1.bf16.msra.mxu0 0
        %4601 = vmatprep.subr.bf16.mxu0 0
        %4602 = vmatpush1.bf16.msra.mxu0 0
        %4603 = vmatprep.subr.bf16.mxu0 0
        %4604 = vmatpush1.bf16.msra.mxu0 0
        %4605 = vmatprep.subr.bf16.mxu0 0
        %4606 = vmatpush1.bf16.msra.mxu0 0
        %4607 = vmatprep.subr.bf16.mxu0 0
        %4608 = vmatpush1.bf16.msra.mxu0 0
        %4609 = vmatprep.subr.bf16.mxu0 0
        %4610 = vmatpush1.bf16.msra.mxu0 0
        %4611 = vmatprep.subr.bf16.mxu0 0
        %4612 = vmatpush1.bf16.msra.mxu0 0
        %4613 = vmatprep.mubr.bf16.mxu0 0
        %4614 = vmatmul.mubr.bf16.gmra.mrb[0].mxu0 %v4579
        %v4615 = vpop.f32.mrb[0].mxu0
        %v4616 = vadd.f32 %v583, %v4615
        %v4617 = vpop.f32.mrb[0].mxu0
        %v4618 = vadd.f32 %v587, %v4617
        %v4619 = vpop.f32.mrb[0].mxu0
        %v4620 = vpop.f32.mrb[0].mxu0
        %4621 = vdwg.mxu0
        %4622 = vmatprep.subr.bf16.mxu0 0
        %4623 = vmatpush1.bf16.msra.mxu0 %v1715
        %4624 = vmatprep.subr.bf16.mxu0 0
        %4625 = vmatpush1.bf16.msra.mxu0 %v1718
        %4626 = vmatprep.subr.bf16.mxu0 0
        %4627 = vmatpush1.bf16.msra.mxu0 %v1721
        %4628 = vmatprep.subr.bf16.mxu0 0
        %4629 = vmatpush1.bf16.msra.mxu0 %v1724
        %4630 = vmatprep.subr.bf16.mxu0 0
        %4631 = vmatpush1.bf16.msra.mxu0 %v1727
        %4632 = vmatprep.subr.bf16.mxu0 0
        %4633 = vmatpush1.bf16.msra.mxu0 %v1730
        %4634 = vmatprep.subr.bf16.mxu0 0
        %4635 = vmatpush1.bf16.msra.mxu0 %v1733
        %4636 = vmatprep.subr.bf16.mxu0 0
        %4637 = vmatpush1.bf16.msra.mxu0 %v1736
        %4638 = vmatprep.subr.bf16.mxu0 0
        %4639 = vmatpush1.bf16.msra.mxu0 0
        %4640 = vmatprep.subr.bf16.mxu0 0
        %4641 = vmatpush1.bf16.msra.mxu0 0
        %4642 = vmatprep.subr.bf16.mxu0 0
        %4643 = vmatpush1.bf16.msra.mxu0 0
        %4644 = vmatprep.subr.bf16.mxu0 0
        %4645 = vmatpush1.bf16.msra.mxu0 0
        %4646 = vmatprep.subr.bf16.mxu0 0
        %4647 = vmatpush1.bf16.msra.mxu0 0
        %4648 = vmatprep.subr.bf16.mxu0 0
        %4649 = vmatpush1.bf16.msra.mxu0 0
        %4650 = vmatprep.subr.bf16.mxu0 0
        %4651 = vmatpush1.bf16.msra.mxu0 0
        %4652 = vmatprep.subr.bf16.mxu0 0
        %4653 = vmatpush1.bf16.msra.mxu0 0
        %4654 = vmatprep.mubr.bf16.mxu0 0
        %4655 = vmatmul.mubr.bf16.gmra.mrb[0].mxu0 %v4579
        %v4656 = vpop.f32.mrb[0].mxu0
        %v4657 = vadd.f32 %v591, %v4656
        %v4658 = vpop.f32.mrb[0].mxu0
        %v4659 = vpop.f32.mrb[0].mxu0
        %v4660 = vpop.f32.mrb[0].mxu0
        %4661 = vdwg.mxu0
        %v4662 = vadd.f32 %v4616, %v4096
        %v4663 = vxor.u32 %v4662, 2147483648
        %v4664 = vmul.f32 %v4663, 1.442695
        %v4665 = vpow.pop %v4664
        %v4666 = vadd.f32 %v4665, 1.0
        %v4667 = vrcp.pop %v4666
        %v4668 = vmul.f32 1.0, %v4667
        %v4669 = vadd.f32 %v4618, %v4098
        %v4670 = vxor.u32 %v4669, 2147483648
        %v4671 = vmul.f32 %v4670, 1.442695
        %v4672 = vpow.pop %v4671
        %v4673 = vadd.f32 %v4672, 1.0
        %v4674 = vrcp.pop %v4673
        %v4675 = vmul.f32 1.0, %v4674
        %v4676 = vadd.f32 %v4137, %v608
        %v4677 = vmul.f32 %v4668, %v4676
        %v4678 = vadd.f32 %v4657, %v4677
        %v4679 = vtanh.pop %v4678
        %v4680 = vsub.f32 1.0, %v4675
        %v4681 = vmul.f32 %v4680, %v4679
        %v4682 = vmul.f32 %v4675, %v3978
        %v4683 = vadd.f32 %v4681, %v4682
        %v4684 = vpack.c.bf16 %v4683, %v4683
        %4685 = vmatprep.subr.bf16.mxu0 %v728
        %4686 = vmatpush1.bf16.msra.mxu0 %v727
        %4687 = vmatprep.subr.bf16.mxu0 %v731
        %4688 = vmatpush1.bf16.msra.mxu0 %v730
        %4689 = vmatprep.subr.bf16.mxu0 %v734
        %4690 = vmatpush1.bf16.msra.mxu0 %v733
        %4691 = vmatprep.subr.bf16.mxu0 %v737
        %4692 = vmatpush1.bf16.msra.mxu0 %v736
        %4693 = vmatprep.subr.bf16.mxu0 %v740
        %4694 = vmatpush1.bf16.msra.mxu0 %v739
        %4695 = vmatprep.subr.bf16.mxu0 %v743
        %4696 = vmatpush1.bf16.msra.mxu0 %v742
        %4697 = vmatprep.subr.bf16.mxu0 %v746
        %4698 = vmatpush1.bf16.msra.mxu0 %v745
        %4699 = vmatprep.subr.bf16.mxu0 %v749
        %4700 = vmatpush1.bf16.msra.mxu0 %v748
        %4701 = vmatprep.subr.bf16.mxu0 0
        %4702 = vmatpush1.bf16.msra.mxu0 0
        %4703 = vmatprep.subr.bf16.mxu0 0
        %4704 = vmatpush1.bf16.msra.mxu0 0
        %4705 = vmatprep.subr.bf16.mxu0 0
        %4706 = vmatpush1.bf16.msra.mxu0 0
        %4707 = vmatprep.subr.bf16.mxu0 0
        %4708 = vmatpush1.bf16.msra.mxu0 0
        %4709 = vmatprep.subr.bf16.mxu0 0
        %4710 = vmatpush1.bf16.msra.mxu0 0
        %4711 = vmatprep.subr.bf16.mxu0 0
        %4712 = vmatpush1.bf16.msra.mxu0 0
        %4713 = vmatprep.subr.bf16.mxu0 0
        %4714 = vmatpush1.bf16.msra.mxu0 0
        %4715 = vmatprep.subr.bf16.mxu0 0
        %4716 = vmatpush1.bf16.msra.mxu0 0
        %4717 = vmatprep.mubr.bf16.mxu0 0
        %4718 = vmatmul.mubr.bf16.gmra.mrb[0].mxu0 %v4579
        %v4719 = vpop.f32.mrb[0].mxu0
        %v4720 = vadd.f32 0.0, %v4719
        %v4721 = vpop.f32.mrb[0].mxu0
        %v4722 = vadd.f32 0.0, %v4721
        %v4723 = vpop.f32.mrb[0].mxu0
        %v4724 = vpop.f32.mrb[0].mxu0
        %4725 = vdwg.mxu0
        %4726 = vmatprep.subr.bf16.mxu0 0
        %4727 = vmatpush1.bf16.msra.mxu0 %v729
        %4728 = vmatprep.subr.bf16.mxu0 0
        %4729 = vmatpush1.bf16.msra.mxu0 %v732
        %4730 = vmatprep.subr.bf16.mxu0 0
        %4731 = vmatpush1.bf16.msra.mxu0 %v735
        %4732 = vmatprep.subr.bf16.mxu0 0
        %4733 = vmatpush1.bf16.msra.mxu0 %v738
        %4734 = vmatprep.subr.bf16.mxu0 0
        %4735 = vmatpush1.bf16.msra.mxu0 %v741
        %4736 = vmatprep.subr.bf16.mxu0 0
        %4737 = vmatpush1.bf16.msra.mxu0 %v744
        %4738 = vmatprep.subr.bf16.mxu0 0
        %4739 = vmatpush1.bf16.msra.mxu0 %v747
        %4740 = vmatprep.subr.bf16.mxu0 0
        %4741 = vmatpush1.bf16.msra.mxu0 %v750
        %4742 = vmatprep.subr.bf16.mxu0 0
        %4743 = vmatpush1.bf16.msra.mxu0 0
        %4744 = vmatprep.subr.bf16.mxu0 0
        %4745 = vmatpush1.bf16.msra.mxu0 0
        %4746 = vmatprep.subr.bf16.mxu0 0
        %4747 = vmatpush1.bf16.msra.mxu0 0
        %4748 = vmatprep.subr.bf16.mxu0 0
        %4749 = vmatpush1.bf16.msra.mxu0 0
        %4750 = vmatprep.subr.bf16.mxu0 0
        %4751 = vmatpush1.bf16.msra.mxu0 0
        %4752 = vmatprep.subr.bf16.mxu0 0
        %4753 = vmatpush1.bf16.msra.mxu0 0
        %4754 = vmatprep.subr.bf16.mxu0 0
        %4755 = vmatpush1.bf16.msra.mxu0 0
        %4756 = vmatprep.subr.bf16.mxu0 0
        %4757 = vmatpush1.bf16.msra.mxu0 0
        %4758 = vmatprep.mubr.bf16.mxu0 0
        %4759 = vmatmul.mubr.bf16.gmra.mrb[0].mxu0 %v4579
        %v4760 = vpop.f32.mrb[0].mxu0
        %v4761 = vadd.f32 0.0, %v4760
        %v4762 = vpop.f32.mrb[0].mxu0
        %v4763 = vpop.f32.mrb[0].mxu0
        %v4764 = vpop.f32.mrb[0].mxu0
        %4765 = vdwg.mxu0
        %4766 = vmatprep.subr.bf16.mxu0 %v970
        %4767 = vmatpush1.bf16.msra.mxu0 %v969
        %4768 = vmatprep.subr.bf16.mxu0 %v973
        %4769 = vmatpush1.bf16.msra.mxu0 %v972
        %4770 = vmatprep.subr.bf16.mxu0 %v976
        %4771 = vmatpush1.bf16.msra.mxu0 %v975
        %4772 = vmatprep.subr.bf16.mxu0 %v979
        %4773 = vmatpush1.bf16.msra.mxu0 %v978
        %4774 = vmatprep.subr.bf16.mxu0 %v982
        %4775 = vmatpush1.bf16.msra.mxu0 %v981
        %4776 = vmatprep.subr.bf16.mxu0 %v985
        %4777 = vmatpush1.bf16.msra.mxu0 %v984
        %4778 = vmatprep.subr.bf16.mxu0 %v988
        %4779 = vmatpush1.bf16.msra.mxu0 %v987
        %4780 = vmatprep.subr.bf16.mxu0 %v991
        %4781 = vmatpush1.bf16.msra.mxu0 %v990
        %4782 = vmatprep.subr.bf16.mxu0 0
        %4783 = vmatpush1.bf16.msra.mxu0 0
        %4784 = vmatprep.subr.bf16.mxu0 0
        %4785 = vmatpush1.bf16.msra.mxu0 0
        %4786 = vmatprep.subr.bf16.mxu0 0
        %4787 = vmatpush1.bf16.msra.mxu0 0
        %4788 = vmatprep.subr.bf16.mxu0 0
        %4789 = vmatpush1.bf16.msra.mxu0 0
        %4790 = vmatprep.subr.bf16.mxu0 0
        %4791 = vmatpush1.bf16.msra.mxu0 0
        %4792 = vmatprep.subr.bf16.mxu0 0
        %4793 = vmatpush1.bf16.msra.mxu0 0
        %4794 = vmatprep.subr.bf16.mxu0 0
        %4795 = vmatpush1.bf16.msra.mxu0 0
        %4796 = vmatprep.subr.bf16.mxu0 0
        %4797 = vmatpush1.bf16.msra.mxu0 0
        %4798 = vmatprep.mubr.bf16.mxu0 0
        %4799 = vmatmul.mubr.bf16.gmra.mrb[0].mxu0 %v4684
        %v4800 = vpop.f32.mrb[0].mxu0
        %v4801 = vadd.f32 0.0, %v4800
        %v4802 = vpop.f32.mrb[0].mxu0
        %v4803 = vadd.f32 0.0, %v4802
        %v4804 = vpop.f32.mrb[0].mxu0
        %v4805 = vpop.f32.mrb[0].mxu0
        %4806 = vdwg.mxu0
        %4807 = vmatprep.subr.bf16.mxu0 0
        %4808 = vmatpush1.bf16.msra.mxu0 %v971
        %4809 = vmatprep.subr.bf16.mxu0 0
        %4810 = vmatpush1.bf16.msra.mxu0 %v974
        %4811 = vmatprep.subr.bf16.mxu0 0
        %4812 = vmatpush1.bf16.msra.mxu0 %v977
        %4813 = vmatprep.subr.bf16.mxu0 0
        %4814 = vmatpush1.bf16.msra.mxu0 %v980
        %4815 = vmatprep.subr.bf16.mxu0 0
        %4816 = vmatpush1.bf16.msra.mxu0 %v983
        %4817 = vmatprep.subr.bf16.mxu0 0
        %4818 = vmatpush1.bf16.msra.mxu0 %v986
        %4819 = vmatprep.subr.bf16.mxu0 0
        %4820 = vmatpush1.bf16.msra.mxu0 %v989
        %4821 = vmatprep.subr.bf16.mxu0 0
        %4822 = vmatpush1.bf16.msra.mxu0 %v992
        %4823 = vmatprep.subr.bf16.mxu0 0
        %4824 = vmatpush1.bf16.msra.mxu0 0
        %4825 = vmatprep.subr.bf16.mxu0 0
        %4826 = vmatpush1.bf16.msra.mxu0 0
        %4827 = vmatprep.subr.bf16.mxu0 0
        %4828 = vmatpush1.bf16.msra.mxu0 0
        %4829 = vmatprep.subr.bf16.mxu0 0
        %4830 = vmatpush1.bf16.msra.mxu0 0
        %4831 = vmatprep.subr.bf16.mxu0 0
        %4832 = vmatpush1.bf16.msra.mxu0 0
        %4833 = vmatprep.subr.bf16.mxu0 0
        %4834 = vmatpush1.bf16.msra.mxu0 0
        %4835 = vmatprep.subr.bf16.mxu0 0
        %4836 = vmatpush1.bf16.msra.mxu0 0
        %4837 = vmatprep.subr.bf16.mxu0 0
        %4838 = vmatpush1.bf16.msra.mxu0 0
        %4839 = vmatprep.mubr.bf16.mxu0 0
        %4840 = vmatmul.mubr.bf16.gmra.mrb[0].mxu0 %v4684
        %v4841 = vpop.f32.mrb[0].mxu0
        %v4842 = vadd.f32 0.0, %v4841
        %v4843 = vpop.f32.mrb[0].mxu0
        %v4844 = vpop.f32.mrb[0].mxu0
        %v4845 = vpop.f32.mrb[0].mxu0
        %4846 = vdwg.mxu0
        %s4847 = scalar_lea.vmem [#allocation3], 5
        %v4848 = vld [vmem:[%s4847] ss:$8 sm:$0x7]
        %s4849 = scalar_lea.vmem [#allocation3], 29
        %v4850 = vld [vmem:[%s4849] ss:$8 sm:$0x7]
        %s4851 = scalar_lea.vmem [#allocation3], 53
        %v4852 = vld [vmem:[%s4851] ss:$8 sm:$0x7]
        %s4853 = scalar_lea.vmem [#allocation3], 77
        %v4854 = vld [vmem:[%s4853] ss:$8 sm:$0x7]
        %s4855 = scalar_lea.vmem [#allocation3], 101
        %v4856 = vld [vmem:[%s4855] ss:$8 sm:$0x7]
        %s4857 = scalar_lea.vmem [#allocation3], 125
        %v4858 = vld [vmem:[%s4857] ss:$8 sm:$0x7]
        %s4859 = scalar_lea.vmem [#allocation3], 149
        %v4860 = vld [vmem:[%s4859] ss:$8 sm:$0x7]
        %s4861 = scalar_lea.vmem [#allocation3], 173
        %v4862 = vld [vmem:[%s4861] ss:$8 sm:$0x7]
        %v4864 = vcombine.high %v4720, %v4720
        %v4866 = vunpack.c.l.s4 1966171168
        %v4867 = vunpack.c.0.s8 %v4866
        %v4868 = vlaneseq
        %v4869 = vshrl.u32 %v4868, 7
        %v4870 = vsub.s32 %v4867, %v4869
        %v4871 = vrot.slane %v4720, %v4870
        %v4873 = vunpack.c.l.s4 1966171168
        %v4874 = vunpack.c.0.s8 %v4873
        %v4875 = vlaneseq
        %v4876 = vshrl.u32 %v4875, 7
        %v4877 = vsub.s32 %v4874, %v4876
        %v4878 = vrot.slane %v4864, %v4877
        %v4879 = vcombine.high %v4871, %v4871
        %v4880 = vcombine.high %v4878, %v4878
        %v4882 = vunpack.c.l.s4 1966171168
        %v4883 = vunpack.c.0.s8 %v4882
        %v4884 = vlaneseq
        %v4885 = vshrl.u32 %v4884, 7
        %v4886 = vsub.s32 %v4883, %v4885
        %v4887 = vrot.slane %v4871, %v4886
        %v4889 = vunpack.c.l.s4 1966171168
        %v4890 = vunpack.c.0.s8 %v4889
        %v4891 = vlaneseq
        %v4892 = vshrl.u32 %v4891, 7
        %v4893 = vsub.s32 %v4890, %v4892
        %v4894 = vrot.slane %v4878, %v4893
        %v4896 = vunpack.c.l.s4 1966171168
        %v4897 = vunpack.c.0.s8 %v4896
        %v4898 = vlaneseq
        %v4899 = vshrl.u32 %v4898, 7
        %v4900 = vsub.s32 %v4897, %v4899
        %v4901 = vrot.slane %v4879, %v4900
        %v4903 = vunpack.c.l.s4 1966171168
        %v4904 = vunpack.c.0.s8 %v4903
        %v4905 = vlaneseq
        %v4906 = vshrl.u32 %v4905, 7
        %v4907 = vsub.s32 %v4904, %v4906
        %v4908 = vrot.slane %v4880, %v4907
        %v4909 = vcombine.high %v4887, %v4887
        %v4910 = vcombine.high %v4894, %v4894
        %v4911 = vcombine.high %v4901, %v4901
        %v4912 = vcombine.high %v4908, %v4908
        %v4921 = vadd.f32 %v4848, %v4887
        %v4922 = vadd.f32 %v4850, %v4901
        %v4923 = vadd.f32 %v4852, %v4909
        %v4924 = vadd.f32 %v4854, %v4911
        %v4925 = vadd.f32 %v4856, %v4894
        %v4926 = vadd.f32 %v4858, %v4908
        %v4927 = vadd.f32 %v4860, %v4910
        %v4928 = vadd.f32 %v4862, %v4912
        %v4929 = vxor.u32 %v4921, 2147483648
        %v4930 = vxor.u32 %v4922, 2147483648
        %v4931 = vxor.u32 %v4923, 2147483648
        %v4932 = vxor.u32 %v4924, 2147483648
        %v4933 = vxor.u32 %v4925, 2147483648
        %v4934 = vxor.u32 %v4926, 2147483648
        %v4935 = vxor.u32 %v4927, 2147483648
        %v4936 = vxor.u32 %v4928, 2147483648
        %v4937 = vmul.f32 %v4929, 1.442695
        %v4938 = vpow.pop %v4937
        %v4939 = vmul.f32 %v4930, 1.442695
        %v4940 = vpow.pop %v4939
        %v4941 = vmul.f32 %v4931, 1.442695
        %v4942 = vpow.pop %v4941
        %v4943 = vmul.f32 %v4932, 1.442695
        %v4944 = vpow.pop %v4943
        %v4945 = vmul.f32 %v4933, 1.442695
        %v4946 = vpow.pop %v4945
        %v4947 = vmul.f32 %v4934, 1.442695
        %v4948 = vpow.pop %v4947
        %v4949 = vmul.f32 %v4935, 1.442695
        %v4950 = vpow.pop %v4949
        %v4951 = vmul.f32 %v4936, 1.442695
        %v4952 = vpow.pop %v4951
        %v4953 = vadd.f32 %v4938, 1.0
        %v4954 = vadd.f32 %v4940, 1.0
        %v4955 = vadd.f32 %v4942, 1.0
        %v4956 = vadd.f32 %v4944, 1.0
        %v4957 = vadd.f32 %v4946, 1.0
        %v4958 = vadd.f32 %v4948, 1.0
        %v4959 = vadd.f32 %v4950, 1.0
        %v4960 = vadd.f32 %v4952, 1.0
        %v4961 = vrcp.pop %v4953
        %v4962 = vmul.f32 1.0, %v4961
        %v4963 = vrcp.pop %v4954
        %v4964 = vmul.f32 1.0, %v4963
        %v4965 = vrcp.pop %v4955
        %v4966 = vmul.f32 1.0, %v4965
        %v4967 = vrcp.pop %v4956
        %v4968 = vmul.f32 1.0, %v4967
        %v4969 = vrcp.pop %v4957
        %v4970 = vmul.f32 1.0, %v4969
        %v4971 = vrcp.pop %v4958
        %v4972 = vmul.f32 1.0, %v4971
        %v4973 = vrcp.pop %v4959
        %v4974 = vmul.f32 1.0, %v4973
        %v4975 = vrcp.pop %v4960
        %v4976 = vmul.f32 1.0, %v4975
        %v4985 = vrot.slane %v4848, 1
        %v4986 = vrot.slane %v4850, 1
        %v4987 = vrot.slane %v4852, 1
        %v4988 = vrot.slane %v4854, 1
        %v4989 = vrot.slane %v4856, 1
        %v4990 = vrot.slane %v4858, 1
        %v4991 = vrot.slane %v4860, 1
        %v4992 = vrot.slane %v4862, 1
        %v5002 = vcombine.high %v4722, %v4722
        %v5004 = vunpack.c.l.s4 1966171168
        %v5005 = vunpack.c.0.s8 %v5004
        %v5006 = vlaneseq
        %v5007 = vshrl.u32 %v5006, 7
        %v5008 = vsub.s32 %v5005, %v5007
        %v5009 = vrot.slane %v4722, %v5008
        %v5011 = vunpack.c.l.s4 1966171168
        %v5012 = vunpack.c.0.s8 %v5011
        %v5013 = vlaneseq
        %v5014 = vshrl.u32 %v5013, 7
        %v5015 = vsub.s32 %v5012, %v5014
        %v5016 = vrot.slane %v5002, %v5015
        %v5017 = vcombine.high %v5009, %v5009
        %v5018 = vcombine.high %v5016, %v5016
        %v5020 = vunpack.c.l.s4 1966171168
        %v5021 = vunpack.c.0.s8 %v5020
        %v5022 = vlaneseq
        %v5023 = vshrl.u32 %v5022, 7
        %v5024 = vsub.s32 %v5021, %v5023
        %v5025 = vrot.slane %v5009, %v5024
        %v5027 = vunpack.c.l.s4 1966171168
        %v5028 = vunpack.c.0.s8 %v5027
        %v5029 = vlaneseq
        %v5030 = vshrl.u32 %v5029, 7
        %v5031 = vsub.s32 %v5028, %v5030
        %v5032 = vrot.slane %v5016, %v5031
        %v5034 = vunpack.c.l.s4 1966171168
        %v5035 = vunpack.c.0.s8 %v5034
        %v5036 = vlaneseq
        %v5037 = vshrl.u32 %v5036, 7
        %v5038 = vsub.s32 %v5035, %v5037
        %v5039 = vrot.slane %v5017, %v5038
        %v5041 = vunpack.c.l.s4 1966171168
        %v5042 = vunpack.c.0.s8 %v5041
        %v5043 = vlaneseq
        %v5044 = vshrl.u32 %v5043, 7
        %v5045 = vsub.s32 %v5042, %v5044
        %v5046 = vrot.slane %v5018, %v5045
        %v5047 = vcombine.high %v5025, %v5025
        %v5048 = vcombine.high %v5032, %v5032
        %v5049 = vcombine.high %v5039, %v5039
        %v5050 = vcombine.high %v5046, %v5046
        %v5059 = vadd.f32 %v4985, %v5025
        %v5060 = vadd.f32 %v4986, %v5039
        %v5061 = vadd.f32 %v4987, %v5047
        %v5062 = vadd.f32 %v4988, %v5049
        %v5063 = vadd.f32 %v4989, %v5032
        %v5064 = vadd.f32 %v4990, %v5046
        %v5065 = vadd.f32 %v4991, %v5048
        %v5066 = vadd.f32 %v4992, %v5050
        %v5067 = vxor.u32 %v5059, 2147483648
        %v5068 = vxor.u32 %v5060, 2147483648
        %v5069 = vxor.u32 %v5061, 2147483648
        %v5070 = vxor.u32 %v5062, 2147483648
        %v5071 = vxor.u32 %v5063, 2147483648
        %v5072 = vxor.u32 %v5064, 2147483648
        %v5073 = vxor.u32 %v5065, 2147483648
        %v5074 = vxor.u32 %v5066, 2147483648
        %v5075 = vmul.f32 %v5067, 1.442695
        %v5076 = vpow.pop %v5075
        %v5077 = vmul.f32 %v5068, 1.442695
        %v5078 = vpow.pop %v5077
        %v5079 = vmul.f32 %v5069, 1.442695
        %v5080 = vpow.pop %v5079
        %v5081 = vmul.f32 %v5070, 1.442695
        %v5082 = vpow.pop %v5081
        %v5083 = vmul.f32 %v5071, 1.442695
        %v5084 = vpow.pop %v5083
        %v5085 = vmul.f32 %v5072, 1.442695
        %v5086 = vpow.pop %v5085
        %v5087 = vmul.f32 %v5073, 1.442695
        %v5088 = vpow.pop %v5087
        %v5089 = vmul.f32 %v5074, 1.442695
        %v5090 = vpow.pop %v5089
        %v5091 = vadd.f32 %v5076, 1.0
        %v5092 = vadd.f32 %v5078, 1.0
        %v5093 = vadd.f32 %v5080, 1.0
        %v5094 = vadd.f32 %v5082, 1.0
        %v5095 = vadd.f32 %v5084, 1.0
        %v5096 = vadd.f32 %v5086, 1.0
        %v5097 = vadd.f32 %v5088, 1.0
        %v5098 = vadd.f32 %v5090, 1.0
        %v5099 = vrcp.pop %v5091
        %v5100 = vmul.f32 1.0, %v5099
        %v5101 = vrcp.pop %v5092
        %v5102 = vmul.f32 1.0, %v5101
        %v5103 = vrcp.pop %v5093
        %v5104 = vmul.f32 1.0, %v5103
        %v5105 = vrcp.pop %v5094
        %v5106 = vmul.f32 1.0, %v5105
        %v5107 = vrcp.pop %v5095
        %v5108 = vmul.f32 1.0, %v5107
        %v5109 = vrcp.pop %v5096
        %v5110 = vmul.f32 1.0, %v5109
        %v5111 = vrcp.pop %v5097
        %v5112 = vmul.f32 1.0, %v5111
        %v5113 = vrcp.pop %v5098
        %v5114 = vmul.f32 1.0, %v5113
        %v5115 = vadd.f32 %v4761, %v600
        %v5117 = vcombine.high %v5115, %v5115
        %v5119 = vunpack.c.l.s4 1966171168
        %v5120 = vunpack.c.0.s8 %v5119
        %v5121 = vlaneseq
        %v5122 = vshrl.u32 %v5121, 7
        %v5123 = vsub.s32 %v5120, %v5122
        %v5124 = vrot.slane %v5115, %v5123
        %v5126 = vunpack.c.l.s4 1966171168
        %v5127 = vunpack.c.0.s8 %v5126
        %v5128 = vlaneseq
        %v5129 = vshrl.u32 %v5128, 7
        %v5130 = vsub.s32 %v5127, %v5129
        %v5131 = vrot.slane %v5117, %v5130
        %v5132 = vcombine.high %v5124, %v5124
        %v5133 = vcombine.high %v5131, %v5131
        %v5135 = vunpack.c.l.s4 1966171168
        %v5136 = vunpack.c.0.s8 %v5135
        %v5137 = vlaneseq
        %v5138 = vshrl.u32 %v5137, 7
        %v5139 = vsub.s32 %v5136, %v5138
        %v5140 = vrot.slane %v5124, %v5139
        %v5142 = vunpack.c.l.s4 1966171168
        %v5143 = vunpack.c.0.s8 %v5142
        %v5144 = vlaneseq
        %v5145 = vshrl.u32 %v5144, 7
        %v5146 = vsub.s32 %v5143, %v5145
        %v5147 = vrot.slane %v5131, %v5146
        %v5149 = vunpack.c.l.s4 1966171168
        %v5150 = vunpack.c.0.s8 %v5149
        %v5151 = vlaneseq
        %v5152 = vshrl.u32 %v5151, 7
        %v5153 = vsub.s32 %v5150, %v5152
        %v5154 = vrot.slane %v5132, %v5153
        %v5156 = vunpack.c.l.s4 1966171168
        %v5157 = vunpack.c.0.s8 %v5156
        %v5158 = vlaneseq
        %v5159 = vshrl.u32 %v5158, 7
        %v5160 = vsub.s32 %v5157, %v5159
        %v5161 = vrot.slane %v5133, %v5160
        %v5162 = vcombine.high %v5140, %v5140
        %v5163 = vcombine.high %v5147, %v5147
        %v5164 = vcombine.high %v5154, %v5154
        %v5165 = vcombine.high %v5161, %v5161
        %v5174 = vmul.f32 %v4962, %v5140
        %v5175 = vmul.f32 %v4964, %v5154
        %v5176 = vmul.f32 %v4966, %v5162
        %v5177 = vmul.f32 %v4968, %v5164
        %v5178 = vmul.f32 %v4970, %v5147
        %v5179 = vmul.f32 %v4972, %v5161
        %v5180 = vmul.f32 %v4974, %v5163
        %v5181 = vmul.f32 %v4976, %v5165
        %v5182 = vrot.slane %v4848, 2
        %v5183 = vrot.slane %v4850, 2
        %v5184 = vrot.slane %v4852, 2
        %v5185 = vrot.slane %v4854, 2
        %v5186 = vrot.slane %v4856, 2
        %v5187 = vrot.slane %v4858, 2
        %v5188 = vrot.slane %v4860, 2
        %v5189 = vrot.slane %v4862, 2
        %v5198 = vadd.f32 %v5182, %v5174
        %v5199 = vadd.f32 %v5183, %v5175
        %v5200 = vadd.f32 %v5184, %v5176
        %v5201 = vadd.f32 %v5185, %v5177
        %v5202 = vadd.f32 %v5186, %v5178
        %v5203 = vadd.f32 %v5187, %v5179
        %v5204 = vadd.f32 %v5188, %v5180
        %v5205 = vadd.f32 %v5189, %v5181
        %v5206 = vtanh.pop %v5198
        %v5207 = vtanh.pop %v5199
        %v5208 = vtanh.pop %v5200
        %v5209 = vtanh.pop %v5201
        %v5210 = vtanh.pop %v5202
        %v5211 = vtanh.pop %v5203
        %v5212 = vtanh.pop %v5204
        %v5213 = vtanh.pop %v5205
        %v5214 = vsub.f32 1.0, %v5100
        %v5215 = vsub.f32 1.0, %v5102
        %v5216 = vsub.f32 1.0, %v5104
        %v5217 = vsub.f32 1.0, %v5106
        %v5218 = vsub.f32 1.0, %v5108
        %v5219 = vsub.f32 1.0, %v5110
        %v5220 = vsub.f32 1.0, %v5112
        %v5221 = vsub.f32 1.0, %v5114
        %v5222 = vmul.f32 %v5214, %v5206
        %v5223 = vmul.f32 %v5215, %v5207
        %v5224 = vmul.f32 %v5216, %v5208
        %v5225 = vmul.f32 %v5217, %v5209
        %v5226 = vmul.f32 %v5218, %v5210
        %v5227 = vmul.f32 %v5219, %v5211
        %v5228 = vmul.f32 %v5220, %v5212
        %v5229 = vmul.f32 %v5221, %v5213
        %v5230 = vmul.f32 %v5100, %v4533
        %v5231 = vmul.f32 %v5102, %v4534
        %v5232 = vmul.f32 %v5104, %v4535
        %v5233 = vmul.f32 %v5106, %v4536
        %v5234 = vmul.f32 %v5108, %v4537
        %v5235 = vmul.f32 %v5110, %v4538
        %v5236 = vmul.f32 %v5112, %v4539
        %v5237 = vmul.f32 %v5114, %v4540
        %v5238 = vadd.f32 %v5222, %v5230
        %v5239 = vadd.f32 %v5223, %v5231
        %v5240 = vadd.f32 %v5224, %v5232
        %v5241 = vadd.f32 %v5225, %v5233
        %v5242 = vadd.f32 %v5226, %v5234
        %v5243 = vadd.f32 %v5227, %v5235
        %v5244 = vadd.f32 %v5228, %v5236
        %v5245 = vadd.f32 %v5229, %v5237
        %v5246 = vpack.c.bf16 %v5238, %v5238
        %v5247 = vpack.c.bf16 %v5239, %v5239
        %v5248 = vpack.c.bf16 %v5240, %v5240
        %v5249 = vpack.c.bf16 %v5241, %v5241
        %v5250 = vpack.c.bf16 %v5242, %v5242
        %v5251 = vpack.c.bf16 %v5243, %v5243
        %v5252 = vpack.c.bf16 %v5244, %v5244
        %v5253 = vpack.c.bf16 %v5245, %v5245
        %v5262 = vunpack.c.l.b16 %v5246
        %v5263 = vunpack.c.l.b16 %v5247
        %v5264 = vunpack.c.l.b16 %v5248
        %v5265 = vunpack.c.l.b16 %v5249
        %v5266 = vunpack.c.l.b16 %v5250
        %v5267 = vunpack.c.l.b16 %v5251
        %v5268 = vunpack.c.l.b16 %v5252
        %v5269 = vunpack.c.l.b16 %v5253
        %v5270 = vrot.slane %v5263, 7
        %v5271 = vsel %vm1611, %v5270, %v5262
        %v5272 = vrot.slane %v5264, 6
        %v5273 = vsel %vm1614, %v5272, %v5271
        %v5274 = vrot.slane %v5265, 5
        %v5275 = vsel %vm1617, %v5274, %v5273
        %v5276 = vrot.slane %v5266, 4
        %v5277 = vsel %vm1620, %v5276, %v5275
        %v5278 = vrot.slane %v5267, 3
        %v5279 = vsel %vm1623, %v5278, %v5277
        %v5280 = vrot.slane %v5268, 2
        %v5281 = vsel %vm1626, %v5280, %v5279
        %v5282 = vrot.slane %v5269, 1
        %v5283 = vsel %vm1629, %v5282, %v5281
        %v5284 = vpack.c.b16 %v5283, %v5283
        %5286 = vmatprep.subr.bf16.mxu0 %v1714
        %5287 = vmatpush1.bf16.msra.mxu0 %v1713
        %5288 = vmatprep.subr.bf16.mxu0 %v1717
        %5289 = vmatpush1.bf16.msra.mxu0 %v1716
        %5290 = vmatprep.subr.bf16.mxu0 %v1720
        %5291 = vmatpush1.bf16.msra.mxu0 %v1719
        %5292 = vmatprep.subr.bf16.mxu0 %v1723
        %5293 = vmatpush1.bf16.msra.mxu0 %v1722
        %5294 = vmatprep.subr.bf16.mxu0 %v1726
        %5295 = vmatpush1.bf16.msra.mxu0 %v1725
        %5296 = vmatprep.subr.bf16.mxu0 %v1729
        %5297 = vmatpush1.bf16.msra.mxu0 %v1728
        %5298 = vmatprep.subr.bf16.mxu0 %v1732
        %5299 = vmatpush1.bf16.msra.mxu0 %v1731
        %5300 = vmatprep.subr.bf16.mxu0 %v1735
        %5301 = vmatpush1.bf16.msra.mxu0 %v1734
        %5302 = vmatprep.subr.bf16.mxu0 0
        %5303 = vmatpush1.bf16.msra.mxu0 0
        %5304 = vmatprep.subr.bf16.mxu0 0
        %5305 = vmatpush1.bf16.msra.mxu0 0
        %5306 = vmatprep.subr.bf16.mxu0 0
        %5307 = vmatpush1.bf16.msra.mxu0 0
        %5308 = vmatprep.subr.bf16.mxu0 0
        %5309 = vmatpush1.bf16.msra.mxu0 0
        %5310 = vmatprep.subr.bf16.mxu0 0
        %5311 = vmatpush1.bf16.msra.mxu0 0
        %5312 = vmatprep.subr.bf16.mxu0 0
        %5313 = vmatpush1.bf16.msra.mxu0 0
        %5314 = vmatprep.subr.bf16.mxu0 0
        %5315 = vmatpush1.bf16.msra.mxu0 0
        %5316 = vmatprep.subr.bf16.mxu0 0
        %5317 = vmatpush1.bf16.msra.mxu0 0
        %5318 = vmatprep.mubr.bf16.mxu0 0
        %5319 = vmatmul.mubr.bf16.gmra.mrb[0].mxu0 %v5284
        %v5320 = vpop.f32.mrb[0].mxu0
        %v5321 = vadd.f32 %v583, %v5320
        %v5322 = vpop.f32.mrb[0].mxu0
        %v5323 = vadd.f32 %v587, %v5322
        %v5324 = vpop.f32.mrb[0].mxu0
        %v5325 = vpop.f32.mrb[0].mxu0
        %5326 = vdwg.mxu0
        %5327 = vmatprep.subr.bf16.mxu0 0
        %5328 = vmatpush1.bf16.msra.mxu0 %v1715
        %5329 = vmatprep.subr.bf16.mxu0 0
        %5330 = vmatpush1.bf16.msra.mxu0 %v1718
        %5331 = vmatprep.subr.bf16.mxu0 0
        %5332 = vmatpush1.bf16.msra.mxu0 %v1721
        %5333 = vmatprep.subr.bf16.mxu0 0
        %5334 = vmatpush1.bf16.msra.mxu0 %v1724
        %5335 = vmatprep.subr.bf16.mxu0 0
        %5336 = vmatpush1.bf16.msra.mxu0 %v1727
        %5337 = vmatprep.subr.bf16.mxu0 0
        %5338 = vmatpush1.bf16.msra.mxu0 %v1730
        %5339 = vmatprep.subr.bf16.mxu0 0
        %5340 = vmatpush1.bf16.msra.mxu0 %v1733
        %5341 = vmatprep.subr.bf16.mxu0 0
        %5342 = vmatpush1.bf16.msra.mxu0 %v1736
        %5343 = vmatprep.subr.bf16.mxu0 0
        %5344 = vmatpush1.bf16.msra.mxu0 0
        %5345 = vmatprep.subr.bf16.mxu0 0
        %5346 = vmatpush1.bf16.msra.mxu0 0
        %5347 = vmatprep.subr.bf16.mxu0 0
        %5348 = vmatpush1.bf16.msra.mxu0 0
        %5349 = vmatprep.subr.bf16.mxu0 0
        %5350 = vmatpush1.bf16.msra.mxu0 0
        %5351 = vmatprep.subr.bf16.mxu0 0
        %5352 = vmatpush1.bf16.msra.mxu0 0
        %5353 = vmatprep.subr.bf16.mxu0 0
        %5354 = vmatpush1.bf16.msra.mxu0 0
        %5355 = vmatprep.subr.bf16.mxu0 0
        %5356 = vmatpush1.bf16.msra.mxu0 0
        %5357 = vmatprep.subr.bf16.mxu0 0
        %5358 = vmatpush1.bf16.msra.mxu0 0
        %5359 = vmatprep.mubr.bf16.mxu0 0
        %5360 = vmatmul.mubr.bf16.gmra.mrb[0].mxu0 %v5284
        %v5361 = vpop.f32.mrb[0].mxu0
        %v5362 = vadd.f32 %v591, %v5361
        %v5363 = vpop.f32.mrb[0].mxu0
        %v5364 = vpop.f32.mrb[0].mxu0
        %v5365 = vpop.f32.mrb[0].mxu0
        %5366 = vdwg.mxu0
        %v5367 = vadd.f32 %v5321, %v4801
        %v5368 = vxor.u32 %v5367, 2147483648
        %v5369 = vmul.f32 %v5368, 1.442695
        %v5370 = vpow.pop %v5369
        %v5371 = vadd.f32 %v5370, 1.0
        %v5372 = vrcp.pop %v5371
        %v5373 = vmul.f32 1.0, %v5372
        %v5374 = vadd.f32 %v5323, %v4803
        %v5375 = vxor.u32 %v5374, 2147483648
        %v5376 = vmul.f32 %v5375, 1.442695
        %v5377 = vpow.pop %v5376
        %v5378 = vadd.f32 %v5377, 1.0
        %v5379 = vrcp.pop %v5378
        %v5380 = vmul.f32 1.0, %v5379
        %v5381 = vadd.f32 %v4842, %v608
        %v5382 = vmul.f32 %v5373, %v5381
        %v5383 = vadd.f32 %v5362, %v5382
        %v5384 = vtanh.pop %v5383
        %v5385 = vsub.f32 1.0, %v5380
        %v5386 = vmul.f32 %v5385, %v5384
        %v5387 = vmul.f32 %v5380, %v4683
        %v5388 = vadd.f32 %v5386, %v5387
        %v5389 = vpack.c.bf16 %v5388, %v5388
        %5390 = vmatprep.subr.bf16.mxu0 %v728
        %5391 = vmatpush1.bf16.msra.mxu0 %v727
        %5392 = vmatprep.subr.bf16.mxu0 %v731
        %5393 = vmatpush1.bf16.msra.mxu0 %v730
        %5394 = vmatprep.subr.bf16.mxu0 %v734
        %5395 = vmatpush1.bf16.msra.mxu0 %v733
        %5396 = vmatprep.subr.bf16.mxu0 %v737
        %5397 = vmatpush1.bf16.msra.mxu0 %v736
        %5398 = vmatprep.subr.bf16.mxu0 %v740
        %5399 = vmatpush1.bf16.msra.mxu0 %v739
        %5400 = vmatprep.subr.bf16.mxu0 %v743
        %5401 = vmatpush1.bf16.msra.mxu0 %v742
        %5402 = vmatprep.subr.bf16.mxu0 %v746
        %5403 = vmatpush1.bf16.msra.mxu0 %v745
        %5404 = vmatprep.subr.bf16.mxu0 %v749
        %5405 = vmatpush1.bf16.msra.mxu0 %v748
        %5406 = vmatprep.subr.bf16.mxu0 0
        %5407 = vmatpush1.bf16.msra.mxu0 0
        %5408 = vmatprep.subr.bf16.mxu0 0
        %5409 = vmatpush1.bf16.msra.mxu0 0
        %5410 = vmatprep.subr.bf16.mxu0 0
        %5411 = vmatpush1.bf16.msra.mxu0 0
        %5412 = vmatprep.subr.bf16.mxu0 0
        %5413 = vmatpush1.bf16.msra.mxu0 0
        %5414 = vmatprep.subr.bf16.mxu0 0
        %5415 = vmatpush1.bf16.msra.mxu0 0
        %5416 = vmatprep.subr.bf16.mxu0 0
        %5417 = vmatpush1.bf16.msra.mxu0 0
        %5418 = vmatprep.subr.bf16.mxu0 0
        %5419 = vmatpush1.bf16.msra.mxu0 0
        %5420 = vmatprep.subr.bf16.mxu0 0
        %5421 = vmatpush1.bf16.msra.mxu0 0
        %5422 = vmatprep.mubr.bf16.mxu0 0
        %5423 = vmatmul.mubr.bf16.gmra.mrb[0].mxu0 %v5284
        %v5424 = vpop.f32.mrb[0].mxu0
        %v5425 = vadd.f32 0.0, %v5424
        %v5426 = vpop.f32.mrb[0].mxu0
        %v5427 = vadd.f32 0.0, %v5426
        %v5428 = vpop.f32.mrb[0].mxu0
        %v5429 = vpop.f32.mrb[0].mxu0
        %5430 = vdwg.mxu0
        %5431 = vmatprep.subr.bf16.mxu0 0
        %5432 = vmatpush1.bf16.msra.mxu0 %v729
        %5433 = vmatprep.subr.bf16.mxu0 0
        %5434 = vmatpush1.bf16.msra.mxu0 %v732
        %5435 = vmatprep.subr.bf16.mxu0 0
        %5436 = vmatpush1.bf16.msra.mxu0 %v735
        %5437 = vmatprep.subr.bf16.mxu0 0
        %5438 = vmatpush1.bf16.msra.mxu0 %v738
        %5439 = vmatprep.subr.bf16.mxu0 0
        %5440 = vmatpush1.bf16.msra.mxu0 %v741
        %5441 = vmatprep.subr.bf16.mxu0 0
        %5442 = vmatpush1.bf16.msra.mxu0 %v744
        %5443 = vmatprep.subr.bf16.mxu0 0
        %5444 = vmatpush1.bf16.msra.mxu0 %v747
        %5445 = vmatprep.subr.bf16.mxu0 0
        %5446 = vmatpush1.bf16.msra.mxu0 %v750
        %5447 = vmatprep.subr.bf16.mxu0 0
        %5448 = vmatpush1.bf16.msra.mxu0 0
        %5449 = vmatprep.subr.bf16.mxu0 0
        %5450 = vmatpush1.bf16.msra.mxu0 0
        %5451 = vmatprep.subr.bf16.mxu0 0
        %5452 = vmatpush1.bf16.msra.mxu0 0
        %5453 = vmatprep.subr.bf16.mxu0 0
        %5454 = vmatpush1.bf16.msra.mxu0 0
        %5455 = vmatprep.subr.bf16.mxu0 0
        %5456 = vmatpush1.bf16.msra.mxu0 0
        %5457 = vmatprep.subr.bf16.mxu0 0
        %5458 = vmatpush1.bf16.msra.mxu0 0
        %5459 = vmatprep.subr.bf16.mxu0 0
        %5460 = vmatpush1.bf16.msra.mxu0 0
        %5461 = vmatprep.subr.bf16.mxu0 0
        %5462 = vmatpush1.bf16.msra.mxu0 0
        %5463 = vmatprep.mubr.bf16.mxu0 0
        %5464 = vmatmul.mubr.bf16.gmra.mrb[0].mxu0 %v5284
        %v5465 = vpop.f32.mrb[0].mxu0
        %v5466 = vadd.f32 0.0, %v5465
        %v5467 = vpop.f32.mrb[0].mxu0
        %v5468 = vpop.f32.mrb[0].mxu0
        %v5469 = vpop.f32.mrb[0].mxu0
        %5470 = vdwg.mxu0
        %5471 = vmatprep.subr.bf16.mxu0 %v970
        %5472 = vmatpush1.bf16.msra.mxu0 %v969
        %5473 = vmatprep.subr.bf16.mxu0 %v973
        %5474 = vmatpush1.bf16.msra.mxu0 %v972
        %5475 = vmatprep.subr.bf16.mxu0 %v976
        %5476 = vmatpush1.bf16.msra.mxu0 %v975
        %5477 = vmatprep.subr.bf16.mxu0 %v979
        %5478 = vmatpush1.bf16.msra.mxu0 %v978
        %5479 = vmatprep.subr.bf16.mxu0 %v982
        %5480 = vmatpush1.bf16.msra.mxu0 %v981
        %5481 = vmatprep.subr.bf16.mxu0 %v985
        %5482 = vmatpush1.bf16.msra.mxu0 %v984
        %5483 = vmatprep.subr.bf16.mxu0 %v988
        %5484 = vmatpush1.bf16.msra.mxu0 %v987
        %5485 = vmatprep.subr.bf16.mxu0 %v991
        %5486 = vmatpush1.bf16.msra.mxu0 %v990
        %5487 = vmatprep.subr.bf16.mxu0 0
        %5488 = vmatpush1.bf16.msra.mxu0 0
        %5489 = vmatprep.subr.bf16.mxu0 0
        %5490 = vmatpush1.bf16.msra.mxu0 0
        %5491 = vmatprep.subr.bf16.mxu0 0
        %5492 = vmatpush1.bf16.msra.mxu0 0
        %5493 = vmatprep.subr.bf16.mxu0 0
        %5494 = vmatpush1.bf16.msra.mxu0 0
        %5495 = vmatprep.subr.bf16.mxu0 0
        %5496 = vmatpush1.bf16.msra.mxu0 0
        %5497 = vmatprep.subr.bf16.mxu0 0
        %5498 = vmatpush1.bf16.msra.mxu0 0
        %5499 = vmatprep.subr.bf16.mxu0 0
        %5500 = vmatpush1.bf16.msra.mxu0 0
        %5501 = vmatprep.subr.bf16.mxu0 0
        %5502 = vmatpush1.bf16.msra.mxu0 0
        %5503 = vmatprep.mubr.bf16.mxu0 0
        %5504 = vmatmul.mubr.bf16.gmra.mrb[0].mxu0 %v5389
        %v5505 = vpop.f32.mrb[0].mxu0
        %v5506 = vadd.f32 0.0, %v5505
        %v5507 = vpop.f32.mrb[0].mxu0
        %v5508 = vadd.f32 0.0, %v5507
        %v5509 = vpop.f32.mrb[0].mxu0
        %v5510 = vpop.f32.mrb[0].mxu0
        %5511 = vdwg.mxu0
        %5512 = vmatprep.subr.bf16.mxu0 0
        %5513 = vmatpush1.bf16.msra.mxu0 %v971
        %5514 = vmatprep.subr.bf16.mxu0 0
        %5515 = vmatpush1.bf16.msra.mxu0 %v974
        %5516 = vmatprep.subr.bf16.mxu0 0
        %5517 = vmatpush1.bf16.msra.mxu0 %v977
        %5518 = vmatprep.subr.bf16.mxu0 0
        %5519 = vmatpush1.bf16.msra.mxu0 %v980
        %5520 = vmatprep.subr.bf16.mxu0 0
        %5521 = vmatpush1.bf16.msra.mxu0 %v983
        %5522 = vmatprep.subr.bf16.mxu0 0
        %5523 = vmatpush1.bf16.msra.mxu0 %v986
        %5524 = vmatprep.subr.bf16.mxu0 0
        %5525 = vmatpush1.bf16.msra.mxu0 %v989
        %5526 = vmatprep.subr.bf16.mxu0 0
        %5527 = vmatpush1.bf16.msra.mxu0 %v992
        %5528 = vmatprep.subr.bf16.mxu0 0
        %5529 = vmatpush1.bf16.msra.mxu0 0
        %5530 = vmatprep.subr.bf16.mxu0 0
        %5531 = vmatpush1.bf16.msra.mxu0 0
        %5532 = vmatprep.subr.bf16.mxu0 0
        %5533 = vmatpush1.bf16.msra.mxu0 0
        %5534 = vmatprep.subr.bf16.mxu0 0
        %5535 = vmatpush1.bf16.msra.mxu0 0
        %5536 = vmatprep.subr.bf16.mxu0 0
        %5537 = vmatpush1.bf16.msra.mxu0 0
        %5538 = vmatprep.subr.bf16.mxu0 0
        %5539 = vmatpush1.bf16.msra.mxu0 0
        %5540 = vmatprep.subr.bf16.mxu0 0
        %5541 = vmatpush1.bf16.msra.mxu0 0
        %5542 = vmatprep.subr.bf16.mxu0 0
        %5543 = vmatpush1.bf16.msra.mxu0 0
        %5544 = vmatprep.mubr.bf16.mxu0 0
        %5545 = vmatmul.mubr.bf16.gmra.mrb[0].mxu0 %v5389
        %v5546 = vpop.f32.mrb[0].mxu0
        %v5547 = vadd.f32 0.0, %v5546
        %v5548 = vpop.f32.mrb[0].mxu0
        %v5549 = vpop.f32.mrb[0].mxu0
        %v5550 = vpop.f32.mrb[0].mxu0
        %5551 = vdwg.mxu0
        %s5552 = scalar_lea.vmem [#allocation3], 6
        %v5553 = vld [vmem:[%s5552] ss:$8 sm:$0x7]
        %s5554 = scalar_lea.vmem [#allocation3], 30
        %v5555 = vld [vmem:[%s5554] ss:$8 sm:$0x7]
        %s5556 = scalar_lea.vmem [#allocation3], 54
        %v5557 = vld [vmem:[%s5556] ss:$8 sm:$0x7]
        %s5558 = scalar_lea.vmem [#allocation3], 78
        %v5559 = vld [vmem:[%s5558] ss:$8 sm:$0x7]
        %s5560 = scalar_lea.vmem [#allocation3], 102
        %v5561 = vld [vmem:[%s5560] ss:$8 sm:$0x7]
        %s5562 = scalar_lea.vmem [#allocation3], 126
        %v5563 = vld [vmem:[%s5562] ss:$8 sm:$0x7]
        %s5564 = scalar_lea.vmem [#allocation3], 150
        %v5565 = vld [vmem:[%s5564] ss:$8 sm:$0x7]
        %s5566 = scalar_lea.vmem [#allocation3], 174
        %v5567 = vld [vmem:[%s5566] ss:$8 sm:$0x7]
        %v5569 = vcombine.high %v5425, %v5425
        %v5571 = vunpack.c.l.s4 1966171168
        %v5572 = vunpack.c.0.s8 %v5571
        %v5573 = vlaneseq
        %v5574 = vshrl.u32 %v5573, 7
        %v5575 = vsub.s32 %v5572, %v5574
        %v5576 = vrot.slane %v5425, %v5575
        %v5578 = vunpack.c.l.s4 1966171168
        %v5579 = vunpack.c.0.s8 %v5578
        %v5580 = vlaneseq
        %v5581 = vshrl.u32 %v5580, 7
        %v5582 = vsub.s32 %v5579, %v5581
        %v5583 = vrot.slane %v5569, %v5582
        %v5584 = vcombine.high %v5576, %v5576
        %v5585 = vcombine.high %v5583, %v5583
        %v5587 = vunpack.c.l.s4 1966171168
        %v5588 = vunpack.c.0.s8 %v5587
        %v5589 = vlaneseq
        %v5590 = vshrl.u32 %v5589, 7
        %v5591 = vsub.s32 %v5588, %v5590
        %v5592 = vrot.slane %v5576, %v5591
        %v5594 = vunpack.c.l.s4 1966171168
        %v5595 = vunpack.c.0.s8 %v5594
        %v5596 = vlaneseq
        %v5597 = vshrl.u32 %v5596, 7
        %v5598 = vsub.s32 %v5595, %v5597
        %v5599 = vrot.slane %v5583, %v5598
        %v5601 = vunpack.c.l.s4 1966171168
        %v5602 = vunpack.c.0.s8 %v5601
        %v5603 = vlaneseq
        %v5604 = vshrl.u32 %v5603, 7
        %v5605 = vsub.s32 %v5602, %v5604
        %v5606 = vrot.slane %v5584, %v5605
        %v5608 = vunpack.c.l.s4 1966171168
        %v5609 = vunpack.c.0.s8 %v5608
        %v5610 = vlaneseq
        %v5611 = vshrl.u32 %v5610, 7
        %v5612 = vsub.s32 %v5609, %v5611
        %v5613 = vrot.slane %v5585, %v5612
        %v5614 = vcombine.high %v5592, %v5592
        %v5615 = vcombine.high %v5599, %v5599
        %v5616 = vcombine.high %v5606, %v5606
        %v5617 = vcombine.high %v5613, %v5613
        %v5626 = vadd.f32 %v5553, %v5592
        %v5627 = vadd.f32 %v5555, %v5606
        %v5628 = vadd.f32 %v5557, %v5614
        %v5629 = vadd.f32 %v5559, %v5616
        %v5630 = vadd.f32 %v5561, %v5599
        %v5631 = vadd.f32 %v5563, %v5613
        %v5632 = vadd.f32 %v5565, %v5615
        %v5633 = vadd.f32 %v5567, %v5617
        %v5634 = vxor.u32 %v5626, 2147483648
        %v5635 = vxor.u32 %v5627, 2147483648
        %v5636 = vxor.u32 %v5628, 2147483648
        %v5637 = vxor.u32 %v5629, 2147483648
        %v5638 = vxor.u32 %v5630, 2147483648
        %v5639 = vxor.u32 %v5631, 2147483648
        %v5640 = vxor.u32 %v5632, 2147483648
        %v5641 = vxor.u32 %v5633, 2147483648
        %v5642 = vmul.f32 %v5634, 1.442695
        %v5643 = vpow.pop %v5642
        %v5644 = vmul.f32 %v5635, 1.442695
        %v5645 = vpow.pop %v5644
        %v5646 = vmul.f32 %v5636, 1.442695
        %v5647 = vpow.pop %v5646
        %v5648 = vmul.f32 %v5637, 1.442695
        %v5649 = vpow.pop %v5648
        %v5650 = vmul.f32 %v5638, 1.442695
        %v5651 = vpow.pop %v5650
        %v5652 = vmul.f32 %v5639, 1.442695
        %v5653 = vpow.pop %v5652
        %v5654 = vmul.f32 %v5640, 1.442695
        %v5655 = vpow.pop %v5654
        %v5656 = vmul.f32 %v5641, 1.442695
        %v5657 = vpow.pop %v5656
        %v5658 = vadd.f32 %v5643, 1.0
        %v5659 = vadd.f32 %v5645, 1.0
        %v5660 = vadd.f32 %v5647, 1.0
        %v5661 = vadd.f32 %v5649, 1.0
        %v5662 = vadd.f32 %v5651, 1.0
        %v5663 = vadd.f32 %v5653, 1.0
        %v5664 = vadd.f32 %v5655, 1.0
        %v5665 = vadd.f32 %v5657, 1.0
        %v5666 = vrcp.pop %v5658
        %v5667 = vmul.f32 1.0, %v5666
        %v5668 = vrcp.pop %v5659
        %v5669 = vmul.f32 1.0, %v5668
        %v5670 = vrcp.pop %v5660
        %v5671 = vmul.f32 1.0, %v5670
        %v5672 = vrcp.pop %v5661
        %v5673 = vmul.f32 1.0, %v5672
        %v5674 = vrcp.pop %v5662
        %v5675 = vmul.f32 1.0, %v5674
        %v5676 = vrcp.pop %v5663
        %v5677 = vmul.f32 1.0, %v5676
        %v5678 = vrcp.pop %v5664
        %v5679 = vmul.f32 1.0, %v5678
        %v5680 = vrcp.pop %v5665
        %v5681 = vmul.f32 1.0, %v5680
        %v5690 = vrot.slane %v5553, 1
        %v5691 = vrot.slane %v5555, 1
        %v5692 = vrot.slane %v5557, 1
        %v5693 = vrot.slane %v5559, 1
        %v5694 = vrot.slane %v5561, 1
        %v5695 = vrot.slane %v5563, 1
        %v5696 = vrot.slane %v5565, 1
        %v5697 = vrot.slane %v5567, 1
        %v5707 = vcombine.high %v5427, %v5427
        %v5709 = vunpack.c.l.s4 1966171168
        %v5710 = vunpack.c.0.s8 %v5709
        %v5711 = vlaneseq
        %v5712 = vshrl.u32 %v5711, 7
        %v5713 = vsub.s32 %v5710, %v5712
        %v5714 = vrot.slane %v5427, %v5713
        %v5716 = vunpack.c.l.s4 1966171168
        %v5717 = vunpack.c.0.s8 %v5716
        %v5718 = vlaneseq
        %v5719 = vshrl.u32 %v5718, 7
        %v5720 = vsub.s32 %v5717, %v5719
        %v5721 = vrot.slane %v5707, %v5720
        %v5722 = vcombine.high %v5714, %v5714
        %v5723 = vcombine.high %v5721, %v5721
        %v5725 = vunpack.c.l.s4 1966171168
        %v5726 = vunpack.c.0.s8 %v5725
        %v5727 = vlaneseq
        %v5728 = vshrl.u32 %v5727, 7
        %v5729 = vsub.s32 %v5726, %v5728
        %v5730 = vrot.slane %v5714, %v5729
        %v5732 = vunpack.c.l.s4 1966171168
        %v5733 = vunpack.c.0.s8 %v5732
        %v5734 = vlaneseq
        %v5735 = vshrl.u32 %v5734, 7
        %v5736 = vsub.s32 %v5733, %v5735
        %v5737 = vrot.slane %v5721, %v5736
        %v5739 = vunpack.c.l.s4 1966171168
        %v5740 = vunpack.c.0.s8 %v5739
        %v5741 = vlaneseq
        %v5742 = vshrl.u32 %v5741, 7
        %v5743 = vsub.s32 %v5740, %v5742
        %v5744 = vrot.slane %v5722, %v5743
        %v5746 = vunpack.c.l.s4 1966171168
        %v5747 = vunpack.c.0.s8 %v5746
        %v5748 = vlaneseq
        %v5749 = vshrl.u32 %v5748, 7
        %v5750 = vsub.s32 %v5747, %v5749
        %v5751 = vrot.slane %v5723, %v5750
        %v5752 = vcombine.high %v5730, %v5730
        %v5753 = vcombine.high %v5737, %v5737
        %v5754 = vcombine.high %v5744, %v5744
        %v5755 = vcombine.high %v5751, %v5751
        %v5764 = vadd.f32 %v5690, %v5730
        %v5765 = vadd.f32 %v5691, %v5744
        %v5766 = vadd.f32 %v5692, %v5752
        %v5767 = vadd.f32 %v5693, %v5754
        %v5768 = vadd.f32 %v5694, %v5737
        %v5769 = vadd.f32 %v5695, %v5751
        %v5770 = vadd.f32 %v5696, %v5753
        %v5771 = vadd.f32 %v5697, %v5755
        %v5772 = vxor.u32 %v5764, 2147483648
        %v5773 = vxor.u32 %v5765, 2147483648
        %v5774 = vxor.u32 %v5766, 2147483648
        %v5775 = vxor.u32 %v5767, 2147483648
        %v5776 = vxor.u32 %v5768, 2147483648
        %v5777 = vxor.u32 %v5769, 2147483648
        %v5778 = vxor.u32 %v5770, 2147483648
        %v5779 = vxor.u32 %v5771, 2147483648
        %v5780 = vmul.f32 %v5772, 1.442695
        %v5781 = vpow.pop %v5780
        %v5782 = vmul.f32 %v5773, 1.442695
        %v5783 = vpow.pop %v5782
        %v5784 = vmul.f32 %v5774, 1.442695
        %v5785 = vpow.pop %v5784
        %v5786 = vmul.f32 %v5775, 1.442695
        %v5787 = vpow.pop %v5786
        %v5788 = vmul.f32 %v5776, 1.442695
        %v5789 = vpow.pop %v5788
        %v5790 = vmul.f32 %v5777, 1.442695
        %v5791 = vpow.pop %v5790
        %v5792 = vmul.f32 %v5778, 1.442695
        %v5793 = vpow.pop %v5792
        %v5794 = vmul.f32 %v5779, 1.442695
        %v5795 = vpow.pop %v5794
        %v5796 = vadd.f32 %v5781, 1.0
        %v5797 = vadd.f32 %v5783, 1.0
        %v5798 = vadd.f32 %v5785, 1.0
        %v5799 = vadd.f32 %v5787, 1.0
        %v5800 = vadd.f32 %v5789, 1.0
        %v5801 = vadd.f32 %v5791, 1.0
        %v5802 = vadd.f32 %v5793, 1.0
        %v5803 = vadd.f32 %v5795, 1.0
        %v5804 = vrcp.pop %v5796
        %v5805 = vmul.f32 1.0, %v5804
        %v5806 = vrcp.pop %v5797
        %v5807 = vmul.f32 1.0, %v5806
        %v5808 = vrcp.pop %v5798
        %v5809 = vmul.f32 1.0, %v5808
        %v5810 = vrcp.pop %v5799
        %v5811 = vmul.f32 1.0, %v5810
        %v5812 = vrcp.pop %v5800
        %v5813 = vmul.f32 1.0, %v5812
        %v5814 = vrcp.pop %v5801
        %v5815 = vmul.f32 1.0, %v5814
        %v5816 = vrcp.pop %v5802
        %v5817 = vmul.f32 1.0, %v5816
        %v5818 = vrcp.pop %v5803
        %v5819 = vmul.f32 1.0, %v5818
        %v5820 = vadd.f32 %v5466, %v600
        %v5822 = vcombine.high %v5820, %v5820
        %v5824 = vunpack.c.l.s4 1966171168
        %v5825 = vunpack.c.0.s8 %v5824
        %v5826 = vlaneseq
        %v5827 = vshrl.u32 %v5826, 7
        %v5828 = vsub.s32 %v5825, %v5827
        %v5829 = vrot.slane %v5820, %v5828
        %v5831 = vunpack.c.l.s4 1966171168
        %v5832 = vunpack.c.0.s8 %v5831
        %v5833 = vlaneseq
        %v5834 = vshrl.u32 %v5833, 7
        %v5835 = vsub.s32 %v5832, %v5834
        %v5836 = vrot.slane %v5822, %v5835
        %v5837 = vcombine.high %v5829, %v5829
        %v5838 = vcombine.high %v5836, %v5836
        %v5840 = vunpack.c.l.s4 1966171168
        %v5841 = vunpack.c.0.s8 %v5840
        %v5842 = vlaneseq
        %v5843 = vshrl.u32 %v5842, 7
        %v5844 = vsub.s32 %v5841, %v5843
        %v5845 = vrot.slane %v5829, %v5844
        %v5847 = vunpack.c.l.s4 1966171168
        %v5848 = vunpack.c.0.s8 %v5847
        %v5849 = vlaneseq
        %v5850 = vshrl.u32 %v5849, 7
        %v5851 = vsub.s32 %v5848, %v5850
        %v5852 = vrot.slane %v5836, %v5851
        %v5854 = vunpack.c.l.s4 1966171168
        %v5855 = vunpack.c.0.s8 %v5854
        %v5856 = vlaneseq
        %v5857 = vshrl.u32 %v5856, 7
        %v5858 = vsub.s32 %v5855, %v5857
        %v5859 = vrot.slane %v5837, %v5858
        %v5861 = vunpack.c.l.s4 1966171168
        %v5862 = vunpack.c.0.s8 %v5861
        %v5863 = vlaneseq
        %v5864 = vshrl.u32 %v5863, 7
        %v5865 = vsub.s32 %v5862, %v5864
        %v5866 = vrot.slane %v5838, %v5865
        %v5867 = vcombine.high %v5845, %v5845
        %v5868 = vcombine.high %v5852, %v5852
        %v5869 = vcombine.high %v5859, %v5859
        %v5870 = vcombine.high %v5866, %v5866
        %v5879 = vmul.f32 %v5667, %v5845
        %v5880 = vmul.f32 %v5669, %v5859
        %v5881 = vmul.f32 %v5671, %v5867
        %v5882 = vmul.f32 %v5673, %v5869
        %v5883 = vmul.f32 %v5675, %v5852
        %v5884 = vmul.f32 %v5677, %v5866
        %v5885 = vmul.f32 %v5679, %v5868
        %v5886 = vmul.f32 %v5681, %v5870
        %v5887 = vrot.slane %v5553, 2
        %v5888 = vrot.slane %v5555, 2
        %v5889 = vrot.slane %v5557, 2
        %v5890 = vrot.slane %v5559, 2
        %v5891 = vrot.slane %v5561, 2
        %v5892 = vrot.slane %v5563, 2
        %v5893 = vrot.slane %v5565, 2
        %v5894 = vrot.slane %v5567, 2
        %v5903 = vadd.f32 %v5887, %v5879
        %v5904 = vadd.f32 %v5888, %v5880
        %v5905 = vadd.f32 %v5889, %v5881
        %v5906 = vadd.f32 %v5890, %v5882
        %v5907 = vadd.f32 %v5891, %v5883
        %v5908 = vadd.f32 %v5892, %v5884
        %v5909 = vadd.f32 %v5893, %v5885
        %v5910 = vadd.f32 %v5894, %v5886
        %v5911 = vtanh.pop %v5903
        %v5912 = vtanh.pop %v5904
        %v5913 = vtanh.pop %v5905
        %v5914 = vtanh.pop %v5906
        %v5915 = vtanh.pop %v5907
        %v5916 = vtanh.pop %v5908
        %v5917 = vtanh.pop %v5909
        %v5918 = vtanh.pop %v5910
        %v5919 = vsub.f32 1.0, %v5805
        %v5920 = vsub.f32 1.0, %v5807
        %v5921 = vsub.f32 1.0, %v5809
        %v5922 = vsub.f32 1.0, %v5811
        %v5923 = vsub.f32 1.0, %v5813
        %v5924 = vsub.f32 1.0, %v5815
        %v5925 = vsub.f32 1.0, %v5817
        %v5926 = vsub.f32 1.0, %v5819
        %v5927 = vmul.f32 %v5919, %v5911
        %v5928 = vmul.f32 %v5920, %v5912
        %v5929 = vmul.f32 %v5921, %v5913
        %v5930 = vmul.f32 %v5922, %v5914
        %v5931 = vmul.f32 %v5923, %v5915
        %v5932 = vmul.f32 %v5924, %v5916
        %v5933 = vmul.f32 %v5925, %v5917
        %v5934 = vmul.f32 %v5926, %v5918
        %v5935 = vmul.f32 %v5805, %v5238
        %v5936 = vmul.f32 %v5807, %v5239
        %v5937 = vmul.f32 %v5809, %v5240
        %v5938 = vmul.f32 %v5811, %v5241
        %v5939 = vmul.f32 %v5813, %v5242
        %v5940 = vmul.f32 %v5815, %v5243
        %v5941 = vmul.f32 %v5817, %v5244
        %v5942 = vmul.f32 %v5819, %v5245
        %v5943 = vadd.f32 %v5927, %v5935
        %v5944 = vadd.f32 %v5928, %v5936
        %v5945 = vadd.f32 %v5929, %v5937
        %v5946 = vadd.f32 %v5930, %v5938
        %v5947 = vadd.f32 %v5931, %v5939
        %v5948 = vadd.f32 %v5932, %v5940
        %v5949 = vadd.f32 %v5933, %v5941
        %v5950 = vadd.f32 %v5934, %v5942
        %v5951 = vpack.c.bf16 %v5943, %v5943
        %v5952 = vpack.c.bf16 %v5944, %v5944
        %v5953 = vpack.c.bf16 %v5945, %v5945
        %v5954 = vpack.c.bf16 %v5946, %v5946
        %v5955 = vpack.c.bf16 %v5947, %v5947
        %v5956 = vpack.c.bf16 %v5948, %v5948
        %v5957 = vpack.c.bf16 %v5949, %v5949
        %v5958 = vpack.c.bf16 %v5950, %v5950
        %v5967 = vunpack.c.l.b16 %v5951
        %v5968 = vunpack.c.l.b16 %v5952
        %v5969 = vunpack.c.l.b16 %v5953
        %v5970 = vunpack.c.l.b16 %v5954
        %v5971 = vunpack.c.l.b16 %v5955
        %v5972 = vunpack.c.l.b16 %v5956
        %v5973 = vunpack.c.l.b16 %v5957
        %v5974 = vunpack.c.l.b16 %v5958
        %v5975 = vrot.slane %v5968, 7
        %v5976 = vsel %vm1611, %v5975, %v5967
        %v5977 = vrot.slane %v5969, 6
        %v5978 = vsel %vm1614, %v5977, %v5976
        %v5979 = vrot.slane %v5970, 5
        %v5980 = vsel %vm1617, %v5979, %v5978
        %v5981 = vrot.slane %v5971, 4
        %v5982 = vsel %vm1620, %v5981, %v5980
        %v5983 = vrot.slane %v5972, 3
        %v5984 = vsel %vm1623, %v5983, %v5982
        %v5985 = vrot.slane %v5973, 2
        %v5986 = vsel %vm1626, %v5985, %v5984
        %v5987 = vrot.slane %v5974, 1
        %v5988 = vsel %vm1629, %v5987, %v5986
        %v5989 = vpack.c.b16 %v5988, %v5988
        %5991 = vmatprep.subr.bf16.mxu0 %v1714
        %5992 = vmatpush1.bf16.msra.mxu0 %v1713
        %5993 = vmatprep.subr.bf16.mxu0 %v1717
        %5994 = vmatpush1.bf16.msra.mxu0 %v1716
        %5995 = vmatprep.subr.bf16.mxu0 %v1720
        %5996 = vmatpush1.bf16.msra.mxu0 %v1719
        %5997 = vmatprep.subr.bf16.mxu0 %v1723
        %5998 = vmatpush1.bf16.msra.mxu0 %v1722
        %5999 = vmatprep.subr.bf16.mxu0 %v1726
        %6000 = vmatpush1.bf16.msra.mxu0 %v1725
        %6001 = vmatprep.subr.bf16.mxu0 %v1729
        %6002 = vmatpush1.bf16.msra.mxu0 %v1728
        %6003 = vmatprep.subr.bf16.mxu0 %v1732
        %6004 = vmatpush1.bf16.msra.mxu0 %v1731
        %6005 = vmatprep.subr.bf16.mxu0 %v1735
        %6006 = vmatpush1.bf16.msra.mxu0 %v1734
        %6007 = vmatprep.subr.bf16.mxu0 0
        %6008 = vmatpush1.bf16.msra.mxu0 0
        %6009 = vmatprep.subr.bf16.mxu0 0
        %6010 = vmatpush1.bf16.msra.mxu0 0
        %6011 = vmatprep.subr.bf16.mxu0 0
        %6012 = vmatpush1.bf16.msra.mxu0 0
        %6013 = vmatprep.subr.bf16.mxu0 0
        %6014 = vmatpush1.bf16.msra.mxu0 0
        %6015 = vmatprep.subr.bf16.mxu0 0
        %6016 = vmatpush1.bf16.msra.mxu0 0
        %6017 = vmatprep.subr.bf16.mxu0 0
        %6018 = vmatpush1.bf16.msra.mxu0 0
        %6019 = vmatprep.subr.bf16.mxu0 0
        %6020 = vmatpush1.bf16.msra.mxu0 0
        %6021 = vmatprep.subr.bf16.mxu0 0
        %6022 = vmatpush1.bf16.msra.mxu0 0
        %6023 = vmatprep.mubr.bf16.mxu0 0
        %6024 = vmatmul.mubr.bf16.gmra.mrb[0].mxu0 %v5989
        %v6025 = vpop.f32.mrb[0].mxu0
        %v6026 = vadd.f32 %v583, %v6025
        %v6027 = vpop.f32.mrb[0].mxu0
        %v6028 = vadd.f32 %v587, %v6027
        %v6029 = vpop.f32.mrb[0].mxu0
        %v6030 = vpop.f32.mrb[0].mxu0
        %6031 = vdwg.mxu0
        %6032 = vmatprep.subr.bf16.mxu0 0
        %6033 = vmatpush1.bf16.msra.mxu0 %v1715
        %6034 = vmatprep.subr.bf16.mxu0 0
        %6035 = vmatpush1.bf16.msra.mxu0 %v1718
        %6036 = vmatprep.subr.bf16.mxu0 0
        %6037 = vmatpush1.bf16.msra.mxu0 %v1721
        %6038 = vmatprep.subr.bf16.mxu0 0
        %6039 = vmatpush1.bf16.msra.mxu0 %v1724
        %6040 = vmatprep.subr.bf16.mxu0 0
        %6041 = vmatpush1.bf16.msra.mxu0 %v1727
        %6042 = vmatprep.subr.bf16.mxu0 0
        %6043 = vmatpush1.bf16.msra.mxu0 %v1730
        %6044 = vmatprep.subr.bf16.mxu0 0
        %6045 = vmatpush1.bf16.msra.mxu0 %v1733
        %6046 = vmatprep.subr.bf16.mxu0 0
        %6047 = vmatpush1.bf16.msra.mxu0 %v1736
        %6048 = vmatprep.subr.bf16.mxu0 0
        %6049 = vmatpush1.bf16.msra.mxu0 0
        %6050 = vmatprep.subr.bf16.mxu0 0
        %6051 = vmatpush1.bf16.msra.mxu0 0
        %6052 = vmatprep.subr.bf16.mxu0 0
        %6053 = vmatpush1.bf16.msra.mxu0 0
        %6054 = vmatprep.subr.bf16.mxu0 0
        %6055 = vmatpush1.bf16.msra.mxu0 0
        %6056 = vmatprep.subr.bf16.mxu0 0
        %6057 = vmatpush1.bf16.msra.mxu0 0
        %6058 = vmatprep.subr.bf16.mxu0 0
        %6059 = vmatpush1.bf16.msra.mxu0 0
        %6060 = vmatprep.subr.bf16.mxu0 0
        %6061 = vmatpush1.bf16.msra.mxu0 0
        %6062 = vmatprep.subr.bf16.mxu0 0
        %6063 = vmatpush1.bf16.msra.mxu0 0
        %6064 = vmatprep.mubr.bf16.mxu0 0
        %6065 = vmatmul.mubr.bf16.gmra.mrb[0].mxu0 %v5989
        %v6066 = vpop.f32.mrb[0].mxu0
        %v6067 = vadd.f32 %v591, %v6066
        %v6068 = vpop.f32.mrb[0].mxu0
        %v6069 = vpop.f32.mrb[0].mxu0
        %v6070 = vpop.f32.mrb[0].mxu0
        %6071 = vdwg.mxu0
        %v6072 = vadd.f32 %v6026, %v5506
        %v6073 = vxor.u32 %v6072, 2147483648
        %v6074 = vmul.f32 %v6073, 1.442695
        %v6075 = vpow.pop %v6074
        %v6076 = vadd.f32 %v6075, 1.0
        %v6077 = vrcp.pop %v6076
        %v6078 = vmul.f32 1.0, %v6077
        %v6079 = vadd.f32 %v6028, %v5508
        %v6080 = vxor.u32 %v6079, 2147483648
        %v6081 = vmul.f32 %v6080, 1.442695
        %v6082 = vpow.pop %v6081
        %v6083 = vadd.f32 %v6082, 1.0
        %v6084 = vrcp.pop %v6083
        %v6085 = vmul.f32 1.0, %v6084
        %v6086 = vadd.f32 %v5547, %v608
        %v6087 = vmul.f32 %v6078, %v6086
        %v6088 = vadd.f32 %v6067, %v6087
        %v6089 = vtanh.pop %v6088
        %v6090 = vsub.f32 1.0, %v6085
        %v6091 = vmul.f32 %v6090, %v6089
        %v6092 = vmul.f32 %v6085, %v5388
        %v6093 = vadd.f32 %v6091, %v6092
        %v6094 = vpack.c.bf16 %v6093, %v6093
        %6095 = vmatprep.subr.bf16.mxu0 %v728
        %6096 = vmatpush1.bf16.msra.mxu0 %v727
        %6097 = vmatprep.subr.bf16.mxu0 %v731
        %6098 = vmatpush1.bf16.msra.mxu0 %v730
        %6099 = vmatprep.subr.bf16.mxu0 %v734
        %6100 = vmatpush1.bf16.msra.mxu0 %v733
        %6101 = vmatprep.subr.bf16.mxu0 %v737
        %6102 = vmatpush1.bf16.msra.mxu0 %v736
        %6103 = vmatprep.subr.bf16.mxu0 %v740
        %6104 = vmatpush1.bf16.msra.mxu0 %v739
        %6105 = vmatprep.subr.bf16.mxu0 %v743
        %6106 = vmatpush1.bf16.msra.mxu0 %v742
        %6107 = vmatprep.subr.bf16.mxu0 %v746
        %6108 = vmatpush1.bf16.msra.mxu0 %v745
        %6109 = vmatprep.subr.bf16.mxu0 %v749
        %6110 = vmatpush1.bf16.msra.mxu0 %v748
        %6111 = vmatprep.subr.bf16.mxu0 0
        %6112 = vmatpush1.bf16.msra.mxu0 0
        %6113 = vmatprep.subr.bf16.mxu0 0
        %6114 = vmatpush1.bf16.msra.mxu0 0
        %6115 = vmatprep.subr.bf16.mxu0 0
        %6116 = vmatpush1.bf16.msra.mxu0 0
        %6117 = vmatprep.subr.bf16.mxu0 0
        %6118 = vmatpush1.bf16.msra.mxu0 0
        %6119 = vmatprep.subr.bf16.mxu0 0
        %6120 = vmatpush1.bf16.msra.mxu0 0
        %6121 = vmatprep.subr.bf16.mxu0 0
        %6122 = vmatpush1.bf16.msra.mxu0 0
        %6123 = vmatprep.subr.bf16.mxu0 0
        %6124 = vmatpush1.bf16.msra.mxu0 0
        %6125 = vmatprep.subr.bf16.mxu0 0
        %6126 = vmatpush1.bf16.msra.mxu0 0
        %6127 = vmatprep.mubr.bf16.mxu0 0
        %6128 = vmatmul.mubr.bf16.gmra.mrb[0].mxu0 %v5989
        %v6129 = vpop.f32.mrb[0].mxu0
        %v6130 = vadd.f32 0.0, %v6129
        %v6131 = vpop.f32.mrb[0].mxu0
        %v6132 = vadd.f32 0.0, %v6131
        %v6133 = vpop.f32.mrb[0].mxu0
        %v6134 = vpop.f32.mrb[0].mxu0
        %6135 = vdwg.mxu0
        %6136 = vmatprep.subr.bf16.mxu0 0
        %6137 = vmatpush1.bf16.msra.mxu0 %v729
        %6138 = vmatprep.subr.bf16.mxu0 0
        %6139 = vmatpush1.bf16.msra.mxu0 %v732
        %6140 = vmatprep.subr.bf16.mxu0 0
        %6141 = vmatpush1.bf16.msra.mxu0 %v735
        %6142 = vmatprep.subr.bf16.mxu0 0
        %6143 = vmatpush1.bf16.msra.mxu0 %v738
        %6144 = vmatprep.subr.bf16.mxu0 0
        %6145 = vmatpush1.bf16.msra.mxu0 %v741
        %6146 = vmatprep.subr.bf16.mxu0 0
        %6147 = vmatpush1.bf16.msra.mxu0 %v744
        %6148 = vmatprep.subr.bf16.mxu0 0
        %6149 = vmatpush1.bf16.msra.mxu0 %v747
        %6150 = vmatprep.subr.bf16.mxu0 0
        %6151 = vmatpush1.bf16.msra.mxu0 %v750
        %6152 = vmatprep.subr.bf16.mxu0 0
        %6153 = vmatpush1.bf16.msra.mxu0 0
        %6154 = vmatprep.subr.bf16.mxu0 0
        %6155 = vmatpush1.bf16.msra.mxu0 0
        %6156 = vmatprep.subr.bf16.mxu0 0
        %6157 = vmatpush1.bf16.msra.mxu0 0
        %6158 = vmatprep.subr.bf16.mxu0 0
        %6159 = vmatpush1.bf16.msra.mxu0 0
        %6160 = vmatprep.subr.bf16.mxu0 0
        %6161 = vmatpush1.bf16.msra.mxu0 0
        %6162 = vmatprep.subr.bf16.mxu0 0
        %6163 = vmatpush1.bf16.msra.mxu0 0
        %6164 = vmatprep.subr.bf16.mxu0 0
        %6165 = vmatpush1.bf16.msra.mxu0 0
        %6166 = vmatprep.subr.bf16.mxu0 0
        %6167 = vmatpush1.bf16.msra.mxu0 0
        %6168 = vmatprep.mubr.bf16.mxu0 0
        %6169 = vmatmul.mubr.bf16.gmra.mrb[0].mxu0 %v5989
        %v6170 = vpop.f32.mrb[0].mxu0
        %v6171 = vadd.f32 0.0, %v6170
        %v6172 = vpop.f32.mrb[0].mxu0
        %v6173 = vpop.f32.mrb[0].mxu0
        %v6174 = vpop.f32.mrb[0].mxu0
        %6175 = vdwg.mxu0
        %6176 = vmatprep.subr.bf16.mxu0 %v970
        %6177 = vmatpush1.bf16.msra.mxu0 %v969
        %6178 = vmatprep.subr.bf16.mxu0 %v973
        %6179 = vmatpush1.bf16.msra.mxu0 %v972
        %6180 = vmatprep.subr.bf16.mxu0 %v976
        %6181 = vmatpush1.bf16.msra.mxu0 %v975
        %6182 = vmatprep.subr.bf16.mxu0 %v979
        %6183 = vmatpush1.bf16.msra.mxu0 %v978
        %6184 = vmatprep.subr.bf16.mxu0 %v982
        %6185 = vmatpush1.bf16.msra.mxu0 %v981
        %6186 = vmatprep.subr.bf16.mxu0 %v985
        %6187 = vmatpush1.bf16.msra.mxu0 %v984
        %6188 = vmatprep.subr.bf16.mxu0 %v988
        %6189 = vmatpush1.bf16.msra.mxu0 %v987
        %6190 = vmatprep.subr.bf16.mxu0 %v991
        %6191 = vmatpush1.bf16.msra.mxu0 %v990
        %6192 = vmatprep.subr.bf16.mxu0 0
        %6193 = vmatpush1.bf16.msra.mxu0 0
        %6194 = vmatprep.subr.bf16.mxu0 0
        %6195 = vmatpush1.bf16.msra.mxu0 0
        %6196 = vmatprep.subr.bf16.mxu0 0
        %6197 = vmatpush1.bf16.msra.mxu0 0
        %6198 = vmatprep.subr.bf16.mxu0 0
        %6199 = vmatpush1.bf16.msra.mxu0 0
        %6200 = vmatprep.subr.bf16.mxu0 0
        %6201 = vmatpush1.bf16.msra.mxu0 0
        %6202 = vmatprep.subr.bf16.mxu0 0
        %6203 = vmatpush1.bf16.msra.mxu0 0
        %6204 = vmatprep.subr.bf16.mxu0 0
        %6205 = vmatpush1.bf16.msra.mxu0 0
        %6206 = vmatprep.subr.bf16.mxu0 0
        %6207 = vmatpush1.bf16.msra.mxu0 0
        %6208 = vmatprep.mubr.bf16.mxu0 0
        %6209 = vmatmul.mubr.bf16.gmra.mrb[0].mxu0 %v6094
        %v6210 = vpop.f32.mrb[0].mxu0
        %v6211 = vadd.f32 0.0, %v6210
        %v6212 = vpop.f32.mrb[0].mxu0
        %v6213 = vadd.f32 0.0, %v6212
        %v6214 = vpop.f32.mrb[0].mxu0
        %v6215 = vpop.f32.mrb[0].mxu0
        %6216 = vdwg.mxu0
        %6217 = vmatprep.subr.bf16.mxu0 0
        %6218 = vmatpush1.bf16.msra.mxu0 %v971
        %6219 = vmatprep.subr.bf16.mxu0 0
        %6220 = vmatpush1.bf16.msra.mxu0 %v974
        %6221 = vmatprep.subr.bf16.mxu0 0
        %6222 = vmatpush1.bf16.msra.mxu0 %v977
        %6223 = vmatprep.subr.bf16.mxu0 0
        %6224 = vmatpush1.bf16.msra.mxu0 %v980
        %6225 = vmatprep.subr.bf16.mxu0 0
        %6226 = vmatpush1.bf16.msra.mxu0 %v983
        %6227 = vmatprep.subr.bf16.mxu0 0
        %6228 = vmatpush1.bf16.msra.mxu0 %v986
        %6229 = vmatprep.subr.bf16.mxu0 0
        %6230 = vmatpush1.bf16.msra.mxu0 %v989
        %6231 = vmatprep.subr.bf16.mxu0 0
        %6232 = vmatpush1.bf16.msra.mxu0 %v992
        %6233 = vmatprep.subr.bf16.mxu0 0
        %6234 = vmatpush1.bf16.msra.mxu0 0
        %6235 = vmatprep.subr.bf16.mxu0 0
        %6236 = vmatpush1.bf16.msra.mxu0 0
        %6237 = vmatprep.subr.bf16.mxu0 0
        %6238 = vmatpush1.bf16.msra.mxu0 0
        %6239 = vmatprep.subr.bf16.mxu0 0
        %6240 = vmatpush1.bf16.msra.mxu0 0
        %6241 = vmatprep.subr.bf16.mxu0 0
        %6242 = vmatpush1.bf16.msra.mxu0 0
        %6243 = vmatprep.subr.bf16.mxu0 0
        %6244 = vmatpush1.bf16.msra.mxu0 0
        %6245 = vmatprep.subr.bf16.mxu0 0
        %6246 = vmatpush1.bf16.msra.mxu0 0
        %6247 = vmatprep.subr.bf16.mxu0 0
        %6248 = vmatpush1.bf16.msra.mxu0 0
        %6249 = vmatprep.mubr.bf16.mxu0 0
        %6250 = vmatmul.mubr.bf16.gmra.mrb[0].mxu0 %v6094
        %v6251 = vpop.f32.mrb[0].mxu0
        %v6252 = vadd.f32 0.0, %v6251
        %v6253 = vpop.f32.mrb[0].mxu0
        %v6254 = vpop.f32.mrb[0].mxu0
        %v6255 = vpop.f32.mrb[0].mxu0
        %6256 = vdwg.mxu0
        %s6257 = scalar_lea.vmem [#allocation3], 7
        %v6258 = vld [vmem:[%s6257] ss:$8 sm:$0x7]
        %s6259 = scalar_lea.vmem [#allocation3], 31
        %v6260 = vld [vmem:[%s6259] ss:$8 sm:$0x7]
        %s6261 = scalar_lea.vmem [#allocation3], 55
        %v6262 = vld [vmem:[%s6261] ss:$8 sm:$0x7]
        %s6263 = scalar_lea.vmem [#allocation3], 79
        %v6264 = vld [vmem:[%s6263] ss:$8 sm:$0x7]
        %s6265 = scalar_lea.vmem [#allocation3], 103
        %v6266 = vld [vmem:[%s6265] ss:$8 sm:$0x7]
        %s6267 = scalar_lea.vmem [#allocation3], 127
        %v6268 = vld [vmem:[%s6267] ss:$8 sm:$0x7]
        %s6269 = scalar_lea.vmem [#allocation3], 151
        %v6270 = vld [vmem:[%s6269] ss:$8 sm:$0x7]
        %s6271 = scalar_lea.vmem [#allocation3], 175
        %v6272 = vld [vmem:[%s6271] ss:$8 sm:$0x7]
        %v6274 = vcombine.high %v6130, %v6130
        %v6276 = vunpack.c.l.s4 1966171168
        %v6277 = vunpack.c.0.s8 %v6276
        %v6278 = vlaneseq
        %v6279 = vshrl.u32 %v6278, 7
        %v6280 = vsub.s32 %v6277, %v6279
        %v6281 = vrot.slane %v6130, %v6280
        %v6283 = vunpack.c.l.s4 1966171168
        %v6284 = vunpack.c.0.s8 %v6283
        %v6285 = vlaneseq
        %v6286 = vshrl.u32 %v6285, 7
        %v6287 = vsub.s32 %v6284, %v6286
        %v6288 = vrot.slane %v6274, %v6287
        %v6289 = vcombine.high %v6281, %v6281
        %v6290 = vcombine.high %v6288, %v6288
        %v6292 = vunpack.c.l.s4 1966171168
        %v6293 = vunpack.c.0.s8 %v6292
        %v6294 = vlaneseq
        %v6295 = vshrl.u32 %v6294, 7
        %v6296 = vsub.s32 %v6293, %v6295
        %v6297 = vrot.slane %v6281, %v6296
        %v6299 = vunpack.c.l.s4 1966171168
        %v6300 = vunpack.c.0.s8 %v6299
        %v6301 = vlaneseq
        %v6302 = vshrl.u32 %v6301, 7
        %v6303 = vsub.s32 %v6300, %v6302
        %v6304 = vrot.slane %v6288, %v6303
        %v6306 = vunpack.c.l.s4 1966171168
        %v6307 = vunpack.c.0.s8 %v6306
        %v6308 = vlaneseq
        %v6309 = vshrl.u32 %v6308, 7
        %v6310 = vsub.s32 %v6307, %v6309
        %v6311 = vrot.slane %v6289, %v6310
        %v6313 = vunpack.c.l.s4 1966171168
        %v6314 = vunpack.c.0.s8 %v6313
        %v6315 = vlaneseq
        %v6316 = vshrl.u32 %v6315, 7
        %v6317 = vsub.s32 %v6314, %v6316
        %v6318 = vrot.slane %v6290, %v6317
        %v6319 = vcombine.high %v6297, %v6297
        %v6320 = vcombine.high %v6304, %v6304
        %v6321 = vcombine.high %v6311, %v6311
        %v6322 = vcombine.high %v6318, %v6318
        %v6331 = vadd.f32 %v6258, %v6297
        %v6332 = vadd.f32 %v6260, %v6311
        %v6333 = vadd.f32 %v6262, %v6319
        %v6334 = vadd.f32 %v6264, %v6321
        %v6335 = vadd.f32 %v6266, %v6304
        %v6336 = vadd.f32 %v6268, %v6318
        %v6337 = vadd.f32 %v6270, %v6320
        %v6338 = vadd.f32 %v6272, %v6322
        %v6339 = vxor.u32 %v6331, 2147483648
        %v6340 = vxor.u32 %v6332, 2147483648
        %v6341 = vxor.u32 %v6333, 2147483648
        %v6342 = vxor.u32 %v6334, 2147483648
        %v6343 = vxor.u32 %v6335, 2147483648
        %v6344 = vxor.u32 %v6336, 2147483648
        %v6345 = vxor.u32 %v6337, 2147483648
        %v6346 = vxor.u32 %v6338, 2147483648
        %v6347 = vmul.f32 %v6339, 1.442695
        %v6348 = vpow.pop %v6347
        %v6349 = vmul.f32 %v6340, 1.442695
        %v6350 = vpow.pop %v6349
        %v6351 = vmul.f32 %v6341, 1.442695
        %v6352 = vpow.pop %v6351
        %v6353 = vmul.f32 %v6342, 1.442695
        %v6354 = vpow.pop %v6353
        %v6355 = vmul.f32 %v6343, 1.442695
        %v6356 = vpow.pop %v6355
        %v6357 = vmul.f32 %v6344, 1.442695
        %v6358 = vpow.pop %v6357
        %v6359 = vmul.f32 %v6345, 1.442695
        %v6360 = vpow.pop %v6359
        %v6361 = vmul.f32 %v6346, 1.442695
        %v6362 = vpow.pop %v6361
        %v6363 = vadd.f32 %v6348, 1.0
        %v6364 = vadd.f32 %v6350, 1.0
        %v6365 = vadd.f32 %v6352, 1.0
        %v6366 = vadd.f32 %v6354, 1.0
        %v6367 = vadd.f32 %v6356, 1.0
        %v6368 = vadd.f32 %v6358, 1.0
        %v6369 = vadd.f32 %v6360, 1.0
        %v6370 = vadd.f32 %v6362, 1.0
        %v6371 = vrcp.pop %v6363
        %v6372 = vmul.f32 1.0, %v6371
        %v6373 = vrcp.pop %v6364
        %v6374 = vmul.f32 1.0, %v6373
        %v6375 = vrcp.pop %v6365
        %v6376 = vmul.f32 1.0, %v6375
        %v6377 = vrcp.pop %v6366
        %v6378 = vmul.f32 1.0, %v6377
        %v6379 = vrcp.pop %v6367
        %v6380 = vmul.f32 1.0, %v6379
        %v6381 = vrcp.pop %v6368
        %v6382 = vmul.f32 1.0, %v6381
        %v6383 = vrcp.pop %v6369
        %v6384 = vmul.f32 1.0, %v6383
        %v6385 = vrcp.pop %v6370
        %v6386 = vmul.f32 1.0, %v6385
        %v6395 = vrot.slane %v6258, 1
        %v6396 = vrot.slane %v6260, 1
        %v6397 = vrot.slane %v6262, 1
        %v6398 = vrot.slane %v6264, 1
        %v6399 = vrot.slane %v6266, 1
        %v6400 = vrot.slane %v6268, 1
        %v6401 = vrot.slane %v6270, 1
        %v6402 = vrot.slane %v6272, 1
        %v6412 = vcombine.high %v6132, %v6132
        %v6414 = vunpack.c.l.s4 1966171168
        %v6415 = vunpack.c.0.s8 %v6414
        %v6416 = vlaneseq
        %v6417 = vshrl.u32 %v6416, 7
        %v6418 = vsub.s32 %v6415, %v6417
        %v6419 = vrot.slane %v6132, %v6418
        %v6421 = vunpack.c.l.s4 1966171168
        %v6422 = vunpack.c.0.s8 %v6421
        %v6423 = vlaneseq
        %v6424 = vshrl.u32 %v6423, 7
        %v6425 = vsub.s32 %v6422, %v6424
        %v6426 = vrot.slane %v6412, %v6425
        %v6427 = vcombine.high %v6419, %v6419
        %v6428 = vcombine.high %v6426, %v6426
        %v6430 = vunpack.c.l.s4 1966171168
        %v6431 = vunpack.c.0.s8 %v6430
        %v6432 = vlaneseq
        %v6433 = vshrl.u32 %v6432, 7
        %v6434 = vsub.s32 %v6431, %v6433
        %v6435 = vrot.slane %v6419, %v6434
        %v6437 = vunpack.c.l.s4 1966171168
        %v6438 = vunpack.c.0.s8 %v6437
        %v6439 = vlaneseq
        %v6440 = vshrl.u32 %v6439, 7
        %v6441 = vsub.s32 %v6438, %v6440
        %v6442 = vrot.slane %v6426, %v6441
        %v6444 = vunpack.c.l.s4 1966171168
        %v6445 = vunpack.c.0.s8 %v6444
        %v6446 = vlaneseq
        %v6447 = vshrl.u32 %v6446, 7
        %v6448 = vsub.s32 %v6445, %v6447
        %v6449 = vrot.slane %v6427, %v6448
        %v6451 = vunpack.c.l.s4 1966171168
        %v6452 = vunpack.c.0.s8 %v6451
        %v6453 = vlaneseq
        %v6454 = vshrl.u32 %v6453, 7
        %v6455 = vsub.s32 %v6452, %v6454
        %v6456 = vrot.slane %v6428, %v6455
        %v6457 = vcombine.high %v6435, %v6435
        %v6458 = vcombine.high %v6442, %v6442
        %v6459 = vcombine.high %v6449, %v6449
        %v6460 = vcombine.high %v6456, %v6456
        %v6469 = vadd.f32 %v6395, %v6435
        %v6470 = vadd.f32 %v6396, %v6449
        %v6471 = vadd.f32 %v6397, %v6457
        %v6472 = vadd.f32 %v6398, %v6459
        %v6473 = vadd.f32 %v6399, %v6442
        %v6474 = vadd.f32 %v6400, %v6456
        %v6475 = vadd.f32 %v6401, %v6458
        %v6476 = vadd.f32 %v6402, %v6460
        %v6477 = vxor.u32 %v6469, 2147483648
        %v6478 = vxor.u32 %v6470, 2147483648
        %v6479 = vxor.u32 %v6471, 2147483648
        %v6480 = vxor.u32 %v6472, 2147483648
        %v6481 = vxor.u32 %v6473, 2147483648
        %v6482 = vxor.u32 %v6474, 2147483648
        %v6483 = vxor.u32 %v6475, 2147483648
        %v6484 = vxor.u32 %v6476, 2147483648
        %v6485 = vmul.f32 %v6477, 1.442695
        %v6486 = vpow.pop %v6485
        %v6487 = vmul.f32 %v6478, 1.442695
        %v6488 = vpow.pop %v6487
        %v6489 = vmul.f32 %v6479, 1.442695
        %v6490 = vpow.pop %v6489
        %v6491 = vmul.f32 %v6480, 1.442695
        %v6492 = vpow.pop %v6491
        %v6493 = vmul.f32 %v6481, 1.442695
        %v6494 = vpow.pop %v6493
        %v6495 = vmul.f32 %v6482, 1.442695
        %v6496 = vpow.pop %v6495
        %v6497 = vmul.f32 %v6483, 1.442695
        %v6498 = vpow.pop %v6497
        %v6499 = vmul.f32 %v6484, 1.442695
        %v6500 = vpow.pop %v6499
        %v6501 = vadd.f32 %v6486, 1.0
        %v6502 = vadd.f32 %v6488, 1.0
        %v6503 = vadd.f32 %v6490, 1.0
        %v6504 = vadd.f32 %v6492, 1.0
        %v6505 = vadd.f32 %v6494, 1.0
        %v6506 = vadd.f32 %v6496, 1.0
        %v6507 = vadd.f32 %v6498, 1.0
        %v6508 = vadd.f32 %v6500, 1.0
        %v6509 = vrcp.pop %v6501
        %v6510 = vmul.f32 1.0, %v6509
        %v6511 = vrcp.pop %v6502
        %v6512 = vmul.f32 1.0, %v6511
        %v6513 = vrcp.pop %v6503
        %v6514 = vmul.f32 1.0, %v6513
        %v6515 = vrcp.pop %v6504
        %v6516 = vmul.f32 1.0, %v6515
        %v6517 = vrcp.pop %v6505
        %v6518 = vmul.f32 1.0, %v6517
        %v6519 = vrcp.pop %v6506
        %v6520 = vmul.f32 1.0, %v6519
        %v6521 = vrcp.pop %v6507
        %v6522 = vmul.f32 1.0, %v6521
        %v6523 = vrcp.pop %v6508
        %v6524 = vmul.f32 1.0, %v6523
        %v6525 = vadd.f32 %v6171, %v600
        %v6527 = vcombine.high %v6525, %v6525
        %v6529 = vunpack.c.l.s4 1966171168
        %v6530 = vunpack.c.0.s8 %v6529
        %v6531 = vlaneseq
        %v6532 = vshrl.u32 %v6531, 7
        %v6533 = vsub.s32 %v6530, %v6532
        %v6534 = vrot.slane %v6525, %v6533
        %v6536 = vunpack.c.l.s4 1966171168
        %v6537 = vunpack.c.0.s8 %v6536
        %v6538 = vlaneseq
        %v6539 = vshrl.u32 %v6538, 7
        %v6540 = vsub.s32 %v6537, %v6539
        %v6541 = vrot.slane %v6527, %v6540
        %v6542 = vcombine.high %v6534, %v6534
        %v6543 = vcombine.high %v6541, %v6541
        %v6545 = vunpack.c.l.s4 1966171168
        %v6546 = vunpack.c.0.s8 %v6545
        %v6547 = vlaneseq
        %v6548 = vshrl.u32 %v6547, 7
        %v6549 = vsub.s32 %v6546, %v6548
        %v6550 = vrot.slane %v6534, %v6549
        %v6552 = vunpack.c.l.s4 1966171168
        %v6553 = vunpack.c.0.s8 %v6552
        %v6554 = vlaneseq
        %v6555 = vshrl.u32 %v6554, 7
        %v6556 = vsub.s32 %v6553, %v6555
        %v6557 = vrot.slane %v6541, %v6556
        %v6559 = vunpack.c.l.s4 1966171168
        %v6560 = vunpack.c.0.s8 %v6559
        %v6561 = vlaneseq
        %v6562 = vshrl.u32 %v6561, 7
        %v6563 = vsub.s32 %v6560, %v6562
        %v6564 = vrot.slane %v6542, %v6563
        %v6566 = vunpack.c.l.s4 1966171168
        %v6567 = vunpack.c.0.s8 %v6566
        %v6568 = vlaneseq
        %v6569 = vshrl.u32 %v6568, 7
        %v6570 = vsub.s32 %v6567, %v6569
        %v6571 = vrot.slane %v6543, %v6570
        %v6572 = vcombine.high %v6550, %v6550
        %v6573 = vcombine.high %v6557, %v6557
        %v6574 = vcombine.high %v6564, %v6564
        %v6575 = vcombine.high %v6571, %v6571
        %v6584 = vmul.f32 %v6372, %v6550
        %v6585 = vmul.f32 %v6374, %v6564
        %v6586 = vmul.f32 %v6376, %v6572
        %v6587 = vmul.f32 %v6378, %v6574
        %v6588 = vmul.f32 %v6380, %v6557
        %v6589 = vmul.f32 %v6382, %v6571
        %v6590 = vmul.f32 %v6384, %v6573
        %v6591 = vmul.f32 %v6386, %v6575
        %v6592 = vrot.slane %v6258, 2
        %v6593 = vrot.slane %v6260, 2
        %v6594 = vrot.slane %v6262, 2
        %v6595 = vrot.slane %v6264, 2
        %v6596 = vrot.slane %v6266, 2
        %v6597 = vrot.slane %v6268, 2
        %v6598 = vrot.slane %v6270, 2
        %v6599 = vrot.slane %v6272, 2
        %v6608 = vadd.f32 %v6592, %v6584
        %v6609 = vadd.f32 %v6593, %v6585
        %v6610 = vadd.f32 %v6594, %v6586
        %v6611 = vadd.f32 %v6595, %v6587
        %v6612 = vadd.f32 %v6596, %v6588
        %v6613 = vadd.f32 %v6597, %v6589
        %v6614 = vadd.f32 %v6598, %v6590
        %v6615 = vadd.f32 %v6599, %v6591
        %v6616 = vtanh.pop %v6608
        %v6617 = vtanh.pop %v6609
        %v6618 = vtanh.pop %v6610
        %v6619 = vtanh.pop %v6611
        %v6620 = vtanh.pop %v6612
        %v6621 = vtanh.pop %v6613
        %v6622 = vtanh.pop %v6614
        %v6623 = vtanh.pop %v6615
        %v6624 = vsub.f32 1.0, %v6510
        %v6625 = vsub.f32 1.0, %v6512
        %v6626 = vsub.f32 1.0, %v6514
        %v6627 = vsub.f32 1.0, %v6516
        %v6628 = vsub.f32 1.0, %v6518
        %v6629 = vsub.f32 1.0, %v6520
        %v6630 = vsub.f32 1.0, %v6522
        %v6631 = vsub.f32 1.0, %v6524
        %v6632 = vmul.f32 %v6624, %v6616
        %v6633 = vmul.f32 %v6625, %v6617
        %v6634 = vmul.f32 %v6626, %v6618
        %v6635 = vmul.f32 %v6627, %v6619
        %v6636 = vmul.f32 %v6628, %v6620
        %v6637 = vmul.f32 %v6629, %v6621
        %v6638 = vmul.f32 %v6630, %v6622
        %v6639 = vmul.f32 %v6631, %v6623
        %v6640 = vmul.f32 %v6510, %v5943
        %v6641 = vmul.f32 %v6512, %v5944
        %v6642 = vmul.f32 %v6514, %v5945
        %v6643 = vmul.f32 %v6516, %v5946
        %v6644 = vmul.f32 %v6518, %v5947
        %v6645 = vmul.f32 %v6520, %v5948
        %v6646 = vmul.f32 %v6522, %v5949
        %v6647 = vmul.f32 %v6524, %v5950
        %v6648 = vadd.f32 %v6632, %v6640
        %v6649 = vadd.f32 %v6633, %v6641
        %v6650 = vadd.f32 %v6634, %v6642
        %v6651 = vadd.f32 %v6635, %v6643
        %v6652 = vadd.f32 %v6636, %v6644
        %v6653 = vadd.f32 %v6637, %v6645
        %v6654 = vadd.f32 %v6638, %v6646
        %v6655 = vadd.f32 %v6639, %v6647
        %v6656 = vpack.c.bf16 %v6648, %v6648
        %v6657 = vpack.c.bf16 %v6649, %v6649
        %v6658 = vpack.c.bf16 %v6650, %v6650
        %v6659 = vpack.c.bf16 %v6651, %v6651
        %v6660 = vpack.c.bf16 %v6652, %v6652
        %v6661 = vpack.c.bf16 %v6653, %v6653
        %v6662 = vpack.c.bf16 %v6654, %v6654
        %v6663 = vpack.c.bf16 %v6655, %v6655
        %v6672 = vunpack.c.l.b16 %v6656
        %v6673 = vunpack.c.l.b16 %v6657
        %v6674 = vunpack.c.l.b16 %v6658
        %v6675 = vunpack.c.l.b16 %v6659
        %v6676 = vunpack.c.l.b16 %v6660
        %v6677 = vunpack.c.l.b16 %v6661
        %v6678 = vunpack.c.l.b16 %v6662
        %v6679 = vunpack.c.l.b16 %v6663
        %v6680 = vrot.slane %v6673, 7
        %v6681 = vsel %vm1611, %v6680, %v6672
        %v6682 = vrot.slane %v6674, 6
        %v6683 = vsel %vm1614, %v6682, %v6681
        %v6684 = vrot.slane %v6675, 5
        %v6685 = vsel %vm1617, %v6684, %v6683
        %v6686 = vrot.slane %v6676, 4
        %v6687 = vsel %vm1620, %v6686, %v6685
        %v6688 = vrot.slane %v6677, 3
        %v6689 = vsel %vm1623, %v6688, %v6687
        %v6690 = vrot.slane %v6678, 2
        %v6691 = vsel %vm1626, %v6690, %v6689
        %v6692 = vrot.slane %v6679, 1
        %v6693 = vsel %vm1629, %v6692, %v6691
        %v6694 = vpack.c.b16 %v6693, %v6693
        %6696 = vmatprep.subr.bf16.mxu0 %v1714
        %6697 = vmatpush1.bf16.msra.mxu0 %v1713
        %6698 = vmatprep.subr.bf16.mxu0 %v1717
        %6699 = vmatpush1.bf16.msra.mxu0 %v1716
        %6700 = vmatprep.subr.bf16.mxu0 %v1720
        %6701 = vmatpush1.bf16.msra.mxu0 %v1719
        %6702 = vmatprep.subr.bf16.mxu0 %v1723
        %6703 = vmatpush1.bf16.msra.mxu0 %v1722
        %6704 = vmatprep.subr.bf16.mxu0 %v1726
        %6705 = vmatpush1.bf16.msra.mxu0 %v1725
        %6706 = vmatprep.subr.bf16.mxu0 %v1729
        %6707 = vmatpush1.bf16.msra.mxu0 %v1728
        %6708 = vmatprep.subr.bf16.mxu0 %v1732
        %6709 = vmatpush1.bf16.msra.mxu0 %v1731
        %6710 = vmatprep.subr.bf16.mxu0 %v1735
        %6711 = vmatpush1.bf16.msra.mxu0 %v1734
        %6712 = vmatprep.subr.bf16.mxu0 0
        %6713 = vmatpush1.bf16.msra.mxu0 0
        %6714 = vmatprep.subr.bf16.mxu0 0
        %6715 = vmatpush1.bf16.msra.mxu0 0
        %6716 = vmatprep.subr.bf16.mxu0 0
        %6717 = vmatpush1.bf16.msra.mxu0 0
        %6718 = vmatprep.subr.bf16.mxu0 0
        %6719 = vmatpush1.bf16.msra.mxu0 0
        %6720 = vmatprep.subr.bf16.mxu0 0
        %6721 = vmatpush1.bf16.msra.mxu0 0
        %6722 = vmatprep.subr.bf16.mxu0 0
        %6723 = vmatpush1.bf16.msra.mxu0 0
        %6724 = vmatprep.subr.bf16.mxu0 0
        %6725 = vmatpush1.bf16.msra.mxu0 0
        %6726 = vmatprep.subr.bf16.mxu0 0
        %6727 = vmatpush1.bf16.msra.mxu0 0
        %6728 = vmatprep.mubr.bf16.mxu0 0
        %6729 = vmatmul.mubr.bf16.gmra.mrb[0].mxu0 %v6694
        %v6730 = vpop.f32.mrb[0].mxu0
        %v6731 = vadd.f32 %v583, %v6730
        %v6732 = vpop.f32.mrb[0].mxu0
        %v6733 = vadd.f32 %v587, %v6732
        %v6734 = vpop.f32.mrb[0].mxu0
        %v6735 = vpop.f32.mrb[0].mxu0
        %6736 = vdwg.mxu0
        %6737 = vmatprep.subr.bf16.mxu0 0
        %6738 = vmatpush1.bf16.msra.mxu0 %v1715
        %6739 = vmatprep.subr.bf16.mxu0 0
        %6740 = vmatpush1.bf16.msra.mxu0 %v1718
        %6741 = vmatprep.subr.bf16.mxu0 0
        %6742 = vmatpush1.bf16.msra.mxu0 %v1721
        %6743 = vmatprep.subr.bf16.mxu0 0
        %6744 = vmatpush1.bf16.msra.mxu0 %v1724
        %6745 = vmatprep.subr.bf16.mxu0 0
        %6746 = vmatpush1.bf16.msra.mxu0 %v1727
        %6747 = vmatprep.subr.bf16.mxu0 0
        %6748 = vmatpush1.bf16.msra.mxu0 %v1730
        %6749 = vmatprep.subr.bf16.mxu0 0
        %6750 = vmatpush1.bf16.msra.mxu0 %v1733
        %6751 = vmatprep.subr.bf16.mxu0 0
        %6752 = vmatpush1.bf16.msra.mxu0 %v1736
        %6753 = vmatprep.subr.bf16.mxu0 0
        %6754 = vmatpush1.bf16.msra.mxu0 0
        %6755 = vmatprep.subr.bf16.mxu0 0
        %6756 = vmatpush1.bf16.msra.mxu0 0
        %6757 = vmatprep.subr.bf16.mxu0 0
        %6758 = vmatpush1.bf16.msra.mxu0 0
        %6759 = vmatprep.subr.bf16.mxu0 0
        %6760 = vmatpush1.bf16.msra.mxu0 0
        %6761 = vmatprep.subr.bf16.mxu0 0
        %6762 = vmatpush1.bf16.msra.mxu0 0
        %6763 = vmatprep.subr.bf16.mxu0 0
        %6764 = vmatpush1.bf16.msra.mxu0 0
        %6765 = vmatprep.subr.bf16.mxu0 0
        %6766 = vmatpush1.bf16.msra.mxu0 0
        %6767 = vmatprep.subr.bf16.mxu0 0
        %6768 = vmatpush1.bf16.msra.mxu0 0
        %6769 = vmatprep.mubr.bf16.mxu0 0
        %6770 = vmatmul.mubr.bf16.gmra.mrb[0].mxu0 %v6694
        %v6771 = vpop.f32.mrb[0].mxu0
        %v6772 = vadd.f32 %v591, %v6771
        %v6773 = vpop.f32.mrb[0].mxu0
        %v6774 = vpop.f32.mrb[0].mxu0
        %v6775 = vpop.f32.mrb[0].mxu0
        %6776 = vdwg.mxu0
        %v6777 = vadd.f32 %v6731, %v6211
        %v6778 = vxor.u32 %v6777, 2147483648
        %v6779 = vmul.f32 %v6778, 1.442695
        %v6780 = vpow.pop %v6779
        %v6781 = vadd.f32 %v6780, 1.0
        %v6782 = vrcp.pop %v6781
        %v6783 = vmul.f32 1.0, %v6782
        %v6784 = vadd.f32 %v6733, %v6213
        %v6785 = vxor.u32 %v6784, 2147483648
        %v6786 = vmul.f32 %v6785, 1.442695
        %v6787 = vpow.pop %v6786
        %v6788 = vadd.f32 %v6787, 1.0
        %v6789 = vrcp.pop %v6788
        %v6790 = vmul.f32 1.0, %v6789
        %v6791 = vadd.f32 %v6252, %v608
        %v6792 = vmul.f32 %v6783, %v6791
        %v6793 = vadd.f32 %v6772, %v6792
        %v6794 = vtanh.pop %v6793
        %v6795 = vsub.f32 1.0, %v6790
        %v6796 = vmul.f32 %v6795, %v6794
        %v6797 = vmul.f32 %v6790, %v6093
        %v6798 = vadd.f32 %v6796, %v6797
        %v6807 = vcombine.low %v6648, %v6649
        %v6808 = vcombine.low %v6650, %v6651
        %v6809 = vcombine.low %v6652, %v6653
        %v6810 = vcombine.low %v6654, %v6655
        %v6812 = vunpack.c.l.s4 1966171168
        %v6813 = vunpack.c.0.s8 %v6812
        %v6814 = vlaneseq
        %v6815 = vshrl.u32 %v6814, 7
        %v6816 = vsub.s32 %v6813, %v6815
        %v6817 = vrot.slane %v6807, %v6816
        %v6819 = vunpack.c.l.s4 1966171168
        %v6820 = vunpack.c.0.s8 %v6819
        %v6821 = vlaneseq
        %v6822 = vshrl.u32 %v6821, 7
        %v6823 = vsub.s32 %v6820, %v6822
        %v6824 = vrot.slane %v6808, %v6823
        %v6826 = vunpack.c.l.s4 1966171168
        %v6827 = vunpack.c.0.s8 %v6826
        %v6828 = vlaneseq
        %v6829 = vshrl.u32 %v6828, 7
        %v6830 = vsub.s32 %v6827, %v6829
        %v6831 = vrot.slane %v6809, %v6830
        %v6833 = vunpack.c.l.s4 1966171168
        %v6834 = vunpack.c.0.s8 %v6833
        %v6835 = vlaneseq
        %v6836 = vshrl.u32 %v6835, 7
        %v6837 = vsub.s32 %v6834, %v6836
        %v6838 = vrot.slane %v6810, %v6837
        %v6839 = vcombine.low %v6817, %v6824
        %v6840 = vcombine.low %v6831, %v6838
        %v6842 = vunpack.c.l.s4 1966171168
        %v6843 = vunpack.c.0.s8 %v6842
        %v6844 = vlaneseq
        %v6845 = vshrl.u32 %v6844, 7
        %v6846 = vsub.s32 %v6843, %v6845
        %v6847 = vrot.slane %v6839, %v6846
        %v6849 = vunpack.c.l.s4 1966171168
        %v6850 = vunpack.c.0.s8 %v6849
        %v6851 = vlaneseq
        %v6852 = vshrl.u32 %v6851, 7
        %v6853 = vsub.s32 %v6850, %v6852
        %v6854 = vrot.slane %v6840, %v6853
        %v6855 = vcombine.low %v6847, %v6854
        %6857 = vst [vmem:[#allocation2] sm:$0xff] %v6855
        %6858 = vst [vmem:[%s611] sm:$0xff] %v6798
        // Predicated region
        $region65: #{tpu_custom_call.1} parent=43 // pred_check
          %p6859 = pneg %p331
        $region66: #{tpu_custom_call.1} parent=43 // pred_check_branch
          %6861 = sbr.rel (%p6859) target = $region68
        $region67: #{tpu_custom_call.1} parent=43 // pred_region
          %v6862 = vld [vmem:[#allocation2] sm:$0xff]
          %v6863 = vld [vmem:[#allocation2 + $0x8] sm:$0xff]
          %6864 = vst [vmem:[%s328] sm:$0xff] %v6862
          %6865 = vst [vmem:[%s328 + $0x8] sm:$0xff] %v6863
        $region68: #{tpu_custom_call.1} parent=43 // pred_fallthru
          _
        %s6866 = sand.u32 %s178, 1
        %s6867 = scalar_lea.sflag [#allocation6], %s6866
        %s6868 = sand.u32 %s178, 1
        %s6869 = smul.addr %s6868, 16
        %s6870 = scalar_lea.vmem [#allocation12], %s6869
        // Predicated region
        $region69: #{tpu_custom_call.1} parent=43 // pred_check
          %p6871 = pneg %p188
        $region70: #{tpu_custom_call.1} parent=43 // pred_check_branch
          %6873 = sbr.rel (%p6871) target = $region72
        $region71: #{tpu_custom_call.1} parent=43 // pred_region
          %s6875 = ssub.s32 256, 256
          %6876 = vsyncadd %s6867, %s6875
          %s6877 = smul.addr %s29, 128
          %s6878 = scalar_lea.hbm %s6, %s6877
          %s6879 = sshll.u32 %s6870, 4
          %s6880 = int_to_ptr.vmem [resolvable:$true] %s6879
          %6885 = dma.vmem_to_hbm [thread:$0]  %s6880, 256, %s6878, %s6867, 128, 256, 8
        $region72: #{tpu_custom_call.1} parent=43 // pred_fallthru
          _
      $region44: #{tpu_custom_call.1} parent=5 // pred_fallthru
        _
      %p6886 = scmp.le.s32.totalorder 2, %s20
      // Predicated region
      $region73: #{tpu_custom_call.1} parent=5 // pred_check
        %p6887 = pneg %p6886
      $region74: #{tpu_custom_call.1} parent=5 // pred_check_branch
        %6889 = sbr.rel (%p6887) target = $region76
      $region75: #{tpu_custom_call.1} parent=5 // pred_region
        %s6890 = ssub.s32 %s20, 2
        // Predicated region
        $region77: #{tpu_custom_call.1} parent=75 // pred_check
          %p6891 = pneg %p194
        $region78: #{tpu_custom_call.1} parent=75 // pred_check_branch
          %6893 = sbr.rel (%p6891) target = $region80
        $region79: #{tpu_custom_call.1} parent=75 // pred_region
          %s6894 = sand.u32 %s179, 1
          %s6895 = scalar_lea.sflag [#allocation6], %s6894
          %s6896 = sand.u32 %s179, 1
          %s6897 = smul.addr %s6896, 16
          %s6898 = scalar_lea.vmem [#allocation12], %s6897
          %6899 = dma.done %s6895, 256
        $region80: #{tpu_custom_call.1} parent=75 // pred_fallthru
          _
      $region76: #{tpu_custom_call.1} parent=5 // pred_fallthru
        _
    $region6: #{tpu_custom_call.1} parent=1 // loop_footer
      %s24 = sadd.s32 1, %s20
    $region7: #{tpu_custom_call.1} parent=1 // loop_footer_branch
      %19 = sbr.rel target = $region3
    $region8: #{tpu_custom_call.1} parent=1 // loop_exit
      _
    %6900 = vsyncpa [#allocation5], 1
    %s6901 = scalar_lea.sflag [#allocation5], 1
    %6902 = vsyncpa %s6901, 1
    %6903 = vsyncpa [#allocation8], 1
    %6904 = vsyncpa [#allocation11], 1
    %6905 = vsyncpa [#allocation6], 1
    %s6906 = scalar_lea.sflag [#allocation6], 1
    %6907 = vsyncpa %s6906, 1

</llo_original>
